<compile_context>
chip_gen: v6e
topology: v6e:2x2x1
jax: 0.10.0
libtpu: 0.0.40
codegen_flags: <defaults>
</compile_context>

<pallas_src>
import functools

import jax
import jax.numpy as jnp
from jax.experimental import pallas as pl
from jax.experimental.pallas import tpu as pltpu


# ----------------------------------------------------------------------------
# small helpers
# ----------------------------------------------------------------------------
def _round_up(x, m):
    return ((x + m - 1) // m) * m


def _pick_tile(dim, preferred, align):
    """Largest tile <= preferred that divides dim and is a multiple of align."""
    if dim <= preferred:
        return dim
    t = (preferred // align) * align
    while t >= align:
        if dim % t == 0:
            return t
        t -= align
    return dim  # fallback: single block


# ----------------------------------------------------------------------------
# Pallas kernel 1: tiled bf16 matmul (+ optional partial BN stats / activation)
# ----------------------------------------------------------------------------
def conv_matmul_kernel(p_ref, w_ref, *rest, act, with_stats):
    """grid = (M_tiles, K_tiles).  K is a reduction ('arbitrary') accumulated
    into an f32 VMEM scratch; M tiles are independent ('parallel').

    At the last K step:
      * with_stats=True  -> store the raw conv output (f32) and per-tile channel
        sum / sum-of-squares (rows 0/1 of an (8, C) stats block) for a later
        BatchNorm pass.
      * with_stats=False -> apply the activation (LeakyReLU / Sigmoid) in-place.
    """
    if with_stats:
        o_ref, stats_ref, acc_ref = rest
    else:
        o_ref, acc_ref = rest

    kk = pl.program_id(1)

    @pl.when(kk == 0)
    def _init():
        acc_ref[...] = jnp.zeros_like(acc_ref)

    acc_ref[...] += jnp.dot(p_ref[...], w_ref[...],
                            preferred_element_type=jnp.float32)

    @pl.when(kk == pl.num_programs(1) - 1)
    def _finalize():
        acc = acc_ref[...]
        if with_stats:
            s_part = jnp.sum(acc, axis=0, keepdims=True)          # (1, C)
            ss_part = jnp.sum(acc * acc, axis=0, keepdims=True)   # (1, C)
            rows = jax.lax.broadcasted_iota(jnp.int32, stats_ref.shape, 0)
            stats_ref[...] = jnp.where(rows == 0, s_part,
                                       jnp.where(rows == 1, ss_part, 0.0))
        if act == "leaky":
            acc = jnp.where(acc >= 0, acc, 0.2 * acc)
        elif act == "sigmoid":
            acc = jax.nn.sigmoid(acc)
        o_ref[...] = acc.astype(o_ref.dtype)


# ----------------------------------------------------------------------------
# Pallas kernel 2: elementwise BatchNorm (pre-folded scale/shift) + LeakyReLU
# ----------------------------------------------------------------------------
def bn_act_kernel(x_ref, scale_ref, shift_ref, o_ref):
    y = x_ref[...] * scale_ref[...] + shift_ref[...]
    o_ref[...] = jnp.where(y >= 0, y, 0.2 * y).astype(o_ref.dtype)


# ----------------------------------------------------------------------------
# Glue: NHWC im2col (bf16) and one-time weight preparation
# ----------------------------------------------------------------------------
# TODO(synk): the patch matrix is still materialized in HBM; an implicit-GEMM
# variant (per-tap accumulation from strided NHWC windows) would cut HBM
# traffic further.
def im2col_nhwc(x_nhwc, ksize, stride, padding):
    N, H, W, C = x_nhwc.shape
    if padding:
        x_nhwc = jnp.pad(x_nhwc, ((0, 0), (padding, padding),
                                  (padding, padding), (0, 0)))
    Ho = (H + 2 * padding - ksize) // stride + 1
    Wo = (W + 2 * padding - ksize) // stride + 1
    cols = []
    for i in range(ksize):
        for j in range(ksize):
            cols.append(x_nhwc[:, i:i + Ho * stride:stride,
                               j:j + Wo * stride:stride, :])      # (N,Ho,Wo,C)
    patches = jnp.stack(cols, axis=3)                              # (N,Ho,Wo,k*k,C)
    return patches.reshape(N * Ho * Wo, ksize * ksize * C), Ho, Wo


def prep_weight(w_oihw, pad_cout_to=None):
    """(Cout,Cin,kh,kw) -> (K=kh*kw*Cin, Cout) bf16, K lane-padded to 128
    multiples, Cout optionally padded (final Cout=1 layer)."""
    cout, cin, kh, kw = w_oihw.shape
    wmat = jnp.transpose(w_oihw, (2, 3, 1, 0)).reshape(kh * kw * cin, cout)
    K, C = wmat.shape
    Kp = _round_up(K, 128)
    Cp = pad_cout_to if pad_cout_to is not None else C
    if (Kp, Cp) != (K, C):
        wmat = jnp.pad(wmat, ((0, Kp - K), (0, Cp - C)))
    return wmat.astype(jnp.bfloat16)


# ----------------------------------------------------------------------------
# One conv layer = im2col glue + tiled Pallas matmul (+ optional BN pass)
# ----------------------------------------------------------------------------
def conv_layer(x_nhwc, wmat, *, ksize, stride, padding, cout, act,
               gamma=None, beta=None, eps=1e-5):
    N = x_nhwc.shape[0]
    patches, Ho, Wo = im2col_nhwc(x_nhwc, ksize, stride, padding)   # (M, Kraw) bf16
    M, Kraw = patches.shape
    Kp, Cp = wmat.shape
    if Kraw < Kp:  # lane-align contraction dim (layer 1: 48 -> 128)
        patches = jnp.pad(patches, ((0, 0), (0, Kp - Kraw)))

    use_bn = gamma is not None
    tm = _pick_tile(M, 256, 8)
    tk = _pick_tile(Kp, 1024, 128)
    gm, gk = M // tm, Kp // tk

    # Conv output stays f32 when BN still has to be applied (or for the final
    # sigmoid); intermediate activations are bf16 (next layer's MXU input).
    out_dtype = jnp.float32 if (use_bn or act == "sigmoid") else jnp.bfloat16

    out_shape = [jax.ShapeDtypeStruct((M, Cp), out_dtype)]
    out_specs = [pl.BlockSpec((tm, Cp), lambda i, k_: (i, 0))]
    if use_bn:
        out_shape.append(jax.ShapeDtypeStruct((8 * gm, Cp), jnp.float32))
        out_specs.append(pl.BlockSpec((8, Cp), lambda i, k_: (i, 0)))

    kernel = functools.partial(conv_matmul_kernel,
                               act=None if use_bn else act,
                               with_stats=use_bn)

    results = pl.pallas_call(
        kernel,
        out_shape=out_shape,
        grid=(gm, gk),
        in_specs=[
            pl.BlockSpec((tm, tk), lambda i, k_: (i, k_)),
            pl.BlockSpec((tk, Cp), lambda i, k_: (k_, 0)),
        ],
        out_specs=out_specs,
        scratch_shapes=[pltpu.VMEM((tm, Cp), jnp.float32)],
        compiler_params=pltpu.CompilerParams(
            dimension_semantics=("parallel", "arbitrary")),
    )(patches, wmat)

    if use_bn:
        conv_out, stats = results
        stats = stats.reshape(gm, 8, Cp)
        total = jnp.sum(stats[:, 0, :], axis=0)       # (Cp,)  sum over all M rows
        total_sq = jnp.sum(stats[:, 1, :], axis=0)    # (Cp,)
        mean = total / M
        var = jnp.maximum(total_sq / M - mean * mean, 0.0)   # biased (train mode)
        inv = jax.lax.rsqrt(var + eps)
        scale = (gamma * inv).reshape(1, Cp).astype(jnp.float32)
        shift = (beta - mean * gamma * inv).reshape(1, Cp).astype(jnp.float32)

        y = pl.pallas_call(
            bn_act_kernel,
            out_shape=jax.ShapeDtypeStruct((M, Cp), jnp.bfloat16),
            grid=(gm,),
            in_specs=[
                pl.BlockSpec((tm, Cp), lambda i: (i, 0)),
                pl.BlockSpec((1, Cp), lambda i: (0, 0)),
                pl.BlockSpec((1, Cp), lambda i: (0, 0)),
            ],
            out_specs=pl.BlockSpec((tm, Cp), lambda i: (i, 0)),
            compiler_params=pltpu.CompilerParams(
                dimension_semantics=("parallel",)),
        )(conv_out, scale, shift)
    else:
        (y,) = results

    if Cp != cout:                 # drop lane padding on the final Cout=1 layer
        y = y[:, :cout]
    return y.reshape(N, Ho, Wo, cout)


# ----------------------------------------------------------------------------
# Parameter init (DCGAN-style N(0, 0.02) conv weights, pre-packed for the MXU;
# BatchNorm gamma=1, beta=0 as in a fresh nn.BatchNorm2d)
# ----------------------------------------------------------------------------
def init_params(key):
    layer_cfg = [
        # (cin, cout, pad_cout_to)
        (3, 64, None),
        (64, 128, None),
        (128, 256, None),
        (256, 512, None),
        (512, 1, 128),
    ]
    keys = jax.random.split(key, len(layer_cfg))
    params = {}
    for idx, (kk, (cin, cout, pct)) in enumerate(zip(keys, layer_cfg), start=1):
        w = 0.02 * jax.random.normal(kk, (cout, cin, 4, 4), dtype=jnp.float32)
        params[f"w{idx}"] = prep_weight(w, pad_cout_to=pct)
    for idx, c in zip((2, 3, 4), (128, 256, 512)):
        params[f"g{idx}"] = jnp.ones((c,), jnp.float32)
        params[f"b{idx}"] = jnp.zeros((c,), jnp.float32)
    return params


# ----------------------------------------------------------------------------
# Full forward: NCHW f32 in (PyTorch layout), (N,1,1,1) f32 out
# ----------------------------------------------------------------------------
def discriminator_forward(x_nchw, params):
    # NCHW f32 -> NHWC bf16 once at the network boundary.
    x = jnp.transpose(x_nchw, (0, 2, 3, 1)).astype(jnp.bfloat16)

    y = conv_layer(x, params["w1"], ksize=4, stride=2, padding=1, cout=64,
                   act="leaky")
    y = conv_layer(y, params["w2"], ksize=4, stride=2, padding=1, cout=128,
                   act="leaky", gamma=params["g2"], beta=params["b2"])
    y = conv_layer(y, params["w3"], ksize=4, stride=2, padding=1, cout=256,
                   act="leaky", gamma=params["g3"], beta=params["b3"])
    y = conv_layer(y, params["w4"], ksize=4, stride=2, padding=1, cout=512,
                   act="leaky", gamma=params["g4"], beta=params["b4"])
    y = conv_layer(y, params["w5"], ksize=4, stride=1, padding=0, cout=1,
                   act="sigmoid")
    # NHWC -> NCHW at the boundary; final shape (N, 1, 1, 1)
    return jnp.transpose(y, (0, 3, 1, 2)).astype(jnp.float32)


if __name__ == "__main__":
    key = jax.random.PRNGKey(0)
    k_param, k_x = jax.random.split(key)
    params = init_params(k_param)

    # DCGAN discriminator expects 3x64x64 inputs (needed so the final 4x4
    # valid conv produces a 1x1 map). Small batch of 2.
    x = jax.random.normal(k_x, (2, 3, 64, 64), dtype=jnp.float32)

    out = jax.jit(discriminator_forward)(x, params)
    out = jax.block_until_ready(out)

    assert out.shape == (2, 1, 1, 1)
    assert bool(jnp.all((out >= 0.0) & (out <= 1.0)))
    print("KERNEL_OK")
</pallas_src>

<mosaic_0001>
module attributes {stable_mosaic.version = 11 : i64} {
  func.func @conv_matmul_kernel(%arg0: i32, %arg1: i32, %arg2: memref<256x128xbf16, #tpu.memory_space<vmem>>, %arg3: memref<128x64xbf16, #tpu.memory_space<vmem>>, %arg4: memref<256x64xbf16, #tpu.memory_space<vmem>>, %arg5: memref<256x64xf32, #tpu.memory_space<vmem>>) attributes {dimension_semantics = [#tpu.dimension_semantics<parallel>, #tpu.dimension_semantics<arbitrary>], iteration_bounds = array<i64: 8, 1>, scalar_prefetch = 0 : i64, scratch_operands = 1 : i64, tpu.core_type = #tpu.core_type<tc>, window_params = [{transform_indices = @transform_0, window_bounds = array<i64: 256, 128>}, {transform_indices = @transform_1, window_bounds = array<i64: 128, 64>}, {transform_indices = @transform_2, window_bounds = array<i64: 256, 64>}]} {
    %c0_i32 = arith.constant 0 : i32
    %0 = arith.cmpi eq, %arg1, %c0_i32 : i32
    %1 = arith.extui %0 : i1 to i32
    %c0_i32_0 = arith.constant 0 : i32
    %2 = arith.cmpi ne, %1, %c0_i32_0 : i32
    scf.if %2 {
      %cst_10 = arith.constant 0.000000e+00 : f32
      %12 = vector.broadcast %cst_10 : f32 to vector<256x64xf32>
      %c0_11 = arith.constant 0 : index
      %c0_12 = arith.constant 0 : index
      %13 = vector.load %arg5[%c0_11, %c0_12] : memref<256x64xf32, #tpu.memory_space<vmem>>, vector<256x64xf32>
      tpu.vector_store %arg5[%c0_11, %c0_12], %12 {strides = array<i32>} : memref<256x64xf32, #tpu.memory_space<vmem>>, vector<256x64xf32>,
    } else {
    }
    %c0 = arith.constant 0 : index
    %c0_1 = arith.constant 0 : index
    %3 = vector.load %arg5[%c0, %c0_1] : memref<256x64xf32, #tpu.memory_space<vmem>>, vector<256x64xf32>
    %c0_2 = arith.constant 0 : index
    %c0_3 = arith.constant 0 : index
    %4 = vector.load %arg2[%c0_2, %c0_3] : memref<256x128xbf16, #tpu.memory_space<vmem>>, vector<256x128xbf16>
    %c0_4 = arith.constant 0 : index
    %c0_5 = arith.constant 0 : index
    %5 = vector.load %arg3[%c0_4, %c0_5] : memref<128x64xbf16, #tpu.memory_space<vmem>>, vector<128x64xbf16>
    %cst = arith.constant dense<0.000000e+00> : vector<256x64xf32>
    %6 = tpu.matmul %4, %5, %cst {dimension_numbers = #tpu.dot_dimension_numbers<[1], [0], [0], [1], [0, 0, 1, 1], [], []>} : vector<256x128xbf16>, vector<128x64xbf16>, vector<256x64xf32> -> vector<256x64xf32>
    %7 = arith.addf %3, %6 : vector<256x64xf32>
    %c0_6 = arith.constant 0 : index
    %c0_7 = arith.constant 0 : index
    %8 = vector.load %arg5[%c0_6, %c0_7] : memref<256x64xf32, #tpu.memory_space<vmem>>, vector<256x64xf32>
    tpu.vector_store %arg5[%c0_6, %c0_7], %7 {strides = array<i32>} : memref<256x64xf32, #tpu.memory_space<vmem>>, vector<256x64xf32>,
    %c0_i32_8 = arith.constant 0 : i32
    %9 = arith.cmpi eq, %arg1, %c0_i32_8 : i32
    %10 = arith.extui %9 : i1 to i32
    %c0_i32_9 = arith.constant 0 : i32
    %11 = arith.cmpi ne, %10, %c0_i32_9 : i32
    scf.if %11 {
      %c0_10 = arith.constant 0 : index
      %c0_11 = arith.constant 0 : index
      %12 = vector.load %arg5[%c0_10, %c0_11] : memref<256x64xf32, #tpu.memory_space<vmem>>, vector<256x64xf32>
      %cst_12 = arith.constant 0.000000e+00 : f32
      %13 = vector.broadcast %cst_12 : f32 to vector<256x64xf32>
      %14 = arith.cmpf oge, %12, %13 : vector<256x64xf32>
      %cst_13 = arith.constant 2.000000e-01 : f32
      %15 = vector.broadcast %cst_13 : f32 to vector<256x64xf32>
      %16 = arith.mulf %15, %12 : vector<256x64xf32>
      %17 = arith.select %14, %12, %16 : vector<256x64xi1>, vector<256x64xf32>
      %18 = arith.truncf %17 : vector<256x64xf32> to vector<256x64xbf16>
      %c0_14 = arith.constant 0 : index
      %c0_15 = arith.constant 0 : index
      %19 = vector.load %arg4[%c0_14, %c0_15] : memref<256x64xbf16, #tpu.memory_space<vmem>>, vector<256x64xbf16>
      tpu.vector_store %arg4[%c0_14, %c0_15], %18 {strides = array<i32>} : memref<256x64xbf16, #tpu.memory_space<vmem>>, vector<256x64xbf16>,
    } else {
    }
    return
  }
  func.func @transform_0(%arg0: i32, %arg1: i32) -> (i32, i32) {
    %c0_i32 = arith.constant 0 : i32
    return %arg0, %arg1 : i32, i32
  }
  func.func @transform_1(%arg0: i32, %arg1: i32) -> (i32, i32) {
    %c0_i32 = arith.constant 0 : i32
    %c0_i32_0 = arith.constant 0 : i32
    return %arg1, %c0_i32 : i32, i32
  }
  func.func @transform_2(%arg0: i32, %arg1: i32) -> (i32, i32) {
    %c0_i32 = arith.constant 0 : i32
    %c0_i32_0 = arith.constant 0 : i32
    return %arg0, %c0_i32 : i32, i32
  }
}

module attributes {stable_mosaic.version = 11 : i64} {
  func.func @conv_matmul_kernel(%arg0: i32, %arg1: i32, %arg2: memref<256x1024xbf16, #tpu.memory_space<vmem>>, %arg3: memref<1024x128xbf16, #tpu.memory_space<vmem>>, %arg4: memref<256x128xf32, #tpu.memory_space<vmem>>, %arg5: memref<8x128xf32, #tpu.memory_space<vmem>>, %arg6: memref<256x128xf32, #tpu.memory_space<vmem>>) attributes {dimension_semantics = [#tpu.dimension_semantics<parallel>, #tpu.dimension_semantics<arbitrary>], iteration_bounds = array<i64: 2, 1>, scalar_prefetch = 0 : i64, scratch_operands = 1 : i64, tpu.core_type = #tpu.core_type<tc>, window_params = [{transform_indices = @transform_0, window_bounds = array<i64: 256, 1024>}, {transform_indices = @transform_1, window_bounds = array<i64: 1024, 128>}, {transform_indices = @transform_2, window_bounds = array<i64: 256, 128>}, {transform_indices = @transform_3, window_bounds = array<i64: 8, 128>}]} {
    %c0_i32 = arith.constant 0 : i32
    %0 = arith.cmpi eq, %arg1, %c0_i32 : i32
    %1 = arith.extui %0 : i1 to i32
    %c0_i32_0 = arith.constant 0 : i32
    %2 = arith.cmpi ne, %1, %c0_i32_0 : i32
    scf.if %2 {
      %cst_10 = arith.constant 0.000000e+00 : f32
      %12 = vector.broadcast %cst_10 : f32 to vector<256x128xf32>
      %c0_11 = arith.constant 0 : index
      %c0_12 = arith.constant 0 : index
      %13 = vector.load %arg6[%c0_11, %c0_12] : memref<256x128xf32, #tpu.memory_space<vmem>>, vector<256x128xf32>
      tpu.vector_store %arg6[%c0_11, %c0_12], %12 {strides = array<i32>} : memref<256x128xf32, #tpu.memory_space<vmem>>, vector<256x128xf32>,
    } else {
    }
    %c0 = arith.constant 0 : index
    %c0_1 = arith.constant 0 : index
    %3 = vector.load %arg6[%c0, %c0_1] : memref<256x128xf32, #tpu.memory_space<vmem>>, vector<256x128xf32>
    %c0_2 = arith.constant 0 : index
    %c0_3 = arith.constant 0 : index
    %4 = vector.load %arg2[%c0_2, %c0_3] : memref<256x1024xbf16, #tpu.memory_space<vmem>>, vector<256x1024xbf16>
    %c0_4 = arith.constant 0 : index
    %c0_5 = arith.constant 0 : index
    %5 = vector.load %arg3[%c0_4, %c0_5] : memref<1024x128xbf16, #tpu.memory_space<vmem>>, vector<1024x128xbf16>
    %cst = arith.constant dense<0.000000e+00> : vector<256x128xf32>
    %6 = tpu.matmul %4, %5, %cst {dimension_numbers = #tpu.dot_dimension_numbers<[1], [0], [0], [1], [0, 0, 1, 1], [], []>} : vector<256x1024xbf16>, vector<1024x128xbf16>, vector<256x128xf32> -> vector<256x128xf32>
    %7 = arith.addf %3, %6 : vector<256x128xf32>
    %c0_6 = arith.constant 0 : index
    %c0_7 = arith.constant 0 : index
    %8 = vector.load %arg6[%c0_6, %c0_7] : memref<256x128xf32, #tpu.memory_space<vmem>>, vector<256x128xf32>
    tpu.vector_store %arg6[%c0_6, %c0_7], %7 {strides = array<i32>} : memref<256x128xf32, #tpu.memory_space<vmem>>, vector<256x128xf32>,
    %c0_i32_8 = arith.constant 0 : i32
    %9 = arith.cmpi eq, %arg1, %c0_i32_8 : i32
    %10 = arith.extui %9 : i1 to i32
    %c0_i32_9 = arith.constant 0 : i32
    %11 = arith.cmpi ne, %10, %c0_i32_9 : i32
    scf.if %11 {
      %c0_10 = arith.constant 0 : index
      %c0_11 = arith.constant 0 : index
      %12 = vector.load %arg6[%c0_10, %c0_11] : memref<256x128xf32, #tpu.memory_space<vmem>>, vector<256x128xf32>
      %cst_12 = arith.constant dense<0.000000e+00> : vector<128xf32>
      %13 = vector.multi_reduction <add>, %12, %cst_12 [0] : vector<256x128xf32> to vector<128xf32>
      %14 = vector.shape_cast %13 : vector<128xf32> to vector<1x128xf32>
      %15 = arith.mulf %12, %12 : vector<256x128xf32>
      %cst_13 = arith.constant dense<0.000000e+00> : vector<128xf32>
      %16 = vector.multi_reduction <add>, %15, %cst_13 [0] : vector<256x128xf32> to vector<128xf32>
      %17 = vector.shape_cast %16 : vector<128xf32> to vector<1x128xf32>
      %18 = tpu.iota {dimensions = array<i32: 0>} : vector<8x128xi32>
      %c0_i32_14 = arith.constant 0 : i32
      %19 = vector.broadcast %c0_i32_14 : i32 to vector<8x128xi32>
      %20 = arith.cmpi eq, %18, %19 : vector<8x128xi32>
      %c1_i32 = arith.constant 1 : i32
      %21 = vector.broadcast %c1_i32 : i32 to vector<8x128xi32>
      %22 = arith.cmpi eq, %18, %21 : vector<8x128xi32>
      %cst_15 = arith.constant 0.000000e+00 : f32
      %23 = vector.shape_cast %17 : vector<1x128xf32> to vector<1x128xf32>
      %24 = vector.broadcast %23 : vector<1x128xf32> to vector<8x128xf32>
      %25 = vector.broadcast %cst_15 : f32 to vector<8x128xf32>
      %26 = arith.select %22, %24, %25 : vector<8x128xi1>, vector<8x128xf32>
      %27 = vector.shape_cast %14 : vector<1x128xf32> to vector<1x128xf32>
      %28 = vector.broadcast %27 : vector<1x128xf32> to vector<8x128xf32>
      %29 = arith.select %20, %28, %26 : vector<8x128xi1>, vector<8x128xf32>
      %c0_16 = arith.constant 0 : index
      %c0_17 = arith.constant 0 : index
      %30 = vector.load %arg5[%c0_16, %c0_17] : memref<8x128xf32, #tpu.memory_space<vmem>>, vector<8x128xf32>
      tpu.vector_store %arg5[%c0_16, %c0_17], %29 {strides = array<i32>} : memref<8x128xf32, #tpu.memory_space<vmem>>, vector<8x128xf32>,
      %c0_18 = arith.constant 0 : index
      %c0_19 = arith.constant 0 : index
      %31 = vector.load %arg4[%c0_18, %c0_19] : memref<256x128xf32, #tpu.memory_space<vmem>>, vector<256x128xf32>
      tpu.vector_store %arg4[%c0_18, %c0_19], %12 {strides = array<i32>} : memref<256x128xf32, #tpu.memory_space<vmem>>, vector<256x128xf32>,
    } else {
    }
    return
  }
  func.func @transform_0(%arg0: i32, %arg1: i32) -> (i32, i32) {
    %c0_i32 = arith.constant 0 : i32
    return %arg0, %arg1 : i32, i32
  }
  func.func @transform_1(%arg0: i32, %arg1: i32) -> (i32, i32) {
    %c0_i32 = arith.constant 0 : i32
    %c0_i32_0 = arith.constant 0 : i32
    return %arg1, %c0_i32 : i32, i32
  }
  func.func @transform_2(%arg0: i32, %arg1: i32) -> (i32, i32) {
    %c0_i32 = arith.constant 0 : i32
    %c0_i32_0 = arith.constant 0 : i32
    return %arg0, %c0_i32 : i32, i32
  }
  func.func @transform_3(%arg0: i32, %arg1: i32) -> (i32, i32) {
    %c0_i32 = arith.constant 0 : i32
    %c0_i32_0 = arith.constant 0 : i32
    return %arg0, %c0_i32 : i32, i32
  }
}

module attributes {stable_mosaic.version = 11 : i64} {
  func.func @bn_act_kernel(%arg0: i32, %arg1: memref<256x128xf32, #tpu.memory_space<vmem>>, %arg2: memref<1x128xf32, #tpu.memory_space<vmem>>, %arg3: memref<1x128xf32, #tpu.memory_space<vmem>>, %arg4: memref<256x128xbf16, #tpu.memory_space<vmem>>) attributes {dimension_semantics = [#tpu.dimension_semantics<parallel>], iteration_bounds = array<i64: 2>, scalar_prefetch = 0 : i64, scratch_operands = 0 : i64, tpu.core_type = #tpu.core_type<tc>, window_params = [{transform_indices = @transform_0, window_bounds = array<i64: 256, 128>}, {pipeline_mode = #tpu.pipeline_mode<synchronous>, transform_indices = @transform_1, window_bounds = array<i64: 1, 128>}, {pipeline_mode = #tpu.pipeline_mode<synchronous>, transform_indices = @transform_2, window_bounds = array<i64: 1, 128>}, {transform_indices = @transform_3, window_bounds = array<i64: 256, 128>}]} {
    %c0 = arith.constant 0 : index
    %c0_0 = arith.constant 0 : index
    %0 = vector.load %arg1[%c0, %c0_0] : memref<256x128xf32, #tpu.memory_space<vmem>>, vector<256x128xf32>
    %c0_1 = arith.constant 0 : index
    %c0_2 = arith.constant 0 : index
    %1 = vector.load %arg2[%c0_1, %c0_2] : memref<1x128xf32, #tpu.memory_space<vmem>>, vector<1x128xf32>
    %2 = vector.broadcast %1 : vector<1x128xf32> to vector<256x128xf32>
    %3 = arith.mulf %0, %2 : vector<256x128xf32>
    %c0_3 = arith.constant 0 : index
    %c0_4 = arith.constant 0 : index
    %4 = vector.load %arg3[%c0_3, %c0_4] : memref<1x128xf32, #tpu.memory_space<vmem>>, vector<1x128xf32>
    %5 = vector.broadcast %4 : vector<1x128xf32> to vector<256x128xf32>
    %6 = arith.addf %3, %5 : vector<256x128xf32>
    %cst = arith.constant 0.000000e+00 : f32
    %7 = vector.broadcast %cst : f32 to vector<256x128xf32>
    %8 = arith.cmpf oge, %6, %7 : vector<256x128xf32>
    %cst_5 = arith.constant 2.000000e-01 : f32
    %9 = vector.broadcast %cst_5 : f32 to vector<256x128xf32>
    %10 = arith.mulf %9, %6 : vector<256x128xf32>
    %11 = arith.select %8, %6, %10 : vector<256x128xi1>, vector<256x128xf32>
    %12 = arith.truncf %11 : vector<256x128xf32> to vector<256x128xbf16>
    %c0_6 = arith.constant 0 : index
    %c0_7 = arith.constant 0 : index
    %13 = vector.load %arg4[%c0_6, %c0_7] : memref<256x128xbf16, #tpu.memory_space<vmem>>, vector<256x128xbf16>
    tpu.vector_store %arg4[%c0_6, %c0_7], %12 {strides = array<i32>} : memref<256x128xbf16, #tpu.memory_space<vmem>>, vector<256x128xbf16>,
    return
  }
  func.func @transform_0(%arg0: i32) -> (i32, i32) {
    %c0_i32 = arith.constant 0 : i32
    %c0_i32_0 = arith.constant 0 : i32
    return %arg0, %c0_i32 : i32, i32
  }
  func.func @transform_1(%arg0: i32) -> (i32, i32) {
    %c0_i32 = arith.constant 0 : i32
    %c0_i32_0 = arith.constant 0 : i32
    %c0_i32_1 = arith.constant 0 : i32
    return %c0_i32, %c0_i32_0 : i32, i32
  }
  func.func @transform_2(%arg0: i32) -> (i32, i32) {
    %c0_i32 = arith.constant 0 : i32
    %c0_i32_0 = arith.constant 0 : i32
    %c0_i32_1 = arith.constant 0 : i32
    return %c0_i32, %c0_i32_0 : i32, i32
  }
  func.func @transform_3(%arg0: i32) -> (i32, i32) {
    %c0_i32 = arith.constant 0 : i32
    %c0_i32_0 = arith.constant 0 : i32
    return %arg0, %c0_i32 : i32, i32
  }
}

module attributes {stable_mosaic.version = 11 : i64} {
  func.func @conv_matmul_kernel(%arg0: i32, %arg1: i32, %arg2: memref<128x1024xbf16, #tpu.memory_space<vmem>>, %arg3: memref<1024x256xbf16, #tpu.memory_space<vmem>>, %arg4: memref<128x256xf32, #tpu.memory_space<vmem>>, %arg5: memref<8x256xf32, #tpu.memory_space<vmem>>, %arg6: memref<128x256xf32, #tpu.memory_space<vmem>>) attributes {dimension_semantics = [#tpu.dimension_semantics<parallel>, #tpu.dimension_semantics<arbitrary>], iteration_bounds = array<i64: 1, 2>, scalar_prefetch = 0 : i64, scratch_operands = 1 : i64, tpu.core_type = #tpu.core_type<tc>, window_params = [{transform_indices = @transform_0, window_bounds = array<i64: 128, 1024>}, {transform_indices = @transform_1, window_bounds = array<i64: 1024, 256>}, {transform_indices = @transform_2, window_bounds = array<i64: 128, 256>}, {transform_indices = @transform_3, window_bounds = array<i64: 8, 256>}]} {
    %c0_i32 = arith.constant 0 : i32
    %0 = arith.cmpi eq, %arg1, %c0_i32 : i32
    %1 = arith.extui %0 : i1 to i32
    %c0_i32_0 = arith.constant 0 : i32
    %2 = arith.cmpi ne, %1, %c0_i32_0 : i32
    scf.if %2 {
      %cst_9 = arith.constant 0.000000e+00 : f32
      %12 = vector.broadcast %cst_9 : f32 to vector<128x256xf32>
      %c0_10 = arith.constant 0 : index
      %c0_11 = arith.constant 0 : index
      %13 = vector.load %arg6[%c0_10, %c0_11] : memref<128x256xf32, #tpu.memory_space<vmem>>, vector<128x256xf32>
      tpu.vector_store %arg6[%c0_10, %c0_11], %12 {strides = array<i32>} : memref<128x256xf32, #tpu.memory_space<vmem>>, vector<128x256xf32>,
    } else {
    }
    %c0 = arith.constant 0 : index
    %c0_1 = arith.constant 0 : index
    %3 = vector.load %arg6[%c0, %c0_1] : memref<128x256xf32, #tpu.memory_space<vmem>>, vector<128x256xf32>
    %c0_2 = arith.constant 0 : index
    %c0_3 = arith.constant 0 : index
    %4 = vector.load %arg2[%c0_2, %c0_3] : memref<128x1024xbf16, #tpu.memory_space<vmem>>, vector<128x1024xbf16>
    %c0_4 = arith.constant 0 : index
    %c0_5 = arith.constant 0 : index
    %5 = vector.load %arg3[%c0_4, %c0_5] : memref<1024x256xbf16, #tpu.memory_space<vmem>>, vector<1024x256xbf16>
    %cst = arith.constant dense<0.000000e+00> : vector<128x256xf32>
    %6 = tpu.matmul %4, %5, %cst {dimension_numbers = #tpu.dot_dimension_numbers<[1], [0], [0], [1], [0, 0, 1, 1], [], []>} : vector<128x1024xbf16>, vector<1024x256xbf16>, vector<128x256xf32> -> vector<128x256xf32>
    %7 = arith.addf %3, %6 : vector<128x256xf32>
    %c0_6 = arith.constant 0 : index
    %c0_7 = arith.constant 0 : index
    %8 = vector.load %arg6[%c0_6, %c0_7] : memref<128x256xf32, #tpu.memory_space<vmem>>, vector<128x256xf32>
    tpu.vector_store %arg6[%c0_6, %c0_7], %7 {strides = array<i32>} : memref<128x256xf32, #tpu.memory_space<vmem>>, vector<128x256xf32>,
    %c1_i32 = arith.constant 1 : i32
    %9 = arith.cmpi eq, %arg1, %c1_i32 : i32
    %10 = arith.extui %9 : i1 to i32
    %c0_i32_8 = arith.constant 0 : i32
    %11 = arith.cmpi ne, %10, %c0_i32_8 : i32
    scf.if %11 {
      %c0_9 = arith.constant 0 : index
      %c0_10 = arith.constant 0 : index
      %12 = vector.load %arg6[%c0_9, %c0_10] : memref<128x256xf32, #tpu.memory_space<vmem>>, vector<128x256xf32>
      %cst_11 = arith.constant dense<0.000000e+00> : vector<256xf32>
      %13 = vector.multi_reduction <add>, %12, %cst_11 [0] : vector<128x256xf32> to vector<256xf32>
      %14 = vector.shape_cast %13 : vector<256xf32> to vector<1x256xf32>
      %15 = arith.mulf %12, %12 : vector<128x256xf32>
      %cst_12 = arith.constant dense<0.000000e+00> : vector<256xf32>
      %16 = vector.multi_reduction <add>, %15, %cst_12 [0] : vector<128x256xf32> to vector<256xf32>
      %17 = vector.shape_cast %16 : vector<256xf32> to vector<1x256xf32>
      %18 = tpu.iota {dimensions = array<i32: 0>} : vector<8x256xi32>
      %c0_i32_13 = arith.constant 0 : i32
      %19 = vector.broadcast %c0_i32_13 : i32 to vector<8x256xi32>
      %20 = arith.cmpi eq, %18, %19 : vector<8x256xi32>
      %c1_i32_14 = arith.constant 1 : i32
      %21 = vector.broadcast %c1_i32_14 : i32 to vector<8x256xi32>
      %22 = arith.cmpi eq, %18, %21 : vector<8x256xi32>
      %cst_15 = arith.constant 0.000000e+00 : f32
      %23 = vector.shape_cast %17 : vector<1x256xf32> to vector<1x256xf32>
      %24 = vector.broadcast %23 : vector<1x256xf32> to vector<8x256xf32>
      %25 = vector.broadcast %cst_15 : f32 to vector<8x256xf32>
      %26 = arith.select %22, %24, %25 : vector<8x256xi1>, vector<8x256xf32>
      %27 = vector.shape_cast %14 : vector<1x256xf32> to vector<1x256xf32>
      %28 = vector.broadcast %27 : vector<1x256xf32> to vector<8x256xf32>
      %29 = arith.select %20, %28, %26 : vector<8x256xi1>, vector<8x256xf32>
      %c0_16 = arith.constant 0 : index
      %c0_17 = arith.constant 0 : index
      %30 = vector.load %arg5[%c0_16, %c0_17] : memref<8x256xf32, #tpu.memory_space<vmem>>, vector<8x256xf32>
      tpu.vector_store %arg5[%c0_16, %c0_17], %29 {strides = array<i32>} : memref<8x256xf32, #tpu.memory_space<vmem>>, vector<8x256xf32>,
      %c0_18 = arith.constant 0 : index
      %c0_19 = arith.constant 0 : index
      %31 = vector.load %arg4[%c0_18, %c0_19] : memref<128x256xf32, #tpu.memory_space<vmem>>, vector<128x256xf32>
      tpu.vector_store %arg4[%c0_18, %c0_19], %12 {strides = array<i32>} : memref<128x256xf32, #tpu.memory_space<vmem>>, vector<128x256xf32>,
    } else {
    }
    return
  }
  func.func @transform_0(%arg0: i32, %arg1: i32) -> (i32, i32) {
    %c0_i32 = arith.constant 0 : i32
    return %arg0, %arg1 : i32, i32
  }
  func.func @transform_1(%arg0: i32, %arg1: i32) -> (i32, i32) {
    %c0_i32 = arith.constant 0 : i32
    %c0_i32_0 = arith.constant 0 : i32
    return %arg1, %c0_i32 : i32, i32
  }
  func.func @transform_2(%arg0: i32, %arg1: i32) -> (i32, i32) {
    %c0_i32 = arith.constant 0 : i32
    %c0_i32_0 = arith.constant 0 : i32
    return %arg0, %c0_i32 : i32, i32
  }
  func.func @transform_3(%arg0: i32, %arg1: i32) -> (i32, i32) {
    %c0_i32 = arith.constant 0 : i32
    %c0_i32_0 = arith.constant 0 : i32
    return %arg0, %c0_i32 : i32, i32
  }
}

module attributes {stable_mosaic.version = 11 : i64} {
  func.func @bn_act_kernel(%arg0: i32, %arg1: memref<128x256xf32, #tpu.memory_space<vmem>>, %arg2: memref<1x256xf32, #tpu.memory_space<vmem>>, %arg3: memref<1x256xf32, #tpu.memory_space<vmem>>, %arg4: memref<128x256xbf16, #tpu.memory_space<vmem>>) attributes {dimension_semantics = [#tpu.dimension_semantics<parallel>], iteration_bounds = array<i64: 1>, scalar_prefetch = 0 : i64, scratch_operands = 0 : i64, tpu.core_type = #tpu.core_type<tc>, window_params = [{transform_indices = @transform_0, window_bounds = array<i64: 128, 256>}, {pipeline_mode = #tpu.pipeline_mode<synchronous>, transform_indices = @transform_1, window_bounds = array<i64: 1, 256>}, {pipeline_mode = #tpu.pipeline_mode<synchronous>, transform_indices = @transform_2, window_bounds = array<i64: 1, 256>}, {transform_indices = @transform_3, window_bounds = array<i64: 128, 256>}]} {
    %c0 = arith.constant 0 : index
    %c0_0 = arith.constant 0 : index
    %0 = vector.load %arg1[%c0, %c0_0] : memref<128x256xf32, #tpu.memory_space<vmem>>, vector<128x256xf32>
    %c0_1 = arith.constant 0 : index
    %c0_2 = arith.constant 0 : index
    %1 = vector.load %arg2[%c0_1, %c0_2] : memref<1x256xf32, #tpu.memory_space<vmem>>, vector<1x256xf32>
    %2 = vector.broadcast %1 : vector<1x256xf32> to vector<128x256xf32>
    %3 = arith.mulf %0, %2 : vector<128x256xf32>
    %c0_3 = arith.constant 0 : index
    %c0_4 = arith.constant 0 : index
    %4 = vector.load %arg3[%c0_3, %c0_4] : memref<1x256xf32, #tpu.memory_space<vmem>>, vector<1x256xf32>
    %5 = vector.broadcast %4 : vector<1x256xf32> to vector<128x256xf32>
    %6 = arith.addf %3, %5 : vector<128x256xf32>
    %cst = arith.constant 0.000000e+00 : f32
    %7 = vector.broadcast %cst : f32 to vector<128x256xf32>
    %8 = arith.cmpf oge, %6, %7 : vector<128x256xf32>
    %cst_5 = arith.constant 2.000000e-01 : f32
    %9 = vector.broadcast %cst_5 : f32 to vector<128x256xf32>
    %10 = arith.mulf %9, %6 : vector<128x256xf32>
    %11 = arith.select %8, %6, %10 : vector<128x256xi1>, vector<128x256xf32>
    %12 = arith.truncf %11 : vector<128x256xf32> to vector<128x256xbf16>
    %c0_6 = arith.constant 0 : index
    %c0_7 = arith.constant 0 : index
    %13 = vector.load %arg4[%c0_6, %c0_7] : memref<128x256xbf16, #tpu.memory_space<vmem>>, vector<128x256xbf16>
    tpu.vector_store %arg4[%c0_6, %c0_7], %12 {strides = array<i32>} : memref<128x256xbf16, #tpu.memory_space<vmem>>, vector<128x256xbf16>,
    return
  }
  func.func @transform_0(%arg0: i32) -> (i32, i32) {
    %c0_i32 = arith.constant 0 : i32
    %c0_i32_0 = arith.constant 0 : i32
    return %arg0, %c0_i32 : i32, i32
  }
  func.func @transform_1(%arg0: i32) -> (i32, i32) {
    %c0_i32 = arith.constant 0 : i32
    %c0_i32_0 = arith.constant 0 : i32
    %c0_i32_1 = arith.constant 0 : i32
    return %c0_i32, %c0_i32_0 : i32, i32
  }
  func.func @transform_2(%arg0: i32) -> (i32, i32) {
    %c0_i32 = arith.constant 0 : i32
    %c0_i32_0 = arith.constant 0 : i32
    %c0_i32_1 = arith.constant 0 : i32
    return %c0_i32, %c0_i32_0 : i32, i32
  }
  func.func @transform_3(%arg0: i32) -> (i32, i32) {
    %c0_i32 = arith.constant 0 : i32
    %c0_i32_0 = arith.constant 0 : i32
    return %arg0, %c0_i32 : i32, i32
  }
}

module attributes {stable_mosaic.version = 11 : i64} {
  func.func @conv_matmul_kernel(%arg0: i32, %arg1: i32, %arg2: memref<32x1024xbf16, #tpu.memory_space<vmem>>, %arg3: memref<1024x512xbf16, #tpu.memory_space<vmem>>, %arg4: memref<32x512xf32, #tpu.memory_space<vmem>>, %arg5: memref<8x512xf32, #tpu.memory_space<vmem>>, %arg6: memref<32x512xf32, #tpu.memory_space<vmem>>) attributes {dimension_semantics = [#tpu.dimension_semantics<parallel>, #tpu.dimension_semantics<arbitrary>], iteration_bounds = array<i64: 1, 4>, scalar_prefetch = 0 : i64, scratch_operands = 1 : i64, tpu.core_type = #tpu.core_type<tc>, window_params = [{transform_indices = @transform_0, window_bounds = array<i64: 32, 1024>}, {transform_indices = @transform_1, window_bounds = array<i64: 1024, 512>}, {transform_indices = @transform_2, window_bounds = array<i64: 32, 512>}, {transform_indices = @transform_3, window_bounds = array<i64: 8, 512>}]} {
    %c0_i32 = arith.constant 0 : i32
    %0 = arith.cmpi eq, %arg1, %c0_i32 : i32
    %1 = arith.extui %0 : i1 to i32
    %c0_i32_0 = arith.constant 0 : i32
    %2 = arith.cmpi ne, %1, %c0_i32_0 : i32
    scf.if %2 {
      %cst_9 = arith.constant 0.000000e+00 : f32
      %12 = vector.broadcast %cst_9 : f32 to vector<32x512xf32>
      %c0_10 = arith.constant 0 : index
      %c0_11 = arith.constant 0 : index
      %13 = vector.load %arg6[%c0_10, %c0_11] : memref<32x512xf32, #tpu.memory_space<vmem>>, vector<32x512xf32>
      tpu.vector_store %arg6[%c0_10, %c0_11], %12 {strides = array<i32>} : memref<32x512xf32, #tpu.memory_space<vmem>>, vector<32x512xf32>,
    } else {
    }
    %c0 = arith.constant 0 : index
    %c0_1 = arith.constant 0 : index
    %3 = vector.load %arg6[%c0, %c0_1] : memref<32x512xf32, #tpu.memory_space<vmem>>, vector<32x512xf32>
    %c0_2 = arith.constant 0 : index
    %c0_3 = arith.constant 0 : index
    %4 = vector.load %arg2[%c0_2, %c0_3] : memref<32x1024xbf16, #tpu.memory_space<vmem>>, vector<32x1024xbf16>
    %c0_4 = arith.constant 0 : index
    %c0_5 = arith.constant 0 : index
    %5 = vector.load %arg3[%c0_4, %c0_5] : memref<1024x512xbf16, #tpu.memory_space<vmem>>, vector<1024x512xbf16>
    %cst = arith.constant dense<0.000000e+00> : vector<32x512xf32>
    %6 = tpu.matmul %4, %5, %cst {dimension_numbers = #tpu.dot_dimension_numbers<[1], [0], [0], [1], [0, 0, 1, 1], [], []>} : vector<32x1024xbf16>, vector<1024x512xbf16>, vector<32x512xf32> -> vector<32x512xf32>
    %7 = arith.addf %3, %6 : vector<32x512xf32>
    %c0_6 = arith.constant 0 : index
    %c0_7 = arith.constant 0 : index
    %8 = vector.load %arg6[%c0_6, %c0_7] : memref<32x512xf32, #tpu.memory_space<vmem>>, vector<32x512xf32>
    tpu.vector_store %arg6[%c0_6, %c0_7], %7 {strides = array<i32>} : memref<32x512xf32, #tpu.memory_space<vmem>>, vector<32x512xf32>,
    %c3_i32 = arith.constant 3 : i32
    %9 = arith.cmpi eq, %arg1, %c3_i32 : i32
    %10 = arith.extui %9 : i1 to i32
    %c0_i32_8 = arith.constant 0 : i32
    %11 = arith.cmpi ne, %10, %c0_i32_8 : i32
    scf.if %11 {
      %c0_9 = arith.constant 0 : index
      %c0_10 = arith.constant 0 : index
      %12 = vector.load %arg6[%c0_9, %c0_10] : memref<32x512xf32, #tpu.memory_space<vmem>>, vector<32x512xf32>
      %cst_11 = arith.constant dense<0.000000e+00> : vector<512xf32>
      %13 = vector.multi_reduction <add>, %12, %cst_11 [0] : vector<32x512xf32> to vector<512xf32>
      %14 = vector.shape_cast %13 : vector<512xf32> to vector<1x512xf32>
      %15 = arith.mulf %12, %12 : vector<32x512xf32>
      %cst_12 = arith.constant dense<0.000000e+00> : vector<512xf32>
      %16 = vector.multi_reduction <add>, %15, %cst_12 [0] : vector<32x512xf32> to vector<512xf32>
      %17 = vector.shape_cast %16 : vector<512xf32> to vector<1x512xf32>
      %18 = tpu.iota {dimensions = array<i32: 0>} : vector<8x512xi32>
      %c0_i32_13 = arith.constant 0 : i32
      %19 = vector.broadcast %c0_i32_13 : i32 to vector<8x512xi32>
      %20 = arith.cmpi eq, %18, %19 : vector<8x512xi32>
      %c1_i32 = arith.constant 1 : i32
      %21 = vector.broadcast %c1_i32 : i32 to vector<8x512xi32>
      %22 = arith.cmpi eq, %18, %21 : vector<8x512xi32>
      %cst_14 = arith.constant 0.000000e+00 : f32
      %23 = vector.shape_cast %17 : vector<1x512xf32> to vector<1x512xf32>
      %24 = vector.broadcast %23 : vector<1x512xf32> to vector<8x512xf32>
      %25 = vector.broadcast %cst_14 : f32 to vector<8x512xf32>
      %26 = arith.select %22, %24, %25 : vector<8x512xi1>, vector<8x512xf32>
      %27 = vector.shape_cast %14 : vector<1x512xf32> to vector<1x512xf32>
      %28 = vector.broadcast %27 : vector<1x512xf32> to vector<8x512xf32>
      %29 = arith.select %20, %28, %26 : vector<8x512xi1>, vector<8x512xf32>
      %c0_15 = arith.constant 0 : index
      %c0_16 = arith.constant 0 : index
      %30 = vector.load %arg5[%c0_15, %c0_16] : memref<8x512xf32, #tpu.memory_space<vmem>>, vector<8x512xf32>
      tpu.vector_store %arg5[%c0_15, %c0_16], %29 {strides = array<i32>} : memref<8x512xf32, #tpu.memory_space<vmem>>, vector<8x512xf32>,
      %c0_17 = arith.constant 0 : index
      %c0_18 = arith.constant 0 : index
      %31 = vector.load %arg4[%c0_17, %c0_18] : memref<32x512xf32, #tpu.memory_space<vmem>>, vector<32x512xf32>
      tpu.vector_store %arg4[%c0_17, %c0_18], %12 {strides = array<i32>} : memref<32x512xf32, #tpu.memory_space<vmem>>, vector<32x512xf32>,
    } else {
    }
    return
  }
  func.func @transform_0(%arg0: i32, %arg1: i32) -> (i32, i32) {
    %c0_i32 = arith.constant 0 : i32
    return %arg0, %arg1 : i32, i32
  }
  func.func @transform_1(%arg0: i32, %arg1: i32) -> (i32, i32) {
    %c0_i32 = arith.constant 0 : i32
    %c0_i32_0 = arith.constant 0 : i32
    return %arg1, %c0_i32 : i32, i32
  }
  func.func @transform_2(%arg0: i32, %arg1: i32) -> (i32, i32) {
    %c0_i32 = arith.constant 0 : i32
    %c0_i32_0 = arith.constant 0 : i32
    return %arg0, %c0_i32 : i32, i32
  }
  func.func @transform_3(%arg0: i32, %arg1: i32) -> (i32, i32) {
    %c0_i32 = arith.constant 0 : i32
    %c0_i32_0 = arith.constant 0 : i32
    return %arg0, %c0_i32 : i32, i32
  }
}

module attributes {stable_mosaic.version = 11 : i64} {
  func.func @bn_act_kernel(%arg0: i32, %arg1: memref<32x512xf32, #tpu.memory_space<vmem>>, %arg2: memref<1x512xf32, #tpu.memory_space<vmem>>, %arg3: memref<1x512xf32, #tpu.memory_space<vmem>>, %arg4: memref<32x512xbf16, #tpu.memory_space<vmem>>) attributes {dimension_semantics = [#tpu.dimension_semantics<parallel>], iteration_bounds = array<i64: 1>, scalar_prefetch = 0 : i64, scratch_operands = 0 : i64, tpu.core_type = #tpu.core_type<tc>, window_params = [{transform_indices = @transform_0, window_bounds = array<i64: 32, 512>}, {pipeline_mode = #tpu.pipeline_mode<synchronous>, transform_indices = @transform_1, window_bounds = array<i64: 1, 512>}, {pipeline_mode = #tpu.pipeline_mode<synchronous>, transform_indices = @transform_2, window_bounds = array<i64: 1, 512>}, {transform_indices = @transform_3, window_bounds = array<i64: 32, 512>}]} {
    %c0 = arith.constant 0 : index
    %c0_0 = arith.constant 0 : index
    %0 = vector.load %arg1[%c0, %c0_0] : memref<32x512xf32, #tpu.memory_space<vmem>>, vector<32x512xf32>
    %c0_1 = arith.constant 0 : index
    %c0_2 = arith.constant 0 : index
    %1 = vector.load %arg2[%c0_1, %c0_2] : memref<1x512xf32, #tpu.memory_space<vmem>>, vector<1x512xf32>
    %2 = vector.broadcast %1 : vector<1x512xf32> to vector<32x512xf32>
    %3 = arith.mulf %0, %2 : vector<32x512xf32>
    %c0_3 = arith.constant 0 : index
    %c0_4 = arith.constant 0 : index
    %4 = vector.load %arg3[%c0_3, %c0_4] : memref<1x512xf32, #tpu.memory_space<vmem>>, vector<1x512xf32>
    %5 = vector.broadcast %4 : vector<1x512xf32> to vector<32x512xf32>
    %6 = arith.addf %3, %5 : vector<32x512xf32>
    %cst = arith.constant 0.000000e+00 : f32
    %7 = vector.broadcast %cst : f32 to vector<32x512xf32>
    %8 = arith.cmpf oge, %6, %7 : vector<32x512xf32>
    %cst_5 = arith.constant 2.000000e-01 : f32
    %9 = vector.broadcast %cst_5 : f32 to vector<32x512xf32>
    %10 = arith.mulf %9, %6 : vector<32x512xf32>
    %11 = arith.select %8, %6, %10 : vector<32x512xi1>, vector<32x512xf32>
    %12 = arith.truncf %11 : vector<32x512xf32> to vector<32x512xbf16>
    %c0_6 = arith.constant 0 : index
    %c0_7 = arith.constant 0 : index
    %13 = vector.load %arg4[%c0_6, %c0_7] : memref<32x512xbf16, #tpu.memory_space<vmem>>, vector<32x512xbf16>
    tpu.vector_store %arg4[%c0_6, %c0_7], %12 {strides = array<i32>} : memref<32x512xbf16, #tpu.memory_space<vmem>>, vector<32x512xbf16>,
    return
  }
  func.func @transform_0(%arg0: i32) -> (i32, i32) {
    %c0_i32 = arith.constant 0 : i32
    %c0_i32_0 = arith.constant 0 : i32
    return %arg0, %c0_i32 : i32, i32
  }
  func.func @transform_1(%arg0: i32) -> (i32, i32) {
    %c0_i32 = arith.constant 0 : i32
    %c0_i32_0 = arith.constant 0 : i32
    %c0_i32_1 = arith.constant 0 : i32
    return %c0_i32, %c0_i32_0 : i32, i32
  }
  func.func @transform_2(%arg0: i32) -> (i32, i32) {
    %c0_i32 = arith.constant 0 : i32
    %c0_i32_0 = arith.constant 0 : i32
    %c0_i32_1 = arith.constant 0 : i32
    return %c0_i32, %c0_i32_0 : i32, i32
  }
  func.func @transform_3(%arg0: i32) -> (i32, i32) {
    %c0_i32 = arith.constant 0 : i32
    %c0_i32_0 = arith.constant 0 : i32
    return %arg0, %c0_i32 : i32, i32
  }
}

module attributes {stable_mosaic.version = 11 : i64} {
  func.func @conv_matmul_kernel(%arg0: i32, %arg1: i32, %arg2: memref<2x1024xbf16, #tpu.memory_space<vmem>>, %arg3: memref<1024x128xbf16, #tpu.memory_space<vmem>>, %arg4: memref<2x128xf32, #tpu.memory_space<vmem>>, %arg5: memref<2x128xf32, #tpu.memory_space<vmem>>) attributes {dimension_semantics = [#tpu.dimension_semantics<parallel>, #tpu.dimension_semantics<arbitrary>], iteration_bounds = array<i64: 1, 8>, scalar_prefetch = 0 : i64, scratch_operands = 1 : i64, tpu.core_type = #tpu.core_type<tc>, window_params = [{transform_indices = @transform_0, window_bounds = array<i64: 2, 1024>}, {transform_indices = @transform_1, window_bounds = array<i64: 1024, 128>}, {transform_indices = @transform_2, window_bounds = array<i64: 2, 128>}]} {
    %c0_i32 = arith.constant 0 : i32
    %0 = arith.cmpi eq, %arg1, %c0_i32 : i32
    %1 = arith.extui %0 : i1 to i32
    %c0_i32_0 = arith.constant 0 : i32
    %2 = arith.cmpi ne, %1, %c0_i32_0 : i32
    scf.if %2 {
      %cst_9 = arith.constant 0.000000e+00 : f32
      %12 = vector.broadcast %cst_9 : f32 to vector<2x128xf32>
      %c0_10 = arith.constant 0 : index
      %c0_11 = arith.constant 0 : index
      %13 = vector.load %arg5[%c0_10, %c0_11] : memref<2x128xf32, #tpu.memory_space<vmem>>, vector<2x128xf32>
      tpu.vector_store %arg5[%c0_10, %c0_11], %12 {strides = array<i32>} : memref<2x128xf32, #tpu.memory_space<vmem>>, vector<2x128xf32>,
    } else {
    }
    %c0 = arith.constant 0 : index
    %c0_1 = arith.constant 0 : index
    %3 = vector.load %arg5[%c0, %c0_1] : memref<2x128xf32, #tpu.memory_space<vmem>>, vector<2x128xf32>
    %c0_2 = arith.constant 0 : index
    %c0_3 = arith.constant 0 : index
    %4 = vector.load %arg2[%c0_2, %c0_3] : memref<2x1024xbf16, #tpu.memory_space<vmem>>, vector<2x1024xbf16>
    %c0_4 = arith.constant 0 : index
    %c0_5 = arith.constant 0 : index
    %5 = vector.load %arg3[%c0_4, %c0_5] : memref<1024x128xbf16, #tpu.memory_space<vmem>>, vector<1024x128xbf16>
    %cst = arith.constant dense<0.000000e+00> : vector<2x128xf32>
    %6 = tpu.matmul %4, %5, %cst {dimension_numbers = #tpu.dot_dimension_numbers<[1], [0], [0], [1], [0, 0, 1, 1], [], []>} : vector<2x1024xbf16>, vector<1024x128xbf16>, vector<2x128xf32> -> vector<2x128xf32>
    %7 = arith.addf %3, %6 : vector<2x128xf32>
    %c0_6 = arith.constant 0 : index
    %c0_7 = arith.constant 0 : index
    %8 = vector.load %arg5[%c0_6, %c0_7] : memref<2x128xf32, #tpu.memory_space<vmem>>, vector<2x128xf32>
    tpu.vector_store %arg5[%c0_6, %c0_7], %7 {strides = array<i32>} : memref<2x128xf32, #tpu.memory_space<vmem>>, vector<2x128xf32>,
    %c7_i32 = arith.constant 7 : i32
    %9 = arith.cmpi eq, %arg1, %c7_i32 : i32
    %10 = arith.extui %9 : i1 to i32
    %c0_i32_8 = arith.constant 0 : i32
    %11 = arith.cmpi ne, %10, %c0_i32_8 : i32
    scf.if %11 {
      %c0_9 = arith.constant 0 : index
      %c0_10 = arith.constant 0 : index
      %12 = vector.load %arg5[%c0_9, %c0_10] : memref<2x128xf32, #tpu.memory_space<vmem>>, vector<2x128xf32>
      %13 = arith.negf %12 : vector<2x128xf32>
      %14 = math.exp %13 : vector<2x128xf32>
      %cst_11 = arith.constant 1.000000e+00 : f32
      %15 = vector.broadcast %cst_11 : f32 to vector<2x128xf32>
      %16 = arith.addf %15, %14 : vector<2x128xf32>
      %17 = arith.divf %15, %16 : vector<2x128xf32>
      %c0_12 = arith.constant 0 : index
      %c0_13 = arith.constant 0 : index
      %18 = vector.load %arg4[%c0_12, %c0_13] : memref<2x128xf32, #tpu.memory_space<vmem>>, vector<2x128xf32>
      tpu.vector_store %arg4[%c0_12, %c0_13], %17 {strides = array<i32>} : memref<2x128xf32, #tpu.memory_space<vmem>>, vector<2x128xf32>,
    } else {
    }
    return
  }
  func.func @transform_0(%arg0: i32, %arg1: i32) -> (i32, i32) {
    %c0_i32 = arith.constant 0 : i32
    return %arg0, %arg1 : i32, i32
  }
  func.func @transform_1(%arg0: i32, %arg1: i32) -> (i32, i32) {
    %c0_i32 = arith.constant 0 : i32
    %c0_i32_0 = arith.constant 0 : i32
    return %arg1, %c0_i32 : i32, i32
  }
  func.func @transform_2(%arg0: i32, %arg1: i32) -> (i32, i32) {
    %c0_i32 = arith.constant 0 : i32
    %c0_i32_0 = arith.constant 0 : i32
    return %arg0, %c0_i32 : i32, i32
  }
}

</mosaic_0001>

<llo_original>
// kernel: discriminator_forward.8
$region0: #{discriminator_forward.8}
  #allocation0 [shape = 'u32[]', space=smem, size = 0x4, offset = 0x4, fixed_abs, tag = 'smem constant byte address 0x4 - core index']
  #allocation1 [shape = 'u32[144,128]{1,0:T(1,128)}', space=vmem, size = 0x12000, scoped, tag = 'internal scratch']
  #allocation2 [shape = 'f32[256,64]{1,0:T(8,128)}', space=vmem, size = 0x20000, scoped, tag = 'scratch operand']
  %s0 = inlined_call_operand.vmem [shape: bf16[2048,128], index: 0, kind: input, shape index: {}]
  %s1 = inlined_call_operand.vmem [shape: bf16[128,64], index: 1, kind: input, shape index: {}]
  %s2 = inlined_call_operand.vmem [shape: bf16[2048,64], index: 2, kind: output, shape index: {}]
  %s3 = sld [smem:[#allocation0]]
  $region49: #{discriminator_forward.8} parent=0
    _
  %s5 = ssub.s32 1, %s3
  %s6 = scalar_select 0, %s5, %s3
  loop: start=0, step=1, limit=10
  $region2: #{discriminator_forward.8} parent=0 // loop_pre_header
    _
  $region3: #{discriminator_forward.8} parent=0 // loop_header
    %s8 = sphi 0, %s12
    %p9 = scmp.ge.s32.totalorder %s8, 10
    %s15 = sphi 0, %s27
    %s16 = sphi 0, %s23
    %s17 = sphi 0, %s15
    %s18 = sphi 0, %s16
    %s19 = sphi 0, %s17
    %s20 = sphi 0, %s18
    %s32 = sphi 0, %s34
    %s35 = sphi 0, %s32
    %s36 = sphi 0, %s35
    %s52 = sphi 0, %s36
    %s58 = sphi 0, %s60
    %s61 = sphi 0, %s58
    %s62 = sphi 0, %s61
    %s78 = sphi 0, %s62
    %s84 = sphi 0, %s86
    %s87 = sphi 0, %s84
    %s88 = sphi 0, %s87
    %s104 = sphi 0, %s88
  $region4: #{discriminator_forward.8} parent=0 // loop_header_branch
    %11 = sbr.rel (%p9) target = $region8
  $region5: #{discriminator_forward.8} parent=0 // loop_body
    %s13 = ssub.s32 %s8, 1
    %s14 = ssub.s32 %s8, 2
    %s21 = sadd.s32 1, %s16
    %p22 = scmp.ge.s32.totalorder %s21, 1
    %s23 = scalar_select %p22, 0, %s21
    %s24 = sadd.s32 1, %s15
    %s25 = scalar_select %p22, %s24, %s15
    %p26 = scmp.ge.s32.totalorder %s25, 8
    %s27 = scalar_select %p26, 0, %s25
    %s28 = ssub.s32 %s15, %s27
    %s29 = ssub.s32 %s16, %s23
    %s30 = sor.u32 %s28, %s29
    %p31 = scmp.eq.s32.totalorder %s30, 0
    %s33 = sadd.s32 %s32, 1
    %s34 = scalar_select %p31, %s32, %s33
    %p37 = pneg %p31
    %p38 = scmp.eq.s32.totalorder %s8, 7
    %p39 = por %p37, %p38
    %p40 = scmp.ne.s32.totalorder %s32, %s35
    %p41 = scmp.eq.s32.totalorder %s8, 0
    %p42 = por %p40, %p41
    %p43 = scmp.ne.s32.totalorder %s32, %s35
    %p44 = scmp.eq.s32.totalorder %s13, 7
    %p45 = por %p43, %p44
    %p46 = scmp.ne.s32.totalorder %s35, %s36
    %p47 = scmp.eq.s32.totalorder %s13, 0
    %p48 = por %p46, %p47
    %p49 = scmp.ne.s32.totalorder %s35, %s36
    %p50 = scmp.eq.s32.totalorder %s14, 7
    %p51 = por %p49, %p50
    %p53 = scmp.ne.s32.totalorder %s36, %s52
    %p54 = scmp.eq.s32.totalorder %s14, 0
    %p55 = por %p53, %p54
    %s56 = ssub.s32 %s16, %s23
    %p57 = scmp.eq.s32.totalorder %s56, 0
    %s59 = sadd.s32 %s58, 1
    %s60 = scalar_select %p57, %s58, %s59
    %p63 = pneg %p57
    %p64 = scmp.eq.s32.totalorder %s8, 7
    %p65 = por %p63, %p64
    %p66 = scmp.ne.s32.totalorder %s58, %s61
    %p67 = scmp.eq.s32.totalorder %s8, 0
    %p68 = por %p66, %p67
    %p69 = scmp.ne.s32.totalorder %s58, %s61
    %p70 = scmp.eq.s32.totalorder %s13, 7
    %p71 = por %p69, %p70
    %p72 = scmp.ne.s32.totalorder %s61, %s62
    %p73 = scmp.eq.s32.totalorder %s13, 0
    %p74 = por %p72, %p73
    %p75 = scmp.ne.s32.totalorder %s61, %s62
    %p76 = scmp.eq.s32.totalorder %s14, 7
    %p77 = por %p75, %p76
    %p79 = scmp.ne.s32.totalorder %s62, %s78
    %p80 = scmp.eq.s32.totalorder %s14, 0
    %p81 = por %p79, %p80
    %s82 = ssub.s32 %s15, %s27
    %p83 = scmp.eq.s32.totalorder %s82, 0
    %s85 = sadd.s32 %s84, 1
    %s86 = scalar_select %p83, %s84, %s85
    %p89 = pneg %p83
    %p90 = scmp.eq.s32.totalorder %s8, 7
    %p91 = por %p89, %p90
    %p92 = scmp.ne.s32.totalorder %s84, %s87
    %p93 = scmp.eq.s32.totalorder %s8, 0
    %p94 = por %p92, %p93
    %p95 = scmp.ne.s32.totalorder %s84, %s87
    %p96 = scmp.eq.s32.totalorder %s13, 7
    %p97 = por %p95, %p96
    %p98 = scmp.ne.s32.totalorder %s87, %s88
    %p99 = scmp.eq.s32.totalorder %s13, 0
    %p100 = por %p98, %p99
    %p101 = scmp.ne.s32.totalorder %s87, %s88
    %p102 = scmp.eq.s32.totalorder %s14, 7
    %p103 = por %p101, %p102
    %p105 = scmp.ne.s32.totalorder %s88, %s104
    %p106 = scmp.eq.s32.totalorder %s14, 0
    %p107 = por %p105, %p106
    %p108 = scmp.le.s32.totalorder 1, %s8
    %p109 = scmp.lt.s32.totalorder %s8, 9
    %p110 = pnand %p108, %p109
    %p111 = pneg %p110
    // Predicated region
    $region9: #{discriminator_forward.8} parent=5 // pred_check
      _
    $region10: #{discriminator_forward.8} parent=5 // pred_check_branch
      %113 = sbr.rel (%p110) target = $region12
    $region11: #{discriminator_forward.8} parent=5 // pred_region
      %s114 = ssub.s32 %s8, 1
      // Predicated region
      $region13: #{discriminator_forward.8} parent=11 // pred_check
        %p115 = pneg %p74
      $region14: #{discriminator_forward.8} parent=11 // pred_check_branch
        %117 = sbr.rel (%p115) target = $region16
      $region15: #{discriminator_forward.8} parent=11 // pred_region
        %s118 = smul.u32 16, %s18
        %p119 = scmp.lt.s32.totalorder %s118, 15
        %s120 = scalar_select %p119, %s118, 15
        %s121 = smul.addr %s120, 4
        %s122 = scalar_lea.vmem %s1, %s121
        %s123 = smul.u32 16, %s18
      $region16: #{discriminator_forward.8} parent=11 // pred_fallthru
        _
    $region12: #{discriminator_forward.8} parent=5 // pred_fallthru
      _
    %p124 = scmp.lt.s32.totalorder %s8, 8
    // Predicated region
    $region17: #{discriminator_forward.8} parent=5 // pred_check
      %p125 = pneg %p124
    $region18: #{discriminator_forward.8} parent=5 // pred_check_branch
      %127 = sbr.rel (%p125) target = $region20
    $region19: #{discriminator_forward.8} parent=5 // pred_region
      // Predicated region
      $region21: #{discriminator_forward.8} parent=19 // pred_check
        %p128 = pneg %p42
      $region22: #{discriminator_forward.8} parent=19 // pred_check_branch
        %130 = sbr.rel (%p128) target = $region24
      $region23: #{discriminator_forward.8} parent=19 // pred_region
        %s131 = smul.u32 32, %s15
        %p132 = scmp.lt.s32.totalorder %s131, 255
        %s133 = scalar_select %p132, %s131, 255
        %p134 = scmp.lt.s32.totalorder %s16, 0
        %s135 = scalar_select %p134, %s16, 0
        %s136 = sadd.s32 %s135, %s133
        %s137 = smul.addr %s136, 4
        %s138 = scalar_lea.vmem %s0, %s137
        %s139 = smul.u32 32, %s15
      $region24: #{discriminator_forward.8} parent=19 // pred_fallthru
        _
    $region20: #{discriminator_forward.8} parent=5 // pred_fallthru
      _
    %p140 = scmp.le.s32.totalorder 1, %s8
    %p141 = scmp.lt.s32.totalorder %s8, 9
    %p142 = pnand %p140, %p141
    %p143 = pneg %p142
    // Predicated region
    $region25: #{discriminator_forward.8} parent=5 // pred_check
      _
    $region26: #{discriminator_forward.8} parent=5 // pred_check_branch
      %145 = sbr.rel (%p142) target = $region28
    $region27: #{discriminator_forward.8} parent=5 // pred_region
      %s146 = ssub.s32 %s8, 1
      %s147 = smul.u32 32, %s17
      %p148 = scmp.lt.s32.totalorder %s147, 255
      %s149 = scalar_select %p148, %s147, 255
      %p150 = scmp.lt.s32.totalorder %s18, 0
      %s151 = scalar_select %p150, %s18, 0
      %s152 = sadd.s32 %s151, %s149
      %s153 = smul.addr %s152, 4
      %s154 = scalar_lea.vmem %s0, %s153
      %p155 = pneg %p48
      %p156 = pneg %p45
      %s157 = smul.u32 16, %s18
      %p158 = scmp.lt.s32.totalorder %s157, 15
      %s159 = scalar_select %p158, %s157, 15
      %s160 = smul.addr %s159, 4
      %s161 = scalar_lea.vmem %s1, %s160
      %p162 = pneg %p74
      %p163 = pneg %p71
      %p164 = pneg %p100
      %p165 = pneg %p97
      %s166 = smul.u32 32, %s17
      %p167 = scmp.lt.s32.totalorder %s166, 255
      %s168 = scalar_select %p167, %s166, 255
      %s169 = smul.addr %s168, 4
      %s170 = scalar_lea.vmem %s2, %s169
      %s171 = smul.u32 32, %s17
      %p172 = scmp.lt.s32.totalorder %s171, 255
      %s173 = scalar_select %p172, %s171, 255
      %p174 = scmp.lt.s32.totalorder %s18, 0
      %s175 = scalar_select %p174, %s18, 0
      %s176 = sadd.s32 %s175, %s173
      %s177 = smul.addr %s176, 4
      %s178 = scalar_lea.vmem %s0, %s177
      %s179 = smul.u32 32, %s17
      %s180 = smul.u32 16, %s18
      %p181 = scmp.lt.s32.totalorder %s180, 15
      %s182 = scalar_select %p181, %s180, 15
      %s183 = smul.addr %s182, 4
      %s184 = scalar_lea.vmem %s1, %s183
      %s185 = smul.u32 16, %s18
      %s186 = smul.u32 32, %s17
      %p187 = scmp.lt.s32.totalorder %s186, 255
      %s188 = scalar_select %p187, %s186, 255
      %s189 = smul.addr %s188, 4
      %s190 = scalar_lea.vmem %s2, %s189
      %s191 = smul.u32 32, %s17
      %p193 = scmp.eq.s32.totalorder %s18, 0
      // Predicated region
      $region29: #{discriminator_forward.8} parent=27 // pred_check
        %p194 = pneg %p193
      $region30: #{discriminator_forward.8} parent=27 // pred_check_branch
        %196 = sbr.rel (%p194) target = $region32
      $region31: #{discriminator_forward.8} parent=27 // pred_region
        %vm197 = vcmask 523264
        %198 = vst.msk [vmem:[#allocation2] sm:$0xff] %vm197, 0.0
        %199 = vst.msk [vmem:[#allocation2 + $0x8] sm:$0xff] %vm197, 0.0
        %200 = vst.msk [vmem:[#allocation2 + $0x10] sm:$0xff] %vm197, 0.0
        %201 = vst.msk [vmem:[#allocation2 + $0x18] sm:$0xff] %vm197, 0.0
        %202 = vst.msk [vmem:[#allocation2 + $0x20] sm:$0xff] %vm197, 0.0
        %203 = vst.msk [vmem:[#allocation2 + $0x28] sm:$0xff] %vm197, 0.0
        %204 = vst.msk [vmem:[#allocation2 + $0x30] sm:$0xff] %vm197, 0.0
        %205 = vst.msk [vmem:[#allocation2 + $0x38] sm:$0xff] %vm197, 0.0
        %206 = vst.msk [vmem:[#allocation2 + $0x40] sm:$0xff] %vm197, 0.0
        %207 = vst.msk [vmem:[#allocation2 + $0x48] sm:$0xff] %vm197, 0.0
        %208 = vst.msk [vmem:[#allocation2 + $0x50] sm:$0xff] %vm197, 0.0
        %209 = vst.msk [vmem:[#allocation2 + $0x58] sm:$0xff] %vm197, 0.0
        %210 = vst.msk [vmem:[#allocation2 + $0x60] sm:$0xff] %vm197, 0.0
        %211 = vst.msk [vmem:[#allocation2 + $0x68] sm:$0xff] %vm197, 0.0
        %212 = vst.msk [vmem:[#allocation2 + $0x70] sm:$0xff] %vm197, 0.0
        %213 = vst.msk [vmem:[#allocation2 + $0x78] sm:$0xff] %vm197, 0.0
        %214 = vst.msk [vmem:[#allocation2 + $0x80] sm:$0xff] %vm197, 0.0
        %215 = vst.msk [vmem:[#allocation2 + $0x88] sm:$0xff] %vm197, 0.0
        %216 = vst.msk [vmem:[#allocation2 + $0x90] sm:$0xff] %vm197, 0.0
        %217 = vst.msk [vmem:[#allocation2 + $0x98] sm:$0xff] %vm197, 0.0
        %218 = vst.msk [vmem:[#allocation2 + $0xa0] sm:$0xff] %vm197, 0.0
        %219 = vst.msk [vmem:[#allocation2 + $0xa8] sm:$0xff] %vm197, 0.0
        %220 = vst.msk [vmem:[#allocation2 + $0xb0] sm:$0xff] %vm197, 0.0
        %221 = vst.msk [vmem:[#allocation2 + $0xb8] sm:$0xff] %vm197, 0.0
        %222 = vst.msk [vmem:[#allocation2 + $0xc0] sm:$0xff] %vm197, 0.0
        %223 = vst.msk [vmem:[#allocation2 + $0xc8] sm:$0xff] %vm197, 0.0
        %224 = vst.msk [vmem:[#allocation2 + $0xd0] sm:$0xff] %vm197, 0.0
        %225 = vst.msk [vmem:[#allocation2 + $0xd8] sm:$0xff] %vm197, 0.0
        %226 = vst.msk [vmem:[#allocation2 + $0xe0] sm:$0xff] %vm197, 0.0
        %227 = vst.msk [vmem:[#allocation2 + $0xe8] sm:$0xff] %vm197, 0.0
        %228 = vst.msk [vmem:[#allocation2 + $0xf0] sm:$0xff] %vm197, 0.0
        %229 = vst.msk [vmem:[#allocation2 + $0xf8] sm:$0xff] %vm197, 0.0
      $region32: #{discriminator_forward.8} parent=27 // pred_fallthru
        _
      %v230 = vld [vmem:[#allocation2] sm:$0xff]
      %v231 = vld [vmem:[#allocation2 + $0x8] sm:$0xff]
      %v232 = vld [vmem:[#allocation2 + $0x10] sm:$0xff]
      %v233 = vld [vmem:[#allocation2 + $0x18] sm:$0xff]
      %v234 = vld [vmem:[#allocation2 + $0x20] sm:$0xff]
      %v235 = vld [vmem:[#allocation2 + $0x28] sm:$0xff]
      %v236 = vld [vmem:[#allocation2 + $0x30] sm:$0xff]
      %v237 = vld [vmem:[#allocation2 + $0x38] sm:$0xff]
      %v238 = vld [vmem:[#allocation2 + $0x40] sm:$0xff]
      %v239 = vld [vmem:[#allocation2 + $0x48] sm:$0xff]
      %v240 = vld [vmem:[#allocation2 + $0x50] sm:$0xff]
      %v241 = vld [vmem:[#allocation2 + $0x58] sm:$0xff]
      %v242 = vld [vmem:[#allocation2 + $0x60] sm:$0xff]
      %v243 = vld [vmem:[#allocation2 + $0x68] sm:$0xff]
      %v244 = vld [vmem:[#allocation2 + $0x70] sm:$0xff]
      %v245 = vld [vmem:[#allocation2 + $0x78] sm:$0xff]
      %v246 = vld [vmem:[#allocation2 + $0x80] sm:$0xff]
      %v247 = vld [vmem:[#allocation2 + $0x88] sm:$0xff]
      %v248 = vld [vmem:[#allocation2 + $0x90] sm:$0xff]
      %v249 = vld [vmem:[#allocation2 + $0x98] sm:$0xff]
      %v250 = vld [vmem:[#allocation2 + $0xa0] sm:$0xff]
      %v251 = vld [vmem:[#allocation2 + $0xa8] sm:$0xff]
      %v252 = vld [vmem:[#allocation2 + $0xb0] sm:$0xff]
      %v253 = vld [vmem:[#allocation2 + $0xb8] sm:$0xff]
      %v254 = vld [vmem:[#allocation2 + $0xc0] sm:$0xff]
      %v255 = vld [vmem:[#allocation2 + $0xc8] sm:$0xff]
      %v256 = vld [vmem:[#allocation2 + $0xd0] sm:$0xff]
      %v257 = vld [vmem:[#allocation2 + $0xd8] sm:$0xff]
      %v258 = vld [vmem:[#allocation2 + $0xe0] sm:$0xff]
      %v259 = vld [vmem:[#allocation2 + $0xe8] sm:$0xff]
      %v260 = vld [vmem:[#allocation2 + $0xf0] sm:$0xff]
      %v261 = vld [vmem:[#allocation2 + $0xf8] sm:$0xff]
      %v262 = vld [vmem:[%s178] sm:$0xf]
      %v263 = vld [vmem:[%s178 + $0x4] sm:$0xf]
      %v264 = vld [vmem:[%s178 + $0x8] sm:$0xf]
      %v265 = vld [vmem:[%s178 + $0xc] sm:$0xf]
      %v266 = vld [vmem:[%s178 + $0x10] sm:$0xf]
      %v267 = vld [vmem:[%s178 + $0x14] sm:$0xf]
      %v268 = vld [vmem:[%s178 + $0x18] sm:$0xf]
      %v269 = vld [vmem:[%s178 + $0x1c] sm:$0xf]
      %v270 = vld [vmem:[%s178 + $0x20] sm:$0xf]
      %v271 = vld [vmem:[%s178 + $0x24] sm:$0xf]
      %v272 = vld [vmem:[%s178 + $0x28] sm:$0xf]
      %v273 = vld [vmem:[%s178 + $0x2c] sm:$0xf]
      %v274 = vld [vmem:[%s178 + $0x30] sm:$0xf]
      %v275 = vld [vmem:[%s178 + $0x34] sm:$0xf]
      %v276 = vld [vmem:[%s178 + $0x38] sm:$0xf]
      %v277 = vld [vmem:[%s178 + $0x3c] sm:$0xf]
      %v278 = vld [vmem:[%s178 + $0x40] sm:$0xf]
      %v279 = vld [vmem:[%s178 + $0x44] sm:$0xf]
      %v280 = vld [vmem:[%s178 + $0x48] sm:$0xf]
      %v281 = vld [vmem:[%s178 + $0x4c] sm:$0xf]
      %v282 = vld [vmem:[%s178 + $0x50] sm:$0xf]
      %v283 = vld [vmem:[%s178 + $0x54] sm:$0xf]
      %v284 = vld [vmem:[%s178 + $0x58] sm:$0xf]
      %v285 = vld [vmem:[%s178 + $0x5c] sm:$0xf]
      %v286 = vld [vmem:[%s178 + $0x60] sm:$0xf]
      %v287 = vld [vmem:[%s178 + $0x64] sm:$0xf]
      %v288 = vld [vmem:[%s178 + $0x68] sm:$0xf]
      %v289 = vld [vmem:[%s178 + $0x6c] sm:$0xf]
      %v290 = vld [vmem:[%s178 + $0x70] sm:$0xf]
      %v291 = vld [vmem:[%s178 + $0x74] sm:$0xf]
      %v292 = vld [vmem:[%s178 + $0x78] sm:$0xf]
      %v293 = vld [vmem:[%s178 + $0x7c] sm:$0xf]
      %v294 = vld [vmem:[%s184] sm:$0xf]
      %v295 = vld [vmem:[%s184 + $0x4] sm:$0xf]
      %v296 = vld [vmem:[%s184 + $0x8] sm:$0xf]
      %v297 = vld [vmem:[%s184 + $0xc] sm:$0xf]
      %v298 = vld [vmem:[%s184 + $0x10] sm:$0xf]
      %v299 = vld [vmem:[%s184 + $0x14] sm:$0xf]
      %v300 = vld [vmem:[%s184 + $0x18] sm:$0xf]
      %v301 = vld [vmem:[%s184 + $0x1c] sm:$0xf]
      %v302 = vld [vmem:[%s184 + $0x20] sm:$0xf]
      %v303 = vld [vmem:[%s184 + $0x24] sm:$0xf]
      %v304 = vld [vmem:[%s184 + $0x28] sm:$0xf]
      %v305 = vld [vmem:[%s184 + $0x2c] sm:$0xf]
      %v306 = vld [vmem:[%s184 + $0x30] sm:$0xf]
      %v307 = vld [vmem:[%s184 + $0x34] sm:$0xf]
      %v308 = vld [vmem:[%s184 + $0x38] sm:$0xf]
      %v309 = vld [vmem:[%s184 + $0x3c] sm:$0xf]
      %v342 = vunpack.c.l.b16 %v262
      %v343 = vunpack.c.l.b16 %v263
      %v344 = vunpack.c.l.b16 %v264
      %v345 = vunpack.c.l.b16 %v265
      %v346 = vunpack.c.l.b16 %v266
      %v347 = vunpack.c.l.b16 %v267
      %v348 = vunpack.c.l.b16 %v268
      %v349 = vunpack.c.l.b16 %v269
      %v350 = vunpack.c.l.b16 %v270
      %v351 = vunpack.c.l.b16 %v271
      %v352 = vunpack.c.l.b16 %v272
      %v353 = vunpack.c.l.b16 %v273
      %v354 = vunpack.c.l.b16 %v274
      %v355 = vunpack.c.l.b16 %v275
      %v356 = vunpack.c.l.b16 %v276
      %v357 = vunpack.c.l.b16 %v277
      %v358 = vunpack.c.l.b16 %v278
      %v359 = vunpack.c.l.b16 %v279
      %v360 = vunpack.c.l.b16 %v280
      %v361 = vunpack.c.l.b16 %v281
      %v362 = vunpack.c.l.b16 %v282
      %v363 = vunpack.c.l.b16 %v283
      %v364 = vunpack.c.l.b16 %v284
      %v365 = vunpack.c.l.b16 %v285
      %v366 = vunpack.c.l.b16 %v286
      %v367 = vunpack.c.l.b16 %v287
      %v368 = vunpack.c.l.b16 %v288
      %v369 = vunpack.c.l.b16 %v289
      %v370 = vunpack.c.l.b16 %v290
      %v371 = vunpack.c.l.b16 %v291
      %v372 = vunpack.c.l.b16 %v292
      %v373 = vunpack.c.l.b16 %v293
      %v374 = vpack.c.b16 %v343, %v342
      %v375 = vpack.c.b16 %v345, %v344
      %v376 = vpack.c.b16 %v347, %v346
      %v377 = vpack.c.b16 %v349, %v348
      %v378 = vpack.c.b16 %v351, %v350
      %v379 = vpack.c.b16 %v353, %v352
      %v380 = vpack.c.b16 %v355, %v354
      %v381 = vpack.c.b16 %v357, %v356
      %v382 = vpack.c.b16 %v359, %v358
      %v383 = vpack.c.b16 %v361, %v360
      %v384 = vpack.c.b16 %v363, %v362
      %v385 = vpack.c.b16 %v365, %v364
      %v386 = vpack.c.b16 %v367, %v366
      %v387 = vpack.c.b16 %v369, %v368
      %v388 = vpack.c.b16 %v371, %v370
      %v389 = vpack.c.b16 %v373, %v372
      %v422 = vunpack.c.l.b16 %v294
      %v423 = vunpack.c.l.b16 %v295
      %v424 = vunpack.c.l.b16 %v296
      %v425 = vunpack.c.l.b16 %v297
      %v426 = vunpack.c.l.b16 %v298
      %v427 = vunpack.c.l.b16 %v299
      %v428 = vunpack.c.l.b16 %v300
      %v429 = vunpack.c.l.b16 %v301
      %v430 = vunpack.c.l.b16 %v302
      %v431 = vunpack.c.l.b16 %v303
      %v432 = vunpack.c.l.b16 %v304
      %v433 = vunpack.c.l.b16 %v305
      %v434 = vunpack.c.l.b16 %v306
      %v435 = vunpack.c.l.b16 %v307
      %v436 = vunpack.c.l.b16 %v308
      %v437 = vunpack.c.l.b16 %v309
      %v438 = vpack.c.b16 %v423, %v422
      %v439 = vpack.c.b16 %v425, %v424
      %v440 = vpack.c.b16 %v427, %v426
      %v441 = vpack.c.b16 %v429, %v428
      %v442 = vpack.c.b16 %v431, %v430
      %v443 = vpack.c.b16 %v433, %v432
      %v444 = vpack.c.b16 %v435, %v434
      %v445 = vpack.c.b16 %v437, %v436
      %454 = vmatprep.subr.bf16.mxu0 0
      %455 = vmatpush1.bf16.msra.mxu0 %v445
      %456 = vmatprep.subr.bf16.mxu0 0
      %457 = vmatpush1.bf16.msra.mxu0 %v444
      %458 = vmatprep.subr.bf16.mxu0 0
      %459 = vmatpush1.bf16.msra.mxu0 %v443
      %460 = vmatprep.subr.bf16.mxu0 0
      %461 = vmatpush1.bf16.msra.mxu0 %v442
      %462 = vmatprep.subr.bf16.mxu0 0
      %463 = vmatpush1.bf16.msra.mxu0 %v441
      %464 = vmatprep.subr.bf16.mxu0 0
      %465 = vmatpush1.bf16.msra.mxu0 %v440
      %466 = vmatprep.subr.bf16.mxu0 0
      %467 = vmatpush1.bf16.msra.mxu0 %v439
      %468 = vmatprep.subr.bf16.mxu0 0
      %469 = vmatpush1.bf16.msra.mxu0 %v438
      %470 = vmatprep.subr.bf16.mxu0 0
      %471 = vmatpush2.bf16.msra.mxu0 0
      %472 = vmatprep.subr.bf16.mxu0 0
      %473 = vmatpush2.bf16.msra.mxu0 0
      %474 = vmatprep.subr.bf16.mxu0 0
      %475 = vmatpush2.bf16.msra.mxu0 0
      %476 = vmatprep.subr.bf16.mxu0 0
      %477 = vmatpush2.bf16.msra.mxu0 0
      %478 = vmatprep.subr.bf16.mxu0 0
      %479 = vmatpush2.bf16.msra.mxu0 0
      %480 = vmatprep.subr.bf16.mxu0 0
      %481 = vmatpush2.bf16.msra.mxu0 0
      %482 = vmatprep.subr.bf16.mxu0 0
      %483 = vmatpush2.bf16.msra.mxu0 0
      %484 = vmatprep.subr.bf16.mxu0 0
      %485 = vmatpush2.bf16.msra.mxu0 0
      %486 = vmatprep.mubr.bf16.mxu0 0
      %487 = vmatmul.mubr.bf16.gmra.mxu0 %v374
      %v488 = vpop.f32.mrf.mxu0
      %v489 = vadd.f32 0.0, %v488
      %v490 = vpop.f32.mrf.mxu0
      %v491 = vpop.f32.mrf.mxu0
      %v492 = vadd.f32 0.0, %v491
      %v493 = vpop.f32.mrf.mxu0
      %494 = vmatprep.mubr.bf16.mxu0 0
      %495 = vmatmul.mubr.bf16.gmra.mxu0 %v375
      %v496 = vpop.f32.mrf.mxu0
      %v497 = vadd.f32 0.0, %v496
      %v498 = vpop.f32.mrf.mxu0
      %v499 = vpop.f32.mrf.mxu0
      %v500 = vadd.f32 0.0, %v499
      %v501 = vpop.f32.mrf.mxu0
      %502 = vmatprep.mubr.bf16.mxu0 0
      %503 = vmatmul.mubr.bf16.gmra.mxu0 %v376
      %v504 = vpop.f32.mrf.mxu0
      %v505 = vadd.f32 0.0, %v504
      %v506 = vpop.f32.mrf.mxu0
      %v507 = vpop.f32.mrf.mxu0
      %v508 = vadd.f32 0.0, %v507
      %v509 = vpop.f32.mrf.mxu0
      %510 = vmatprep.mubr.bf16.mxu0 0
      %511 = vmatmul.mubr.bf16.gmra.mxu0 %v377
      %v512 = vpop.f32.mrf.mxu0
      %v513 = vadd.f32 0.0, %v512
      %v514 = vpop.f32.mrf.mxu0
      %v515 = vpop.f32.mrf.mxu0
      %v516 = vadd.f32 0.0, %v515
      %v517 = vpop.f32.mrf.mxu0
      %518 = vmatprep.mubr.bf16.mxu0 0
      %519 = vmatmul.mubr.bf16.gmra.mxu0 %v378
      %v520 = vpop.f32.mrf.mxu0
      %v521 = vadd.f32 0.0, %v520
      %v522 = vpop.f32.mrf.mxu0
      %v523 = vpop.f32.mrf.mxu0
      %v524 = vadd.f32 0.0, %v523
      %v525 = vpop.f32.mrf.mxu0
      %526 = vmatprep.mubr.bf16.mxu0 0
      %527 = vmatmul.mubr.bf16.gmra.mxu0 %v379
      %v528 = vpop.f32.mrf.mxu0
      %v529 = vadd.f32 0.0, %v528
      %v530 = vpop.f32.mrf.mxu0
      %v531 = vpop.f32.mrf.mxu0
      %v532 = vadd.f32 0.0, %v531
      %v533 = vpop.f32.mrf.mxu0
      %534 = vmatprep.mubr.bf16.mxu0 0
      %535 = vmatmul.mubr.bf16.gmra.mxu0 %v380
      %v536 = vpop.f32.mrf.mxu0
      %v537 = vadd.f32 0.0, %v536
      %v538 = vpop.f32.mrf.mxu0
      %v539 = vpop.f32.mrf.mxu0
      %v540 = vadd.f32 0.0, %v539
      %v541 = vpop.f32.mrf.mxu0
      %542 = vmatprep.mubr.bf16.mxu0 0
      %543 = vmatmul.mubr.bf16.gmra.mxu0 %v381
      %v544 = vpop.f32.mrf.mxu0
      %v545 = vadd.f32 0.0, %v544
      %v546 = vpop.f32.mrf.mxu0
      %v547 = vpop.f32.mrf.mxu0
      %v548 = vadd.f32 0.0, %v547
      %v549 = vpop.f32.mrf.mxu0
      %550 = vmatprep.mubr.bf16.mxu0 0
      %551 = vmatmul.mubr.bf16.gmra.mxu0 %v382
      %v552 = vpop.f32.mrf.mxu0
      %v553 = vadd.f32 0.0, %v552
      %v554 = vpop.f32.mrf.mxu0
      %v555 = vpop.f32.mrf.mxu0
      %v556 = vadd.f32 0.0, %v555
      %v557 = vpop.f32.mrf.mxu0
      %558 = vmatprep.mubr.bf16.mxu0 0
      %559 = vmatmul.mubr.bf16.gmra.mxu0 %v383
      %v560 = vpop.f32.mrf.mxu0
      %v561 = vadd.f32 0.0, %v560
      %v562 = vpop.f32.mrf.mxu0
      %v563 = vpop.f32.mrf.mxu0
      %v564 = vadd.f32 0.0, %v563
      %v565 = vpop.f32.mrf.mxu0
      %566 = vmatprep.mubr.bf16.mxu0 0
      %567 = vmatmul.mubr.bf16.gmra.mxu0 %v384
      %v568 = vpop.f32.mrf.mxu0
      %v569 = vadd.f32 0.0, %v568
      %v570 = vpop.f32.mrf.mxu0
      %v571 = vpop.f32.mrf.mxu0
      %v572 = vadd.f32 0.0, %v571
      %v573 = vpop.f32.mrf.mxu0
      %574 = vmatprep.mubr.bf16.mxu0 0
      %575 = vmatmul.mubr.bf16.gmra.mxu0 %v385
      %v576 = vpop.f32.mrf.mxu0
      %v577 = vadd.f32 0.0, %v576
      %v578 = vpop.f32.mrf.mxu0
      %v579 = vpop.f32.mrf.mxu0
      %v580 = vadd.f32 0.0, %v579
      %v581 = vpop.f32.mrf.mxu0
      %582 = vmatprep.mubr.bf16.mxu0 0
      %583 = vmatmul.mubr.bf16.gmra.mxu0 %v386
      %v584 = vpop.f32.mrf.mxu0
      %v585 = vadd.f32 0.0, %v584
      %v586 = vpop.f32.mrf.mxu0
      %v587 = vpop.f32.mrf.mxu0
      %v588 = vadd.f32 0.0, %v587
      %v589 = vpop.f32.mrf.mxu0
      %590 = vmatprep.mubr.bf16.mxu0 0
      %591 = vmatmul.mubr.bf16.gmra.mxu0 %v387
      %v592 = vpop.f32.mrf.mxu0
      %v593 = vadd.f32 0.0, %v592
      %v594 = vpop.f32.mrf.mxu0
      %v595 = vpop.f32.mrf.mxu0
      %v596 = vadd.f32 0.0, %v595
      %v597 = vpop.f32.mrf.mxu0
      %598 = vmatprep.mubr.bf16.mxu0 0
      %599 = vmatmul.mubr.bf16.gmra.mxu0 %v388
      %v600 = vpop.f32.mrf.mxu0
      %v601 = vadd.f32 0.0, %v600
      %v602 = vpop.f32.mrf.mxu0
      %v603 = vpop.f32.mrf.mxu0
      %v604 = vadd.f32 0.0, %v603
      %v605 = vpop.f32.mrf.mxu0
      %606 = vmatprep.mubr.bf16.mxu0 0
      %607 = vmatmul.mubr.bf16.gmra.mxu0 %v389
      %v608 = vpop.f32.mrf.mxu0
      %v609 = vadd.f32 0.0, %v608
      %v610 = vpop.f32.mrf.mxu0
      %v611 = vpop.f32.mrf.mxu0
      %v612 = vadd.f32 0.0, %v611
      %v613 = vpop.f32.mrf.mxu0
      %614 = vdwg.mxu0
      %v615 = vadd.f32 %v230, %v489
      %v616 = vadd.f32 %v231, %v492
      %v617 = vadd.f32 %v232, %v497
      %v618 = vadd.f32 %v233, %v500
      %v619 = vadd.f32 %v234, %v505
      %v620 = vadd.f32 %v235, %v508
      %v621 = vadd.f32 %v236, %v513
      %v622 = vadd.f32 %v237, %v516
      %v623 = vadd.f32 %v238, %v521
      %v624 = vadd.f32 %v239, %v524
      %v625 = vadd.f32 %v240, %v529
      %v626 = vadd.f32 %v241, %v532
      %v627 = vadd.f32 %v242, %v537
      %v628 = vadd.f32 %v243, %v540
      %v629 = vadd.f32 %v244, %v545
      %v630 = vadd.f32 %v245, %v548
      %v631 = vadd.f32 %v246, %v553
      %v632 = vadd.f32 %v247, %v556
      %v633 = vadd.f32 %v248, %v561
      %v634 = vadd.f32 %v249, %v564
      %v635 = vadd.f32 %v250, %v569
      %v636 = vadd.f32 %v251, %v572
      %v637 = vadd.f32 %v252, %v577
      %v638 = vadd.f32 %v253, %v580
      %v639 = vadd.f32 %v254, %v585
      %v640 = vadd.f32 %v255, %v588
      %v641 = vadd.f32 %v256, %v593
      %v642 = vadd.f32 %v257, %v596
      %v643 = vadd.f32 %v258, %v601
      %v644 = vadd.f32 %v259, %v604
      %v645 = vadd.f32 %v260, %v609
      %v646 = vadd.f32 %v261, %v612
      %vm647 = vcmask 523264
      %648 = vst.msk [vmem:[#allocation2] sm:$0xff] %vm647, %v615
      %649 = vst.msk [vmem:[#allocation2 + $0x8] sm:$0xff] %vm647, %v616
      %650 = vst.msk [vmem:[#allocation2 + $0x10] sm:$0xff] %vm647, %v617
      %651 = vst.msk [vmem:[#allocation2 + $0x18] sm:$0xff] %vm647, %v618
      %652 = vst.msk [vmem:[#allocation2 + $0x20] sm:$0xff] %vm647, %v619
      %653 = vst.msk [vmem:[#allocation2 + $0x28] sm:$0xff] %vm647, %v620
      %654 = vst.msk [vmem:[#allocation2 + $0x30] sm:$0xff] %vm647, %v621
      %655 = vst.msk [vmem:[#allocation2 + $0x38] sm:$0xff] %vm647, %v622
      %656 = vst.msk [vmem:[#allocation2 + $0x40] sm:$0xff] %vm647, %v623
      %657 = vst.msk [vmem:[#allocation2 + $0x48] sm:$0xff] %vm647, %v624
      %658 = vst.msk [vmem:[#allocation2 + $0x50] sm:$0xff] %vm647, %v625
      %659 = vst.msk [vmem:[#allocation2 + $0x58] sm:$0xff] %vm647, %v626
      %660 = vst.msk [vmem:[#allocation2 + $0x60] sm:$0xff] %vm647, %v627
      %661 = vst.msk [vmem:[#allocation2 + $0x68] sm:$0xff] %vm647, %v628
      %662 = vst.msk [vmem:[#allocation2 + $0x70] sm:$0xff] %vm647, %v629
      %663 = vst.msk [vmem:[#allocation2 + $0x78] sm:$0xff] %vm647, %v630
      %664 = vst.msk [vmem:[#allocation2 + $0x80] sm:$0xff] %vm647, %v631
      %665 = vst.msk [vmem:[#allocation2 + $0x88] sm:$0xff] %vm647, %v632
      %666 = vst.msk [vmem:[#allocation2 + $0x90] sm:$0xff] %vm647, %v633
      %667 = vst.msk [vmem:[#allocation2 + $0x98] sm:$0xff] %vm647, %v634
      %668 = vst.msk [vmem:[#allocation2 + $0xa0] sm:$0xff] %vm647, %v635
      %669 = vst.msk [vmem:[#allocation2 + $0xa8] sm:$0xff] %vm647, %v636
      %670 = vst.msk [vmem:[#allocation2 + $0xb0] sm:$0xff] %vm647, %v637
      %671 = vst.msk [vmem:[#allocation2 + $0xb8] sm:$0xff] %vm647, %v638
      %672 = vst.msk [vmem:[#allocation2 + $0xc0] sm:$0xff] %vm647, %v639
      %673 = vst.msk [vmem:[#allocation2 + $0xc8] sm:$0xff] %vm647, %v640
      %674 = vst.msk [vmem:[#allocation2 + $0xd0] sm:$0xff] %vm647, %v641
      %675 = vst.msk [vmem:[#allocation2 + $0xd8] sm:$0xff] %vm647, %v642
      %676 = vst.msk [vmem:[#allocation2 + $0xe0] sm:$0xff] %vm647, %v643
      %677 = vst.msk [vmem:[#allocation2 + $0xe8] sm:$0xff] %vm647, %v644
      %678 = vst.msk [vmem:[#allocation2 + $0xf0] sm:$0xff] %vm647, %v645
      %679 = vst.msk [vmem:[#allocation2 + $0xf8] sm:$0xff] %vm647, %v646
      // Predicated region
      $region33: #{discriminator_forward.8} parent=27 // pred_check
        %p680 = pneg %p193
      $region34: #{discriminator_forward.8} parent=27 // pred_check_branch
        %682 = sbr.rel (%p680) target = $region36
      $region35: #{discriminator_forward.8} parent=27 // pred_region
        %v683 = vld [vmem:[#allocation2] sm:$0xff]
        %v684 = vld [vmem:[#allocation2 + $0x8] sm:$0xff]
        %v685 = vld [vmem:[#allocation2 + $0x10] sm:$0xff]
        %v686 = vld [vmem:[#allocation2 + $0x18] sm:$0xff]
        %v687 = vld [vmem:[#allocation2 + $0x20] sm:$0xff]
        %v688 = vld [vmem:[#allocation2 + $0x28] sm:$0xff]
        %v689 = vld [vmem:[#allocation2 + $0x30] sm:$0xff]
        %v690 = vld [vmem:[#allocation2 + $0x38] sm:$0xff]
        %v691 = vld [vmem:[#allocation2 + $0x40] sm:$0xff]
        %v692 = vld [vmem:[#allocation2 + $0x48] sm:$0xff]
        %v693 = vld [vmem:[#allocation2 + $0x50] sm:$0xff]
        %v694 = vld [vmem:[#allocation2 + $0x58] sm:$0xff]
        %v695 = vld [vmem:[#allocation2 + $0x60] sm:$0xff]
        %v696 = vld [vmem:[#allocation2 + $0x68] sm:$0xff]
        %v697 = vld [vmem:[#allocation2 + $0x70] sm:$0xff]
        %v698 = vld [vmem:[#allocation2 + $0x78] sm:$0xff]
        %v699 = vld [vmem:[#allocation2 + $0x80] sm:$0xff]
        %v700 = vld [vmem:[#allocation2 + $0x88] sm:$0xff]
        %v701 = vld [vmem:[#allocation2 + $0x90] sm:$0xff]
        %v702 = vld [vmem:[#allocation2 + $0x98] sm:$0xff]
        %v703 = vld [vmem:[#allocation2 + $0xa0] sm:$0xff]
        %v704 = vld [vmem:[#allocation2 + $0xa8] sm:$0xff]
        %v705 = vld [vmem:[#allocation2 + $0xb0] sm:$0xff]
        %v706 = vld [vmem:[#allocation2 + $0xb8] sm:$0xff]
        %v707 = vld [vmem:[#allocation2 + $0xc0] sm:$0xff]
        %v708 = vld [vmem:[#allocation2 + $0xc8] sm:$0xff]
        %v709 = vld [vmem:[#allocation2 + $0xd0] sm:$0xff]
        %v710 = vld [vmem:[#allocation2 + $0xd8] sm:$0xff]
        %v711 = vld [vmem:[#allocation2 + $0xe0] sm:$0xff]
        %v712 = vld [vmem:[#allocation2 + $0xe8] sm:$0xff]
        %v713 = vld [vmem:[#allocation2 + $0xf0] sm:$0xff]
        %v714 = vld [vmem:[#allocation2 + $0xf8] sm:$0xff]
        %vm715 = vcmp.ge.f32.partialorder %v683, 0.0
        %vm716 = vcmp.ge.f32.partialorder %v684, 0.0
        %vm717 = vcmp.ge.f32.partialorder %v685, 0.0
        %vm718 = vcmp.ge.f32.partialorder %v686, 0.0
        %vm719 = vcmp.ge.f32.partialorder %v687, 0.0
        %vm720 = vcmp.ge.f32.partialorder %v688, 0.0
        %vm721 = vcmp.ge.f32.partialorder %v689, 0.0
        %vm722 = vcmp.ge.f32.partialorder %v690, 0.0
        %vm723 = vcmp.ge.f32.partialorder %v691, 0.0
        %vm724 = vcmp.ge.f32.partialorder %v692, 0.0
        %vm725 = vcmp.ge.f32.partialorder %v693, 0.0
        %vm726 = vcmp.ge.f32.partialorder %v694, 0.0
        %vm727 = vcmp.ge.f32.partialorder %v695, 0.0
        %vm728 = vcmp.ge.f32.partialorder %v696, 0.0
        %vm729 = vcmp.ge.f32.partialorder %v697, 0.0
        %vm730 = vcmp.ge.f32.partialorder %v698, 0.0
        %vm731 = vcmp.ge.f32.partialorder %v699, 0.0
        %vm732 = vcmp.ge.f32.partialorder %v700, 0.0
        %vm733 = vcmp.ge.f32.partialorder %v701, 0.0
        %vm734 = vcmp.ge.f32.partialorder %v702, 0.0
        %vm735 = vcmp.ge.f32.partialorder %v703, 0.0
        %vm736 = vcmp.ge.f32.partialorder %v704, 0.0
        %vm737 = vcmp.ge.f32.partialorder %v705, 0.0
        %vm738 = vcmp.ge.f32.partialorder %v706, 0.0
        %vm739 = vcmp.ge.f32.partialorder %v707, 0.0
        %vm740 = vcmp.ge.f32.partialorder %v708, 0.0
        %vm741 = vcmp.ge.f32.partialorder %v709, 0.0
        %vm742 = vcmp.ge.f32.partialorder %v710, 0.0
        %vm743 = vcmp.ge.f32.partialorder %v711, 0.0
        %vm744 = vcmp.ge.f32.partialorder %v712, 0.0
        %vm745 = vcmp.ge.f32.partialorder %v713, 0.0
        %vm746 = vcmp.ge.f32.partialorder %v714, 0.0
        %v747 = vmul.f32 %v683, 0.2
        %v748 = vmul.f32 %v684, 0.2
        %v749 = vmul.f32 %v685, 0.2
        %v750 = vmul.f32 %v686, 0.2
        %v751 = vmul.f32 %v687, 0.2
        %v752 = vmul.f32 %v688, 0.2
        %v753 = vmul.f32 %v689, 0.2
        %v754 = vmul.f32 %v690, 0.2
        %v755 = vmul.f32 %v691, 0.2
        %v756 = vmul.f32 %v692, 0.2
        %v757 = vmul.f32 %v693, 0.2
        %v758 = vmul.f32 %v694, 0.2
        %v759 = vmul.f32 %v695, 0.2
        %v760 = vmul.f32 %v696, 0.2
        %v761 = vmul.f32 %v697, 0.2
        %v762 = vmul.f32 %v698, 0.2
        %v763 = vmul.f32 %v699, 0.2
        %v764 = vmul.f32 %v700, 0.2
        %v765 = vmul.f32 %v701, 0.2
        %v766 = vmul.f32 %v702, 0.2
        %v767 = vmul.f32 %v703, 0.2
        %v768 = vmul.f32 %v704, 0.2
        %v769 = vmul.f32 %v705, 0.2
        %v770 = vmul.f32 %v706, 0.2
        %v771 = vmul.f32 %v707, 0.2
        %v772 = vmul.f32 %v708, 0.2
        %v773 = vmul.f32 %v709, 0.2
        %v774 = vmul.f32 %v710, 0.2
        %v775 = vmul.f32 %v711, 0.2
        %v776 = vmul.f32 %v712, 0.2
        %v777 = vmul.f32 %v713, 0.2
        %v778 = vmul.f32 %v714, 0.2
        %v779 = vsel %vm715, %v683, %v747
        %v780 = vsel %vm716, %v684, %v748
        %v781 = vsel %vm717, %v685, %v749
        %v782 = vsel %vm718, %v686, %v750
        %v783 = vsel %vm719, %v687, %v751
        %v784 = vsel %vm720, %v688, %v752
        %v785 = vsel %vm721, %v689, %v753
        %v786 = vsel %vm722, %v690, %v754
        %v787 = vsel %vm723, %v691, %v755
        %v788 = vsel %vm724, %v692, %v756
        %v789 = vsel %vm725, %v693, %v757
        %v790 = vsel %vm726, %v694, %v758
        %v791 = vsel %vm727, %v695, %v759
        %v792 = vsel %vm728, %v696, %v760
        %v793 = vsel %vm729, %v697, %v761
        %v794 = vsel %vm730, %v698, %v762
        %v795 = vsel %vm731, %v699, %v763
        %v796 = vsel %vm732, %v700, %v764
        %v797 = vsel %vm733, %v701, %v765
        %v798 = vsel %vm734, %v702, %v766
        %v799 = vsel %vm735, %v703, %v767
        %v800 = vsel %vm736, %v704, %v768
        %v801 = vsel %vm737, %v705, %v769
        %v802 = vsel %vm738, %v706, %v770
        %v803 = vsel %vm739, %v707, %v771
        %v804 = vsel %vm740, %v708, %v772
        %v805 = vsel %vm741, %v709, %v773
        %v806 = vsel %vm742, %v710, %v774
        %v807 = vsel %vm743, %v711, %v775
        %v808 = vsel %vm744, %v712, %v776
        %v809 = vsel %vm745, %v713, %v777
        %v810 = vsel %vm746, %v714, %v778
        %v811 = vpack.c.bf16 %v780, %v779
        %v812 = vpack.c.bf16 %v782, %v781
        %v813 = vpack.c.bf16 %v784, %v783
        %v814 = vpack.c.bf16 %v786, %v785
        %v815 = vpack.c.bf16 %v788, %v787
        %v816 = vpack.c.bf16 %v790, %v789
        %v817 = vpack.c.bf16 %v792, %v791
        %v818 = vpack.c.bf16 %v794, %v793
        %v819 = vpack.c.bf16 %v796, %v795
        %v820 = vpack.c.bf16 %v798, %v797
        %v821 = vpack.c.bf16 %v800, %v799
        %v822 = vpack.c.bf16 %v802, %v801
        %v823 = vpack.c.bf16 %v804, %v803
        %v824 = vpack.c.bf16 %v806, %v805
        %v825 = vpack.c.bf16 %v808, %v807
        %v826 = vpack.c.bf16 %v810, %v809
        %v843 = vunpack.c.l.b16 %v811
        %v844 = vunpack.c.h.b16 %v811
        %v845 = vunpack.c.l.b16 %v812
        %v846 = vunpack.c.h.b16 %v812
        %v847 = vunpack.c.l.b16 %v813
        %v848 = vunpack.c.h.b16 %v813
        %v849 = vunpack.c.l.b16 %v814
        %v850 = vunpack.c.h.b16 %v814
        %v851 = vunpack.c.l.b16 %v815
        %v852 = vunpack.c.h.b16 %v815
        %v853 = vunpack.c.l.b16 %v816
        %v854 = vunpack.c.h.b16 %v816
        %v855 = vunpack.c.l.b16 %v817
        %v856 = vunpack.c.h.b16 %v817
        %v857 = vunpack.c.l.b16 %v818
        %v858 = vunpack.c.h.b16 %v818
        %v859 = vunpack.c.l.b16 %v819
        %v860 = vunpack.c.h.b16 %v819
        %v861 = vunpack.c.l.b16 %v820
        %v862 = vunpack.c.h.b16 %v820
        %v863 = vunpack.c.l.b16 %v821
        %v864 = vunpack.c.h.b16 %v821
        %v865 = vunpack.c.l.b16 %v822
        %v866 = vunpack.c.h.b16 %v822
        %v867 = vunpack.c.l.b16 %v823
        %v868 = vunpack.c.h.b16 %v823
        %v869 = vunpack.c.l.b16 %v824
        %v870 = vunpack.c.h.b16 %v824
        %v871 = vunpack.c.l.b16 %v825
        %v872 = vunpack.c.h.b16 %v825
        %v873 = vunpack.c.l.b16 %v826
        %v874 = vunpack.c.h.b16 %v826
        %v875 = vpack.c.b16 %v843, %v843
        %v876 = vpack.c.b16 %v844, %v844
        %v877 = vpack.c.b16 %v845, %v845
        %v878 = vpack.c.b16 %v846, %v846
        %v879 = vpack.c.b16 %v847, %v847
        %v880 = vpack.c.b16 %v848, %v848
        %v881 = vpack.c.b16 %v849, %v849
        %v882 = vpack.c.b16 %v850, %v850
        %v883 = vpack.c.b16 %v851, %v851
        %v884 = vpack.c.b16 %v852, %v852
        %v885 = vpack.c.b16 %v853, %v853
        %v886 = vpack.c.b16 %v854, %v854
        %v887 = vpack.c.b16 %v855, %v855
        %v888 = vpack.c.b16 %v856, %v856
        %v889 = vpack.c.b16 %v857, %v857
        %v890 = vpack.c.b16 %v858, %v858
        %v891 = vpack.c.b16 %v859, %v859
        %v892 = vpack.c.b16 %v860, %v860
        %v893 = vpack.c.b16 %v861, %v861
        %v894 = vpack.c.b16 %v862, %v862
        %v895 = vpack.c.b16 %v863, %v863
        %v896 = vpack.c.b16 %v864, %v864
        %v897 = vpack.c.b16 %v865, %v865
        %v898 = vpack.c.b16 %v866, %v866
        %v899 = vpack.c.b16 %v867, %v867
        %v900 = vpack.c.b16 %v868, %v868
        %v901 = vpack.c.b16 %v869, %v869
        %v902 = vpack.c.b16 %v870, %v870
        %v903 = vpack.c.b16 %v871, %v871
        %v904 = vpack.c.b16 %v872, %v872
        %v905 = vpack.c.b16 %v873, %v873
        %v906 = vpack.c.b16 %v874, %v874
        %vm939 = vcmask 519168
        %940 = vst.msk [vmem:[%s190] sm:$0xf] %vm939, %v875
        %941 = vst.msk [vmem:[%s190 + $0x4] sm:$0xf] %vm939, %v876
        %942 = vst.msk [vmem:[%s190 + $0x8] sm:$0xf] %vm939, %v877
        %943 = vst.msk [vmem:[%s190 + $0xc] sm:$0xf] %vm939, %v878
        %944 = vst.msk [vmem:[%s190 + $0x10] sm:$0xf] %vm939, %v879
        %945 = vst.msk [vmem:[%s190 + $0x14] sm:$0xf] %vm939, %v880
        %946 = vst.msk [vmem:[%s190 + $0x18] sm:$0xf] %vm939, %v881
        %947 = vst.msk [vmem:[%s190 + $0x1c] sm:$0xf] %vm939, %v882
        %948 = vst.msk [vmem:[%s190 + $0x20] sm:$0xf] %vm939, %v883
        %949 = vst.msk [vmem:[%s190 + $0x24] sm:$0xf] %vm939, %v884
        %950 = vst.msk [vmem:[%s190 + $0x28] sm:$0xf] %vm939, %v885
        %951 = vst.msk [vmem:[%s190 + $0x2c] sm:$0xf] %vm939, %v886
        %952 = vst.msk [vmem:[%s190 + $0x30] sm:$0xf] %vm939, %v887
        %953 = vst.msk [vmem:[%s190 + $0x34] sm:$0xf] %vm939, %v888
        %954 = vst.msk [vmem:[%s190 + $0x38] sm:$0xf] %vm939, %v889
        %955 = vst.msk [vmem:[%s190 + $0x3c] sm:$0xf] %vm939, %v890
        %956 = vst.msk [vmem:[%s190 + $0x40] sm:$0xf] %vm939, %v891
        %957 = vst.msk [vmem:[%s190 + $0x44] sm:$0xf] %vm939, %v892
        %958 = vst.msk [vmem:[%s190 + $0x48] sm:$0xf] %vm939, %v893
        %959 = vst.msk [vmem:[%s190 + $0x4c] sm:$0xf] %vm939, %v894
        %960 = vst.msk [vmem:[%s190 + $0x50] sm:$0xf] %vm939, %v895
        %961 = vst.msk [vmem:[%s190 + $0x54] sm:$0xf] %vm939, %v896
        %962 = vst.msk [vmem:[%s190 + $0x58] sm:$0xf] %vm939, %v897
        %963 = vst.msk [vmem:[%s190 + $0x5c] sm:$0xf] %vm939, %v898
        %964 = vst.msk [vmem:[%s190 + $0x60] sm:$0xf] %vm939, %v899
        %965 = vst.msk [vmem:[%s190 + $0x64] sm:$0xf] %vm939, %v900
        %966 = vst.msk [vmem:[%s190 + $0x68] sm:$0xf] %vm939, %v901
        %967 = vst.msk [vmem:[%s190 + $0x6c] sm:$0xf] %vm939, %v902
        %968 = vst.msk [vmem:[%s190 + $0x70] sm:$0xf] %vm939, %v903
        %969 = vst.msk [vmem:[%s190 + $0x74] sm:$0xf] %vm939, %v904
        %970 = vst.msk [vmem:[%s190 + $0x78] sm:$0xf] %vm939, %v905
        %971 = vst.msk [vmem:[%s190 + $0x7c] sm:$0xf] %vm939, %v906
      $region36: #{discriminator_forward.8} parent=27 // pred_fallthru
        _
      %s972 = smul.u32 32, %s17
      %p973 = scmp.lt.s32.totalorder %s972, 255
      %s974 = scalar_select %p973, %s972, 255
      %s975 = smul.addr %s974, 4
      %s976 = scalar_lea.vmem %s2, %s975
      // Predicated region
      $region37: #{discriminator_forward.8} parent=27 // pred_check
        %p977 = pneg %p97
      $region38: #{discriminator_forward.8} parent=27 // pred_check_branch
        %979 = sbr.rel (%p977) target = $region40
      $region39: #{discriminator_forward.8} parent=27 // pred_region
        %s980 = smul.u32 32, %s17
      $region40: #{discriminator_forward.8} parent=27 // pred_fallthru
        _
    $region28: #{discriminator_forward.8} parent=5 // pred_fallthru
      _
    %p981 = scmp.le.s32.totalorder 2, %s8
    // Predicated region
    $region41: #{discriminator_forward.8} parent=5 // pred_check
      %p982 = pneg %p981
    $region42: #{discriminator_forward.8} parent=5 // pred_check_branch
      %984 = sbr.rel (%p982) target = $region44
    $region43: #{discriminator_forward.8} parent=5 // pred_region
      %s985 = ssub.s32 %s8, 2
      // Predicated region
      $region45: #{discriminator_forward.8} parent=43 // pred_check
        %p986 = pneg %p103
      $region46: #{discriminator_forward.8} parent=43 // pred_check_branch
        %988 = sbr.rel (%p986) target = $region48
      $region47: #{discriminator_forward.8} parent=43 // pred_region
        %s989 = smul.u32 32, %s19
        %p990 = scmp.lt.s32.totalorder %s989, 255
        %s991 = scalar_select %p990, %s989, 255
        %s992 = smul.addr %s991, 4
        %s993 = scalar_lea.vmem %s2, %s992
      $region48: #{discriminator_forward.8} parent=43 // pred_fallthru
        _
    $region44: #{discriminator_forward.8} parent=5 // pred_fallthru
      _
  $region6: #{discriminator_forward.8} parent=0 // loop_footer
    %s12 = sadd.s32 1, %s8
  $region7: #{discriminator_forward.8} parent=0 // loop_footer_branch
    %7 = sbr.rel target = $region3
  $region8: #{discriminator_forward.8} parent=0 // loop_exit
    _

// kernel: discriminator_forward.9
$region0: #{discriminator_forward.9}
  #allocation0 [shape = 'u32[]', space=smem, size = 0x4, offset = 0x4, fixed_abs, tag = 'smem constant byte address 0x4 - core index']
  #allocation1 [shape = 'u32[144,128]{1,0:T(1,128)}', space=vmem, size = 0x12000, scoped, tag = 'internal scratch']
  #allocation2 [shape = 'f32[256,128]{1,0:T(8,128)}', space=vmem, size = 0x20000, scoped, tag = 'scratch operand']
  %s0 = inlined_call_operand.vmem [shape: bf16[512,1024], index: 0, kind: input, shape index: {}]
  %s1 = inlined_call_operand.vmem [shape: bf16[1024,128], index: 1, kind: input, shape index: {}]
  %s2 = inlined_call_operand.vmem [shape: f32[512,128], index: 2, kind: output, shape index: {0}]
  %s3 = inlined_call_operand.vmem [shape: f32[16,128], index: 3, kind: output, shape index: {1}]
  %4 = xla_tuple %s2, %s3
  %s5 = sld [smem:[#allocation0]]
  $region57: #{discriminator_forward.9} parent=0
    _
  %s7 = ssub.s32 1, %s5
  %s8 = scalar_select 0, %s7, %s5
  loop: start=0, step=1, limit=4
  $region2: #{discriminator_forward.9} parent=0 // loop_pre_header
    _
  $region3: #{discriminator_forward.9} parent=0 // loop_header
    %s10 = sphi 0, %s14
    %p11 = scmp.ge.s32.totalorder %s10, 4
    %s17 = sphi 0, %s29
    %s18 = sphi 0, %s25
    %s19 = sphi 0, %s17
    %s20 = sphi 0, %s18
    %s21 = sphi 0, %s19
    %s22 = sphi 0, %s20
    %s34 = sphi 0, %s36
    %s37 = sphi 0, %s34
    %s38 = sphi 0, %s37
    %s54 = sphi 0, %s38
    %s60 = sphi 0, %s62
    %s63 = sphi 0, %s60
    %s64 = sphi 0, %s63
    %s80 = sphi 0, %s64
    %s86 = sphi 0, %s88
    %s89 = sphi 0, %s86
    %s90 = sphi 0, %s89
    %s106 = sphi 0, %s90
    %s112 = sphi 0, %s114
    %s115 = sphi 0, %s112
    %s116 = sphi 0, %s115
    %s132 = sphi 0, %s116
  $region4: #{discriminator_forward.9} parent=0 // loop_header_branch
    %13 = sbr.rel (%p11) target = $region8
  $region5: #{discriminator_forward.9} parent=0 // loop_body
    %s15 = ssub.s32 %s10, 1
    %s16 = ssub.s32 %s10, 2
    %s23 = sadd.s32 1, %s18
    %p24 = scmp.ge.s32.totalorder %s23, 1
    %s25 = scalar_select %p24, 0, %s23
    %s26 = sadd.s32 1, %s17
    %s27 = scalar_select %p24, %s26, %s17
    %p28 = scmp.ge.s32.totalorder %s27, 2
    %s29 = scalar_select %p28, 0, %s27
    %s30 = ssub.s32 %s17, %s29
    %s31 = ssub.s32 %s18, %s25
    %s32 = sor.u32 %s30, %s31
    %p33 = scmp.eq.s32.totalorder %s32, 0
    %s35 = sadd.s32 %s34, 1
    %s36 = scalar_select %p33, %s34, %s35
    %p39 = pneg %p33
    %p40 = scmp.eq.s32.totalorder %s10, 1
    %p41 = por %p39, %p40
    %p42 = scmp.ne.s32.totalorder %s34, %s37
    %p43 = scmp.eq.s32.totalorder %s10, 0
    %p44 = por %p42, %p43
    %p45 = scmp.ne.s32.totalorder %s34, %s37
    %p46 = scmp.eq.s32.totalorder %s15, 1
    %p47 = por %p45, %p46
    %p48 = scmp.ne.s32.totalorder %s37, %s38
    %p49 = scmp.eq.s32.totalorder %s15, 0
    %p50 = por %p48, %p49
    %p51 = scmp.ne.s32.totalorder %s37, %s38
    %p52 = scmp.eq.s32.totalorder %s16, 1
    %p53 = por %p51, %p52
    %p55 = scmp.ne.s32.totalorder %s38, %s54
    %p56 = scmp.eq.s32.totalorder %s16, 0
    %p57 = por %p55, %p56
    %s58 = ssub.s32 %s18, %s25
    %p59 = scmp.eq.s32.totalorder %s58, 0
    %s61 = sadd.s32 %s60, 1
    %s62 = scalar_select %p59, %s60, %s61
    %p65 = pneg %p59
    %p66 = scmp.eq.s32.totalorder %s10, 1
    %p67 = por %p65, %p66
    %p68 = scmp.ne.s32.totalorder %s60, %s63
    %p69 = scmp.eq.s32.totalorder %s10, 0
    %p70 = por %p68, %p69
    %p71 = scmp.ne.s32.totalorder %s60, %s63
    %p72 = scmp.eq.s32.totalorder %s15, 1
    %p73 = por %p71, %p72
    %p74 = scmp.ne.s32.totalorder %s63, %s64
    %p75 = scmp.eq.s32.totalorder %s15, 0
    %p76 = por %p74, %p75
    %p77 = scmp.ne.s32.totalorder %s63, %s64
    %p78 = scmp.eq.s32.totalorder %s16, 1
    %p79 = por %p77, %p78
    %p81 = scmp.ne.s32.totalorder %s64, %s80
    %p82 = scmp.eq.s32.totalorder %s16, 0
    %p83 = por %p81, %p82
    %s84 = ssub.s32 %s17, %s29
    %p85 = scmp.eq.s32.totalorder %s84, 0
    %s87 = sadd.s32 %s86, 1
    %s88 = scalar_select %p85, %s86, %s87
    %p91 = pneg %p85
    %p92 = scmp.eq.s32.totalorder %s10, 1
    %p93 = por %p91, %p92
    %p94 = scmp.ne.s32.totalorder %s86, %s89
    %p95 = scmp.eq.s32.totalorder %s10, 0
    %p96 = por %p94, %p95
    %p97 = scmp.ne.s32.totalorder %s86, %s89
    %p98 = scmp.eq.s32.totalorder %s15, 1
    %p99 = por %p97, %p98
    %p100 = scmp.ne.s32.totalorder %s89, %s90
    %p101 = scmp.eq.s32.totalorder %s15, 0
    %p102 = por %p100, %p101
    %p103 = scmp.ne.s32.totalorder %s89, %s90
    %p104 = scmp.eq.s32.totalorder %s16, 1
    %p105 = por %p103, %p104
    %p107 = scmp.ne.s32.totalorder %s90, %s106
    %p108 = scmp.eq.s32.totalorder %s16, 0
    %p109 = por %p107, %p108
    %s110 = ssub.s32 %s17, %s29
    %p111 = scmp.eq.s32.totalorder %s110, 0
    %s113 = sadd.s32 %s112, 1
    %s114 = scalar_select %p111, %s112, %s113
    %p117 = pneg %p111
    %p118 = scmp.eq.s32.totalorder %s10, 1
    %p119 = por %p117, %p118
    %p120 = scmp.ne.s32.totalorder %s112, %s115
    %p121 = scmp.eq.s32.totalorder %s10, 0
    %p122 = por %p120, %p121
    %p123 = scmp.ne.s32.totalorder %s112, %s115
    %p124 = scmp.eq.s32.totalorder %s15, 1
    %p125 = por %p123, %p124
    %p126 = scmp.ne.s32.totalorder %s115, %s116
    %p127 = scmp.eq.s32.totalorder %s15, 0
    %p128 = por %p126, %p127
    %p129 = scmp.ne.s32.totalorder %s115, %s116
    %p130 = scmp.eq.s32.totalorder %s16, 1
    %p131 = por %p129, %p130
    %p133 = scmp.ne.s32.totalorder %s116, %s132
    %p134 = scmp.eq.s32.totalorder %s16, 0
    %p135 = por %p133, %p134
    %p136 = scmp.le.s32.totalorder 1, %s10
    %p137 = scmp.lt.s32.totalorder %s10, 3
    %p138 = pnand %p136, %p137
    %p139 = pneg %p138
    // Predicated region
    $region9: #{discriminator_forward.9} parent=5 // pred_check
      _
    $region10: #{discriminator_forward.9} parent=5 // pred_check_branch
      %141 = sbr.rel (%p138) target = $region12
    $region11: #{discriminator_forward.9} parent=5 // pred_region
      %s142 = ssub.s32 %s10, 1
      // Predicated region
      $region13: #{discriminator_forward.9} parent=11 // pred_check
        %p143 = pneg %p76
      $region14: #{discriminator_forward.9} parent=11 // pred_check_branch
        %145 = sbr.rel (%p143) target = $region16
      $region15: #{discriminator_forward.9} parent=11 // pred_region
        %s146 = smul.u32 128, %s20
        %p147 = scmp.lt.s32.totalorder %s146, 127
        %s148 = scalar_select %p147, %s146, 127
        %s149 = smul.addr %s148, 4
        %s150 = scalar_lea.vmem %s1, %s149
        %s151 = smul.u32 128, %s20
      $region16: #{discriminator_forward.9} parent=11 // pred_fallthru
        _
    $region12: #{discriminator_forward.9} parent=5 // pred_fallthru
      _
    %p152 = scmp.lt.s32.totalorder %s10, 2
    // Predicated region
    $region17: #{discriminator_forward.9} parent=5 // pred_check
      %p153 = pneg %p152
    $region18: #{discriminator_forward.9} parent=5 // pred_check_branch
      %155 = sbr.rel (%p153) target = $region20
    $region19: #{discriminator_forward.9} parent=5 // pred_region
      // Predicated region
      $region21: #{discriminator_forward.9} parent=19 // pred_check
        %p156 = pneg %p44
      $region22: #{discriminator_forward.9} parent=19 // pred_check_branch
        %158 = sbr.rel (%p156) target = $region24
      $region23: #{discriminator_forward.9} parent=19 // pred_region
        %s159 = smul.u32 32, %s17
        %s160 = smul.u32 8, %s18
        %p161 = scmp.lt.s32.totalorder %s159, 63
        %s162 = scalar_select %p161, %s159, 63
        %p163 = scmp.lt.s32.totalorder %s160, 7
        %s164 = scalar_select %p163, %s160, 7
        %s165 = smul.addr %s162, 8
        %s166 = sadd.s32 %s164, %s165
        %s167 = smul.addr %s166, 4
        %s168 = scalar_lea.vmem %s0, %s167
        %s169 = smul.u32 32, %s17
        %s170 = smul.u32 8, %s18
      $region24: #{discriminator_forward.9} parent=19 // pred_fallthru
        _
    $region20: #{discriminator_forward.9} parent=5 // pred_fallthru
      _
    %p171 = scmp.le.s32.totalorder 1, %s10
    %p172 = scmp.lt.s32.totalorder %s10, 3
    %p173 = pnand %p171, %p172
    %p174 = pneg %p173
    // Predicated region
    $region25: #{discriminator_forward.9} parent=5 // pred_check
      _
    $region26: #{discriminator_forward.9} parent=5 // pred_check_branch
      %176 = sbr.rel (%p173) target = $region28
    $region27: #{discriminator_forward.9} parent=5 // pred_region
      %s177 = ssub.s32 %s10, 1
      %s178 = smul.u32 32, %s19
      %s179 = smul.u32 8, %s20
      %p180 = scmp.lt.s32.totalorder %s178, 63
      %s181 = scalar_select %p180, %s178, 63
      %p182 = scmp.lt.s32.totalorder %s179, 7
      %s183 = scalar_select %p182, %s179, 7
      %s184 = smul.addr %s181, 8
      %s185 = sadd.s32 %s183, %s184
      %s186 = smul.addr %s185, 4
      %s187 = scalar_lea.vmem %s0, %s186
      %p188 = pneg %p50
      %p189 = pneg %p47
      %s190 = smul.u32 128, %s20
      %p191 = scmp.lt.s32.totalorder %s190, 127
      %s192 = scalar_select %p191, %s190, 127
      %s193 = smul.addr %s192, 4
      %s194 = scalar_lea.vmem %s1, %s193
      %p195 = pneg %p76
      %p196 = pneg %p73
      %p197 = pneg %p102
      %p198 = pneg %p99
      %s199 = smul.u32 32, %s19
      %p200 = scmp.lt.s32.totalorder %s199, 63
      %s201 = scalar_select %p200, %s199, 63
      %s202 = smul.addr %s201, 8
      %s203 = scalar_lea.vmem %s2, %s202
      %p204 = pneg %p128
      %p205 = pneg %p125
      %p206 = scmp.lt.s32.totalorder %s19, 1
      %s207 = scalar_select %p206, %s19, 1
      %s208 = smul.addr %s207, 8
      %s209 = scalar_lea.vmem %s3, %s208
      %s210 = smul.u32 32, %s19
      %s211 = smul.u32 8, %s20
      %p212 = scmp.lt.s32.totalorder %s210, 63
      %s213 = scalar_select %p212, %s210, 63
      %p214 = scmp.lt.s32.totalorder %s211, 7
      %s215 = scalar_select %p214, %s211, 7
      %s216 = smul.addr %s213, 8
      %s217 = sadd.s32 %s215, %s216
      %s218 = smul.addr %s217, 4
      %s219 = scalar_lea.vmem %s0, %s218
      %s220 = smul.u32 32, %s19
      %s221 = smul.u32 8, %s20
      %s222 = smul.u32 128, %s20
      %p223 = scmp.lt.s32.totalorder %s222, 127
      %s224 = scalar_select %p223, %s222, 127
      %s225 = smul.addr %s224, 4
      %s226 = scalar_lea.vmem %s1, %s225
      %s227 = smul.u32 128, %s20
      %s228 = smul.u32 32, %s19
      %p229 = scmp.lt.s32.totalorder %s228, 63
      %s230 = scalar_select %p229, %s228, 63
      %s231 = smul.addr %s230, 8
      %s232 = scalar_lea.vmem %s2, %s231
      %s233 = smul.u32 32, %s19
      %p234 = scmp.lt.s32.totalorder %s19, 1
      %s235 = scalar_select %p234, %s19, 1
      %s236 = smul.addr %s235, 8
      %s237 = scalar_lea.vmem %s3, %s236
      %p239 = scmp.eq.s32.totalorder %s20, 0
      // Predicated region
      $region29: #{discriminator_forward.9} parent=27 // pred_check
        %p240 = pneg %p239
      $region30: #{discriminator_forward.9} parent=27 // pred_check_branch
        %242 = sbr.rel (%p240) target = $region32
      $region31: #{discriminator_forward.9} parent=27 // pred_region
        %243 = vst [vmem:[#allocation2] sm:$0xff] 0.0
        %244 = vst [vmem:[#allocation2 + $0x8] sm:$0xff] 0.0
        %245 = vst [vmem:[#allocation2 + $0x10] sm:$0xff] 0.0
        %246 = vst [vmem:[#allocation2 + $0x18] sm:$0xff] 0.0
        %247 = vst [vmem:[#allocation2 + $0x20] sm:$0xff] 0.0
        %248 = vst [vmem:[#allocation2 + $0x28] sm:$0xff] 0.0
        %249 = vst [vmem:[#allocation2 + $0x30] sm:$0xff] 0.0
        %250 = vst [vmem:[#allocation2 + $0x38] sm:$0xff] 0.0
        %251 = vst [vmem:[#allocation2 + $0x40] sm:$0xff] 0.0
        %252 = vst [vmem:[#allocation2 + $0x48] sm:$0xff] 0.0
        %253 = vst [vmem:[#allocation2 + $0x50] sm:$0xff] 0.0
        %254 = vst [vmem:[#allocation2 + $0x58] sm:$0xff] 0.0
        %255 = vst [vmem:[#allocation2 + $0x60] sm:$0xff] 0.0
        %256 = vst [vmem:[#allocation2 + $0x68] sm:$0xff] 0.0
        %257 = vst [vmem:[#allocation2 + $0x70] sm:$0xff] 0.0
        %258 = vst [vmem:[#allocation2 + $0x78] sm:$0xff] 0.0
        %259 = vst [vmem:[#allocation2 + $0x80] sm:$0xff] 0.0
        %260 = vst [vmem:[#allocation2 + $0x88] sm:$0xff] 0.0
        %261 = vst [vmem:[#allocation2 + $0x90] sm:$0xff] 0.0
        %262 = vst [vmem:[#allocation2 + $0x98] sm:$0xff] 0.0
        %263 = vst [vmem:[#allocation2 + $0xa0] sm:$0xff] 0.0
        %264 = vst [vmem:[#allocation2 + $0xa8] sm:$0xff] 0.0
        %265 = vst [vmem:[#allocation2 + $0xb0] sm:$0xff] 0.0
        %266 = vst [vmem:[#allocation2 + $0xb8] sm:$0xff] 0.0
        %267 = vst [vmem:[#allocation2 + $0xc0] sm:$0xff] 0.0
        %268 = vst [vmem:[#allocation2 + $0xc8] sm:$0xff] 0.0
        %269 = vst [vmem:[#allocation2 + $0xd0] sm:$0xff] 0.0
        %270 = vst [vmem:[#allocation2 + $0xd8] sm:$0xff] 0.0
        %271 = vst [vmem:[#allocation2 + $0xe0] sm:$0xff] 0.0
        %272 = vst [vmem:[#allocation2 + $0xe8] sm:$0xff] 0.0
        %273 = vst [vmem:[#allocation2 + $0xf0] sm:$0xff] 0.0
        %274 = vst [vmem:[#allocation2 + $0xf8] sm:$0xff] 0.0
      $region32: #{discriminator_forward.9} parent=27 // pred_fallthru
        _
      %v275 = vld [vmem:[#allocation2] sm:$0xff]
      %v276 = vld [vmem:[#allocation2 + $0x8] sm:$0xff]
      %v277 = vld [vmem:[#allocation2 + $0x10] sm:$0xff]
      %v278 = vld [vmem:[#allocation2 + $0x18] sm:$0xff]
      %v279 = vld [vmem:[#allocation2 + $0x20] sm:$0xff]
      %v280 = vld [vmem:[#allocation2 + $0x28] sm:$0xff]
      %v281 = vld [vmem:[#allocation2 + $0x30] sm:$0xff]
      %v282 = vld [vmem:[#allocation2 + $0x38] sm:$0xff]
      %v283 = vld [vmem:[#allocation2 + $0x40] sm:$0xff]
      %v284 = vld [vmem:[#allocation2 + $0x48] sm:$0xff]
      %v285 = vld [vmem:[#allocation2 + $0x50] sm:$0xff]
      %v286 = vld [vmem:[#allocation2 + $0x58] sm:$0xff]
      %v287 = vld [vmem:[#allocation2 + $0x60] sm:$0xff]
      %v288 = vld [vmem:[#allocation2 + $0x68] sm:$0xff]
      %v289 = vld [vmem:[#allocation2 + $0x70] sm:$0xff]
      %v290 = vld [vmem:[#allocation2 + $0x78] sm:$0xff]
      %v291 = vld [vmem:[#allocation2 + $0x80] sm:$0xff]
      %v292 = vld [vmem:[#allocation2 + $0x88] sm:$0xff]
      %v293 = vld [vmem:[#allocation2 + $0x90] sm:$0xff]
      %v294 = vld [vmem:[#allocation2 + $0x98] sm:$0xff]
      %v295 = vld [vmem:[#allocation2 + $0xa0] sm:$0xff]
      %v296 = vld [vmem:[#allocation2 + $0xa8] sm:$0xff]
      %v297 = vld [vmem:[#allocation2 + $0xb0] sm:$0xff]
      %v298 = vld [vmem:[#allocation2 + $0xb8] sm:$0xff]
      %v299 = vld [vmem:[#allocation2 + $0xc0] sm:$0xff]
      %v300 = vld [vmem:[#allocation2 + $0xc8] sm:$0xff]
      %v301 = vld [vmem:[#allocation2 + $0xd0] sm:$0xff]
      %v302 = vld [vmem:[#allocation2 + $0xd8] sm:$0xff]
      %v303 = vld [vmem:[#allocation2 + $0xe0] sm:$0xff]
      %v304 = vld [vmem:[#allocation2 + $0xe8] sm:$0xff]
      %v305 = vld [vmem:[#allocation2 + $0xf0] sm:$0xff]
      %v306 = vld [vmem:[#allocation2 + $0xf8] sm:$0xff]
      %v307 = vld [vmem:[%s219] sm:$0xff]
      %v308 = vld [vmem:[%s219 + $0x8] sm:$0xff]
      %v309 = vld [vmem:[%s219 + $0x10] sm:$0xff]
      %v310 = vld [vmem:[%s219 + $0x18] sm:$0xff]
      %v311 = vld [vmem:[%s219 + $0x20] sm:$0xff]
      %v312 = vld [vmem:[%s219 + $0x28] sm:$0xff]
      %v313 = vld [vmem:[%s219 + $0x30] sm:$0xff]
      %v314 = vld [vmem:[%s219 + $0x38] sm:$0xff]
      %v315 = vld [vmem:[%s219 + $0x40] sm:$0xff]
      %v316 = vld [vmem:[%s219 + $0x48] sm:$0xff]
      %v317 = vld [vmem:[%s219 + $0x50] sm:$0xff]
      %v318 = vld [vmem:[%s219 + $0x58] sm:$0xff]
      %v319 = vld [vmem:[%s219 + $0x60] sm:$0xff]
      %v320 = vld [vmem:[%s219 + $0x68] sm:$0xff]
      %v321 = vld [vmem:[%s219 + $0x70] sm:$0xff]
      %v322 = vld [vmem:[%s219 + $0x78] sm:$0xff]
      %v323 = vld [vmem:[%s219 + $0x80] sm:$0xff]
      %v324 = vld [vmem:[%s219 + $0x88] sm:$0xff]
      %v325 = vld [vmem:[%s219 + $0x90] sm:$0xff]
      %v326 = vld [vmem:[%s219 + $0x98] sm:$0xff]
      %v327 = vld [vmem:[%s219 + $0xa0] sm:$0xff]
      %v328 = vld [vmem:[%s219 + $0xa8] sm:$0xff]
      %v329 = vld [vmem:[%s219 + $0xb0] sm:$0xff]
      %v330 = vld [vmem:[%s219 + $0xb8] sm:$0xff]
      %v331 = vld [vmem:[%s219 + $0xc0] sm:$0xff]
      %v332 = vld [vmem:[%s219 + $0xc8] sm:$0xff]
      %v333 = vld [vmem:[%s219 + $0xd0] sm:$0xff]
      %v334 = vld [vmem:[%s219 + $0xd8] sm:$0xff]
      %v335 = vld [vmem:[%s219 + $0xe0] sm:$0xff]
      %v336 = vld [vmem:[%s219 + $0xe8] sm:$0xff]
      %v337 = vld [vmem:[%s219 + $0xf0] sm:$0xff]
      %v338 = vld [vmem:[%s219 + $0xf8] sm:$0xff]
      %v339 = vld [vmem:[%s219 + $0x100] sm:$0xff]
      %v340 = vld [vmem:[%s219 + $0x108] sm:$0xff]
      %v341 = vld [vmem:[%s219 + $0x110] sm:$0xff]
      %v342 = vld [vmem:[%s219 + $0x118] sm:$0xff]
      %v343 = vld [vmem:[%s219 + $0x120] sm:$0xff]
      %v344 = vld [vmem:[%s219 + $0x128] sm:$0xff]
      %v345 = vld [vmem:[%s219 + $0x130] sm:$0xff]
      %v346 = vld [vmem:[%s219 + $0x138] sm:$0xff]
      %v347 = vld [vmem:[%s219 + $0x140] sm:$0xff]
      %v348 = vld [vmem:[%s219 + $0x148] sm:$0xff]
      %v349 = vld [vmem:[%s219 + $0x150] sm:$0xff]
      %v350 = vld [vmem:[%s219 + $0x158] sm:$0xff]
      %v351 = vld [vmem:[%s219 + $0x160] sm:$0xff]
      %v352 = vld [vmem:[%s219 + $0x168] sm:$0xff]
      %v353 = vld [vmem:[%s219 + $0x170] sm:$0xff]
      %v354 = vld [vmem:[%s219 + $0x178] sm:$0xff]
      %v355 = vld [vmem:[%s219 + $0x180] sm:$0xff]
      %v356 = vld [vmem:[%s219 + $0x188] sm:$0xff]
      %v357 = vld [vmem:[%s219 + $0x190] sm:$0xff]
      %v358 = vld [vmem:[%s219 + $0x198] sm:$0xff]
      %v359 = vld [vmem:[%s219 + $0x1a0] sm:$0xff]
      %v360 = vld [vmem:[%s219 + $0x1a8] sm:$0xff]
      %v361 = vld [vmem:[%s219 + $0x1b0] sm:$0xff]
      %v362 = vld [vmem:[%s219 + $0x1b8] sm:$0xff]
      %v363 = vld [vmem:[%s219 + $0x1c0] sm:$0xff]
      %v364 = vld [vmem:[%s219 + $0x1c8] sm:$0xff]
      %v365 = vld [vmem:[%s219 + $0x1d0] sm:$0xff]
      %v366 = vld [vmem:[%s219 + $0x1d8] sm:$0xff]
      %v367 = vld [vmem:[%s219 + $0x1e0] sm:$0xff]
      %v368 = vld [vmem:[%s219 + $0x1e8] sm:$0xff]
      %v369 = vld [vmem:[%s219 + $0x1f0] sm:$0xff]
      %v370 = vld [vmem:[%s219 + $0x1f8] sm:$0xff]
      %v371 = vld [vmem:[%s219 + $0x200] sm:$0xff]
      %v372 = vld [vmem:[%s219 + $0x208] sm:$0xff]
      %v373 = vld [vmem:[%s219 + $0x210] sm:$0xff]
      %v374 = vld [vmem:[%s219 + $0x218] sm:$0xff]
      %v375 = vld [vmem:[%s219 + $0x220] sm:$0xff]
      %v376 = vld [vmem:[%s219 + $0x228] sm:$0xff]
      %v377 = vld [vmem:[%s219 + $0x230] sm:$0xff]
      %v378 = vld [vmem:[%s219 + $0x238] sm:$0xff]
      %v379 = vld [vmem:[%s219 + $0x240] sm:$0xff]
      %v380 = vld [vmem:[%s219 + $0x248] sm:$0xff]
      %v381 = vld [vmem:[%s219 + $0x250] sm:$0xff]
      %v382 = vld [vmem:[%s219 + $0x258] sm:$0xff]
      %v383 = vld [vmem:[%s219 + $0x260] sm:$0xff]
      %v384 = vld [vmem:[%s219 + $0x268] sm:$0xff]
      %v385 = vld [vmem:[%s219 + $0x270] sm:$0xff]
      %v386 = vld [vmem:[%s219 + $0x278] sm:$0xff]
      %v387 = vld [vmem:[%s219 + $0x280] sm:$0xff]
      %v388 = vld [vmem:[%s219 + $0x288] sm:$0xff]
      %v389 = vld [vmem:[%s219 + $0x290] sm:$0xff]
      %v390 = vld [vmem:[%s219 + $0x298] sm:$0xff]
      %v391 = vld [vmem:[%s219 + $0x2a0] sm:$0xff]
      %v392 = vld [vmem:[%s219 + $0x2a8] sm:$0xff]
      %v393 = vld [vmem:[%s219 + $0x2b0] sm:$0xff]
      %v394 = vld [vmem:[%s219 + $0x2b8] sm:$0xff]
      %v395 = vld [vmem:[%s219 + $0x2c0] sm:$0xff]
      %v396 = vld [vmem:[%s219 + $0x2c8] sm:$0xff]
      %v397 = vld [vmem:[%s219 + $0x2d0] sm:$0xff]
      %v398 = vld [vmem:[%s219 + $0x2d8] sm:$0xff]
      %v399 = vld [vmem:[%s219 + $0x2e0] sm:$0xff]
      %v400 = vld [vmem:[%s219 + $0x2e8] sm:$0xff]
      %v401 = vld [vmem:[%s219 + $0x2f0] sm:$0xff]
      %v402 = vld [vmem:[%s219 + $0x2f8] sm:$0xff]
      %v403 = vld [vmem:[%s219 + $0x300] sm:$0xff]
      %v404 = vld [vmem:[%s219 + $0x308] sm:$0xff]
      %v405 = vld [vmem:[%s219 + $0x310] sm:$0xff]
      %v406 = vld [vmem:[%s219 + $0x318] sm:$0xff]
      %v407 = vld [vmem:[%s219 + $0x320] sm:$0xff]
      %v408 = vld [vmem:[%s219 + $0x328] sm:$0xff]
      %v409 = vld [vmem:[%s219 + $0x330] sm:$0xff]
      %v410 = vld [vmem:[%s219 + $0x338] sm:$0xff]
      %v411 = vld [vmem:[%s219 + $0x340] sm:$0xff]
      %v412 = vld [vmem:[%s219 + $0x348] sm:$0xff]
      %v413 = vld [vmem:[%s219 + $0x350] sm:$0xff]
      %v414 = vld [vmem:[%s219 + $0x358] sm:$0xff]
      %v415 = vld [vmem:[%s219 + $0x360] sm:$0xff]
      %v416 = vld [vmem:[%s219 + $0x368] sm:$0xff]
      %v417 = vld [vmem:[%s219 + $0x370] sm:$0xff]
      %v418 = vld [vmem:[%s219 + $0x378] sm:$0xff]
      %v419 = vld [vmem:[%s219 + $0x380] sm:$0xff]
      %v420 = vld [vmem:[%s219 + $0x388] sm:$0xff]
      %v421 = vld [vmem:[%s219 + $0x390] sm:$0xff]
      %v422 = vld [vmem:[%s219 + $0x398] sm:$0xff]
      %v423 = vld [vmem:[%s219 + $0x3a0] sm:$0xff]
      %v424 = vld [vmem:[%s219 + $0x3a8] sm:$0xff]
      %v425 = vld [vmem:[%s219 + $0x3b0] sm:$0xff]
      %v426 = vld [vmem:[%s219 + $0x3b8] sm:$0xff]
      %v427 = vld [vmem:[%s219 + $0x3c0] sm:$0xff]
      %v428 = vld [vmem:[%s219 + $0x3c8] sm:$0xff]
      %v429 = vld [vmem:[%s219 + $0x3d0] sm:$0xff]
      %v430 = vld [vmem:[%s219 + $0x3d8] sm:$0xff]
      %v431 = vld [vmem:[%s219 + $0x3e0] sm:$0xff]
      %v432 = vld [vmem:[%s219 + $0x3e8] sm:$0xff]
      %v433 = vld [vmem:[%s219 + $0x3f0] sm:$0xff]
      %v434 = vld [vmem:[%s219 + $0x3f8] sm:$0xff]
      %v435 = vld [vmem:[%s226] sm:$0xf]
      %v436 = vld [vmem:[%s226 + $0x4] sm:$0xf]
      %v437 = vld [vmem:[%s226 + $0x8] sm:$0xf]
      %v438 = vld [vmem:[%s226 + $0xc] sm:$0xf]
      %v439 = vld [vmem:[%s226 + $0x10] sm:$0xf]
      %v440 = vld [vmem:[%s226 + $0x14] sm:$0xf]
      %v441 = vld [vmem:[%s226 + $0x18] sm:$0xf]
      %v442 = vld [vmem:[%s226 + $0x1c] sm:$0xf]
      %v443 = vld [vmem:[%s226 + $0x20] sm:$0xf]
      %v444 = vld [vmem:[%s226 + $0x24] sm:$0xf]
      %v445 = vld [vmem:[%s226 + $0x28] sm:$0xf]
      %v446 = vld [vmem:[%s226 + $0x2c] sm:$0xf]
      %v447 = vld [vmem:[%s226 + $0x30] sm:$0xf]
      %v448 = vld [vmem:[%s226 + $0x34] sm:$0xf]
      %v449 = vld [vmem:[%s226 + $0x38] sm:$0xf]
      %v450 = vld [vmem:[%s226 + $0x3c] sm:$0xf]
      %v451 = vld [vmem:[%s226 + $0x40] sm:$0xf]
      %v452 = vld [vmem:[%s226 + $0x44] sm:$0xf]
      %v453 = vld [vmem:[%s226 + $0x48] sm:$0xf]
      %v454 = vld [vmem:[%s226 + $0x4c] sm:$0xf]
      %v455 = vld [vmem:[%s226 + $0x50] sm:$0xf]
      %v456 = vld [vmem:[%s226 + $0x54] sm:$0xf]
      %v457 = vld [vmem:[%s226 + $0x58] sm:$0xf]
      %v458 = vld [vmem:[%s226 + $0x5c] sm:$0xf]
      %v459 = vld [vmem:[%s226 + $0x60] sm:$0xf]
      %v460 = vld [vmem:[%s226 + $0x64] sm:$0xf]
      %v461 = vld [vmem:[%s226 + $0x68] sm:$0xf]
      %v462 = vld [vmem:[%s226 + $0x6c] sm:$0xf]
      %v463 = vld [vmem:[%s226 + $0x70] sm:$0xf]
      %v464 = vld [vmem:[%s226 + $0x74] sm:$0xf]
      %v465 = vld [vmem:[%s226 + $0x78] sm:$0xf]
      %v466 = vld [vmem:[%s226 + $0x7c] sm:$0xf]
      %v467 = vld [vmem:[%s226 + $0x80] sm:$0xf]
      %v468 = vld [vmem:[%s226 + $0x84] sm:$0xf]
      %v469 = vld [vmem:[%s226 + $0x88] sm:$0xf]
      %v470 = vld [vmem:[%s226 + $0x8c] sm:$0xf]
      %v471 = vld [vmem:[%s226 + $0x90] sm:$0xf]
      %v472 = vld [vmem:[%s226 + $0x94] sm:$0xf]
      %v473 = vld [vmem:[%s226 + $0x98] sm:$0xf]
      %v474 = vld [vmem:[%s226 + $0x9c] sm:$0xf]
      %v475 = vld [vmem:[%s226 + $0xa0] sm:$0xf]
      %v476 = vld [vmem:[%s226 + $0xa4] sm:$0xf]
      %v477 = vld [vmem:[%s226 + $0xa8] sm:$0xf]
      %v478 = vld [vmem:[%s226 + $0xac] sm:$0xf]
      %v479 = vld [vmem:[%s226 + $0xb0] sm:$0xf]
      %v480 = vld [vmem:[%s226 + $0xb4] sm:$0xf]
      %v481 = vld [vmem:[%s226 + $0xb8] sm:$0xf]
      %v482 = vld [vmem:[%s226 + $0xbc] sm:$0xf]
      %v483 = vld [vmem:[%s226 + $0xc0] sm:$0xf]
      %v484 = vld [vmem:[%s226 + $0xc4] sm:$0xf]
      %v485 = vld [vmem:[%s226 + $0xc8] sm:$0xf]
      %v486 = vld [vmem:[%s226 + $0xcc] sm:$0xf]
      %v487 = vld [vmem:[%s226 + $0xd0] sm:$0xf]
      %v488 = vld [vmem:[%s226 + $0xd4] sm:$0xf]
      %v489 = vld [vmem:[%s226 + $0xd8] sm:$0xf]
      %v490 = vld [vmem:[%s226 + $0xdc] sm:$0xf]
      %v491 = vld [vmem:[%s226 + $0xe0] sm:$0xf]
      %v492 = vld [vmem:[%s226 + $0xe4] sm:$0xf]
      %v493 = vld [vmem:[%s226 + $0xe8] sm:$0xf]
      %v494 = vld [vmem:[%s226 + $0xec] sm:$0xf]
      %v495 = vld [vmem:[%s226 + $0xf0] sm:$0xf]
      %v496 = vld [vmem:[%s226 + $0xf4] sm:$0xf]
      %v497 = vld [vmem:[%s226 + $0xf8] sm:$0xf]
      %v498 = vld [vmem:[%s226 + $0xfc] sm:$0xf]
      %v499 = vld [vmem:[%s226 + $0x100] sm:$0xf]
      %v500 = vld [vmem:[%s226 + $0x104] sm:$0xf]
      %v501 = vld [vmem:[%s226 + $0x108] sm:$0xf]
      %v502 = vld [vmem:[%s226 + $0x10c] sm:$0xf]
      %v503 = vld [vmem:[%s226 + $0x110] sm:$0xf]
      %v504 = vld [vmem:[%s226 + $0x114] sm:$0xf]
      %v505 = vld [vmem:[%s226 + $0x118] sm:$0xf]
      %v506 = vld [vmem:[%s226 + $0x11c] sm:$0xf]
      %v507 = vld [vmem:[%s226 + $0x120] sm:$0xf]
      %v508 = vld [vmem:[%s226 + $0x124] sm:$0xf]
      %v509 = vld [vmem:[%s226 + $0x128] sm:$0xf]
      %v510 = vld [vmem:[%s226 + $0x12c] sm:$0xf]
      %v511 = vld [vmem:[%s226 + $0x130] sm:$0xf]
      %v512 = vld [vmem:[%s226 + $0x134] sm:$0xf]
      %v513 = vld [vmem:[%s226 + $0x138] sm:$0xf]
      %v514 = vld [vmem:[%s226 + $0x13c] sm:$0xf]
      %v515 = vld [vmem:[%s226 + $0x140] sm:$0xf]
      %v516 = vld [vmem:[%s226 + $0x144] sm:$0xf]
      %v517 = vld [vmem:[%s226 + $0x148] sm:$0xf]
      %v518 = vld [vmem:[%s226 + $0x14c] sm:$0xf]
      %v519 = vld [vmem:[%s226 + $0x150] sm:$0xf]
      %v520 = vld [vmem:[%s226 + $0x154] sm:$0xf]
      %v521 = vld [vmem:[%s226 + $0x158] sm:$0xf]
      %v522 = vld [vmem:[%s226 + $0x15c] sm:$0xf]
      %v523 = vld [vmem:[%s226 + $0x160] sm:$0xf]
      %v524 = vld [vmem:[%s226 + $0x164] sm:$0xf]
      %v525 = vld [vmem:[%s226 + $0x168] sm:$0xf]
      %v526 = vld [vmem:[%s226 + $0x16c] sm:$0xf]
      %v527 = vld [vmem:[%s226 + $0x170] sm:$0xf]
      %v528 = vld [vmem:[%s226 + $0x174] sm:$0xf]
      %v529 = vld [vmem:[%s226 + $0x178] sm:$0xf]
      %v530 = vld [vmem:[%s226 + $0x17c] sm:$0xf]
      %v531 = vld [vmem:[%s226 + $0x180] sm:$0xf]
      %v532 = vld [vmem:[%s226 + $0x184] sm:$0xf]
      %v533 = vld [vmem:[%s226 + $0x188] sm:$0xf]
      %v534 = vld [vmem:[%s226 + $0x18c] sm:$0xf]
      %v535 = vld [vmem:[%s226 + $0x190] sm:$0xf]
      %v536 = vld [vmem:[%s226 + $0x194] sm:$0xf]
      %v537 = vld [vmem:[%s226 + $0x198] sm:$0xf]
      %v538 = vld [vmem:[%s226 + $0x19c] sm:$0xf]
      %v539 = vld [vmem:[%s226 + $0x1a0] sm:$0xf]
      %v540 = vld [vmem:[%s226 + $0x1a4] sm:$0xf]
      %v541 = vld [vmem:[%s226 + $0x1a8] sm:$0xf]
      %v542 = vld [vmem:[%s226 + $0x1ac] sm:$0xf]
      %v543 = vld [vmem:[%s226 + $0x1b0] sm:$0xf]
      %v544 = vld [vmem:[%s226 + $0x1b4] sm:$0xf]
      %v545 = vld [vmem:[%s226 + $0x1b8] sm:$0xf]
      %v546 = vld [vmem:[%s226 + $0x1bc] sm:$0xf]
      %v547 = vld [vmem:[%s226 + $0x1c0] sm:$0xf]
      %v548 = vld [vmem:[%s226 + $0x1c4] sm:$0xf]
      %v549 = vld [vmem:[%s226 + $0x1c8] sm:$0xf]
      %v550 = vld [vmem:[%s226 + $0x1cc] sm:$0xf]
      %v551 = vld [vmem:[%s226 + $0x1d0] sm:$0xf]
      %v552 = vld [vmem:[%s226 + $0x1d4] sm:$0xf]
      %v553 = vld [vmem:[%s226 + $0x1d8] sm:$0xf]
      %v554 = vld [vmem:[%s226 + $0x1dc] sm:$0xf]
      %v555 = vld [vmem:[%s226 + $0x1e0] sm:$0xf]
      %v556 = vld [vmem:[%s226 + $0x1e4] sm:$0xf]
      %v557 = vld [vmem:[%s226 + $0x1e8] sm:$0xf]
      %v558 = vld [vmem:[%s226 + $0x1ec] sm:$0xf]
      %v559 = vld [vmem:[%s226 + $0x1f0] sm:$0xf]
      %v560 = vld [vmem:[%s226 + $0x1f4] sm:$0xf]
      %v561 = vld [vmem:[%s226 + $0x1f8] sm:$0xf]
      %v562 = vld [vmem:[%s226 + $0x1fc] sm:$0xf]
      %v691 = vunpack.c.l.b16 %v307
      %v692 = vunpack.c.h.b16 %v307
      %v693 = vunpack.c.l.b16 %v308
      %v694 = vunpack.c.h.b16 %v308
      %v695 = vunpack.c.l.b16 %v309
      %v696 = vunpack.c.h.b16 %v309
      %v697 = vunpack.c.l.b16 %v310
      %v698 = vunpack.c.h.b16 %v310
      %v699 = vunpack.c.l.b16 %v311
      %v700 = vunpack.c.h.b16 %v311
      %v701 = vunpack.c.l.b16 %v312
      %v702 = vunpack.c.h.b16 %v312
      %v703 = vunpack.c.l.b16 %v313
      %v704 = vunpack.c.h.b16 %v313
      %v705 = vunpack.c.l.b16 %v314
      %v706 = vunpack.c.h.b16 %v314
      %v707 = vunpack.c.l.b16 %v315
      %v708 = vunpack.c.h.b16 %v315
      %v709 = vunpack.c.l.b16 %v316
      %v710 = vunpack.c.h.b16 %v316
      %v711 = vunpack.c.l.b16 %v317
      %v712 = vunpack.c.h.b16 %v317
      %v713 = vunpack.c.l.b16 %v318
      %v714 = vunpack.c.h.b16 %v318
      %v715 = vunpack.c.l.b16 %v319
      %v716 = vunpack.c.h.b16 %v319
      %v717 = vunpack.c.l.b16 %v320
      %v718 = vunpack.c.h.b16 %v320
      %v719 = vunpack.c.l.b16 %v321
      %v720 = vunpack.c.h.b16 %v321
      %v721 = vunpack.c.l.b16 %v322
      %v722 = vunpack.c.h.b16 %v322
      %v723 = vunpack.c.l.b16 %v323
      %v724 = vunpack.c.h.b16 %v323
      %v725 = vunpack.c.l.b16 %v324
      %v726 = vunpack.c.h.b16 %v324
      %v727 = vunpack.c.l.b16 %v325
      %v728 = vunpack.c.h.b16 %v325
      %v729 = vunpack.c.l.b16 %v326
      %v730 = vunpack.c.h.b16 %v326
      %v731 = vunpack.c.l.b16 %v327
      %v732 = vunpack.c.h.b16 %v327
      %v733 = vunpack.c.l.b16 %v328
      %v734 = vunpack.c.h.b16 %v328
      %v735 = vunpack.c.l.b16 %v329
      %v736 = vunpack.c.h.b16 %v329
      %v737 = vunpack.c.l.b16 %v330
      %v738 = vunpack.c.h.b16 %v330
      %v739 = vunpack.c.l.b16 %v331
      %v740 = vunpack.c.h.b16 %v331
      %v741 = vunpack.c.l.b16 %v332
      %v742 = vunpack.c.h.b16 %v332
      %v743 = vunpack.c.l.b16 %v333
      %v744 = vunpack.c.h.b16 %v333
      %v745 = vunpack.c.l.b16 %v334
      %v746 = vunpack.c.h.b16 %v334
      %v747 = vunpack.c.l.b16 %v335
      %v748 = vunpack.c.h.b16 %v335
      %v749 = vunpack.c.l.b16 %v336
      %v750 = vunpack.c.h.b16 %v336
      %v751 = vunpack.c.l.b16 %v337
      %v752 = vunpack.c.h.b16 %v337
      %v753 = vunpack.c.l.b16 %v338
      %v754 = vunpack.c.h.b16 %v338
      %v755 = vunpack.c.l.b16 %v339
      %v756 = vunpack.c.h.b16 %v339
      %v757 = vunpack.c.l.b16 %v340
      %v758 = vunpack.c.h.b16 %v340
      %v759 = vunpack.c.l.b16 %v341
      %v760 = vunpack.c.h.b16 %v341
      %v761 = vunpack.c.l.b16 %v342
      %v762 = vunpack.c.h.b16 %v342
      %v763 = vunpack.c.l.b16 %v343
      %v764 = vunpack.c.h.b16 %v343
      %v765 = vunpack.c.l.b16 %v344
      %v766 = vunpack.c.h.b16 %v344
      %v767 = vunpack.c.l.b16 %v345
      %v768 = vunpack.c.h.b16 %v345
      %v769 = vunpack.c.l.b16 %v346
      %v770 = vunpack.c.h.b16 %v346
      %v771 = vunpack.c.l.b16 %v347
      %v772 = vunpack.c.h.b16 %v347
      %v773 = vunpack.c.l.b16 %v348
      %v774 = vunpack.c.h.b16 %v348
      %v775 = vunpack.c.l.b16 %v349
      %v776 = vunpack.c.h.b16 %v349
      %v777 = vunpack.c.l.b16 %v350
      %v778 = vunpack.c.h.b16 %v350
      %v779 = vunpack.c.l.b16 %v351
      %v780 = vunpack.c.h.b16 %v351
      %v781 = vunpack.c.l.b16 %v352
      %v782 = vunpack.c.h.b16 %v352
      %v783 = vunpack.c.l.b16 %v353
      %v784 = vunpack.c.h.b16 %v353
      %v785 = vunpack.c.l.b16 %v354
      %v786 = vunpack.c.h.b16 %v354
      %v787 = vunpack.c.l.b16 %v355
      %v788 = vunpack.c.h.b16 %v355
      %v789 = vunpack.c.l.b16 %v356
      %v790 = vunpack.c.h.b16 %v356
      %v791 = vunpack.c.l.b16 %v357
      %v792 = vunpack.c.h.b16 %v357
      %v793 = vunpack.c.l.b16 %v358
      %v794 = vunpack.c.h.b16 %v358
      %v795 = vunpack.c.l.b16 %v359
      %v796 = vunpack.c.h.b16 %v359
      %v797 = vunpack.c.l.b16 %v360
      %v798 = vunpack.c.h.b16 %v360
      %v799 = vunpack.c.l.b16 %v361
      %v800 = vunpack.c.h.b16 %v361
      %v801 = vunpack.c.l.b16 %v362
      %v802 = vunpack.c.h.b16 %v362
      %v803 = vunpack.c.l.b16 %v363
      %v804 = vunpack.c.h.b16 %v363
      %v805 = vunpack.c.l.b16 %v364
      %v806 = vunpack.c.h.b16 %v364
      %v807 = vunpack.c.l.b16 %v365
      %v808 = vunpack.c.h.b16 %v365
      %v809 = vunpack.c.l.b16 %v366
      %v810 = vunpack.c.h.b16 %v366
      %v811 = vunpack.c.l.b16 %v367
      %v812 = vunpack.c.h.b16 %v367
      %v813 = vunpack.c.l.b16 %v368
      %v814 = vunpack.c.h.b16 %v368
      %v815 = vunpack.c.l.b16 %v369
      %v816 = vunpack.c.h.b16 %v369
      %v817 = vunpack.c.l.b16 %v370
      %v818 = vunpack.c.h.b16 %v370
      %v819 = vunpack.c.l.b16 %v371
      %v820 = vunpack.c.h.b16 %v371
      %v821 = vunpack.c.l.b16 %v372
      %v822 = vunpack.c.h.b16 %v372
      %v823 = vunpack.c.l.b16 %v373
      %v824 = vunpack.c.h.b16 %v373
      %v825 = vunpack.c.l.b16 %v374
      %v826 = vunpack.c.h.b16 %v374
      %v827 = vunpack.c.l.b16 %v375
      %v828 = vunpack.c.h.b16 %v375
      %v829 = vunpack.c.l.b16 %v376
      %v830 = vunpack.c.h.b16 %v376
      %v831 = vunpack.c.l.b16 %v377
      %v832 = vunpack.c.h.b16 %v377
      %v833 = vunpack.c.l.b16 %v378
      %v834 = vunpack.c.h.b16 %v378
      %v835 = vunpack.c.l.b16 %v379
      %v836 = vunpack.c.h.b16 %v379
      %v837 = vunpack.c.l.b16 %v380
      %v838 = vunpack.c.h.b16 %v380
      %v839 = vunpack.c.l.b16 %v381
      %v840 = vunpack.c.h.b16 %v381
      %v841 = vunpack.c.l.b16 %v382
      %v842 = vunpack.c.h.b16 %v382
      %v843 = vunpack.c.l.b16 %v383
      %v844 = vunpack.c.h.b16 %v383
      %v845 = vunpack.c.l.b16 %v384
      %v846 = vunpack.c.h.b16 %v384
      %v847 = vunpack.c.l.b16 %v385
      %v848 = vunpack.c.h.b16 %v385
      %v849 = vunpack.c.l.b16 %v386
      %v850 = vunpack.c.h.b16 %v386
      %v851 = vunpack.c.l.b16 %v387
      %v852 = vunpack.c.h.b16 %v387
      %v853 = vunpack.c.l.b16 %v388
      %v854 = vunpack.c.h.b16 %v388
      %v855 = vunpack.c.l.b16 %v389
      %v856 = vunpack.c.h.b16 %v389
      %v857 = vunpack.c.l.b16 %v390
      %v858 = vunpack.c.h.b16 %v390
      %v859 = vunpack.c.l.b16 %v391
      %v860 = vunpack.c.h.b16 %v391
      %v861 = vunpack.c.l.b16 %v392
      %v862 = vunpack.c.h.b16 %v392
      %v863 = vunpack.c.l.b16 %v393
      %v864 = vunpack.c.h.b16 %v393
      %v865 = vunpack.c.l.b16 %v394
      %v866 = vunpack.c.h.b16 %v394
      %v867 = vunpack.c.l.b16 %v395
      %v868 = vunpack.c.h.b16 %v395
      %v869 = vunpack.c.l.b16 %v396
      %v870 = vunpack.c.h.b16 %v396
      %v871 = vunpack.c.l.b16 %v397
      %v872 = vunpack.c.h.b16 %v397
      %v873 = vunpack.c.l.b16 %v398
      %v874 = vunpack.c.h.b16 %v398
      %v875 = vunpack.c.l.b16 %v399
      %v876 = vunpack.c.h.b16 %v399
      %v877 = vunpack.c.l.b16 %v400
      %v878 = vunpack.c.h.b16 %v400
      %v879 = vunpack.c.l.b16 %v401
      %v880 = vunpack.c.h.b16 %v401
      %v881 = vunpack.c.l.b16 %v402
      %v882 = vunpack.c.h.b16 %v402
      %v883 = vunpack.c.l.b16 %v403
      %v884 = vunpack.c.h.b16 %v403
      %v885 = vunpack.c.l.b16 %v404
      %v886 = vunpack.c.h.b16 %v404
      %v887 = vunpack.c.l.b16 %v405
      %v888 = vunpack.c.h.b16 %v405
      %v889 = vunpack.c.l.b16 %v406
      %v890 = vunpack.c.h.b16 %v406
      %v891 = vunpack.c.l.b16 %v407
      %v892 = vunpack.c.h.b16 %v407
      %v893 = vunpack.c.l.b16 %v408
      %v894 = vunpack.c.h.b16 %v408
      %v895 = vunpack.c.l.b16 %v409
      %v896 = vunpack.c.h.b16 %v409
      %v897 = vunpack.c.l.b16 %v410
      %v898 = vunpack.c.h.b16 %v410
      %v899 = vunpack.c.l.b16 %v411
      %v900 = vunpack.c.h.b16 %v411
      %v901 = vunpack.c.l.b16 %v412
      %v902 = vunpack.c.h.b16 %v412
      %v903 = vunpack.c.l.b16 %v413
      %v904 = vunpack.c.h.b16 %v413
      %v905 = vunpack.c.l.b16 %v414
      %v906 = vunpack.c.h.b16 %v414
      %v907 = vunpack.c.l.b16 %v415
      %v908 = vunpack.c.h.b16 %v415
      %v909 = vunpack.c.l.b16 %v416
      %v910 = vunpack.c.h.b16 %v416
      %v911 = vunpack.c.l.b16 %v417
      %v912 = vunpack.c.h.b16 %v417
      %v913 = vunpack.c.l.b16 %v418
      %v914 = vunpack.c.h.b16 %v418
      %v915 = vunpack.c.l.b16 %v419
      %v916 = vunpack.c.h.b16 %v419
      %v917 = vunpack.c.l.b16 %v420
      %v918 = vunpack.c.h.b16 %v420
      %v919 = vunpack.c.l.b16 %v421
      %v920 = vunpack.c.h.b16 %v421
      %v921 = vunpack.c.l.b16 %v422
      %v922 = vunpack.c.h.b16 %v422
      %v923 = vunpack.c.l.b16 %v423
      %v924 = vunpack.c.h.b16 %v423
      %v925 = vunpack.c.l.b16 %v424
      %v926 = vunpack.c.h.b16 %v424
      %v927 = vunpack.c.l.b16 %v425
      %v928 = vunpack.c.h.b16 %v425
      %v929 = vunpack.c.l.b16 %v426
      %v930 = vunpack.c.h.b16 %v426
      %v931 = vunpack.c.l.b16 %v427
      %v932 = vunpack.c.h.b16 %v427
      %v933 = vunpack.c.l.b16 %v428
      %v934 = vunpack.c.h.b16 %v428
      %v935 = vunpack.c.l.b16 %v429
      %v936 = vunpack.c.h.b16 %v429
      %v937 = vunpack.c.l.b16 %v430
      %v938 = vunpack.c.h.b16 %v430
      %v939 = vunpack.c.l.b16 %v431
      %v940 = vunpack.c.h.b16 %v431
      %v941 = vunpack.c.l.b16 %v432
      %v942 = vunpack.c.h.b16 %v432
      %v943 = vunpack.c.l.b16 %v433
      %v944 = vunpack.c.h.b16 %v433
      %v945 = vunpack.c.l.b16 %v434
      %v946 = vunpack.c.h.b16 %v434
      %v947 = vpack.c.b16 %v699, %v691
      %v948 = vpack.c.b16 %v700, %v692
      %v949 = vpack.c.b16 %v701, %v693
      %v950 = vpack.c.b16 %v702, %v694
      %v951 = vpack.c.b16 %v703, %v695
      %v952 = vpack.c.b16 %v704, %v696
      %v953 = vpack.c.b16 %v705, %v697
      %v954 = vpack.c.b16 %v706, %v698
      %v955 = vpack.c.b16 %v715, %v707
      %v956 = vpack.c.b16 %v716, %v708
      %v957 = vpack.c.b16 %v717, %v709
      %v958 = vpack.c.b16 %v718, %v710
      %v959 = vpack.c.b16 %v719, %v711
      %v960 = vpack.c.b16 %v720, %v712
      %v961 = vpack.c.b16 %v721, %v713
      %v962 = vpack.c.b16 %v722, %v714
      %v963 = vpack.c.b16 %v731, %v723
      %v964 = vpack.c.b16 %v732, %v724
      %v965 = vpack.c.b16 %v733, %v725
      %v966 = vpack.c.b16 %v734, %v726
      %v967 = vpack.c.b16 %v735, %v727
      %v968 = vpack.c.b16 %v736, %v728
      %v969 = vpack.c.b16 %v737, %v729
      %v970 = vpack.c.b16 %v738, %v730
      %v971 = vpack.c.b16 %v747, %v739
      %v972 = vpack.c.b16 %v748, %v740
      %v973 = vpack.c.b16 %v749, %v741
      %v974 = vpack.c.b16 %v750, %v742
      %v975 = vpack.c.b16 %v751, %v743
      %v976 = vpack.c.b16 %v752, %v744
      %v977 = vpack.c.b16 %v753, %v745
      %v978 = vpack.c.b16 %v754, %v746
      %v979 = vpack.c.b16 %v763, %v755
      %v980 = vpack.c.b16 %v764, %v756
      %v981 = vpack.c.b16 %v765, %v757
      %v982 = vpack.c.b16 %v766, %v758
      %v983 = vpack.c.b16 %v767, %v759
      %v984 = vpack.c.b16 %v768, %v760
      %v985 = vpack.c.b16 %v769, %v761
      %v986 = vpack.c.b16 %v770, %v762
      %v987 = vpack.c.b16 %v779, %v771
      %v988 = vpack.c.b16 %v780, %v772
      %v989 = vpack.c.b16 %v781, %v773
      %v990 = vpack.c.b16 %v782, %v774
      %v991 = vpack.c.b16 %v783, %v775
      %v992 = vpack.c.b16 %v784, %v776
      %v993 = vpack.c.b16 %v785, %v777
      %v994 = vpack.c.b16 %v786, %v778
      %v995 = vpack.c.b16 %v795, %v787
      %v996 = vpack.c.b16 %v796, %v788
      %v997 = vpack.c.b16 %v797, %v789
      %v998 = vpack.c.b16 %v798, %v790
      %v999 = vpack.c.b16 %v799, %v791
      %v1000 = vpack.c.b16 %v800, %v792
      %v1001 = vpack.c.b16 %v801, %v793
      %v1002 = vpack.c.b16 %v802, %v794
      %v1003 = vpack.c.b16 %v811, %v803
      %v1004 = vpack.c.b16 %v812, %v804
      %v1005 = vpack.c.b16 %v813, %v805
      %v1006 = vpack.c.b16 %v814, %v806
      %v1007 = vpack.c.b16 %v815, %v807
      %v1008 = vpack.c.b16 %v816, %v808
      %v1009 = vpack.c.b16 %v817, %v809
      %v1010 = vpack.c.b16 %v818, %v810
      %v1011 = vpack.c.b16 %v827, %v819
      %v1012 = vpack.c.b16 %v828, %v820
      %v1013 = vpack.c.b16 %v829, %v821
      %v1014 = vpack.c.b16 %v830, %v822
      %v1015 = vpack.c.b16 %v831, %v823
      %v1016 = vpack.c.b16 %v832, %v824
      %v1017 = vpack.c.b16 %v833, %v825
      %v1018 = vpack.c.b16 %v834, %v826
      %v1019 = vpack.c.b16 %v843, %v835
      %v1020 = vpack.c.b16 %v844, %v836
      %v1021 = vpack.c.b16 %v845, %v837
      %v1022 = vpack.c.b16 %v846, %v838
      %v1023 = vpack.c.b16 %v847, %v839
      %v1024 = vpack.c.b16 %v848, %v840
      %v1025 = vpack.c.b16 %v849, %v841
      %v1026 = vpack.c.b16 %v850, %v842
      %v1027 = vpack.c.b16 %v859, %v851
      %v1028 = vpack.c.b16 %v860, %v852
      %v1029 = vpack.c.b16 %v861, %v853
      %v1030 = vpack.c.b16 %v862, %v854
      %v1031 = vpack.c.b16 %v863, %v855
      %v1032 = vpack.c.b16 %v864, %v856
      %v1033 = vpack.c.b16 %v865, %v857
      %v1034 = vpack.c.b16 %v866, %v858
      %v1035 = vpack.c.b16 %v875, %v867
      %v1036 = vpack.c.b16 %v876, %v868
      %v1037 = vpack.c.b16 %v877, %v869
      %v1038 = vpack.c.b16 %v878, %v870
      %v1039 = vpack.c.b16 %v879, %v871
      %v1040 = vpack.c.b16 %v880, %v872
      %v1041 = vpack.c.b16 %v881, %v873
      %v1042 = vpack.c.b16 %v882, %v874
      %v1043 = vpack.c.b16 %v891, %v883
      %v1044 = vpack.c.b16 %v892, %v884
      %v1045 = vpack.c.b16 %v893, %v885
      %v1046 = vpack.c.b16 %v894, %v886
      %v1047 = vpack.c.b16 %v895, %v887
      %v1048 = vpack.c.b16 %v896, %v888
      %v1049 = vpack.c.b16 %v897, %v889
      %v1050 = vpack.c.b16 %v898, %v890
      %v1051 = vpack.c.b16 %v907, %v899
      %v1052 = vpack.c.b16 %v908, %v900
      %v1053 = vpack.c.b16 %v909, %v901
      %v1054 = vpack.c.b16 %v910, %v902
      %v1055 = vpack.c.b16 %v911, %v903
      %v1056 = vpack.c.b16 %v912, %v904
      %v1057 = vpack.c.b16 %v913, %v905
      %v1058 = vpack.c.b16 %v914, %v906
      %v1059 = vpack.c.b16 %v923, %v915
      %v1060 = vpack.c.b16 %v924, %v916
      %v1061 = vpack.c.b16 %v925, %v917
      %v1062 = vpack.c.b16 %v926, %v918
      %v1063 = vpack.c.b16 %v927, %v919
      %v1064 = vpack.c.b16 %v928, %v920
      %v1065 = vpack.c.b16 %v929, %v921
      %v1066 = vpack.c.b16 %v930, %v922
      %v1067 = vpack.c.b16 %v939, %v931
      %v1068 = vpack.c.b16 %v940, %v932
      %v1069 = vpack.c.b16 %v941, %v933
      %v1070 = vpack.c.b16 %v942, %v934
      %v1071 = vpack.c.b16 %v943, %v935
      %v1072 = vpack.c.b16 %v944, %v936
      %v1073 = vpack.c.b16 %v945, %v937
      %v1074 = vpack.c.b16 %v946, %v938
      %v1331 = vunpack.c.l.b16 %v435
      %v1332 = vunpack.c.l.b16 %v436
      %v1333 = vunpack.c.l.b16 %v437
      %v1334 = vunpack.c.l.b16 %v438
      %v1335 = vunpack.c.l.b16 %v439
      %v1336 = vunpack.c.l.b16 %v440
      %v1337 = vunpack.c.l.b16 %v441
      %v1338 = vunpack.c.l.b16 %v442
      %v1339 = vunpack.c.l.b16 %v443
      %v1340 = vunpack.c.l.b16 %v444
      %v1341 = vunpack.c.l.b16 %v445
      %v1342 = vunpack.c.l.b16 %v446
      %v1343 = vunpack.c.l.b16 %v447
      %v1344 = vunpack.c.l.b16 %v448
      %v1345 = vunpack.c.l.b16 %v449
      %v1346 = vunpack.c.l.b16 %v450
      %v1347 = vunpack.c.l.b16 %v451
      %v1348 = vunpack.c.l.b16 %v452
      %v1349 = vunpack.c.l.b16 %v453
      %v1350 = vunpack.c.l.b16 %v454
      %v1351 = vunpack.c.l.b16 %v455
      %v1352 = vunpack.c.l.b16 %v456
      %v1353 = vunpack.c.l.b16 %v457
      %v1354 = vunpack.c.l.b16 %v458
      %v1355 = vunpack.c.l.b16 %v459
      %v1356 = vunpack.c.l.b16 %v460
      %v1357 = vunpack.c.l.b16 %v461
      %v1358 = vunpack.c.l.b16 %v462
      %v1359 = vunpack.c.l.b16 %v463
      %v1360 = vunpack.c.l.b16 %v464
      %v1361 = vunpack.c.l.b16 %v465
      %v1362 = vunpack.c.l.b16 %v466
      %v1363 = vunpack.c.l.b16 %v467
      %v1364 = vunpack.c.l.b16 %v468
      %v1365 = vunpack.c.l.b16 %v469
      %v1366 = vunpack.c.l.b16 %v470
      %v1367 = vunpack.c.l.b16 %v471
      %v1368 = vunpack.c.l.b16 %v472
      %v1369 = vunpack.c.l.b16 %v473
      %v1370 = vunpack.c.l.b16 %v474
      %v1371 = vunpack.c.l.b16 %v475
      %v1372 = vunpack.c.l.b16 %v476
      %v1373 = vunpack.c.l.b16 %v477
      %v1374 = vunpack.c.l.b16 %v478
      %v1375 = vunpack.c.l.b16 %v479
      %v1376 = vunpack.c.l.b16 %v480
      %v1377 = vunpack.c.l.b16 %v481
      %v1378 = vunpack.c.l.b16 %v482
      %v1379 = vunpack.c.l.b16 %v483
      %v1380 = vunpack.c.l.b16 %v484
      %v1381 = vunpack.c.l.b16 %v485
      %v1382 = vunpack.c.l.b16 %v486
      %v1383 = vunpack.c.l.b16 %v487
      %v1384 = vunpack.c.l.b16 %v488
      %v1385 = vunpack.c.l.b16 %v489
      %v1386 = vunpack.c.l.b16 %v490
      %v1387 = vunpack.c.l.b16 %v491
      %v1388 = vunpack.c.l.b16 %v492
      %v1389 = vunpack.c.l.b16 %v493
      %v1390 = vunpack.c.l.b16 %v494
      %v1391 = vunpack.c.l.b16 %v495
      %v1392 = vunpack.c.l.b16 %v496
      %v1393 = vunpack.c.l.b16 %v497
      %v1394 = vunpack.c.l.b16 %v498
      %v1395 = vunpack.c.l.b16 %v499
      %v1396 = vunpack.c.l.b16 %v500
      %v1397 = vunpack.c.l.b16 %v501
      %v1398 = vunpack.c.l.b16 %v502
      %v1399 = vunpack.c.l.b16 %v503
      %v1400 = vunpack.c.l.b16 %v504
      %v1401 = vunpack.c.l.b16 %v505
      %v1402 = vunpack.c.l.b16 %v506
      %v1403 = vunpack.c.l.b16 %v507
      %v1404 = vunpack.c.l.b16 %v508
      %v1405 = vunpack.c.l.b16 %v509
      %v1406 = vunpack.c.l.b16 %v510
      %v1407 = vunpack.c.l.b16 %v511
      %v1408 = vunpack.c.l.b16 %v512
      %v1409 = vunpack.c.l.b16 %v513
      %v1410 = vunpack.c.l.b16 %v514
      %v1411 = vunpack.c.l.b16 %v515
      %v1412 = vunpack.c.l.b16 %v516
      %v1413 = vunpack.c.l.b16 %v517
      %v1414 = vunpack.c.l.b16 %v518
      %v1415 = vunpack.c.l.b16 %v519
      %v1416 = vunpack.c.l.b16 %v520
      %v1417 = vunpack.c.l.b16 %v521
      %v1418 = vunpack.c.l.b16 %v522
      %v1419 = vunpack.c.l.b16 %v523
      %v1420 = vunpack.c.l.b16 %v524
      %v1421 = vunpack.c.l.b16 %v525
      %v1422 = vunpack.c.l.b16 %v526
      %v1423 = vunpack.c.l.b16 %v527
      %v1424 = vunpack.c.l.b16 %v528
      %v1425 = vunpack.c.l.b16 %v529
      %v1426 = vunpack.c.l.b16 %v530
      %v1427 = vunpack.c.l.b16 %v531
      %v1428 = vunpack.c.l.b16 %v532
      %v1429 = vunpack.c.l.b16 %v533
      %v1430 = vunpack.c.l.b16 %v534
      %v1431 = vunpack.c.l.b16 %v535
      %v1432 = vunpack.c.l.b16 %v536
      %v1433 = vunpack.c.l.b16 %v537
      %v1434 = vunpack.c.l.b16 %v538
      %v1435 = vunpack.c.l.b16 %v539
      %v1436 = vunpack.c.l.b16 %v540
      %v1437 = vunpack.c.l.b16 %v541
      %v1438 = vunpack.c.l.b16 %v542
      %v1439 = vunpack.c.l.b16 %v543
      %v1440 = vunpack.c.l.b16 %v544
      %v1441 = vunpack.c.l.b16 %v545
      %v1442 = vunpack.c.l.b16 %v546
      %v1443 = vunpack.c.l.b16 %v547
      %v1444 = vunpack.c.l.b16 %v548
      %v1445 = vunpack.c.l.b16 %v549
      %v1446 = vunpack.c.l.b16 %v550
      %v1447 = vunpack.c.l.b16 %v551
      %v1448 = vunpack.c.l.b16 %v552
      %v1449 = vunpack.c.l.b16 %v553
      %v1450 = vunpack.c.l.b16 %v554
      %v1451 = vunpack.c.l.b16 %v555
      %v1452 = vunpack.c.l.b16 %v556
      %v1453 = vunpack.c.l.b16 %v557
      %v1454 = vunpack.c.l.b16 %v558
      %v1455 = vunpack.c.l.b16 %v559
      %v1456 = vunpack.c.l.b16 %v560
      %v1457 = vunpack.c.l.b16 %v561
      %v1458 = vunpack.c.l.b16 %v562
      %v1459 = vpack.c.b16 %v1332, %v1331
      %v1460 = vpack.c.b16 %v1334, %v1333
      %v1461 = vpack.c.b16 %v1336, %v1335
      %v1462 = vpack.c.b16 %v1338, %v1337
      %v1463 = vpack.c.b16 %v1340, %v1339
      %v1464 = vpack.c.b16 %v1342, %v1341
      %v1465 = vpack.c.b16 %v1344, %v1343
      %v1466 = vpack.c.b16 %v1346, %v1345
      %v1467 = vpack.c.b16 %v1348, %v1347
      %v1468 = vpack.c.b16 %v1350, %v1349
      %v1469 = vpack.c.b16 %v1352, %v1351
      %v1470 = vpack.c.b16 %v1354, %v1353
      %v1471 = vpack.c.b16 %v1356, %v1355
      %v1472 = vpack.c.b16 %v1358, %v1357
      %v1473 = vpack.c.b16 %v1360, %v1359
      %v1474 = vpack.c.b16 %v1362, %v1361
      %v1475 = vpack.c.b16 %v1364, %v1363
      %v1476 = vpack.c.b16 %v1366, %v1365
      %v1477 = vpack.c.b16 %v1368, %v1367
      %v1478 = vpack.c.b16 %v1370, %v1369
      %v1479 = vpack.c.b16 %v1372, %v1371
      %v1480 = vpack.c.b16 %v1374, %v1373
      %v1481 = vpack.c.b16 %v1376, %v1375
      %v1482 = vpack.c.b16 %v1378, %v1377
      %v1483 = vpack.c.b16 %v1380, %v1379
      %v1484 = vpack.c.b16 %v1382, %v1381
      %v1485 = vpack.c.b16 %v1384, %v1383
      %v1486 = vpack.c.b16 %v1386, %v1385
      %v1487 = vpack.c.b16 %v1388, %v1387
      %v1488 = vpack.c.b16 %v1390, %v1389
      %v1489 = vpack.c.b16 %v1392, %v1391
      %v1490 = vpack.c.b16 %v1394, %v1393
      %v1491 = vpack.c.b16 %v1396, %v1395
      %v1492 = vpack.c.b16 %v1398, %v1397
      %v1493 = vpack.c.b16 %v1400, %v1399
      %v1494 = vpack.c.b16 %v1402, %v1401
      %v1495 = vpack.c.b16 %v1404, %v1403
      %v1496 = vpack.c.b16 %v1406, %v1405
      %v1497 = vpack.c.b16 %v1408, %v1407
      %v1498 = vpack.c.b16 %v1410, %v1409
      %v1499 = vpack.c.b16 %v1412, %v1411
      %v1500 = vpack.c.b16 %v1414, %v1413
      %v1501 = vpack.c.b16 %v1416, %v1415
      %v1502 = vpack.c.b16 %v1418, %v1417
      %v1503 = vpack.c.b16 %v1420, %v1419
      %v1504 = vpack.c.b16 %v1422, %v1421
      %v1505 = vpack.c.b16 %v1424, %v1423
      %v1506 = vpack.c.b16 %v1426, %v1425
      %v1507 = vpack.c.b16 %v1428, %v1427
      %v1508 = vpack.c.b16 %v1430, %v1429
      %v1509 = vpack.c.b16 %v1432, %v1431
      %v1510 = vpack.c.b16 %v1434, %v1433
      %v1511 = vpack.c.b16 %v1436, %v1435
      %v1512 = vpack.c.b16 %v1438, %v1437
      %v1513 = vpack.c.b16 %v1440, %v1439
      %v1514 = vpack.c.b16 %v1442, %v1441
      %v1515 = vpack.c.b16 %v1444, %v1443
      %v1516 = vpack.c.b16 %v1446, %v1445
      %v1517 = vpack.c.b16 %v1448, %v1447
      %v1518 = vpack.c.b16 %v1450, %v1449
      %v1519 = vpack.c.b16 %v1452, %v1451
      %v1520 = vpack.c.b16 %v1454, %v1453
      %v1521 = vpack.c.b16 %v1456, %v1455
      %v1522 = vpack.c.b16 %v1458, %v1457
      %1587 = vmatprep.subr.bf16.mxu0 0
      %1588 = vmatpush1.bf16.msra.mxu0 %v1466
      %1589 = vmatprep.subr.bf16.mxu0 0
      %1590 = vmatpush1.bf16.msra.mxu0 %v1465
      %1591 = vmatprep.subr.bf16.mxu0 0
      %1592 = vmatpush1.bf16.msra.mxu0 %v1464
      %1593 = vmatprep.subr.bf16.mxu0 0
      %1594 = vmatpush1.bf16.msra.mxu0 %v1463
      %1595 = vmatprep.subr.bf16.mxu0 0
      %1596 = vmatpush1.bf16.msra.mxu0 %v1462
      %1597 = vmatprep.subr.bf16.mxu0 0
      %1598 = vmatpush1.bf16.msra.mxu0 %v1461
      %1599 = vmatprep.subr.bf16.mxu0 0
      %1600 = vmatpush1.bf16.msra.mxu0 %v1460
      %1601 = vmatprep.subr.bf16.mxu0 0
      %1602 = vmatpush1.bf16.msra.mxu0 %v1459
      %1603 = vmatprep.subr.bf16.mxu0 0
      %1604 = vmatpush2.bf16.msra.mxu0 %v1474
      %1605 = vmatprep.subr.bf16.mxu0 0
      %1606 = vmatpush2.bf16.msra.mxu0 %v1473
      %1607 = vmatprep.subr.bf16.mxu0 0
      %1608 = vmatpush2.bf16.msra.mxu0 %v1472
      %1609 = vmatprep.subr.bf16.mxu0 0
      %1610 = vmatpush2.bf16.msra.mxu0 %v1471
      %1611 = vmatprep.subr.bf16.mxu0 0
      %1612 = vmatpush2.bf16.msra.mxu0 %v1470
      %1613 = vmatprep.subr.bf16.mxu0 0
      %1614 = vmatpush2.bf16.msra.mxu0 %v1469
      %1615 = vmatprep.subr.bf16.mxu0 0
      %1616 = vmatpush2.bf16.msra.mxu0 %v1468
      %1617 = vmatprep.subr.bf16.mxu0 0
      %1618 = vmatpush2.bf16.msra.mxu0 %v1467
      %1619 = vmatprep.mubr.bf16.mxu0 %v948
      %1620 = vmatmul.mubr.bf16.gmra.mxu0 %v947
      %v1621 = vpop.f32.mrf.mxu0
      %v1622 = vadd.f32 0.0, %v1621
      %v1623 = vpop.f32.mrf.mxu0
      %v1624 = vpop.f32.mrf.mxu0
      %v1625 = vadd.f32 0.0, %v1624
      %v1626 = vpop.f32.mrf.mxu0
      %1627 = vmatprep.mubr.bf16.mxu0 %v956
      %1628 = vmatmul.mubr.bf16.gmra.mxu0 %v955
      %v1629 = vpop.f32.mrf.mxu0
      %v1630 = vadd.f32 0.0, %v1629
      %v1631 = vpop.f32.mrf.mxu0
      %v1632 = vpop.f32.mrf.mxu0
      %v1633 = vadd.f32 0.0, %v1632
      %v1634 = vpop.f32.mrf.mxu0
      %1635 = vmatprep.mubr.bf16.mxu0 %v964
      %1636 = vmatmul.mubr.bf16.gmra.mxu0 %v963
      %v1637 = vpop.f32.mrf.mxu0
      %v1638 = vadd.f32 0.0, %v1637
      %v1639 = vpop.f32.mrf.mxu0
      %v1640 = vpop.f32.mrf.mxu0
      %v1641 = vadd.f32 0.0, %v1640
      %v1642 = vpop.f32.mrf.mxu0
      %1643 = vmatprep.mubr.bf16.mxu0 %v972
      %1644 = vmatmul.mubr.bf16.gmra.mxu0 %v971
      %v1645 = vpop.f32.mrf.mxu0
      %v1646 = vadd.f32 0.0, %v1645
      %v1647 = vpop.f32.mrf.mxu0
      %v1648 = vpop.f32.mrf.mxu0
      %v1649 = vadd.f32 0.0, %v1648
      %v1650 = vpop.f32.mrf.mxu0
      %1651 = vmatprep.mubr.bf16.mxu0 %v980
      %1652 = vmatmul.mubr.bf16.gmra.mxu0 %v979
      %v1653 = vpop.f32.mrf.mxu0
      %v1654 = vadd.f32 0.0, %v1653
      %v1655 = vpop.f32.mrf.mxu0
      %v1656 = vpop.f32.mrf.mxu0
      %v1657 = vadd.f32 0.0, %v1656
      %v1658 = vpop.f32.mrf.mxu0
      %1659 = vmatprep.mubr.bf16.mxu0 %v988
      %1660 = vmatmul.mubr.bf16.gmra.mxu0 %v987
      %v1661 = vpop.f32.mrf.mxu0
      %v1662 = vadd.f32 0.0, %v1661
      %v1663 = vpop.f32.mrf.mxu0
      %v1664 = vpop.f32.mrf.mxu0
      %v1665 = vadd.f32 0.0, %v1664
      %v1666 = vpop.f32.mrf.mxu0
      %1667 = vmatprep.mubr.bf16.mxu0 %v996
      %1668 = vmatmul.mubr.bf16.gmra.mxu0 %v995
      %v1669 = vpop.f32.mrf.mxu0
      %v1670 = vadd.f32 0.0, %v1669
      %v1671 = vpop.f32.mrf.mxu0
      %v1672 = vpop.f32.mrf.mxu0
      %v1673 = vadd.f32 0.0, %v1672
      %v1674 = vpop.f32.mrf.mxu0
      %1675 = vmatprep.mubr.bf16.mxu0 %v1004
      %1676 = vmatmul.mubr.bf16.gmra.mxu0 %v1003
      %v1677 = vpop.f32.mrf.mxu0
      %v1678 = vadd.f32 0.0, %v1677
      %v1679 = vpop.f32.mrf.mxu0
      %v1680 = vpop.f32.mrf.mxu0
      %v1681 = vadd.f32 0.0, %v1680
      %v1682 = vpop.f32.mrf.mxu0
      %1683 = vmatprep.mubr.bf16.mxu0 %v1012
      %1684 = vmatmul.mubr.bf16.gmra.mxu0 %v1011
      %v1685 = vpop.f32.mrf.mxu0
      %v1686 = vadd.f32 0.0, %v1685
      %v1687 = vpop.f32.mrf.mxu0
      %v1688 = vpop.f32.mrf.mxu0
      %v1689 = vadd.f32 0.0, %v1688
      %v1690 = vpop.f32.mrf.mxu0
      %1691 = vmatprep.mubr.bf16.mxu0 %v1020
      %1692 = vmatmul.mubr.bf16.gmra.mxu0 %v1019
      %v1693 = vpop.f32.mrf.mxu0
      %v1694 = vadd.f32 0.0, %v1693
      %v1695 = vpop.f32.mrf.mxu0
      %v1696 = vpop.f32.mrf.mxu0
      %v1697 = vadd.f32 0.0, %v1696
      %v1698 = vpop.f32.mrf.mxu0
      %1699 = vmatprep.mubr.bf16.mxu0 %v1028
      %1700 = vmatmul.mubr.bf16.gmra.mxu0 %v1027
      %v1701 = vpop.f32.mrf.mxu0
      %v1702 = vadd.f32 0.0, %v1701
      %v1703 = vpop.f32.mrf.mxu0
      %v1704 = vpop.f32.mrf.mxu0
      %v1705 = vadd.f32 0.0, %v1704
      %v1706 = vpop.f32.mrf.mxu0
      %1707 = vmatprep.mubr.bf16.mxu0 %v1036
      %1708 = vmatmul.mubr.bf16.gmra.mxu0 %v1035
      %v1709 = vpop.f32.mrf.mxu0
      %v1710 = vadd.f32 0.0, %v1709
      %v1711 = vpop.f32.mrf.mxu0
      %v1712 = vpop.f32.mrf.mxu0
      %v1713 = vadd.f32 0.0, %v1712
      %v1714 = vpop.f32.mrf.mxu0
      %1715 = vmatprep.mubr.bf16.mxu0 %v1044
      %1716 = vmatmul.mubr.bf16.gmra.mxu0 %v1043
      %v1717 = vpop.f32.mrf.mxu0
      %v1718 = vadd.f32 0.0, %v1717
      %v1719 = vpop.f32.mrf.mxu0
      %v1720 = vpop.f32.mrf.mxu0
      %v1721 = vadd.f32 0.0, %v1720
      %v1722 = vpop.f32.mrf.mxu0
      %1723 = vmatprep.mubr.bf16.mxu0 %v1052
      %1724 = vmatmul.mubr.bf16.gmra.mxu0 %v1051
      %v1725 = vpop.f32.mrf.mxu0
      %v1726 = vadd.f32 0.0, %v1725
      %v1727 = vpop.f32.mrf.mxu0
      %v1728 = vpop.f32.mrf.mxu0
      %v1729 = vadd.f32 0.0, %v1728
      %v1730 = vpop.f32.mrf.mxu0
      %1731 = vmatprep.mubr.bf16.mxu0 %v1060
      %1732 = vmatmul.mubr.bf16.gmra.mxu0 %v1059
      %v1733 = vpop.f32.mrf.mxu0
      %v1734 = vadd.f32 0.0, %v1733
      %v1735 = vpop.f32.mrf.mxu0
      %v1736 = vpop.f32.mrf.mxu0
      %v1737 = vadd.f32 0.0, %v1736
      %v1738 = vpop.f32.mrf.mxu0
      %1739 = vmatprep.mubr.bf16.mxu0 %v1068
      %1740 = vmatmul.mubr.bf16.gmra.mxu0 %v1067
      %v1741 = vpop.f32.mrf.mxu0
      %v1742 = vadd.f32 0.0, %v1741
      %v1743 = vpop.f32.mrf.mxu0
      %v1744 = vpop.f32.mrf.mxu0
      %v1745 = vadd.f32 0.0, %v1744
      %v1746 = vpop.f32.mrf.mxu0
      %1747 = vdwg.mxu0
      %1748 = vmatprep.subr.bf16.mxu0 0
      %1749 = vmatpush1.bf16.msra.mxu0 %v1482
      %1750 = vmatprep.subr.bf16.mxu0 0
      %1751 = vmatpush1.bf16.msra.mxu0 %v1481
      %1752 = vmatprep.subr.bf16.mxu0 0
      %1753 = vmatpush1.bf16.msra.mxu0 %v1480
      %1754 = vmatprep.subr.bf16.mxu0 0
      %1755 = vmatpush1.bf16.msra.mxu0 %v1479
      %1756 = vmatprep.subr.bf16.mxu0 0
      %1757 = vmatpush1.bf16.msra.mxu0 %v1478
      %1758 = vmatprep.subr.bf16.mxu0 0
      %1759 = vmatpush1.bf16.msra.mxu0 %v1477
      %1760 = vmatprep.subr.bf16.mxu0 0
      %1761 = vmatpush1.bf16.msra.mxu0 %v1476
      %1762 = vmatprep.subr.bf16.mxu0 0
      %1763 = vmatpush1.bf16.msra.mxu0 %v1475
      %1764 = vmatprep.subr.bf16.mxu0 0
      %1765 = vmatpush2.bf16.msra.mxu0 %v1490
      %1766 = vmatprep.subr.bf16.mxu0 0
      %1767 = vmatpush2.bf16.msra.mxu0 %v1489
      %1768 = vmatprep.subr.bf16.mxu0 0
      %1769 = vmatpush2.bf16.msra.mxu0 %v1488
      %1770 = vmatprep.subr.bf16.mxu0 0
      %1771 = vmatpush2.bf16.msra.mxu0 %v1487
      %1772 = vmatprep.subr.bf16.mxu0 0
      %1773 = vmatpush2.bf16.msra.mxu0 %v1486
      %1774 = vmatprep.subr.bf16.mxu0 0
      %1775 = vmatpush2.bf16.msra.mxu0 %v1485
      %1776 = vmatprep.subr.bf16.mxu0 0
      %1777 = vmatpush2.bf16.msra.mxu0 %v1484
      %1778 = vmatprep.subr.bf16.mxu0 0
      %1779 = vmatpush2.bf16.msra.mxu0 %v1483
      %1780 = vmatprep.mubr.bf16.mxu0 %v950
      %1781 = vmatmul.mubr.bf16.gmra.mxu0 %v949
      %v1782 = vpop.f32.mrf.mxu0
      %v1783 = vadd.f32 %v1622, %v1782
      %v1784 = vpop.f32.mrf.mxu0
      %v1785 = vpop.f32.mrf.mxu0
      %v1786 = vadd.f32 %v1625, %v1785
      %v1787 = vpop.f32.mrf.mxu0
      %1788 = vmatprep.mubr.bf16.mxu0 %v958
      %1789 = vmatmul.mubr.bf16.gmra.mxu0 %v957
      %v1790 = vpop.f32.mrf.mxu0
      %v1791 = vadd.f32 %v1630, %v1790
      %v1792 = vpop.f32.mrf.mxu0
      %v1793 = vpop.f32.mrf.mxu0
      %v1794 = vadd.f32 %v1633, %v1793
      %v1795 = vpop.f32.mrf.mxu0
      %1796 = vmatprep.mubr.bf16.mxu0 %v966
      %1797 = vmatmul.mubr.bf16.gmra.mxu0 %v965
      %v1798 = vpop.f32.mrf.mxu0
      %v1799 = vadd.f32 %v1638, %v1798
      %v1800 = vpop.f32.mrf.mxu0
      %v1801 = vpop.f32.mrf.mxu0
      %v1802 = vadd.f32 %v1641, %v1801
      %v1803 = vpop.f32.mrf.mxu0
      %1804 = vmatprep.mubr.bf16.mxu0 %v974
      %1805 = vmatmul.mubr.bf16.gmra.mxu0 %v973
      %v1806 = vpop.f32.mrf.mxu0
      %v1807 = vadd.f32 %v1646, %v1806
      %v1808 = vpop.f32.mrf.mxu0
      %v1809 = vpop.f32.mrf.mxu0
      %v1810 = vadd.f32 %v1649, %v1809
      %v1811 = vpop.f32.mrf.mxu0
      %1812 = vmatprep.mubr.bf16.mxu0 %v982
      %1813 = vmatmul.mubr.bf16.gmra.mxu0 %v981
      %v1814 = vpop.f32.mrf.mxu0
      %v1815 = vadd.f32 %v1654, %v1814
      %v1816 = vpop.f32.mrf.mxu0
      %v1817 = vpop.f32.mrf.mxu0
      %v1818 = vadd.f32 %v1657, %v1817
      %v1819 = vpop.f32.mrf.mxu0
      %1820 = vmatprep.mubr.bf16.mxu0 %v990
      %1821 = vmatmul.mubr.bf16.gmra.mxu0 %v989
      %v1822 = vpop.f32.mrf.mxu0
      %v1823 = vadd.f32 %v1662, %v1822
      %v1824 = vpop.f32.mrf.mxu0
      %v1825 = vpop.f32.mrf.mxu0
      %v1826 = vadd.f32 %v1665, %v1825
      %v1827 = vpop.f32.mrf.mxu0
      %1828 = vmatprep.mubr.bf16.mxu0 %v998
      %1829 = vmatmul.mubr.bf16.gmra.mxu0 %v997
      %v1830 = vpop.f32.mrf.mxu0
      %v1831 = vadd.f32 %v1670, %v1830
      %v1832 = vpop.f32.mrf.mxu0
      %v1833 = vpop.f32.mrf.mxu0
      %v1834 = vadd.f32 %v1673, %v1833
      %v1835 = vpop.f32.mrf.mxu0
      %1836 = vmatprep.mubr.bf16.mxu0 %v1006
      %1837 = vmatmul.mubr.bf16.gmra.mxu0 %v1005
      %v1838 = vpop.f32.mrf.mxu0
      %v1839 = vadd.f32 %v1678, %v1838
      %v1840 = vpop.f32.mrf.mxu0
      %v1841 = vpop.f32.mrf.mxu0
      %v1842 = vadd.f32 %v1681, %v1841
      %v1843 = vpop.f32.mrf.mxu0
      %1844 = vmatprep.mubr.bf16.mxu0 %v1014
      %1845 = vmatmul.mubr.bf16.gmra.mxu0 %v1013
      %v1846 = vpop.f32.mrf.mxu0
      %v1847 = vadd.f32 %v1686, %v1846
      %v1848 = vpop.f32.mrf.mxu0
      %v1849 = vpop.f32.mrf.mxu0
      %v1850 = vadd.f32 %v1689, %v1849
      %v1851 = vpop.f32.mrf.mxu0
      %1852 = vmatprep.mubr.bf16.mxu0 %v1022
      %1853 = vmatmul.mubr.bf16.gmra.mxu0 %v1021
      %v1854 = vpop.f32.mrf.mxu0
      %v1855 = vadd.f32 %v1694, %v1854
      %v1856 = vpop.f32.mrf.mxu0
      %v1857 = vpop.f32.mrf.mxu0
      %v1858 = vadd.f32 %v1697, %v1857
      %v1859 = vpop.f32.mrf.mxu0
      %1860 = vmatprep.mubr.bf16.mxu0 %v1030
      %1861 = vmatmul.mubr.bf16.gmra.mxu0 %v1029
      %v1862 = vpop.f32.mrf.mxu0
      %v1863 = vadd.f32 %v1702, %v1862
      %v1864 = vpop.f32.mrf.mxu0
      %v1865 = vpop.f32.mrf.mxu0
      %v1866 = vadd.f32 %v1705, %v1865
      %v1867 = vpop.f32.mrf.mxu0
      %1868 = vmatprep.mubr.bf16.mxu0 %v1038
      %1869 = vmatmul.mubr.bf16.gmra.mxu0 %v1037
      %v1870 = vpop.f32.mrf.mxu0
      %v1871 = vadd.f32 %v1710, %v1870
      %v1872 = vpop.f32.mrf.mxu0
      %v1873 = vpop.f32.mrf.mxu0
      %v1874 = vadd.f32 %v1713, %v1873
      %v1875 = vpop.f32.mrf.mxu0
      %1876 = vmatprep.mubr.bf16.mxu0 %v1046
      %1877 = vmatmul.mubr.bf16.gmra.mxu0 %v1045
      %v1878 = vpop.f32.mrf.mxu0
      %v1879 = vadd.f32 %v1718, %v1878
      %v1880 = vpop.f32.mrf.mxu0
      %v1881 = vpop.f32.mrf.mxu0
      %v1882 = vadd.f32 %v1721, %v1881
      %v1883 = vpop.f32.mrf.mxu0
      %1884 = vmatprep.mubr.bf16.mxu0 %v1054
      %1885 = vmatmul.mubr.bf16.gmra.mxu0 %v1053
      %v1886 = vpop.f32.mrf.mxu0
      %v1887 = vadd.f32 %v1726, %v1886
      %v1888 = vpop.f32.mrf.mxu0
      %v1889 = vpop.f32.mrf.mxu0
      %v1890 = vadd.f32 %v1729, %v1889
      %v1891 = vpop.f32.mrf.mxu0
      %1892 = vmatprep.mubr.bf16.mxu0 %v1062
      %1893 = vmatmul.mubr.bf16.gmra.mxu0 %v1061
      %v1894 = vpop.f32.mrf.mxu0
      %v1895 = vadd.f32 %v1734, %v1894
      %v1896 = vpop.f32.mrf.mxu0
      %v1897 = vpop.f32.mrf.mxu0
      %v1898 = vadd.f32 %v1737, %v1897
      %v1899 = vpop.f32.mrf.mxu0
      %1900 = vmatprep.mubr.bf16.mxu0 %v1070
      %1901 = vmatmul.mubr.bf16.gmra.mxu0 %v1069
      %v1902 = vpop.f32.mrf.mxu0
      %v1903 = vadd.f32 %v1742, %v1902
      %v1904 = vpop.f32.mrf.mxu0
      %v1905 = vpop.f32.mrf.mxu0
      %v1906 = vadd.f32 %v1745, %v1905
      %v1907 = vpop.f32.mrf.mxu0
      %1908 = vdwg.mxu0
      %1909 = vmatprep.subr.bf16.mxu0 0
      %1910 = vmatpush1.bf16.msra.mxu0 %v1498
      %1911 = vmatprep.subr.bf16.mxu0 0
      %1912 = vmatpush1.bf16.msra.mxu0 %v1497
      %1913 = vmatprep.subr.bf16.mxu0 0
      %1914 = vmatpush1.bf16.msra.mxu0 %v1496
      %1915 = vmatprep.subr.bf16.mxu0 0
      %1916 = vmatpush1.bf16.msra.mxu0 %v1495
      %1917 = vmatprep.subr.bf16.mxu0 0
      %1918 = vmatpush1.bf16.msra.mxu0 %v1494
      %1919 = vmatprep.subr.bf16.mxu0 0
      %1920 = vmatpush1.bf16.msra.mxu0 %v1493
      %1921 = vmatprep.subr.bf16.mxu0 0
      %1922 = vmatpush1.bf16.msra.mxu0 %v1492
      %1923 = vmatprep.subr.bf16.mxu0 0
      %1924 = vmatpush1.bf16.msra.mxu0 %v1491
      %1925 = vmatprep.subr.bf16.mxu0 0
      %1926 = vmatpush2.bf16.msra.mxu0 %v1506
      %1927 = vmatprep.subr.bf16.mxu0 0
      %1928 = vmatpush2.bf16.msra.mxu0 %v1505
      %1929 = vmatprep.subr.bf16.mxu0 0
      %1930 = vmatpush2.bf16.msra.mxu0 %v1504
      %1931 = vmatprep.subr.bf16.mxu0 0
      %1932 = vmatpush2.bf16.msra.mxu0 %v1503
      %1933 = vmatprep.subr.bf16.mxu0 0
      %1934 = vmatpush2.bf16.msra.mxu0 %v1502
      %1935 = vmatprep.subr.bf16.mxu0 0
      %1936 = vmatpush2.bf16.msra.mxu0 %v1501
      %1937 = vmatprep.subr.bf16.mxu0 0
      %1938 = vmatpush2.bf16.msra.mxu0 %v1500
      %1939 = vmatprep.subr.bf16.mxu0 0
      %1940 = vmatpush2.bf16.msra.mxu0 %v1499
      %1941 = vmatprep.mubr.bf16.mxu0 %v952
      %1942 = vmatmul.mubr.bf16.gmra.mxu0 %v951
      %v1943 = vpop.f32.mrf.mxu0
      %v1944 = vadd.f32 %v1783, %v1943
      %v1945 = vpop.f32.mrf.mxu0
      %v1946 = vpop.f32.mrf.mxu0
      %v1947 = vadd.f32 %v1786, %v1946
      %v1948 = vpop.f32.mrf.mxu0
      %1949 = vmatprep.mubr.bf16.mxu0 %v960
      %1950 = vmatmul.mubr.bf16.gmra.mxu0 %v959
      %v1951 = vpop.f32.mrf.mxu0
      %v1952 = vadd.f32 %v1791, %v1951
      %v1953 = vpop.f32.mrf.mxu0
      %v1954 = vpop.f32.mrf.mxu0
      %v1955 = vadd.f32 %v1794, %v1954
      %v1956 = vpop.f32.mrf.mxu0
      %1957 = vmatprep.mubr.bf16.mxu0 %v968
      %1958 = vmatmul.mubr.bf16.gmra.mxu0 %v967
      %v1959 = vpop.f32.mrf.mxu0
      %v1960 = vadd.f32 %v1799, %v1959
      %v1961 = vpop.f32.mrf.mxu0
      %v1962 = vpop.f32.mrf.mxu0
      %v1963 = vadd.f32 %v1802, %v1962
      %v1964 = vpop.f32.mrf.mxu0
      %1965 = vmatprep.mubr.bf16.mxu0 %v976
      %1966 = vmatmul.mubr.bf16.gmra.mxu0 %v975
      %v1967 = vpop.f32.mrf.mxu0
      %v1968 = vadd.f32 %v1807, %v1967
      %v1969 = vpop.f32.mrf.mxu0
      %v1970 = vpop.f32.mrf.mxu0
      %v1971 = vadd.f32 %v1810, %v1970
      %v1972 = vpop.f32.mrf.mxu0
      %1973 = vmatprep.mubr.bf16.mxu0 %v984
      %1974 = vmatmul.mubr.bf16.gmra.mxu0 %v983
      %v1975 = vpop.f32.mrf.mxu0
      %v1976 = vadd.f32 %v1815, %v1975
      %v1977 = vpop.f32.mrf.mxu0
      %v1978 = vpop.f32.mrf.mxu0
      %v1979 = vadd.f32 %v1818, %v1978
      %v1980 = vpop.f32.mrf.mxu0
      %1981 = vmatprep.mubr.bf16.mxu0 %v992
      %1982 = vmatmul.mubr.bf16.gmra.mxu0 %v991
      %v1983 = vpop.f32.mrf.mxu0
      %v1984 = vadd.f32 %v1823, %v1983
      %v1985 = vpop.f32.mrf.mxu0
      %v1986 = vpop.f32.mrf.mxu0
      %v1987 = vadd.f32 %v1826, %v1986
      %v1988 = vpop.f32.mrf.mxu0
      %1989 = vmatprep.mubr.bf16.mxu0 %v1000
      %1990 = vmatmul.mubr.bf16.gmra.mxu0 %v999
      %v1991 = vpop.f32.mrf.mxu0
      %v1992 = vadd.f32 %v1831, %v1991
      %v1993 = vpop.f32.mrf.mxu0
      %v1994 = vpop.f32.mrf.mxu0
      %v1995 = vadd.f32 %v1834, %v1994
      %v1996 = vpop.f32.mrf.mxu0
      %1997 = vmatprep.mubr.bf16.mxu0 %v1008
      %1998 = vmatmul.mubr.bf16.gmra.mxu0 %v1007
      %v1999 = vpop.f32.mrf.mxu0
      %v2000 = vadd.f32 %v1839, %v1999
      %v2001 = vpop.f32.mrf.mxu0
      %v2002 = vpop.f32.mrf.mxu0
      %v2003 = vadd.f32 %v1842, %v2002
      %v2004 = vpop.f32.mrf.mxu0
      %2005 = vmatprep.mubr.bf16.mxu0 %v1016
      %2006 = vmatmul.mubr.bf16.gmra.mxu0 %v1015
      %v2007 = vpop.f32.mrf.mxu0
      %v2008 = vadd.f32 %v1847, %v2007
      %v2009 = vpop.f32.mrf.mxu0
      %v2010 = vpop.f32.mrf.mxu0
      %v2011 = vadd.f32 %v1850, %v2010
      %v2012 = vpop.f32.mrf.mxu0
      %2013 = vmatprep.mubr.bf16.mxu0 %v1024
      %2014 = vmatmul.mubr.bf16.gmra.mxu0 %v1023
      %v2015 = vpop.f32.mrf.mxu0
      %v2016 = vadd.f32 %v1855, %v2015
      %v2017 = vpop.f32.mrf.mxu0
      %v2018 = vpop.f32.mrf.mxu0
      %v2019 = vadd.f32 %v1858, %v2018
      %v2020 = vpop.f32.mrf.mxu0
      %2021 = vmatprep.mubr.bf16.mxu0 %v1032
      %2022 = vmatmul.mubr.bf16.gmra.mxu0 %v1031
      %v2023 = vpop.f32.mrf.mxu0
      %v2024 = vadd.f32 %v1863, %v2023
      %v2025 = vpop.f32.mrf.mxu0
      %v2026 = vpop.f32.mrf.mxu0
      %v2027 = vadd.f32 %v1866, %v2026
      %v2028 = vpop.f32.mrf.mxu0
      %2029 = vmatprep.mubr.bf16.mxu0 %v1040
      %2030 = vmatmul.mubr.bf16.gmra.mxu0 %v1039
      %v2031 = vpop.f32.mrf.mxu0
      %v2032 = vadd.f32 %v1871, %v2031
      %v2033 = vpop.f32.mrf.mxu0
      %v2034 = vpop.f32.mrf.mxu0
      %v2035 = vadd.f32 %v1874, %v2034
      %v2036 = vpop.f32.mrf.mxu0
      %2037 = vmatprep.mubr.bf16.mxu0 %v1048
      %2038 = vmatmul.mubr.bf16.gmra.mxu0 %v1047
      %v2039 = vpop.f32.mrf.mxu0
      %v2040 = vadd.f32 %v1879, %v2039
      %v2041 = vpop.f32.mrf.mxu0
      %v2042 = vpop.f32.mrf.mxu0
      %v2043 = vadd.f32 %v1882, %v2042
      %v2044 = vpop.f32.mrf.mxu0
      %2045 = vmatprep.mubr.bf16.mxu0 %v1056
      %2046 = vmatmul.mubr.bf16.gmra.mxu0 %v1055
      %v2047 = vpop.f32.mrf.mxu0
      %v2048 = vadd.f32 %v1887, %v2047
      %v2049 = vpop.f32.mrf.mxu0
      %v2050 = vpop.f32.mrf.mxu0
      %v2051 = vadd.f32 %v1890, %v2050
      %v2052 = vpop.f32.mrf.mxu0
      %2053 = vmatprep.mubr.bf16.mxu0 %v1064
      %2054 = vmatmul.mubr.bf16.gmra.mxu0 %v1063
      %v2055 = vpop.f32.mrf.mxu0
      %v2056 = vadd.f32 %v1895, %v2055
      %v2057 = vpop.f32.mrf.mxu0
      %v2058 = vpop.f32.mrf.mxu0
      %v2059 = vadd.f32 %v1898, %v2058
      %v2060 = vpop.f32.mrf.mxu0
      %2061 = vmatprep.mubr.bf16.mxu0 %v1072
      %2062 = vmatmul.mubr.bf16.gmra.mxu0 %v1071
      %v2063 = vpop.f32.mrf.mxu0
      %v2064 = vadd.f32 %v1903, %v2063
      %v2065 = vpop.f32.mrf.mxu0
      %v2066 = vpop.f32.mrf.mxu0
      %v2067 = vadd.f32 %v1906, %v2066
      %v2068 = vpop.f32.mrf.mxu0
      %2069 = vdwg.mxu0
      %2070 = vmatprep.subr.bf16.mxu0 0
      %2071 = vmatpush1.bf16.msra.mxu0 %v1514
      %2072 = vmatprep.subr.bf16.mxu0 0
      %2073 = vmatpush1.bf16.msra.mxu0 %v1513
      %2074 = vmatprep.subr.bf16.mxu0 0
      %2075 = vmatpush1.bf16.msra.mxu0 %v1512
      %2076 = vmatprep.subr.bf16.mxu0 0
      %2077 = vmatpush1.bf16.msra.mxu0 %v1511
      %2078 = vmatprep.subr.bf16.mxu0 0
      %2079 = vmatpush1.bf16.msra.mxu0 %v1510
      %2080 = vmatprep.subr.bf16.mxu0 0
      %2081 = vmatpush1.bf16.msra.mxu0 %v1509
      %2082 = vmatprep.subr.bf16.mxu0 0
      %2083 = vmatpush1.bf16.msra.mxu0 %v1508
      %2084 = vmatprep.subr.bf16.mxu0 0
      %2085 = vmatpush1.bf16.msra.mxu0 %v1507
      %2086 = vmatprep.subr.bf16.mxu0 0
      %2087 = vmatpush2.bf16.msra.mxu0 %v1522
      %2088 = vmatprep.subr.bf16.mxu0 0
      %2089 = vmatpush2.bf16.msra.mxu0 %v1521
      %2090 = vmatprep.subr.bf16.mxu0 0
      %2091 = vmatpush2.bf16.msra.mxu0 %v1520
      %2092 = vmatprep.subr.bf16.mxu0 0
      %2093 = vmatpush2.bf16.msra.mxu0 %v1519
      %2094 = vmatprep.subr.bf16.mxu0 0
      %2095 = vmatpush2.bf16.msra.mxu0 %v1518
      %2096 = vmatprep.subr.bf16.mxu0 0
      %2097 = vmatpush2.bf16.msra.mxu0 %v1517
      %2098 = vmatprep.subr.bf16.mxu0 0
      %2099 = vmatpush2.bf16.msra.mxu0 %v1516
      %2100 = vmatprep.subr.bf16.mxu0 0
      %2101 = vmatpush2.bf16.msra.mxu0 %v1515
      %2102 = vmatprep.mubr.bf16.mxu0 %v954
      %2103 = vmatmul.mubr.bf16.gmra.mxu0 %v953
      %v2104 = vpop.f32.mrf.mxu0
      %v2105 = vadd.f32 %v1944, %v2104
      %v2106 = vpop.f32.mrf.mxu0
      %v2107 = vpop.f32.mrf.mxu0
      %v2108 = vadd.f32 %v1947, %v2107
      %v2109 = vpop.f32.mrf.mxu0
      %2110 = vmatprep.mubr.bf16.mxu0 %v962
      %2111 = vmatmul.mubr.bf16.gmra.mxu0 %v961
      %v2112 = vpop.f32.mrf.mxu0
      %v2113 = vadd.f32 %v1952, %v2112
      %v2114 = vpop.f32.mrf.mxu0
      %v2115 = vpop.f32.mrf.mxu0
      %v2116 = vadd.f32 %v1955, %v2115
      %v2117 = vpop.f32.mrf.mxu0
      %2118 = vmatprep.mubr.bf16.mxu0 %v970
      %2119 = vmatmul.mubr.bf16.gmra.mxu0 %v969
      %v2120 = vpop.f32.mrf.mxu0
      %v2121 = vadd.f32 %v1960, %v2120
      %v2122 = vpop.f32.mrf.mxu0
      %v2123 = vpop.f32.mrf.mxu0
      %v2124 = vadd.f32 %v1963, %v2123
      %v2125 = vpop.f32.mrf.mxu0
      %2126 = vmatprep.mubr.bf16.mxu0 %v978
      %2127 = vmatmul.mubr.bf16.gmra.mxu0 %v977
      %v2128 = vpop.f32.mrf.mxu0
      %v2129 = vadd.f32 %v1968, %v2128
      %v2130 = vpop.f32.mrf.mxu0
      %v2131 = vpop.f32.mrf.mxu0
      %v2132 = vadd.f32 %v1971, %v2131
      %v2133 = vpop.f32.mrf.mxu0
      %2134 = vmatprep.mubr.bf16.mxu0 %v986
      %2135 = vmatmul.mubr.bf16.gmra.mxu0 %v985
      %v2136 = vpop.f32.mrf.mxu0
      %v2137 = vadd.f32 %v1976, %v2136
      %v2138 = vpop.f32.mrf.mxu0
      %v2139 = vpop.f32.mrf.mxu0
      %v2140 = vadd.f32 %v1979, %v2139
      %v2141 = vpop.f32.mrf.mxu0
      %2142 = vmatprep.mubr.bf16.mxu0 %v994
      %2143 = vmatmul.mubr.bf16.gmra.mxu0 %v993
      %v2144 = vpop.f32.mrf.mxu0
      %v2145 = vadd.f32 %v1984, %v2144
      %v2146 = vpop.f32.mrf.mxu0
      %v2147 = vpop.f32.mrf.mxu0
      %v2148 = vadd.f32 %v1987, %v2147
      %v2149 = vpop.f32.mrf.mxu0
      %2150 = vmatprep.mubr.bf16.mxu0 %v1002
      %2151 = vmatmul.mubr.bf16.gmra.mxu0 %v1001
      %v2152 = vpop.f32.mrf.mxu0
      %v2153 = vadd.f32 %v1992, %v2152
      %v2154 = vpop.f32.mrf.mxu0
      %v2155 = vpop.f32.mrf.mxu0
      %v2156 = vadd.f32 %v1995, %v2155
      %v2157 = vpop.f32.mrf.mxu0
      %2158 = vmatprep.mubr.bf16.mxu0 %v1010
      %2159 = vmatmul.mubr.bf16.gmra.mxu0 %v1009
      %v2160 = vpop.f32.mrf.mxu0
      %v2161 = vadd.f32 %v2000, %v2160
      %v2162 = vpop.f32.mrf.mxu0
      %v2163 = vpop.f32.mrf.mxu0
      %v2164 = vadd.f32 %v2003, %v2163
      %v2165 = vpop.f32.mrf.mxu0
      %2166 = vmatprep.mubr.bf16.mxu0 %v1018
      %2167 = vmatmul.mubr.bf16.gmra.mxu0 %v1017
      %v2168 = vpop.f32.mrf.mxu0
      %v2169 = vadd.f32 %v2008, %v2168
      %v2170 = vpop.f32.mrf.mxu0
      %v2171 = vpop.f32.mrf.mxu0
      %v2172 = vadd.f32 %v2011, %v2171
      %v2173 = vpop.f32.mrf.mxu0
      %2174 = vmatprep.mubr.bf16.mxu0 %v1026
      %2175 = vmatmul.mubr.bf16.gmra.mxu0 %v1025
      %v2176 = vpop.f32.mrf.mxu0
      %v2177 = vadd.f32 %v2016, %v2176
      %v2178 = vpop.f32.mrf.mxu0
      %v2179 = vpop.f32.mrf.mxu0
      %v2180 = vadd.f32 %v2019, %v2179
      %v2181 = vpop.f32.mrf.mxu0
      %2182 = vmatprep.mubr.bf16.mxu0 %v1034
      %2183 = vmatmul.mubr.bf16.gmra.mxu0 %v1033
      %v2184 = vpop.f32.mrf.mxu0
      %v2185 = vadd.f32 %v2024, %v2184
      %v2186 = vpop.f32.mrf.mxu0
      %v2187 = vpop.f32.mrf.mxu0
      %v2188 = vadd.f32 %v2027, %v2187
      %v2189 = vpop.f32.mrf.mxu0
      %2190 = vmatprep.mubr.bf16.mxu0 %v1042
      %2191 = vmatmul.mubr.bf16.gmra.mxu0 %v1041
      %v2192 = vpop.f32.mrf.mxu0
      %v2193 = vadd.f32 %v2032, %v2192
      %v2194 = vpop.f32.mrf.mxu0
      %v2195 = vpop.f32.mrf.mxu0
      %v2196 = vadd.f32 %v2035, %v2195
      %v2197 = vpop.f32.mrf.mxu0
      %2198 = vmatprep.mubr.bf16.mxu0 %v1050
      %2199 = vmatmul.mubr.bf16.gmra.mxu0 %v1049
      %v2200 = vpop.f32.mrf.mxu0
      %v2201 = vadd.f32 %v2040, %v2200
      %v2202 = vpop.f32.mrf.mxu0
      %v2203 = vpop.f32.mrf.mxu0
      %v2204 = vadd.f32 %v2043, %v2203
      %v2205 = vpop.f32.mrf.mxu0
      %2206 = vmatprep.mubr.bf16.mxu0 %v1058
      %2207 = vmatmul.mubr.bf16.gmra.mxu0 %v1057
      %v2208 = vpop.f32.mrf.mxu0
      %v2209 = vadd.f32 %v2048, %v2208
      %v2210 = vpop.f32.mrf.mxu0
      %v2211 = vpop.f32.mrf.mxu0
      %v2212 = vadd.f32 %v2051, %v2211
      %v2213 = vpop.f32.mrf.mxu0
      %2214 = vmatprep.mubr.bf16.mxu0 %v1066
      %2215 = vmatmul.mubr.bf16.gmra.mxu0 %v1065
      %v2216 = vpop.f32.mrf.mxu0
      %v2217 = vadd.f32 %v2056, %v2216
      %v2218 = vpop.f32.mrf.mxu0
      %v2219 = vpop.f32.mrf.mxu0
      %v2220 = vadd.f32 %v2059, %v2219
      %v2221 = vpop.f32.mrf.mxu0
      %2222 = vmatprep.mubr.bf16.mxu0 %v1074
      %2223 = vmatmul.mubr.bf16.gmra.mxu0 %v1073
      %v2224 = vpop.f32.mrf.mxu0
      %v2225 = vadd.f32 %v2064, %v2224
      %v2226 = vpop.f32.mrf.mxu0
      %v2227 = vpop.f32.mrf.mxu0
      %v2228 = vadd.f32 %v2067, %v2227
      %v2229 = vpop.f32.mrf.mxu0
      %2230 = vdwg.mxu0
      %v2231 = vadd.f32 %v275, %v2105
      %v2232 = vadd.f32 %v276, %v2108
      %v2233 = vadd.f32 %v277, %v2113
      %v2234 = vadd.f32 %v278, %v2116
      %v2235 = vadd.f32 %v279, %v2121
      %v2236 = vadd.f32 %v280, %v2124
      %v2237 = vadd.f32 %v281, %v2129
      %v2238 = vadd.f32 %v282, %v2132
      %v2239 = vadd.f32 %v283, %v2137
      %v2240 = vadd.f32 %v284, %v2140
      %v2241 = vadd.f32 %v285, %v2145
      %v2242 = vadd.f32 %v286, %v2148
      %v2243 = vadd.f32 %v287, %v2153
      %v2244 = vadd.f32 %v288, %v2156
      %v2245 = vadd.f32 %v289, %v2161
      %v2246 = vadd.f32 %v290, %v2164
      %v2247 = vadd.f32 %v291, %v2169
      %v2248 = vadd.f32 %v292, %v2172
      %v2249 = vadd.f32 %v293, %v2177
      %v2250 = vadd.f32 %v294, %v2180
      %v2251 = vadd.f32 %v295, %v2185
      %v2252 = vadd.f32 %v296, %v2188
      %v2253 = vadd.f32 %v297, %v2193
      %v2254 = vadd.f32 %v298, %v2196
      %v2255 = vadd.f32 %v299, %v2201
      %v2256 = vadd.f32 %v300, %v2204
      %v2257 = vadd.f32 %v301, %v2209
      %v2258 = vadd.f32 %v302, %v2212
      %v2259 = vadd.f32 %v303, %v2217
      %v2260 = vadd.f32 %v304, %v2220
      %v2261 = vadd.f32 %v305, %v2225
      %v2262 = vadd.f32 %v306, %v2228
      %2263 = vst [vmem:[#allocation2] sm:$0xff] %v2231
      %2264 = vst [vmem:[#allocation2 + $0x8] sm:$0xff] %v2232
      %2265 = vst [vmem:[#allocation2 + $0x10] sm:$0xff] %v2233
      %2266 = vst [vmem:[#allocation2 + $0x18] sm:$0xff] %v2234
      %2267 = vst [vmem:[#allocation2 + $0x20] sm:$0xff] %v2235
      %2268 = vst [vmem:[#allocation2 + $0x28] sm:$0xff] %v2236
      %2269 = vst [vmem:[#allocation2 + $0x30] sm:$0xff] %v2237
      %2270 = vst [vmem:[#allocation2 + $0x38] sm:$0xff] %v2238
      %2271 = vst [vmem:[#allocation2 + $0x40] sm:$0xff] %v2239
      %2272 = vst [vmem:[#allocation2 + $0x48] sm:$0xff] %v2240
      %2273 = vst [vmem:[#allocation2 + $0x50] sm:$0xff] %v2241
      %2274 = vst [vmem:[#allocation2 + $0x58] sm:$0xff] %v2242
      %2275 = vst [vmem:[#allocation2 + $0x60] sm:$0xff] %v2243
      %2276 = vst [vmem:[#allocation2 + $0x68] sm:$0xff] %v2244
      %2277 = vst [vmem:[#allocation2 + $0x70] sm:$0xff] %v2245
      %2278 = vst [vmem:[#allocation2 + $0x78] sm:$0xff] %v2246
      %2279 = vst [vmem:[#allocation2 + $0x80] sm:$0xff] %v2247
      %2280 = vst [vmem:[#allocation2 + $0x88] sm:$0xff] %v2248
      %2281 = vst [vmem:[#allocation2 + $0x90] sm:$0xff] %v2249
      %2282 = vst [vmem:[#allocation2 + $0x98] sm:$0xff] %v2250
      %2283 = vst [vmem:[#allocation2 + $0xa0] sm:$0xff] %v2251
      %2284 = vst [vmem:[#allocation2 + $0xa8] sm:$0xff] %v2252
      %2285 = vst [vmem:[#allocation2 + $0xb0] sm:$0xff] %v2253
      %2286 = vst [vmem:[#allocation2 + $0xb8] sm:$0xff] %v2254
      %2287 = vst [vmem:[#allocation2 + $0xc0] sm:$0xff] %v2255
      %2288 = vst [vmem:[#allocation2 + $0xc8] sm:$0xff] %v2256
      %2289 = vst [vmem:[#allocation2 + $0xd0] sm:$0xff] %v2257
      %2290 = vst [vmem:[#allocation2 + $0xd8] sm:$0xff] %v2258
      %2291 = vst [vmem:[#allocation2 + $0xe0] sm:$0xff] %v2259
      %2292 = vst [vmem:[#allocation2 + $0xe8] sm:$0xff] %v2260
      %2293 = vst [vmem:[#allocation2 + $0xf0] sm:$0xff] %v2261
      %2294 = vst [vmem:[#allocation2 + $0xf8] sm:$0xff] %v2262
      // Predicated region
      $region33: #{discriminator_forward.9} parent=27 // pred_check
        %p2295 = pneg %p239
      $region34: #{discriminator_forward.9} parent=27 // pred_check_branch
        %2297 = sbr.rel (%p2295) target = $region36
      $region35: #{discriminator_forward.9} parent=27 // pred_region
        %v2298 = vld [vmem:[#allocation2] sm:$0xff]
        %v2299 = vld [vmem:[#allocation2 + $0x8] sm:$0xff]
        %v2300 = vld [vmem:[#allocation2 + $0x10] sm:$0xff]
        %v2301 = vld [vmem:[#allocation2 + $0x18] sm:$0xff]
        %v2302 = vld [vmem:[#allocation2 + $0x20] sm:$0xff]
        %v2303 = vld [vmem:[#allocation2 + $0x28] sm:$0xff]
        %v2304 = vld [vmem:[#allocation2 + $0x30] sm:$0xff]
        %v2305 = vld [vmem:[#allocation2 + $0x38] sm:$0xff]
        %v2306 = vld [vmem:[#allocation2 + $0x40] sm:$0xff]
        %v2307 = vld [vmem:[#allocation2 + $0x48] sm:$0xff]
        %v2308 = vld [vmem:[#allocation2 + $0x50] sm:$0xff]
        %v2309 = vld [vmem:[#allocation2 + $0x58] sm:$0xff]
        %v2310 = vld [vmem:[#allocation2 + $0x60] sm:$0xff]
        %v2311 = vld [vmem:[#allocation2 + $0x68] sm:$0xff]
        %v2312 = vld [vmem:[#allocation2 + $0x70] sm:$0xff]
        %v2313 = vld [vmem:[#allocation2 + $0x78] sm:$0xff]
        %v2314 = vld [vmem:[#allocation2 + $0x80] sm:$0xff]
        %v2315 = vld [vmem:[#allocation2 + $0x88] sm:$0xff]
        %v2316 = vld [vmem:[#allocation2 + $0x90] sm:$0xff]
        %v2317 = vld [vmem:[#allocation2 + $0x98] sm:$0xff]
        %v2318 = vld [vmem:[#allocation2 + $0xa0] sm:$0xff]
        %v2319 = vld [vmem:[#allocation2 + $0xa8] sm:$0xff]
        %v2320 = vld [vmem:[#allocation2 + $0xb0] sm:$0xff]
        %v2321 = vld [vmem:[#allocation2 + $0xb8] sm:$0xff]
        %v2322 = vld [vmem:[#allocation2 + $0xc0] sm:$0xff]
        %v2323 = vld [vmem:[#allocation2 + $0xc8] sm:$0xff]
        %v2324 = vld [vmem:[#allocation2 + $0xd0] sm:$0xff]
        %v2325 = vld [vmem:[#allocation2 + $0xd8] sm:$0xff]
        %v2326 = vld [vmem:[#allocation2 + $0xe0] sm:$0xff]
        %v2327 = vld [vmem:[#allocation2 + $0xe8] sm:$0xff]
        %v2328 = vld [vmem:[#allocation2 + $0xf0] sm:$0xff]
        %v2329 = vld [vmem:[#allocation2 + $0xf8] sm:$0xff]
        %v2330 = vadd.f32 %v2298, %v2299
        %v2331 = vadd.f32 %v2330, %v2300
        %v2332 = vadd.f32 %v2331, %v2301
        %v2333 = vadd.f32 %v2332, %v2302
        %v2334 = vadd.f32 %v2333, %v2303
        %v2335 = vadd.f32 %v2334, %v2304
        %v2336 = vadd.f32 %v2335, %v2305
        %v2337 = vadd.f32 %v2336, %v2306
        %v2338 = vadd.f32 %v2337, %v2307
        %v2339 = vadd.f32 %v2338, %v2308
        %v2340 = vadd.f32 %v2339, %v2309
        %v2341 = vadd.f32 %v2340, %v2310
        %v2342 = vadd.f32 %v2341, %v2311
        %v2343 = vadd.f32 %v2342, %v2312
        %v2344 = vadd.f32 %v2343, %v2313
        %v2345 = vadd.f32 %v2344, %v2314
        %v2346 = vadd.f32 %v2345, %v2315
        %v2347 = vadd.f32 %v2346, %v2316
        %v2348 = vadd.f32 %v2347, %v2317
        %v2349 = vadd.f32 %v2348, %v2318
        %v2350 = vadd.f32 %v2349, %v2319
        %v2351 = vadd.f32 %v2350, %v2320
        %v2352 = vadd.f32 %v2351, %v2321
        %v2353 = vadd.f32 %v2352, %v2322
        %v2354 = vadd.f32 %v2353, %v2323
        %v2355 = vadd.f32 %v2354, %v2324
        %v2356 = vadd.f32 %v2355, %v2325
        %v2357 = vadd.f32 %v2356, %v2326
        %v2358 = vadd.f32 %v2357, %v2327
        %v2359 = vadd.f32 %v2358, %v2328
        %v2360 = vadd.f32 %v2359, %v2329
        %v2361 = vrot.slane %v2360, 4
        %v2362 = vadd.f32 %v2360, %v2361
        %v2363 = vrot.slane %v2362, 2
        %v2364 = vadd.f32 %v2362, %v2363
        %v2365 = vrot.slane %v2364, 1
        %v2366 = vadd.f32 %v2364, %v2365
        %v2367 = vmul.f32 %v2298, %v2298
        %v2368 = vmul.f32 %v2299, %v2299
        %v2369 = vmul.f32 %v2300, %v2300
        %v2370 = vmul.f32 %v2301, %v2301
        %v2371 = vmul.f32 %v2302, %v2302
        %v2372 = vmul.f32 %v2303, %v2303
        %v2373 = vmul.f32 %v2304, %v2304
        %v2374 = vmul.f32 %v2305, %v2305
        %v2375 = vmul.f32 %v2306, %v2306
        %v2376 = vmul.f32 %v2307, %v2307
        %v2377 = vmul.f32 %v2308, %v2308
        %v2378 = vmul.f32 %v2309, %v2309
        %v2379 = vmul.f32 %v2310, %v2310
        %v2380 = vmul.f32 %v2311, %v2311
        %v2381 = vmul.f32 %v2312, %v2312
        %v2382 = vmul.f32 %v2313, %v2313
        %v2383 = vmul.f32 %v2314, %v2314
        %v2384 = vmul.f32 %v2315, %v2315
        %v2385 = vmul.f32 %v2316, %v2316
        %v2386 = vmul.f32 %v2317, %v2317
        %v2387 = vmul.f32 %v2318, %v2318
        %v2388 = vmul.f32 %v2319, %v2319
        %v2389 = vmul.f32 %v2320, %v2320
        %v2390 = vmul.f32 %v2321, %v2321
        %v2391 = vmul.f32 %v2322, %v2322
        %v2392 = vmul.f32 %v2323, %v2323
        %v2393 = vmul.f32 %v2324, %v2324
        %v2394 = vmul.f32 %v2325, %v2325
        %v2395 = vmul.f32 %v2326, %v2326
        %v2396 = vmul.f32 %v2327, %v2327
        %v2397 = vmul.f32 %v2328, %v2328
        %v2398 = vmul.f32 %v2329, %v2329
        %v2399 = vadd.f32 %v2367, %v2368
        %v2400 = vadd.f32 %v2399, %v2369
        %v2401 = vadd.f32 %v2400, %v2370
        %v2402 = vadd.f32 %v2401, %v2371
        %v2403 = vadd.f32 %v2402, %v2372
        %v2404 = vadd.f32 %v2403, %v2373
        %v2405 = vadd.f32 %v2404, %v2374
        %v2406 = vadd.f32 %v2405, %v2375
        %v2407 = vadd.f32 %v2406, %v2376
        %v2408 = vadd.f32 %v2407, %v2377
        %v2409 = vadd.f32 %v2408, %v2378
        %v2410 = vadd.f32 %v2409, %v2379
        %v2411 = vadd.f32 %v2410, %v2380
        %v2412 = vadd.f32 %v2411, %v2381
        %v2413 = vadd.f32 %v2412, %v2382
        %v2414 = vadd.f32 %v2413, %v2383
        %v2415 = vadd.f32 %v2414, %v2384
        %v2416 = vadd.f32 %v2415, %v2385
        %v2417 = vadd.f32 %v2416, %v2386
        %v2418 = vadd.f32 %v2417, %v2387
        %v2419 = vadd.f32 %v2418, %v2388
        %v2420 = vadd.f32 %v2419, %v2389
        %v2421 = vadd.f32 %v2420, %v2390
        %v2422 = vadd.f32 %v2421, %v2391
        %v2423 = vadd.f32 %v2422, %v2392
        %v2424 = vadd.f32 %v2423, %v2393
        %v2425 = vadd.f32 %v2424, %v2394
        %v2426 = vadd.f32 %v2425, %v2395
        %v2427 = vadd.f32 %v2426, %v2396
        %v2428 = vadd.f32 %v2427, %v2397
        %v2429 = vadd.f32 %v2428, %v2398
        %v2430 = vrot.slane %v2429, 4
        %v2431 = vadd.f32 %v2429, %v2430
        %v2432 = vrot.slane %v2431, 2
        %v2433 = vadd.f32 %v2431, %v2432
        %v2434 = vrot.slane %v2433, 1
        %v2435 = vadd.f32 %v2433, %v2434
        %v2436 = vlaneseq
        %v2437 = vshrl.u32 %v2436, 7
        %vm2438 = vcmp.eq.s32.totalorder %v2437, 0
        %vm2439 = vcmp.eq.s32.totalorder %v2437, 1
        %v2440 = vsel %vm2439, %v2435, 0.0
        %v2441 = vsel %vm2438, %v2366, %v2440
        %2442 = vst [vmem:[%s237] sm:$0xff] %v2441
        %2443 = vst [vmem:[%s232] sm:$0xff] %v2298
        %2444 = vst [vmem:[%s232 + $0x8] sm:$0xff] %v2299
        %2445 = vst [vmem:[%s232 + $0x10] sm:$0xff] %v2300
        %2446 = vst [vmem:[%s232 + $0x18] sm:$0xff] %v2301
        %2447 = vst [vmem:[%s232 + $0x20] sm:$0xff] %v2302
        %2448 = vst [vmem:[%s232 + $0x28] sm:$0xff] %v2303
        %2449 = vst [vmem:[%s232 + $0x30] sm:$0xff] %v2304
        %2450 = vst [vmem:[%s232 + $0x38] sm:$0xff] %v2305
        %2451 = vst [vmem:[%s232 + $0x40] sm:$0xff] %v2306
        %2452 = vst [vmem:[%s232 + $0x48] sm:$0xff] %v2307
        %2453 = vst [vmem:[%s232 + $0x50] sm:$0xff] %v2308
        %2454 = vst [vmem:[%s232 + $0x58] sm:$0xff] %v2309
        %2455 = vst [vmem:[%s232 + $0x60] sm:$0xff] %v2310
        %2456 = vst [vmem:[%s232 + $0x68] sm:$0xff] %v2311
        %2457 = vst [vmem:[%s232 + $0x70] sm:$0xff] %v2312
        %2458 = vst [vmem:[%s232 + $0x78] sm:$0xff] %v2313
        %2459 = vst [vmem:[%s232 + $0x80] sm:$0xff] %v2314
        %2460 = vst [vmem:[%s232 + $0x88] sm:$0xff] %v2315
        %2461 = vst [vmem:[%s232 + $0x90] sm:$0xff] %v2316
        %2462 = vst [vmem:[%s232 + $0x98] sm:$0xff] %v2317
        %2463 = vst [vmem:[%s232 + $0xa0] sm:$0xff] %v2318
        %2464 = vst [vmem:[%s232 + $0xa8] sm:$0xff] %v2319
        %2465 = vst [vmem:[%s232 + $0xb0] sm:$0xff] %v2320
        %2466 = vst [vmem:[%s232 + $0xb8] sm:$0xff] %v2321
        %2467 = vst [vmem:[%s232 + $0xc0] sm:$0xff] %v2322
        %2468 = vst [vmem:[%s232 + $0xc8] sm:$0xff] %v2323
        %2469 = vst [vmem:[%s232 + $0xd0] sm:$0xff] %v2324
        %2470 = vst [vmem:[%s232 + $0xd8] sm:$0xff] %v2325
        %2471 = vst [vmem:[%s232 + $0xe0] sm:$0xff] %v2326
        %2472 = vst [vmem:[%s232 + $0xe8] sm:$0xff] %v2327
        %2473 = vst [vmem:[%s232 + $0xf0] sm:$0xff] %v2328
        %2474 = vst [vmem:[%s232 + $0xf8] sm:$0xff] %v2329
      $region36: #{discriminator_forward.9} parent=27 // pred_fallthru
        _
      %s2475 = smul.u32 32, %s19
      %p2476 = scmp.lt.s32.totalorder %s2475, 63
      %s2477 = scalar_select %p2476, %s2475, 63
      %s2478 = smul.addr %s2477, 8
      %s2479 = scalar_lea.vmem %s2, %s2478
      %p2480 = scmp.lt.s32.totalorder %s19, 1
      %s2481 = scalar_select %p2480, %s19, 1
      %s2482 = smul.addr %s2481, 8
      %s2483 = scalar_lea.vmem %s3, %s2482
      // Predicated region
      $region37: #{discriminator_forward.9} parent=27 // pred_check
        %p2484 = pneg %p99
      $region38: #{discriminator_forward.9} parent=27 // pred_check_branch
        %2486 = sbr.rel (%p2484) target = $region40
      $region39: #{discriminator_forward.9} parent=27 // pred_region
        %s2487 = smul.u32 32, %s19
      $region40: #{discriminator_forward.9} parent=27 // pred_fallthru
        _
      // Predicated region
      $region41: #{discriminator_forward.9} parent=27 // pred_check
        %p2488 = pneg %p125
      $region42: #{discriminator_forward.9} parent=27 // pred_check_branch
        %2490 = sbr.rel (%p2488) target = $region44
      $region43: #{discriminator_forward.9} parent=27 // pred_region
        _
      $region44: #{discriminator_forward.9} parent=27 // pred_fallthru
        _
    $region28: #{discriminator_forward.9} parent=5 // pred_fallthru
      _
    %p2491 = scmp.le.s32.totalorder 2, %s10
    // Predicated region
    $region45: #{discriminator_forward.9} parent=5 // pred_check
      %p2492 = pneg %p2491
    $region46: #{discriminator_forward.9} parent=5 // pred_check_branch
      %2494 = sbr.rel (%p2492) target = $region48
    $region47: #{discriminator_forward.9} parent=5 // pred_region
      %s2495 = ssub.s32 %s10, 2
      // Predicated region
      $region49: #{discriminator_forward.9} parent=47 // pred_check
        %p2496 = pneg %p105
      $region50: #{discriminator_forward.9} parent=47 // pred_check_branch
        %2498 = sbr.rel (%p2496) target = $region52
      $region51: #{discriminator_forward.9} parent=47 // pred_region
        %s2499 = smul.u32 32, %s21
        %p2500 = scmp.lt.s32.totalorder %s2499, 63
        %s2501 = scalar_select %p2500, %s2499, 63
        %s2502 = smul.addr %s2501, 8
        %s2503 = scalar_lea.vmem %s2, %s2502
      $region52: #{discriminator_forward.9} parent=47 // pred_fallthru
        _
      // Predicated region
      $region53: #{discriminator_forward.9} parent=47 // pred_check
        %p2504 = pneg %p131
      $region54: #{discriminator_forward.9} parent=47 // pred_check_branch
        %2506 = sbr.rel (%p2504) target = $region56
      $region55: #{discriminator_forward.9} parent=47 // pred_region
        %p2507 = scmp.lt.s32.totalorder %s21, 1
        %s2508 = scalar_select %p2507, %s21, 1
        %s2509 = smul.addr %s2508, 8
        %s2510 = scalar_lea.vmem %s3, %s2509
      $region56: #{discriminator_forward.9} parent=47 // pred_fallthru
        _
    $region48: #{discriminator_forward.9} parent=5 // pred_fallthru
      _
  $region6: #{discriminator_forward.9} parent=0 // loop_footer
    %s14 = sadd.s32 1, %s10
  $region7: #{discriminator_forward.9} parent=0 // loop_footer_branch
    %9 = sbr.rel target = $region3
  $region8: #{discriminator_forward.9} parent=0 // loop_exit
    _

// kernel: discriminator_forward.10
$region0: #{discriminator_forward.10}
  #allocation0 [shape = 'u32[]', space=smem, size = 0x4, offset = 0x4, fixed_abs, tag = 'smem constant byte address 0x4 - core index']
  #allocation1 [shape = 'u32[144,128]{1,0:T(1,128)}', space=vmem, size = 0x12000, scoped, tag = 'internal scratch']
  %s0 = inlined_call_operand.vmem [shape: f32[512,128], index: 0, kind: input, shape index: {}]
  %s1 = inlined_call_operand.vmem [shape: f32[1,128], index: 1, kind: input, shape index: {}]
  %s2 = inlined_call_operand.vmem [shape: f32[1,128], index: 2, kind: input, shape index: {}]
  %s3 = inlined_call_operand.vmem [shape: bf16[512,128], index: 3, kind: output, shape index: {}]
  %s4 = sld [smem:[#allocation0]]
  $region45: #{discriminator_forward.10} parent=0
    _
  %s6 = ssub.s32 1, %s4
  %s7 = scalar_select 0, %s6, %s4
  loop: start=0, step=1, limit=4
  $region2: #{discriminator_forward.10} parent=0 // loop_pre_header
    _
  $region3: #{discriminator_forward.10} parent=0 // loop_header
    %s9 = sphi 0, %s13
    %p10 = scmp.ge.s32.totalorder %s9, 4
    %s19 = sphi 0, %s21
    %s22 = sphi 0, %s19
    %s23 = sphi 0, %s22
    %s39 = sphi 0, %s23
    %s43 = sphi 0, %s43
    %s45 = sphi 0, %s43
    %s46 = sphi 0, %s45
    %s60 = sphi 0, %s46
    %s64 = sphi 0, %s64
    %s66 = sphi 0, %s64
    %s67 = sphi 0, %s66
    %s81 = sphi 0, %s67
    %s87 = sphi 0, %s89
    %s90 = sphi 0, %s87
    %s91 = sphi 0, %s90
    %s107 = sphi 0, %s91
  $region4: #{discriminator_forward.10} parent=0 // loop_header_branch
    %12 = sbr.rel (%p10) target = $region8
  $region5: #{discriminator_forward.10} parent=0 // loop_body
    %s14 = ssub.s32 %s9, 1
    %s15 = ssub.s32 %s9, 2
    %s16 = sadd.s32 %s9, 1
    %s17 = ssub.s32 %s9, %s16
    %p18 = scmp.eq.s32.totalorder %s17, 0
    %s20 = sadd.s32 %s19, 1
    %s21 = scalar_select %p18, %s19, %s20
    %p24 = pneg %p18
    %p25 = scmp.eq.s32.totalorder %s9, 1
    %p26 = por %p24, %p25
    %p27 = scmp.ne.s32.totalorder %s19, %s22
    %p28 = scmp.eq.s32.totalorder %s9, 0
    %p29 = por %p27, %p28
    %p30 = scmp.ne.s32.totalorder %s19, %s22
    %p31 = scmp.eq.s32.totalorder %s14, 1
    %p32 = por %p30, %p31
    %p33 = scmp.ne.s32.totalorder %s22, %s23
    %p34 = scmp.eq.s32.totalorder %s14, 0
    %p35 = por %p33, %p34
    %p36 = scmp.ne.s32.totalorder %s22, %s23
    %p37 = scmp.eq.s32.totalorder %s15, 1
    %p38 = por %p36, %p37
    %p40 = scmp.ne.s32.totalorder %s23, %s39
    %p41 = scmp.eq.s32.totalorder %s15, 0
    %p42 = por %p40, %p41
    %s44 = sadd.s32 %s43, 1
    %p47 = scmp.eq.s32.totalorder %s9, 1
    %p48 = scmp.ne.s32.totalorder %s43, %s45
    %p49 = scmp.eq.s32.totalorder %s9, 0
    %p50 = por %p48, %p49
    %p51 = scmp.ne.s32.totalorder %s43, %s45
    %p52 = scmp.eq.s32.totalorder %s14, 1
    %p53 = por %p51, %p52
    %p54 = scmp.ne.s32.totalorder %s45, %s46
    %p55 = scmp.eq.s32.totalorder %s14, 0
    %p56 = por %p54, %p55
    %p57 = scmp.ne.s32.totalorder %s45, %s46
    %p58 = scmp.eq.s32.totalorder %s15, 1
    %p59 = por %p57, %p58
    %p61 = scmp.ne.s32.totalorder %s46, %s60
    %p62 = scmp.eq.s32.totalorder %s15, 0
    %p63 = por %p61, %p62
    %s65 = sadd.s32 %s64, 1
    %p68 = scmp.eq.s32.totalorder %s9, 1
    %p69 = scmp.ne.s32.totalorder %s64, %s66
    %p70 = scmp.eq.s32.totalorder %s9, 0
    %p71 = por %p69, %p70
    %p72 = scmp.ne.s32.totalorder %s64, %s66
    %p73 = scmp.eq.s32.totalorder %s14, 1
    %p74 = por %p72, %p73
    %p75 = scmp.ne.s32.totalorder %s66, %s67
    %p76 = scmp.eq.s32.totalorder %s14, 0
    %p77 = por %p75, %p76
    %p78 = scmp.ne.s32.totalorder %s66, %s67
    %p79 = scmp.eq.s32.totalorder %s15, 1
    %p80 = por %p78, %p79
    %p82 = scmp.ne.s32.totalorder %s67, %s81
    %p83 = scmp.eq.s32.totalorder %s15, 0
    %p84 = por %p82, %p83
    %s85 = ssub.s32 %s9, %s16
    %p86 = scmp.eq.s32.totalorder %s85, 0
    %s88 = sadd.s32 %s87, 1
    %s89 = scalar_select %p86, %s87, %s88
    %p92 = pneg %p86
    %p93 = scmp.eq.s32.totalorder %s9, 1
    %p94 = por %p92, %p93
    %p95 = scmp.ne.s32.totalorder %s87, %s90
    %p96 = scmp.eq.s32.totalorder %s9, 0
    %p97 = por %p95, %p96
    %p98 = scmp.ne.s32.totalorder %s87, %s90
    %p99 = scmp.eq.s32.totalorder %s14, 1
    %p100 = por %p98, %p99
    %p101 = scmp.ne.s32.totalorder %s90, %s91
    %p102 = scmp.eq.s32.totalorder %s14, 0
    %p103 = por %p101, %p102
    %p104 = scmp.ne.s32.totalorder %s90, %s91
    %p105 = scmp.eq.s32.totalorder %s15, 1
    %p106 = por %p104, %p105
    %p108 = scmp.ne.s32.totalorder %s91, %s107
    %p109 = scmp.eq.s32.totalorder %s15, 0
    %p110 = por %p108, %p109
    %p111 = scmp.le.s32.totalorder 1, %s9
    %p112 = scmp.lt.s32.totalorder %s9, 3
    %p113 = pnand %p111, %p112
    %p114 = pneg %p113
    // Predicated region
    $region9: #{discriminator_forward.10} parent=5 // pred_check
      _
    $region10: #{discriminator_forward.10} parent=5 // pred_check_branch
      %116 = sbr.rel (%p113) target = $region12
    $region11: #{discriminator_forward.10} parent=5 // pred_region
      %s117 = ssub.s32 %s9, 1
      // Predicated region
      $region13: #{discriminator_forward.10} parent=11 // pred_check
        %p118 = pneg %p56
      $region14: #{discriminator_forward.10} parent=11 // pred_check_branch
        %120 = sbr.rel (%p118) target = $region16
      $region15: #{discriminator_forward.10} parent=11 // pred_region
        _
      $region16: #{discriminator_forward.10} parent=11 // pred_fallthru
        _
      // Predicated region
      $region17: #{discriminator_forward.10} parent=11 // pred_check
        %p121 = pneg %p77
      $region18: #{discriminator_forward.10} parent=11 // pred_check_branch
        %123 = sbr.rel (%p121) target = $region20
      $region19: #{discriminator_forward.10} parent=11 // pred_region
        _
      $region20: #{discriminator_forward.10} parent=11 // pred_fallthru
        _
    $region12: #{discriminator_forward.10} parent=5 // pred_fallthru
      _
    %p124 = scmp.lt.s32.totalorder %s9, 2
    // Predicated region
    $region21: #{discriminator_forward.10} parent=5 // pred_check
      %p125 = pneg %p124
    $region22: #{discriminator_forward.10} parent=5 // pred_check_branch
      %127 = sbr.rel (%p125) target = $region24
    $region23: #{discriminator_forward.10} parent=5 // pred_region
      // Predicated region
      $region25: #{discriminator_forward.10} parent=23 // pred_check
        %p128 = pneg %p29
      $region26: #{discriminator_forward.10} parent=23 // pred_check_branch
        %130 = sbr.rel (%p128) target = $region28
      $region27: #{discriminator_forward.10} parent=23 // pred_region
        %s131 = smul.u32 32, %s9
        %p132 = scmp.lt.s32.totalorder %s131, 63
        %s133 = scalar_select %p132, %s131, 63
        %s134 = smul.addr %s133, 8
        %s135 = scalar_lea.vmem %s0, %s134
        %s136 = smul.u32 32, %s9
      $region28: #{discriminator_forward.10} parent=23 // pred_fallthru
        _
    $region24: #{discriminator_forward.10} parent=5 // pred_fallthru
      _
    %p137 = scmp.le.s32.totalorder 1, %s9
    %p138 = scmp.lt.s32.totalorder %s9, 3
    %p139 = pnand %p137, %p138
    %p140 = pneg %p139
    // Predicated region
    $region29: #{discriminator_forward.10} parent=5 // pred_check
      _
    $region30: #{discriminator_forward.10} parent=5 // pred_check_branch
      %142 = sbr.rel (%p139) target = $region32
    $region31: #{discriminator_forward.10} parent=5 // pred_region
      %s143 = ssub.s32 %s9, 1
      %s144 = smul.u32 32, %s14
      %p145 = scmp.lt.s32.totalorder %s144, 63
      %s146 = scalar_select %p145, %s144, 63
      %s147 = smul.addr %s146, 8
      %s148 = scalar_lea.vmem %s0, %s147
      %p149 = pneg %p35
      %p150 = pneg %p32
      %p151 = pneg %p56
      %p152 = pneg %p53
      %p153 = pneg %p77
      %p154 = pneg %p74
      %p155 = pneg %p103
      %p156 = pneg %p100
      %s157 = smul.u32 32, %s14
      %p158 = scmp.lt.s32.totalorder %s157, 63
      %s159 = scalar_select %p158, %s157, 63
      %s160 = smul.addr %s159, 4
      %s161 = scalar_lea.vmem %s3, %s160
      %s162 = smul.u32 32, %s14
      %p163 = scmp.lt.s32.totalorder %s162, 63
      %s164 = scalar_select %p163, %s162, 63
      %s165 = smul.addr %s164, 8
      %s166 = scalar_lea.vmem %s0, %s165
      %s167 = smul.u32 32, %s14
      %s168 = smul.u32 32, %s14
      %p169 = scmp.lt.s32.totalorder %s168, 63
      %s170 = scalar_select %p169, %s168, 63
      %s171 = smul.addr %s170, 4
      %s172 = scalar_lea.vmem %s3, %s171
      %s173 = smul.u32 32, %s14
      %v174 = vld [vmem:[%s166] sm:$0xff]
      %v175 = vld [vmem:[%s166 + $0x8] sm:$0xff]
      %v176 = vld [vmem:[%s166 + $0x10] sm:$0xff]
      %v177 = vld [vmem:[%s166 + $0x18] sm:$0xff]
      %v178 = vld [vmem:[%s166 + $0x20] sm:$0xff]
      %v179 = vld [vmem:[%s166 + $0x28] sm:$0xff]
      %v180 = vld [vmem:[%s166 + $0x30] sm:$0xff]
      %v181 = vld [vmem:[%s166 + $0x38] sm:$0xff]
      %v182 = vld [vmem:[%s166 + $0x40] sm:$0xff]
      %v183 = vld [vmem:[%s166 + $0x48] sm:$0xff]
      %v184 = vld [vmem:[%s166 + $0x50] sm:$0xff]
      %v185 = vld [vmem:[%s166 + $0x58] sm:$0xff]
      %v186 = vld [vmem:[%s166 + $0x60] sm:$0xff]
      %v187 = vld [vmem:[%s166 + $0x68] sm:$0xff]
      %v188 = vld [vmem:[%s166 + $0x70] sm:$0xff]
      %v189 = vld [vmem:[%s166 + $0x78] sm:$0xff]
      %v190 = vld [vmem:[%s166 + $0x80] sm:$0xff]
      %v191 = vld [vmem:[%s166 + $0x88] sm:$0xff]
      %v192 = vld [vmem:[%s166 + $0x90] sm:$0xff]
      %v193 = vld [vmem:[%s166 + $0x98] sm:$0xff]
      %v194 = vld [vmem:[%s166 + $0xa0] sm:$0xff]
      %v195 = vld [vmem:[%s166 + $0xa8] sm:$0xff]
      %v196 = vld [vmem:[%s166 + $0xb0] sm:$0xff]
      %v197 = vld [vmem:[%s166 + $0xb8] sm:$0xff]
      %v198 = vld [vmem:[%s166 + $0xc0] sm:$0xff]
      %v199 = vld [vmem:[%s166 + $0xc8] sm:$0xff]
      %v200 = vld [vmem:[%s166 + $0xd0] sm:$0xff]
      %v201 = vld [vmem:[%s166 + $0xd8] sm:$0xff]
      %v202 = vld [vmem:[%s166 + $0xe0] sm:$0xff]
      %v203 = vld [vmem:[%s166 + $0xe8] sm:$0xff]
      %v204 = vld [vmem:[%s166 + $0xf0] sm:$0xff]
      %v205 = vld [vmem:[%s166 + $0xf8] sm:$0xff]
      %v206 = vld [vmem:[%s1] sm:$0x1]
      %v208 = vlaneseq
      %v209 = vshrl.u32 %v208, 7
      %v210 = vsub.s32 0, %v209
      %v211 = vrot.slane %v206, %v210
      %v213 = vmul.f32 %v174, %v211
      %v214 = vmul.f32 %v175, %v211
      %v215 = vmul.f32 %v176, %v211
      %v216 = vmul.f32 %v177, %v211
      %v217 = vmul.f32 %v178, %v211
      %v218 = vmul.f32 %v179, %v211
      %v219 = vmul.f32 %v180, %v211
      %v220 = vmul.f32 %v181, %v211
      %v221 = vmul.f32 %v182, %v211
      %v222 = vmul.f32 %v183, %v211
      %v223 = vmul.f32 %v184, %v211
      %v224 = vmul.f32 %v185, %v211
      %v225 = vmul.f32 %v186, %v211
      %v226 = vmul.f32 %v187, %v211
      %v227 = vmul.f32 %v188, %v211
      %v228 = vmul.f32 %v189, %v211
      %v229 = vmul.f32 %v190, %v211
      %v230 = vmul.f32 %v191, %v211
      %v231 = vmul.f32 %v192, %v211
      %v232 = vmul.f32 %v193, %v211
      %v233 = vmul.f32 %v194, %v211
      %v234 = vmul.f32 %v195, %v211
      %v235 = vmul.f32 %v196, %v211
      %v236 = vmul.f32 %v197, %v211
      %v237 = vmul.f32 %v198, %v211
      %v238 = vmul.f32 %v199, %v211
      %v239 = vmul.f32 %v200, %v211
      %v240 = vmul.f32 %v201, %v211
      %v241 = vmul.f32 %v202, %v211
      %v242 = vmul.f32 %v203, %v211
      %v243 = vmul.f32 %v204, %v211
      %v244 = vmul.f32 %v205, %v211
      %v245 = vld [vmem:[%s2] sm:$0x1]
      %v247 = vlaneseq
      %v248 = vshrl.u32 %v247, 7
      %v249 = vsub.s32 0, %v248
      %v250 = vrot.slane %v245, %v249
      %v252 = vadd.f32 %v213, %v250
      %v253 = vadd.f32 %v214, %v250
      %v254 = vadd.f32 %v215, %v250
      %v255 = vadd.f32 %v216, %v250
      %v256 = vadd.f32 %v217, %v250
      %v257 = vadd.f32 %v218, %v250
      %v258 = vadd.f32 %v219, %v250
      %v259 = vadd.f32 %v220, %v250
      %v260 = vadd.f32 %v221, %v250
      %v261 = vadd.f32 %v222, %v250
      %v262 = vadd.f32 %v223, %v250
      %v263 = vadd.f32 %v224, %v250
      %v264 = vadd.f32 %v225, %v250
      %v265 = vadd.f32 %v226, %v250
      %v266 = vadd.f32 %v227, %v250
      %v267 = vadd.f32 %v228, %v250
      %v268 = vadd.f32 %v229, %v250
      %v269 = vadd.f32 %v230, %v250
      %v270 = vadd.f32 %v231, %v250
      %v271 = vadd.f32 %v232, %v250
      %v272 = vadd.f32 %v233, %v250
      %v273 = vadd.f32 %v234, %v250
      %v274 = vadd.f32 %v235, %v250
      %v275 = vadd.f32 %v236, %v250
      %v276 = vadd.f32 %v237, %v250
      %v277 = vadd.f32 %v238, %v250
      %v278 = vadd.f32 %v239, %v250
      %v279 = vadd.f32 %v240, %v250
      %v280 = vadd.f32 %v241, %v250
      %v281 = vadd.f32 %v242, %v250
      %v282 = vadd.f32 %v243, %v250
      %v283 = vadd.f32 %v244, %v250
      %vm284 = vcmp.ge.f32.partialorder %v252, 0.0
      %vm285 = vcmp.ge.f32.partialorder %v253, 0.0
      %vm286 = vcmp.ge.f32.partialorder %v254, 0.0
      %vm287 = vcmp.ge.f32.partialorder %v255, 0.0
      %vm288 = vcmp.ge.f32.partialorder %v256, 0.0
      %vm289 = vcmp.ge.f32.partialorder %v257, 0.0
      %vm290 = vcmp.ge.f32.partialorder %v258, 0.0
      %vm291 = vcmp.ge.f32.partialorder %v259, 0.0
      %vm292 = vcmp.ge.f32.partialorder %v260, 0.0
      %vm293 = vcmp.ge.f32.partialorder %v261, 0.0
      %vm294 = vcmp.ge.f32.partialorder %v262, 0.0
      %vm295 = vcmp.ge.f32.partialorder %v263, 0.0
      %vm296 = vcmp.ge.f32.partialorder %v264, 0.0
      %vm297 = vcmp.ge.f32.partialorder %v265, 0.0
      %vm298 = vcmp.ge.f32.partialorder %v266, 0.0
      %vm299 = vcmp.ge.f32.partialorder %v267, 0.0
      %vm300 = vcmp.ge.f32.partialorder %v268, 0.0
      %vm301 = vcmp.ge.f32.partialorder %v269, 0.0
      %vm302 = vcmp.ge.f32.partialorder %v270, 0.0
      %vm303 = vcmp.ge.f32.partialorder %v271, 0.0
      %vm304 = vcmp.ge.f32.partialorder %v272, 0.0
      %vm305 = vcmp.ge.f32.partialorder %v273, 0.0
      %vm306 = vcmp.ge.f32.partialorder %v274, 0.0
      %vm307 = vcmp.ge.f32.partialorder %v275, 0.0
      %vm308 = vcmp.ge.f32.partialorder %v276, 0.0
      %vm309 = vcmp.ge.f32.partialorder %v277, 0.0
      %vm310 = vcmp.ge.f32.partialorder %v278, 0.0
      %vm311 = vcmp.ge.f32.partialorder %v279, 0.0
      %vm312 = vcmp.ge.f32.partialorder %v280, 0.0
      %vm313 = vcmp.ge.f32.partialorder %v281, 0.0
      %vm314 = vcmp.ge.f32.partialorder %v282, 0.0
      %vm315 = vcmp.ge.f32.partialorder %v283, 0.0
      %v316 = vmul.f32 %v252, 0.2
      %v317 = vmul.f32 %v253, 0.2
      %v318 = vmul.f32 %v254, 0.2
      %v319 = vmul.f32 %v255, 0.2
      %v320 = vmul.f32 %v256, 0.2
      %v321 = vmul.f32 %v257, 0.2
      %v322 = vmul.f32 %v258, 0.2
      %v323 = vmul.f32 %v259, 0.2
      %v324 = vmul.f32 %v260, 0.2
      %v325 = vmul.f32 %v261, 0.2
      %v326 = vmul.f32 %v262, 0.2
      %v327 = vmul.f32 %v263, 0.2
      %v328 = vmul.f32 %v264, 0.2
      %v329 = vmul.f32 %v265, 0.2
      %v330 = vmul.f32 %v266, 0.2
      %v331 = vmul.f32 %v267, 0.2
      %v332 = vmul.f32 %v268, 0.2
      %v333 = vmul.f32 %v269, 0.2
      %v334 = vmul.f32 %v270, 0.2
      %v335 = vmul.f32 %v271, 0.2
      %v336 = vmul.f32 %v272, 0.2
      %v337 = vmul.f32 %v273, 0.2
      %v338 = vmul.f32 %v274, 0.2
      %v339 = vmul.f32 %v275, 0.2
      %v340 = vmul.f32 %v276, 0.2
      %v341 = vmul.f32 %v277, 0.2
      %v342 = vmul.f32 %v278, 0.2
      %v343 = vmul.f32 %v279, 0.2
      %v344 = vmul.f32 %v280, 0.2
      %v345 = vmul.f32 %v281, 0.2
      %v346 = vmul.f32 %v282, 0.2
      %v347 = vmul.f32 %v283, 0.2
      %v348 = vsel %vm284, %v252, %v316
      %v349 = vsel %vm285, %v253, %v317
      %v350 = vsel %vm286, %v254, %v318
      %v351 = vsel %vm287, %v255, %v319
      %v352 = vsel %vm288, %v256, %v320
      %v353 = vsel %vm289, %v257, %v321
      %v354 = vsel %vm290, %v258, %v322
      %v355 = vsel %vm291, %v259, %v323
      %v356 = vsel %vm292, %v260, %v324
      %v357 = vsel %vm293, %v261, %v325
      %v358 = vsel %vm294, %v262, %v326
      %v359 = vsel %vm295, %v263, %v327
      %v360 = vsel %vm296, %v264, %v328
      %v361 = vsel %vm297, %v265, %v329
      %v362 = vsel %vm298, %v266, %v330
      %v363 = vsel %vm299, %v267, %v331
      %v364 = vsel %vm300, %v268, %v332
      %v365 = vsel %vm301, %v269, %v333
      %v366 = vsel %vm302, %v270, %v334
      %v367 = vsel %vm303, %v271, %v335
      %v368 = vsel %vm304, %v272, %v336
      %v369 = vsel %vm305, %v273, %v337
      %v370 = vsel %vm306, %v274, %v338
      %v371 = vsel %vm307, %v275, %v339
      %v372 = vsel %vm308, %v276, %v340
      %v373 = vsel %vm309, %v277, %v341
      %v374 = vsel %vm310, %v278, %v342
      %v375 = vsel %vm311, %v279, %v343
      %v376 = vsel %vm312, %v280, %v344
      %v377 = vsel %vm313, %v281, %v345
      %v378 = vsel %vm314, %v282, %v346
      %v379 = vsel %vm315, %v283, %v347
      %v380 = vpack.c.bf16 %v349, %v348
      %v381 = vpack.c.bf16 %v351, %v350
      %v382 = vpack.c.bf16 %v353, %v352
      %v383 = vpack.c.bf16 %v355, %v354
      %v384 = vpack.c.bf16 %v357, %v356
      %v385 = vpack.c.bf16 %v359, %v358
      %v386 = vpack.c.bf16 %v361, %v360
      %v387 = vpack.c.bf16 %v363, %v362
      %v388 = vpack.c.bf16 %v365, %v364
      %v389 = vpack.c.bf16 %v367, %v366
      %v390 = vpack.c.bf16 %v369, %v368
      %v391 = vpack.c.bf16 %v371, %v370
      %v392 = vpack.c.bf16 %v373, %v372
      %v393 = vpack.c.bf16 %v375, %v374
      %v394 = vpack.c.bf16 %v377, %v376
      %v395 = vpack.c.bf16 %v379, %v378
      %v412 = vunpack.c.l.b16 %v380
      %v413 = vunpack.c.h.b16 %v380
      %v414 = vunpack.c.l.b16 %v381
      %v415 = vunpack.c.h.b16 %v381
      %v416 = vunpack.c.l.b16 %v382
      %v417 = vunpack.c.h.b16 %v382
      %v418 = vunpack.c.l.b16 %v383
      %v419 = vunpack.c.h.b16 %v383
      %v420 = vunpack.c.l.b16 %v384
      %v421 = vunpack.c.h.b16 %v384
      %v422 = vunpack.c.l.b16 %v385
      %v423 = vunpack.c.h.b16 %v385
      %v424 = vunpack.c.l.b16 %v386
      %v425 = vunpack.c.h.b16 %v386
      %v426 = vunpack.c.l.b16 %v387
      %v427 = vunpack.c.h.b16 %v387
      %v428 = vunpack.c.l.b16 %v388
      %v429 = vunpack.c.h.b16 %v388
      %v430 = vunpack.c.l.b16 %v389
      %v431 = vunpack.c.h.b16 %v389
      %v432 = vunpack.c.l.b16 %v390
      %v433 = vunpack.c.h.b16 %v390
      %v434 = vunpack.c.l.b16 %v391
      %v435 = vunpack.c.h.b16 %v391
      %v436 = vunpack.c.l.b16 %v392
      %v437 = vunpack.c.h.b16 %v392
      %v438 = vunpack.c.l.b16 %v393
      %v439 = vunpack.c.h.b16 %v393
      %v440 = vunpack.c.l.b16 %v394
      %v441 = vunpack.c.h.b16 %v394
      %v442 = vunpack.c.l.b16 %v395
      %v443 = vunpack.c.h.b16 %v395
      %v444 = vpack.c.b16 %v412, %v412
      %v445 = vpack.c.b16 %v413, %v413
      %v446 = vpack.c.b16 %v414, %v414
      %v447 = vpack.c.b16 %v415, %v415
      %v448 = vpack.c.b16 %v416, %v416
      %v449 = vpack.c.b16 %v417, %v417
      %v450 = vpack.c.b16 %v418, %v418
      %v451 = vpack.c.b16 %v419, %v419
      %v452 = vpack.c.b16 %v420, %v420
      %v453 = vpack.c.b16 %v421, %v421
      %v454 = vpack.c.b16 %v422, %v422
      %v455 = vpack.c.b16 %v423, %v423
      %v456 = vpack.c.b16 %v424, %v424
      %v457 = vpack.c.b16 %v425, %v425
      %v458 = vpack.c.b16 %v426, %v426
      %v459 = vpack.c.b16 %v427, %v427
      %v460 = vpack.c.b16 %v428, %v428
      %v461 = vpack.c.b16 %v429, %v429
      %v462 = vpack.c.b16 %v430, %v430
      %v463 = vpack.c.b16 %v431, %v431
      %v464 = vpack.c.b16 %v432, %v432
      %v465 = vpack.c.b16 %v433, %v433
      %v466 = vpack.c.b16 %v434, %v434
      %v467 = vpack.c.b16 %v435, %v435
      %v468 = vpack.c.b16 %v436, %v436
      %v469 = vpack.c.b16 %v437, %v437
      %v470 = vpack.c.b16 %v438, %v438
      %v471 = vpack.c.b16 %v439, %v439
      %v472 = vpack.c.b16 %v440, %v440
      %v473 = vpack.c.b16 %v441, %v441
      %v474 = vpack.c.b16 %v442, %v442
      %v475 = vpack.c.b16 %v443, %v443
      %508 = vst [vmem:[%s172] sm:$0xf] %v444
      %509 = vst [vmem:[%s172 + $0x4] sm:$0xf] %v445
      %510 = vst [vmem:[%s172 + $0x8] sm:$0xf] %v446
      %511 = vst [vmem:[%s172 + $0xc] sm:$0xf] %v447
      %512 = vst [vmem:[%s172 + $0x10] sm:$0xf] %v448
      %513 = vst [vmem:[%s172 + $0x14] sm:$0xf] %v449
      %514 = vst [vmem:[%s172 + $0x18] sm:$0xf] %v450
      %515 = vst [vmem:[%s172 + $0x1c] sm:$0xf] %v451
      %516 = vst [vmem:[%s172 + $0x20] sm:$0xf] %v452
      %517 = vst [vmem:[%s172 + $0x24] sm:$0xf] %v453
      %518 = vst [vmem:[%s172 + $0x28] sm:$0xf] %v454
      %519 = vst [vmem:[%s172 + $0x2c] sm:$0xf] %v455
      %520 = vst [vmem:[%s172 + $0x30] sm:$0xf] %v456
      %521 = vst [vmem:[%s172 + $0x34] sm:$0xf] %v457
      %522 = vst [vmem:[%s172 + $0x38] sm:$0xf] %v458
      %523 = vst [vmem:[%s172 + $0x3c] sm:$0xf] %v459
      %524 = vst [vmem:[%s172 + $0x40] sm:$0xf] %v460
      %525 = vst [vmem:[%s172 + $0x44] sm:$0xf] %v461
      %526 = vst [vmem:[%s172 + $0x48] sm:$0xf] %v462
      %527 = vst [vmem:[%s172 + $0x4c] sm:$0xf] %v463
      %528 = vst [vmem:[%s172 + $0x50] sm:$0xf] %v464
      %529 = vst [vmem:[%s172 + $0x54] sm:$0xf] %v465
      %530 = vst [vmem:[%s172 + $0x58] sm:$0xf] %v466
      %531 = vst [vmem:[%s172 + $0x5c] sm:$0xf] %v467
      %532 = vst [vmem:[%s172 + $0x60] sm:$0xf] %v468
      %533 = vst [vmem:[%s172 + $0x64] sm:$0xf] %v469
      %534 = vst [vmem:[%s172 + $0x68] sm:$0xf] %v470
      %535 = vst [vmem:[%s172 + $0x6c] sm:$0xf] %v471
      %536 = vst [vmem:[%s172 + $0x70] sm:$0xf] %v472
      %537 = vst [vmem:[%s172 + $0x74] sm:$0xf] %v473
      %538 = vst [vmem:[%s172 + $0x78] sm:$0xf] %v474
      %539 = vst [vmem:[%s172 + $0x7c] sm:$0xf] %v475
      %s540 = smul.u32 32, %s14
      %p541 = scmp.lt.s32.totalorder %s540, 63
      %s542 = scalar_select %p541, %s540, 63
      %s543 = smul.addr %s542, 4
      %s544 = scalar_lea.vmem %s3, %s543
      // Predicated region
      $region33: #{discriminator_forward.10} parent=31 // pred_check
        %p545 = pneg %p100
      $region34: #{discriminator_forward.10} parent=31 // pred_check_branch
        %547 = sbr.rel (%p545) target = $region36
      $region35: #{discriminator_forward.10} parent=31 // pred_region
        %s548 = smul.u32 32, %s14
      $region36: #{discriminator_forward.10} parent=31 // pred_fallthru
        _
    $region32: #{discriminator_forward.10} parent=5 // pred_fallthru
      _
    %p549 = scmp.le.s32.totalorder 2, %s9
    // Predicated region
    $region37: #{discriminator_forward.10} parent=5 // pred_check
      %p550 = pneg %p549
    $region38: #{discriminator_forward.10} parent=5 // pred_check_branch
      %552 = sbr.rel (%p550) target = $region40
    $region39: #{discriminator_forward.10} parent=5 // pred_region
      %s553 = ssub.s32 %s9, 2
      // Predicated region
      $region41: #{discriminator_forward.10} parent=39 // pred_check
        %p554 = pneg %p106
      $region42: #{discriminator_forward.10} parent=39 // pred_check_branch
        %556 = sbr.rel (%p554) target = $region44
      $region43: #{discriminator_forward.10} parent=39 // pred_region
        %s557 = smul.u32 32, %s15
        %p558 = scmp.lt.s32.totalorder %s557, 63
        %s559 = scalar_select %p558, %s557, 63
        %s560 = smul.addr %s559, 4
        %s561 = scalar_lea.vmem %s3, %s560
      $region44: #{discriminator_forward.10} parent=39 // pred_fallthru
        _
    $region40: #{discriminator_forward.10} parent=5 // pred_fallthru
      _
  $region6: #{discriminator_forward.10} parent=0 // loop_footer
    %s13 = sadd.s32 1, %s9
  $region7: #{discriminator_forward.10} parent=0 // loop_footer_branch
    %8 = sbr.rel target = $region3
  $region8: #{discriminator_forward.10} parent=0 // loop_exit
    _

// kernel: discriminator_forward.12
$region0: #{discriminator_forward.12}
  #allocation0 [shape = 'u32[]', space=smem, size = 0x4, offset = 0x4, fixed_abs, tag = 'smem constant byte address 0x4 - core index']
  #allocation1 [shape = 'u32[144,128]{1,0:T(1,128)}', space=vmem, size = 0x12000, scoped, tag = 'internal scratch']
  %s0 = inlined_call_operand.vmem [shape: f32[128,256], index: 0, kind: input, shape index: {}]
  %s1 = inlined_call_operand.vmem [shape: f32[1,256], index: 1, kind: input, shape index: {}]
  %s2 = inlined_call_operand.vmem [shape: f32[1,256], index: 2, kind: input, shape index: {}]
  %s3 = inlined_call_operand.vmem [shape: bf16[128,256], index: 3, kind: output, shape index: {}]
  %s4 = sld [smem:[#allocation0]]
  $region22: #{discriminator_forward.12} parent=0
    _
  %s6 = ssub.s32 1, %s4
  %s7 = scalar_select 0, %s6, %s4
  // Predicated region
  $region2: #{discriminator_forward.12} parent=0 // pred_check
    _
  $region3: #{discriminator_forward.12} parent=0 // pred_check_branch
    %9 = sbr.rel (0) target = $region5
  $region4: #{discriminator_forward.12} parent=0 // pred_region
    _
  $region5: #{discriminator_forward.12} parent=0 // pred_fallthru
    _
  // Predicated region
  $region6: #{discriminator_forward.12} parent=0 // pred_check
    _
  $region7: #{discriminator_forward.12} parent=0 // pred_check_branch
    %11 = sbr.rel (0) target = $region9
  $region8: #{discriminator_forward.12} parent=0 // pred_region
    _
  $region9: #{discriminator_forward.12} parent=0 // pred_fallthru
    _
  // Predicated region
  $region10: #{discriminator_forward.12} parent=0 // pred_check
    _
  $region11: #{discriminator_forward.12} parent=0 // pred_check_branch
    %13 = sbr.rel (0) target = $region13
  $region12: #{discriminator_forward.12} parent=0 // pred_region
    _
  $region13: #{discriminator_forward.12} parent=0 // pred_fallthru
    _
  %v14 = vld [vmem:[%s0] sm:$0xff]
  %v15 = vld [vmem:[%s0 + $0x8] sm:$0xff]
  %v16 = vld [vmem:[%s0 + $0x10] sm:$0xff]
  %v17 = vld [vmem:[%s0 + $0x18] sm:$0xff]
  %v18 = vld [vmem:[%s0 + $0x20] sm:$0xff]
  %v19 = vld [vmem:[%s0 + $0x28] sm:$0xff]
  %v20 = vld [vmem:[%s0 + $0x30] sm:$0xff]
  %v21 = vld [vmem:[%s0 + $0x38] sm:$0xff]
  %v22 = vld [vmem:[%s0 + $0x40] sm:$0xff]
  %v23 = vld [vmem:[%s0 + $0x48] sm:$0xff]
  %v24 = vld [vmem:[%s0 + $0x50] sm:$0xff]
  %v25 = vld [vmem:[%s0 + $0x58] sm:$0xff]
  %v26 = vld [vmem:[%s0 + $0x60] sm:$0xff]
  %v27 = vld [vmem:[%s0 + $0x68] sm:$0xff]
  %v28 = vld [vmem:[%s0 + $0x70] sm:$0xff]
  %v29 = vld [vmem:[%s0 + $0x78] sm:$0xff]
  %v30 = vld [vmem:[%s0 + $0x80] sm:$0xff]
  %v31 = vld [vmem:[%s0 + $0x88] sm:$0xff]
  %v32 = vld [vmem:[%s0 + $0x90] sm:$0xff]
  %v33 = vld [vmem:[%s0 + $0x98] sm:$0xff]
  %v34 = vld [vmem:[%s0 + $0xa0] sm:$0xff]
  %v35 = vld [vmem:[%s0 + $0xa8] sm:$0xff]
  %v36 = vld [vmem:[%s0 + $0xb0] sm:$0xff]
  %v37 = vld [vmem:[%s0 + $0xb8] sm:$0xff]
  %v38 = vld [vmem:[%s0 + $0xc0] sm:$0xff]
  %v39 = vld [vmem:[%s0 + $0xc8] sm:$0xff]
  %v40 = vld [vmem:[%s0 + $0xd0] sm:$0xff]
  %v41 = vld [vmem:[%s0 + $0xd8] sm:$0xff]
  %v42 = vld [vmem:[%s0 + $0xe0] sm:$0xff]
  %v43 = vld [vmem:[%s0 + $0xe8] sm:$0xff]
  %v44 = vld [vmem:[%s0 + $0xf0] sm:$0xff]
  %v45 = vld [vmem:[%s0 + $0xf8] sm:$0xff]
  %v46 = vld [vmem:[%s1] sm:$0x3]
  %v48 = vlaneseq
  %v49 = vshrl.u32 %v48, 7
  %v50 = vsub.s32 0, %v49
  %v51 = vrot.slane %v46, %v50
  %v52 = vlaneseq
  %v53 = vshrl.u32 %v52, 7
  %v54 = vsub.s32 1, %v53
  %v55 = vrot.slane %v46, %v54
  %v58 = vmul.f32 %v14, %v51
  %v59 = vmul.f32 %v15, %v55
  %v60 = vmul.f32 %v16, %v51
  %v61 = vmul.f32 %v17, %v55
  %v62 = vmul.f32 %v18, %v51
  %v63 = vmul.f32 %v19, %v55
  %v64 = vmul.f32 %v20, %v51
  %v65 = vmul.f32 %v21, %v55
  %v66 = vmul.f32 %v22, %v51
  %v67 = vmul.f32 %v23, %v55
  %v68 = vmul.f32 %v24, %v51
  %v69 = vmul.f32 %v25, %v55
  %v70 = vmul.f32 %v26, %v51
  %v71 = vmul.f32 %v27, %v55
  %v72 = vmul.f32 %v28, %v51
  %v73 = vmul.f32 %v29, %v55
  %v74 = vmul.f32 %v30, %v51
  %v75 = vmul.f32 %v31, %v55
  %v76 = vmul.f32 %v32, %v51
  %v77 = vmul.f32 %v33, %v55
  %v78 = vmul.f32 %v34, %v51
  %v79 = vmul.f32 %v35, %v55
  %v80 = vmul.f32 %v36, %v51
  %v81 = vmul.f32 %v37, %v55
  %v82 = vmul.f32 %v38, %v51
  %v83 = vmul.f32 %v39, %v55
  %v84 = vmul.f32 %v40, %v51
  %v85 = vmul.f32 %v41, %v55
  %v86 = vmul.f32 %v42, %v51
  %v87 = vmul.f32 %v43, %v55
  %v88 = vmul.f32 %v44, %v51
  %v89 = vmul.f32 %v45, %v55
  %v90 = vld [vmem:[%s2] sm:$0x3]
  %v92 = vlaneseq
  %v93 = vshrl.u32 %v92, 7
  %v94 = vsub.s32 0, %v93
  %v95 = vrot.slane %v90, %v94
  %v96 = vlaneseq
  %v97 = vshrl.u32 %v96, 7
  %v98 = vsub.s32 1, %v97
  %v99 = vrot.slane %v90, %v98
  %v102 = vadd.f32 %v58, %v95
  %v103 = vadd.f32 %v59, %v99
  %v104 = vadd.f32 %v60, %v95
  %v105 = vadd.f32 %v61, %v99
  %v106 = vadd.f32 %v62, %v95
  %v107 = vadd.f32 %v63, %v99
  %v108 = vadd.f32 %v64, %v95
  %v109 = vadd.f32 %v65, %v99
  %v110 = vadd.f32 %v66, %v95
  %v111 = vadd.f32 %v67, %v99
  %v112 = vadd.f32 %v68, %v95
  %v113 = vadd.f32 %v69, %v99
  %v114 = vadd.f32 %v70, %v95
  %v115 = vadd.f32 %v71, %v99
  %v116 = vadd.f32 %v72, %v95
  %v117 = vadd.f32 %v73, %v99
  %v118 = vadd.f32 %v74, %v95
  %v119 = vadd.f32 %v75, %v99
  %v120 = vadd.f32 %v76, %v95
  %v121 = vadd.f32 %v77, %v99
  %v122 = vadd.f32 %v78, %v95
  %v123 = vadd.f32 %v79, %v99
  %v124 = vadd.f32 %v80, %v95
  %v125 = vadd.f32 %v81, %v99
  %v126 = vadd.f32 %v82, %v95
  %v127 = vadd.f32 %v83, %v99
  %v128 = vadd.f32 %v84, %v95
  %v129 = vadd.f32 %v85, %v99
  %v130 = vadd.f32 %v86, %v95
  %v131 = vadd.f32 %v87, %v99
  %v132 = vadd.f32 %v88, %v95
  %v133 = vadd.f32 %v89, %v99
  %vm134 = vcmp.ge.f32.partialorder %v102, 0.0
  %vm135 = vcmp.ge.f32.partialorder %v103, 0.0
  %vm136 = vcmp.ge.f32.partialorder %v104, 0.0
  %vm137 = vcmp.ge.f32.partialorder %v105, 0.0
  %vm138 = vcmp.ge.f32.partialorder %v106, 0.0
  %vm139 = vcmp.ge.f32.partialorder %v107, 0.0
  %vm140 = vcmp.ge.f32.partialorder %v108, 0.0
  %vm141 = vcmp.ge.f32.partialorder %v109, 0.0
  %vm142 = vcmp.ge.f32.partialorder %v110, 0.0
  %vm143 = vcmp.ge.f32.partialorder %v111, 0.0
  %vm144 = vcmp.ge.f32.partialorder %v112, 0.0
  %vm145 = vcmp.ge.f32.partialorder %v113, 0.0
  %vm146 = vcmp.ge.f32.partialorder %v114, 0.0
  %vm147 = vcmp.ge.f32.partialorder %v115, 0.0
  %vm148 = vcmp.ge.f32.partialorder %v116, 0.0
  %vm149 = vcmp.ge.f32.partialorder %v117, 0.0
  %vm150 = vcmp.ge.f32.partialorder %v118, 0.0
  %vm151 = vcmp.ge.f32.partialorder %v119, 0.0
  %vm152 = vcmp.ge.f32.partialorder %v120, 0.0
  %vm153 = vcmp.ge.f32.partialorder %v121, 0.0
  %vm154 = vcmp.ge.f32.partialorder %v122, 0.0
  %vm155 = vcmp.ge.f32.partialorder %v123, 0.0
  %vm156 = vcmp.ge.f32.partialorder %v124, 0.0
  %vm157 = vcmp.ge.f32.partialorder %v125, 0.0
  %vm158 = vcmp.ge.f32.partialorder %v126, 0.0
  %vm159 = vcmp.ge.f32.partialorder %v127, 0.0
  %vm160 = vcmp.ge.f32.partialorder %v128, 0.0
  %vm161 = vcmp.ge.f32.partialorder %v129, 0.0
  %vm162 = vcmp.ge.f32.partialorder %v130, 0.0
  %vm163 = vcmp.ge.f32.partialorder %v131, 0.0
  %vm164 = vcmp.ge.f32.partialorder %v132, 0.0
  %vm165 = vcmp.ge.f32.partialorder %v133, 0.0
  %v166 = vmul.f32 %v102, 0.2
  %v167 = vmul.f32 %v103, 0.2
  %v168 = vmul.f32 %v104, 0.2
  %v169 = vmul.f32 %v105, 0.2
  %v170 = vmul.f32 %v106, 0.2
  %v171 = vmul.f32 %v107, 0.2
  %v172 = vmul.f32 %v108, 0.2
  %v173 = vmul.f32 %v109, 0.2
  %v174 = vmul.f32 %v110, 0.2
  %v175 = vmul.f32 %v111, 0.2
  %v176 = vmul.f32 %v112, 0.2
  %v177 = vmul.f32 %v113, 0.2
  %v178 = vmul.f32 %v114, 0.2
  %v179 = vmul.f32 %v115, 0.2
  %v180 = vmul.f32 %v116, 0.2
  %v181 = vmul.f32 %v117, 0.2
  %v182 = vmul.f32 %v118, 0.2
  %v183 = vmul.f32 %v119, 0.2
  %v184 = vmul.f32 %v120, 0.2
  %v185 = vmul.f32 %v121, 0.2
  %v186 = vmul.f32 %v122, 0.2
  %v187 = vmul.f32 %v123, 0.2
  %v188 = vmul.f32 %v124, 0.2
  %v189 = vmul.f32 %v125, 0.2
  %v190 = vmul.f32 %v126, 0.2
  %v191 = vmul.f32 %v127, 0.2
  %v192 = vmul.f32 %v128, 0.2
  %v193 = vmul.f32 %v129, 0.2
  %v194 = vmul.f32 %v130, 0.2
  %v195 = vmul.f32 %v131, 0.2
  %v196 = vmul.f32 %v132, 0.2
  %v197 = vmul.f32 %v133, 0.2
  %v198 = vsel %vm134, %v102, %v166
  %v199 = vsel %vm135, %v103, %v167
  %v200 = vsel %vm136, %v104, %v168
  %v201 = vsel %vm137, %v105, %v169
  %v202 = vsel %vm138, %v106, %v170
  %v203 = vsel %vm139, %v107, %v171
  %v204 = vsel %vm140, %v108, %v172
  %v205 = vsel %vm141, %v109, %v173
  %v206 = vsel %vm142, %v110, %v174
  %v207 = vsel %vm143, %v111, %v175
  %v208 = vsel %vm144, %v112, %v176
  %v209 = vsel %vm145, %v113, %v177
  %v210 = vsel %vm146, %v114, %v178
  %v211 = vsel %vm147, %v115, %v179
  %v212 = vsel %vm148, %v116, %v180
  %v213 = vsel %vm149, %v117, %v181
  %v214 = vsel %vm150, %v118, %v182
  %v215 = vsel %vm151, %v119, %v183
  %v216 = vsel %vm152, %v120, %v184
  %v217 = vsel %vm153, %v121, %v185
  %v218 = vsel %vm154, %v122, %v186
  %v219 = vsel %vm155, %v123, %v187
  %v220 = vsel %vm156, %v124, %v188
  %v221 = vsel %vm157, %v125, %v189
  %v222 = vsel %vm158, %v126, %v190
  %v223 = vsel %vm159, %v127, %v191
  %v224 = vsel %vm160, %v128, %v192
  %v225 = vsel %vm161, %v129, %v193
  %v226 = vsel %vm162, %v130, %v194
  %v227 = vsel %vm163, %v131, %v195
  %v228 = vsel %vm164, %v132, %v196
  %v229 = vsel %vm165, %v133, %v197
  %v230 = vpack.c.bf16 %v200, %v198
  %v231 = vpack.c.bf16 %v201, %v199
  %v232 = vpack.c.bf16 %v204, %v202
  %v233 = vpack.c.bf16 %v205, %v203
  %v234 = vpack.c.bf16 %v208, %v206
  %v235 = vpack.c.bf16 %v209, %v207
  %v236 = vpack.c.bf16 %v212, %v210
  %v237 = vpack.c.bf16 %v213, %v211
  %v238 = vpack.c.bf16 %v216, %v214
  %v239 = vpack.c.bf16 %v217, %v215
  %v240 = vpack.c.bf16 %v220, %v218
  %v241 = vpack.c.bf16 %v221, %v219
  %v242 = vpack.c.bf16 %v224, %v222
  %v243 = vpack.c.bf16 %v225, %v223
  %v244 = vpack.c.bf16 %v228, %v226
  %v245 = vpack.c.bf16 %v229, %v227
  %v262 = vunpack.c.l.b16 %v230
  %v263 = vunpack.c.l.b16 %v231
  %v264 = vunpack.c.h.b16 %v230
  %v265 = vunpack.c.h.b16 %v231
  %v266 = vunpack.c.l.b16 %v232
  %v267 = vunpack.c.l.b16 %v233
  %v268 = vunpack.c.h.b16 %v232
  %v269 = vunpack.c.h.b16 %v233
  %v270 = vunpack.c.l.b16 %v234
  %v271 = vunpack.c.l.b16 %v235
  %v272 = vunpack.c.h.b16 %v234
  %v273 = vunpack.c.h.b16 %v235
  %v274 = vunpack.c.l.b16 %v236
  %v275 = vunpack.c.l.b16 %v237
  %v276 = vunpack.c.h.b16 %v236
  %v277 = vunpack.c.h.b16 %v237
  %v278 = vunpack.c.l.b16 %v238
  %v279 = vunpack.c.l.b16 %v239
  %v280 = vunpack.c.h.b16 %v238
  %v281 = vunpack.c.h.b16 %v239
  %v282 = vunpack.c.l.b16 %v240
  %v283 = vunpack.c.l.b16 %v241
  %v284 = vunpack.c.h.b16 %v240
  %v285 = vunpack.c.h.b16 %v241
  %v286 = vunpack.c.l.b16 %v242
  %v287 = vunpack.c.l.b16 %v243
  %v288 = vunpack.c.h.b16 %v242
  %v289 = vunpack.c.h.b16 %v243
  %v290 = vunpack.c.l.b16 %v244
  %v291 = vunpack.c.l.b16 %v245
  %v292 = vunpack.c.h.b16 %v244
  %v293 = vunpack.c.h.b16 %v245
  %v294 = vpack.c.b16 %v263, %v262
  %v295 = vpack.c.b16 %v265, %v264
  %v296 = vpack.c.b16 %v267, %v266
  %v297 = vpack.c.b16 %v269, %v268
  %v298 = vpack.c.b16 %v271, %v270
  %v299 = vpack.c.b16 %v273, %v272
  %v300 = vpack.c.b16 %v275, %v274
  %v301 = vpack.c.b16 %v277, %v276
  %v302 = vpack.c.b16 %v279, %v278
  %v303 = vpack.c.b16 %v281, %v280
  %v304 = vpack.c.b16 %v283, %v282
  %v305 = vpack.c.b16 %v285, %v284
  %v306 = vpack.c.b16 %v287, %v286
  %v307 = vpack.c.b16 %v289, %v288
  %v308 = vpack.c.b16 %v291, %v290
  %v309 = vpack.c.b16 %v293, %v292
  %326 = vst [vmem:[%s3] sm:$0xff] %v294
  %327 = vst [vmem:[%s3 + $0x8] sm:$0xff] %v295
  %328 = vst [vmem:[%s3 + $0x10] sm:$0xff] %v296
  %329 = vst [vmem:[%s3 + $0x18] sm:$0xff] %v297
  %330 = vst [vmem:[%s3 + $0x20] sm:$0xff] %v298
  %331 = vst [vmem:[%s3 + $0x28] sm:$0xff] %v299
  %332 = vst [vmem:[%s3 + $0x30] sm:$0xff] %v300
  %333 = vst [vmem:[%s3 + $0x38] sm:$0xff] %v301
  %334 = vst [vmem:[%s3 + $0x40] sm:$0xff] %v302
  %335 = vst [vmem:[%s3 + $0x48] sm:$0xff] %v303
  %336 = vst [vmem:[%s3 + $0x50] sm:$0xff] %v304
  %337 = vst [vmem:[%s3 + $0x58] sm:$0xff] %v305
  %338 = vst [vmem:[%s3 + $0x60] sm:$0xff] %v306
  %339 = vst [vmem:[%s3 + $0x68] sm:$0xff] %v307
  %340 = vst [vmem:[%s3 + $0x70] sm:$0xff] %v308
  %341 = vst [vmem:[%s3 + $0x78] sm:$0xff] %v309
  // Predicated region
  $region14: #{discriminator_forward.12} parent=0 // pred_check
    _
  $region15: #{discriminator_forward.12} parent=0 // pred_check_branch
    %343 = sbr.rel (0) target = $region17
  $region16: #{discriminator_forward.12} parent=0 // pred_region
    _
  $region17: #{discriminator_forward.12} parent=0 // pred_fallthru
    _
  // Predicated region
  $region18: #{discriminator_forward.12} parent=0 // pred_check
    _
  $region19: #{discriminator_forward.12} parent=0 // pred_check_branch
    %345 = sbr.rel (0) target = $region21
  $region20: #{discriminator_forward.12} parent=0 // pred_region
    _
  $region21: #{discriminator_forward.12} parent=0 // pred_fallthru
    _

// kernel: discriminator_forward.11
$region0: #{discriminator_forward.11}
  #allocation0 [shape = 'u32[]', space=smem, size = 0x4, offset = 0x4, fixed_abs, tag = 'smem constant byte address 0x4 - core index']
  #allocation1 [shape = 'u32[144,128]{1,0:T(1,128)}', space=vmem, size = 0x12000, scoped, tag = 'internal scratch']
  #allocation2 [shape = 'f32[128,256]{1,0:T(8,128)}', space=vmem, size = 0x20000, scoped, tag = 'scratch operand']
  %s0 = inlined_call_operand.vmem [shape: bf16[128,2048], index: 0, kind: input, shape index: {}]
  %s1 = inlined_call_operand.vmem [shape: bf16[2048,256], index: 1, kind: input, shape index: {}]
  %s2 = inlined_call_operand.vmem [shape: f32[128,256], index: 2, kind: output, shape index: {0}]
  %s3 = inlined_call_operand.vmem [shape: f32[8,256], index: 3, kind: output, shape index: {1}]
  %4 = xla_tuple %s2, %s3
  %s5 = sld [smem:[#allocation0]]
  $region80: #{discriminator_forward.11} parent=0
    _
  %s7 = ssub.s32 1, %s5
  %s8 = scalar_select 0, %s7, %s5
  $region1: #{discriminator_forward.11} parent=0
    #allocation3 [shape = 'u8[524288]{0}', space=vmem, size = 0x80000, scoped, tag = 'input window, operand 0']
    loop: start=0, step=1, limit=4
    $region2: #{discriminator_forward.11} parent=1 // loop_pre_header
      _
    $region3: #{discriminator_forward.11} parent=1 // loop_header
      %s10 = sphi 0, %s14
      %p11 = scmp.ge.s32.totalorder %s10, 4
      %s17 = sphi 0, %s29
      %s18 = sphi 0, %s25
      %s19 = sphi 0, %s17
      %s20 = sphi 0, %s18
      %s21 = sphi 0, %s19
      %s22 = sphi 0, %s20
      %s34 = sphi 0, %s36
      %s37 = sphi 0, %s34
      %s38 = sphi 0, %s37
      %s54 = sphi 0, %s38
      %s60 = sphi 0, %s62
      %s63 = sphi 0, %s60
      %s64 = sphi 0, %s63
      %s80 = sphi 0, %s64
      %s86 = sphi 0, %s88
      %s89 = sphi 0, %s86
      %s90 = sphi 0, %s89
      %s106 = sphi 0, %s90
      %s112 = sphi 0, %s114
      %s115 = sphi 0, %s112
      %s116 = sphi 0, %s115
      %s132 = sphi 0, %s116
    $region4: #{discriminator_forward.11} parent=1 // loop_header_branch
      %13 = sbr.rel (%p11) target = $region8
    $region5: #{discriminator_forward.11} parent=1 // loop_body
      %s15 = ssub.s32 %s10, 1
      %s16 = ssub.s32 %s10, 2
      %s23 = sadd.s32 1, %s18
      %p24 = scmp.ge.s32.totalorder %s23, 2
      %s25 = scalar_select %p24, 0, %s23
      %s26 = sadd.s32 1, %s17
      %s27 = scalar_select %p24, %s26, %s17
      %p28 = scmp.ge.s32.totalorder %s27, 1
      %s29 = scalar_select %p28, 0, %s27
      %s30 = ssub.s32 %s17, %s29
      %s31 = ssub.s32 %s18, %s25
      %s32 = sor.u32 %s30, %s31
      %p33 = scmp.eq.s32.totalorder %s32, 0
      %s35 = sadd.s32 %s34, 1
      %s36 = scalar_select %p33, %s34, %s35
      %p39 = pneg %p33
      %p40 = scmp.eq.s32.totalorder %s10, 1
      %p41 = por %p39, %p40
      %p42 = scmp.ne.s32.totalorder %s34, %s37
      %p43 = scmp.eq.s32.totalorder %s10, 0
      %p44 = por %p42, %p43
      %p45 = scmp.ne.s32.totalorder %s34, %s37
      %p46 = scmp.eq.s32.totalorder %s15, 1
      %p47 = por %p45, %p46
      %p48 = scmp.ne.s32.totalorder %s37, %s38
      %p49 = scmp.eq.s32.totalorder %s15, 0
      %p50 = por %p48, %p49
      %p51 = scmp.ne.s32.totalorder %s37, %s38
      %p52 = scmp.eq.s32.totalorder %s16, 1
      %p53 = por %p51, %p52
      %p55 = scmp.ne.s32.totalorder %s38, %s54
      %p56 = scmp.eq.s32.totalorder %s16, 0
      %p57 = por %p55, %p56
      %s58 = ssub.s32 %s18, %s25
      %p59 = scmp.eq.s32.totalorder %s58, 0
      %s61 = sadd.s32 %s60, 1
      %s62 = scalar_select %p59, %s60, %s61
      %p65 = pneg %p59
      %p66 = scmp.eq.s32.totalorder %s10, 1
      %p67 = por %p65, %p66
      %p68 = scmp.ne.s32.totalorder %s60, %s63
      %p69 = scmp.eq.s32.totalorder %s10, 0
      %p70 = por %p68, %p69
      %p71 = scmp.ne.s32.totalorder %s60, %s63
      %p72 = scmp.eq.s32.totalorder %s15, 1
      %p73 = por %p71, %p72
      %p74 = scmp.ne.s32.totalorder %s63, %s64
      %p75 = scmp.eq.s32.totalorder %s15, 0
      %p76 = por %p74, %p75
      %p77 = scmp.ne.s32.totalorder %s63, %s64
      %p78 = scmp.eq.s32.totalorder %s16, 1
      %p79 = por %p77, %p78
      %p81 = scmp.ne.s32.totalorder %s64, %s80
      %p82 = scmp.eq.s32.totalorder %s16, 0
      %p83 = por %p81, %p82
      %s84 = ssub.s32 %s17, %s29
      %p85 = scmp.eq.s32.totalorder %s84, 0
      %s87 = sadd.s32 %s86, 1
      %s88 = scalar_select %p85, %s86, %s87
      %p91 = pneg %p85
      %p92 = scmp.eq.s32.totalorder %s10, 1
      %p93 = por %p91, %p92
      %p94 = scmp.ne.s32.totalorder %s86, %s89
      %p95 = scmp.eq.s32.totalorder %s10, 0
      %p96 = por %p94, %p95
      %p97 = scmp.ne.s32.totalorder %s86, %s89
      %p98 = scmp.eq.s32.totalorder %s15, 1
      %p99 = por %p97, %p98
      %p100 = scmp.ne.s32.totalorder %s89, %s90
      %p101 = scmp.eq.s32.totalorder %s15, 0
      %p102 = por %p100, %p101
      %p103 = scmp.ne.s32.totalorder %s89, %s90
      %p104 = scmp.eq.s32.totalorder %s16, 1
      %p105 = por %p103, %p104
      %p107 = scmp.ne.s32.totalorder %s90, %s106
      %p108 = scmp.eq.s32.totalorder %s16, 0
      %p109 = por %p107, %p108
      %s110 = ssub.s32 %s17, %s29
      %p111 = scmp.eq.s32.totalorder %s110, 0
      %s113 = sadd.s32 %s112, 1
      %s114 = scalar_select %p111, %s112, %s113
      %p117 = pneg %p111
      %p118 = scmp.eq.s32.totalorder %s10, 1
      %p119 = por %p117, %p118
      %p120 = scmp.ne.s32.totalorder %s112, %s115
      %p121 = scmp.eq.s32.totalorder %s10, 0
      %p122 = por %p120, %p121
      %p123 = scmp.ne.s32.totalorder %s112, %s115
      %p124 = scmp.eq.s32.totalorder %s15, 1
      %p125 = por %p123, %p124
      %p126 = scmp.ne.s32.totalorder %s115, %s116
      %p127 = scmp.eq.s32.totalorder %s15, 0
      %p128 = por %p126, %p127
      %p129 = scmp.ne.s32.totalorder %s115, %s116
      %p130 = scmp.eq.s32.totalorder %s16, 1
      %p131 = por %p129, %p130
      %p133 = scmp.ne.s32.totalorder %s116, %s132
      %p134 = scmp.eq.s32.totalorder %s16, 0
      %p135 = por %p133, %p134
      %p136 = scmp.le.s32.totalorder 1, %s10
      %p137 = scmp.lt.s32.totalorder %s10, 3
      %p138 = pnand %p136, %p137
      %p139 = pneg %p138
      // Predicated region
      $region9: #{discriminator_forward.11} parent=5 // pred_check
        _
      $region10: #{discriminator_forward.11} parent=5 // pred_check_branch
        %141 = sbr.rel (%p138) target = $region12
      $region11: #{discriminator_forward.11} parent=5 // pred_region
        %s142 = ssub.s32 %s10, 1
      $region12: #{discriminator_forward.11} parent=5 // pred_fallthru
        _
      %p143 = scmp.lt.s32.totalorder %s10, 2
      // Predicated region
      $region13: #{discriminator_forward.11} parent=5 // pred_check
        %p144 = pneg %p143
      $region14: #{discriminator_forward.11} parent=5 // pred_check_branch
        %146 = sbr.rel (%p144) target = $region16
      $region15: #{discriminator_forward.11} parent=5 // pred_region
        // Predicated region
        $region17: #{discriminator_forward.11} parent=15 // pred_check
          %p147 = pneg %p44
        $region18: #{discriminator_forward.11} parent=15 // pred_check_branch
          %149 = sbr.rel (%p147) target = $region20
        $region19: #{discriminator_forward.11} parent=15 // pred_region
          %s150 = sand.u32 %s34, 1
          %s151 = sand.u32 %s34, 1
          %s152 = smul.addr %s151, 512
          %s153 = scalar_lea.vmem [#allocation3], %s152
          %s154 = smul.u32 16, %s17
          %s155 = smul.u32 8, %s18
          %s156 = smul.addr %s154, 16
          %s157 = sadd.s32 %s155, %s156
          %s158 = smul.addr %s157, 4
          %s159 = scalar_lea.vmem %s0, %s158
          // Predicated region
          $region21: #{discriminator_forward.11} parent=19 // pred_check
            _
          $region22: #{discriminator_forward.11} parent=19 // pred_check_branch
            %161 = sbr.rel (0) target = $region24
          $region23: #{discriminator_forward.11} parent=19 // pred_region
            // Predicated region
            $region25: #{discriminator_forward.11} parent=23 // pred_check
              _
            $region26: #{discriminator_forward.11} parent=23 // pred_check_branch
              %163 = sbr.rel (0) target = $region28
            $region27: #{discriminator_forward.11} parent=23 // pred_region
              loop: start=0, step=1, limit=1
              $region29: #{discriminator_forward.11} parent=27 // loop_pre_header
                _
              $region30: #{discriminator_forward.11} parent=27 // loop_header
                %s165 = sphi 0, %s169
                %p166 = scmp.ge.s32.totalorder %s165, 1
                %s170 = sphi %s159, %s159
                %s171 = sphi %s153, %s153
              $region31: #{discriminator_forward.11} parent=27 // loop_header_branch
                %168 = sbr.rel (%p166) target = $region35
              $region32: #{discriminator_forward.11} parent=27 // loop_body
                %v172 = vld [vmem:[%s170] sm:$0xff]
                %173 = vst [vmem:[%s171] sm:$0xff] %v172
                %v174 = vld [vmem:[%s170 + $0x8] sm:$0xff]
                %175 = vst [vmem:[%s171 + $0x8] sm:$0xff] %v174
                %v176 = vld [vmem:[%s170 + $0x10] sm:$0xff]
                %177 = vst [vmem:[%s171 + $0x10] sm:$0xff] %v176
                %v178 = vld [vmem:[%s170 + $0x18] sm:$0xff]
                %179 = vst [vmem:[%s171 + $0x18] sm:$0xff] %v178
                %v180 = vld [vmem:[%s170 + $0x40] sm:$0xff]
                %181 = vst [vmem:[%s171 + $0x20] sm:$0xff] %v180
                %v182 = vld [vmem:[%s170 + $0x48] sm:$0xff]
                %183 = vst [vmem:[%s171 + $0x28] sm:$0xff] %v182
                %v184 = vld [vmem:[%s170 + $0x50] sm:$0xff]
                %185 = vst [vmem:[%s171 + $0x30] sm:$0xff] %v184
                %v186 = vld [vmem:[%s170 + $0x58] sm:$0xff]
                %187 = vst [vmem:[%s171 + $0x38] sm:$0xff] %v186
                %v188 = vld [vmem:[%s170 + $0x80] sm:$0xff]
                %189 = vst [vmem:[%s171 + $0x40] sm:$0xff] %v188
                %v190 = vld [vmem:[%s170 + $0x88] sm:$0xff]
                %191 = vst [vmem:[%s171 + $0x48] sm:$0xff] %v190
                %v192 = vld [vmem:[%s170 + $0x90] sm:$0xff]
                %193 = vst [vmem:[%s171 + $0x50] sm:$0xff] %v192
                %v194 = vld [vmem:[%s170 + $0x98] sm:$0xff]
                %195 = vst [vmem:[%s171 + $0x58] sm:$0xff] %v194
                %v196 = vld [vmem:[%s170 + $0xc0] sm:$0xff]
                %197 = vst [vmem:[%s171 + $0x60] sm:$0xff] %v196
                %v198 = vld [vmem:[%s170 + $0xc8] sm:$0xff]
                %199 = vst [vmem:[%s171 + $0x68] sm:$0xff] %v198
                %v200 = vld [vmem:[%s170 + $0xd0] sm:$0xff]
                %201 = vst [vmem:[%s171 + $0x70] sm:$0xff] %v200
                %v202 = vld [vmem:[%s170 + $0xd8] sm:$0xff]
                %203 = vst [vmem:[%s171 + $0x78] sm:$0xff] %v202
                %v204 = vld [vmem:[%s170 + $0x100] sm:$0xff]
                %205 = vst [vmem:[%s171 + $0x80] sm:$0xff] %v204
                %v206 = vld [vmem:[%s170 + $0x108] sm:$0xff]
                %207 = vst [vmem:[%s171 + $0x88] sm:$0xff] %v206
                %v208 = vld [vmem:[%s170 + $0x110] sm:$0xff]
                %209 = vst [vmem:[%s171 + $0x90] sm:$0xff] %v208
                %v210 = vld [vmem:[%s170 + $0x118] sm:$0xff]
                %211 = vst [vmem:[%s171 + $0x98] sm:$0xff] %v210
                %v212 = vld [vmem:[%s170 + $0x140] sm:$0xff]
                %213 = vst [vmem:[%s171 + $0xa0] sm:$0xff] %v212
                %v214 = vld [vmem:[%s170 + $0x148] sm:$0xff]
                %215 = vst [vmem:[%s171 + $0xa8] sm:$0xff] %v214
                %v216 = vld [vmem:[%s170 + $0x150] sm:$0xff]
                %217 = vst [vmem:[%s171 + $0xb0] sm:$0xff] %v216
                %v218 = vld [vmem:[%s170 + $0x158] sm:$0xff]
                %219 = vst [vmem:[%s171 + $0xb8] sm:$0xff] %v218
                %v220 = vld [vmem:[%s170 + $0x180] sm:$0xff]
                %221 = vst [vmem:[%s171 + $0xc0] sm:$0xff] %v220
                %v222 = vld [vmem:[%s170 + $0x188] sm:$0xff]
                %223 = vst [vmem:[%s171 + $0xc8] sm:$0xff] %v222
                %v224 = vld [vmem:[%s170 + $0x190] sm:$0xff]
                %225 = vst [vmem:[%s171 + $0xd0] sm:$0xff] %v224
                %v226 = vld [vmem:[%s170 + $0x198] sm:$0xff]
                %227 = vst [vmem:[%s171 + $0xd8] sm:$0xff] %v226
                %v228 = vld [vmem:[%s170 + $0x1c0] sm:$0xff]
                %229 = vst [vmem:[%s171 + $0xe0] sm:$0xff] %v228
                %v230 = vld [vmem:[%s170 + $0x1c8] sm:$0xff]
                %231 = vst [vmem:[%s171 + $0xe8] sm:$0xff] %v230
                %v232 = vld [vmem:[%s170 + $0x1d0] sm:$0xff]
                %233 = vst [vmem:[%s171 + $0xf0] sm:$0xff] %v232
                %v234 = vld [vmem:[%s170 + $0x1d8] sm:$0xff]
                %235 = vst [vmem:[%s171 + $0xf8] sm:$0xff] %v234
                %v236 = vld [vmem:[%s170 + $0x200] sm:$0xff]
                %237 = vst [vmem:[%s171 + $0x100] sm:$0xff] %v236
                %v238 = vld [vmem:[%s170 + $0x208] sm:$0xff]
                %239 = vst [vmem:[%s171 + $0x108] sm:$0xff] %v238
                %v240 = vld [vmem:[%s170 + $0x210] sm:$0xff]
                %241 = vst [vmem:[%s171 + $0x110] sm:$0xff] %v240
                %v242 = vld [vmem:[%s170 + $0x218] sm:$0xff]
                %243 = vst [vmem:[%s171 + $0x118] sm:$0xff] %v242
                %v244 = vld [vmem:[%s170 + $0x240] sm:$0xff]
                %245 = vst [vmem:[%s171 + $0x120] sm:$0xff] %v244
                %v246 = vld [vmem:[%s170 + $0x248] sm:$0xff]
                %247 = vst [vmem:[%s171 + $0x128] sm:$0xff] %v246
                %v248 = vld [vmem:[%s170 + $0x250] sm:$0xff]
                %249 = vst [vmem:[%s171 + $0x130] sm:$0xff] %v248
                %v250 = vld [vmem:[%s170 + $0x258] sm:$0xff]
                %251 = vst [vmem:[%s171 + $0x138] sm:$0xff] %v250
                %v252 = vld [vmem:[%s170 + $0x280] sm:$0xff]
                %253 = vst [vmem:[%s171 + $0x140] sm:$0xff] %v252
                %v254 = vld [vmem:[%s170 + $0x288] sm:$0xff]
                %255 = vst [vmem:[%s171 + $0x148] sm:$0xff] %v254
                %v256 = vld [vmem:[%s170 + $0x290] sm:$0xff]
                %257 = vst [vmem:[%s171 + $0x150] sm:$0xff] %v256
                %v258 = vld [vmem:[%s170 + $0x298] sm:$0xff]
                %259 = vst [vmem:[%s171 + $0x158] sm:$0xff] %v258
                %v260 = vld [vmem:[%s170 + $0x2c0] sm:$0xff]
                %261 = vst [vmem:[%s171 + $0x160] sm:$0xff] %v260
                %v262 = vld [vmem:[%s170 + $0x2c8] sm:$0xff]
                %263 = vst [vmem:[%s171 + $0x168] sm:$0xff] %v262
                %v264 = vld [vmem:[%s170 + $0x2d0] sm:$0xff]
                %265 = vst [vmem:[%s171 + $0x170] sm:$0xff] %v264
                %v266 = vld [vmem:[%s170 + $0x2d8] sm:$0xff]
                %267 = vst [vmem:[%s171 + $0x178] sm:$0xff] %v266
                %v268 = vld [vmem:[%s170 + $0x300] sm:$0xff]
                %269 = vst [vmem:[%s171 + $0x180] sm:$0xff] %v268
                %v270 = vld [vmem:[%s170 + $0x308] sm:$0xff]
                %271 = vst [vmem:[%s171 + $0x188] sm:$0xff] %v270
                %v272 = vld [vmem:[%s170 + $0x310] sm:$0xff]
                %273 = vst [vmem:[%s171 + $0x190] sm:$0xff] %v272
                %v274 = vld [vmem:[%s170 + $0x318] sm:$0xff]
                %275 = vst [vmem:[%s171 + $0x198] sm:$0xff] %v274
                %v276 = vld [vmem:[%s170 + $0x340] sm:$0xff]
                %277 = vst [vmem:[%s171 + $0x1a0] sm:$0xff] %v276
                %v278 = vld [vmem:[%s170 + $0x348] sm:$0xff]
                %279 = vst [vmem:[%s171 + $0x1a8] sm:$0xff] %v278
                %v280 = vld [vmem:[%s170 + $0x350] sm:$0xff]
                %281 = vst [vmem:[%s171 + $0x1b0] sm:$0xff] %v280
                %v282 = vld [vmem:[%s170 + $0x358] sm:$0xff]
                %283 = vst [vmem:[%s171 + $0x1b8] sm:$0xff] %v282
                %v284 = vld [vmem:[%s170 + $0x380] sm:$0xff]
                %285 = vst [vmem:[%s171 + $0x1c0] sm:$0xff] %v284
                %v286 = vld [vmem:[%s170 + $0x388] sm:$0xff]
                %287 = vst [vmem:[%s171 + $0x1c8] sm:$0xff] %v286
                %v288 = vld [vmem:[%s170 + $0x390] sm:$0xff]
                %289 = vst [vmem:[%s171 + $0x1d0] sm:$0xff] %v288
                %v290 = vld [vmem:[%s170 + $0x398] sm:$0xff]
                %291 = vst [vmem:[%s171 + $0x1d8] sm:$0xff] %v290
                %v292 = vld [vmem:[%s170 + $0x3c0] sm:$0xff]
                %293 = vst [vmem:[%s171 + $0x1e0] sm:$0xff] %v292
                %v294 = vld [vmem:[%s170 + $0x3c8] sm:$0xff]
                %295 = vst [vmem:[%s171 + $0x1e8] sm:$0xff] %v294
                %v296 = vld [vmem:[%s170 + $0x3d0] sm:$0xff]
                %297 = vst [vmem:[%s171 + $0x1f0] sm:$0xff] %v296
                %v298 = vld [vmem:[%s170 + $0x3d8] sm:$0xff]
                %299 = vst [vmem:[%s171 + $0x1f8] sm:$0xff] %v298
              $region33: #{discriminator_forward.11} parent=27 // loop_footer
                %s169 = sadd.s32 1, %s165
              $region34: #{discriminator_forward.11} parent=27 // loop_footer_branch
                %164 = sbr.rel target = $region30
              $region35: #{discriminator_forward.11} parent=27 // loop_exit
                _
            $region28: #{discriminator_forward.11} parent=23 // pred_fallthru
              _
            // Predicated region
            $region36: #{discriminator_forward.11} parent=23 // pred_check
              _
            $region37: #{discriminator_forward.11} parent=23 // pred_check_branch
              %301 = sbr.rel target = $region39
            $region38: #{discriminator_forward.11} parent=23 // pred_region
              _
            $region39: #{discriminator_forward.11} parent=23 // pred_fallthru
              _
          $region24: #{discriminator_forward.11} parent=19 // pred_fallthru
            _
          %302 = vnop
        $region20: #{discriminator_forward.11} parent=15 // pred_fallthru
          _
        // Predicated region
        $region40: #{discriminator_forward.11} parent=15 // pred_check
          %p303 = pneg %p70
        $region41: #{discriminator_forward.11} parent=15 // pred_check_branch
          %305 = sbr.rel (%p303) target = $region43
        $region42: #{discriminator_forward.11} parent=15 // pred_region
          %s306 = smul.u32 128, %s18
          %p307 = scmp.lt.s32.totalorder %s306, 255
          %s308 = scalar_select %p307, %s306, 255
          %s309 = smul.addr %s308, 2
          %s310 = smul.addr %s309, 4
          %s311 = scalar_lea.vmem %s1, %s310
          %s312 = smul.u32 128, %s18
        $region43: #{discriminator_forward.11} parent=15 // pred_fallthru
          _
      $region16: #{discriminator_forward.11} parent=5 // pred_fallthru
        _
      %p313 = scmp.le.s32.totalorder 1, %s10
      %p314 = scmp.lt.s32.totalorder %s10, 3
      %p315 = pnand %p313, %p314
      %p316 = pneg %p315
      // Predicated region
      $region44: #{discriminator_forward.11} parent=5 // pred_check
        _
      $region45: #{discriminator_forward.11} parent=5 // pred_check_branch
        %318 = sbr.rel (%p315) target = $region47
      $region46: #{discriminator_forward.11} parent=5 // pred_region
        %s319 = ssub.s32 %s10, 1
        %s320 = sand.u32 %s37, 1
        %s321 = sand.u32 %s37, 1
        %s322 = smul.addr %s321, 512
        %s323 = scalar_lea.vmem [#allocation3], %s322
        // Predicated region
        $region48: #{discriminator_forward.11} parent=46 // pred_check
          %p324 = pneg %p50
        $region49: #{discriminator_forward.11} parent=46 // pred_check_branch
          %326 = sbr.rel (%p324) target = $region51
        $region50: #{discriminator_forward.11} parent=46 // pred_region
          _
        $region51: #{discriminator_forward.11} parent=46 // pred_fallthru
          _
        %s327 = sand.u32 %s37, 1
        %s328 = sand.u32 %s37, 1
        %s329 = smul.addr %s328, 512
        %s330 = scalar_lea.vmem [#allocation3], %s329
        %p331 = pneg %p50
        %p332 = pneg %p47
        %s333 = smul.u32 128, %s20
        %p334 = scmp.lt.s32.totalorder %s333, 255
        %s335 = scalar_select %p334, %s333, 255
        %s336 = smul.addr %s335, 2
        %s337 = smul.addr %s336, 4
        %s338 = scalar_lea.vmem %s1, %s337
        %p339 = pneg %p76
        %p340 = pneg %p73
        %p341 = pneg %p102
        %p342 = pneg %p99
        %s343 = smul.u32 16, %s19
        %p344 = scmp.lt.s32.totalorder %s343, 15
        %s345 = scalar_select %p344, %s343, 15
        %s346 = smul.addr %s345, 2
        %s347 = smul.addr %s346, 8
        %s348 = scalar_lea.vmem %s2, %s347
        %p349 = pneg %p128
        %p350 = pneg %p125
        %p351 = scmp.lt.s32.totalorder %s19, 0
        %s352 = scalar_select %p351, %s19, 0
        %s353 = smul.addr %s352, 2
        %s354 = smul.addr %s353, 8
        %s355 = scalar_lea.vmem %s3, %s354
        %s356 = smul.u32 16, %s19
        %s357 = smul.u32 8, %s20
        %s358 = smul.u32 128, %s20
        %p359 = scmp.lt.s32.totalorder %s358, 255
        %s360 = scalar_select %p359, %s358, 255
        %s361 = smul.addr %s360, 2
        %s362 = smul.addr %s361, 4
        %s363 = scalar_lea.vmem %s1, %s362
        %s364 = smul.u32 128, %s20
        %s365 = smul.u32 16, %s19
        %p366 = scmp.lt.s32.totalorder %s365, 15
        %s367 = scalar_select %p366, %s365, 15
        %s368 = smul.addr %s367, 2
        %s369 = smul.addr %s368, 8
        %s370 = scalar_lea.vmem %s2, %s369
        %s371 = smul.u32 16, %s19
        %p372 = scmp.lt.s32.totalorder %s19, 0
        %s373 = scalar_select %p372, %s19, 0
        %s374 = smul.addr %s373, 2
        %s375 = smul.addr %s374, 8
        %s376 = scalar_lea.vmem %s3, %s375
        %p377 = scmp.eq.s32.totalorder %s20, 0
        // Predicated region
        $region52: #{discriminator_forward.11} parent=46 // pred_check
          %p378 = pneg %p377
        $region53: #{discriminator_forward.11} parent=46 // pred_check_branch
          %380 = sbr.rel (%p378) target = $region55
        $region54: #{discriminator_forward.11} parent=46 // pred_region
          %381 = vst [vmem:[#allocation2] sm:$0xff] 0.0
          %382 = vst [vmem:[#allocation2 + $0x8] sm:$0xff] 0.0
          %383 = vst [vmem:[#allocation2 + $0x10] sm:$0xff] 0.0
          %384 = vst [vmem:[#allocation2 + $0x18] sm:$0xff] 0.0
          %385 = vst [vmem:[#allocation2 + $0x20] sm:$0xff] 0.0
          %386 = vst [vmem:[#allocation2 + $0x28] sm:$0xff] 0.0
          %387 = vst [vmem:[#allocation2 + $0x30] sm:$0xff] 0.0
          %388 = vst [vmem:[#allocation2 + $0x38] sm:$0xff] 0.0
          %389 = vst [vmem:[#allocation2 + $0x40] sm:$0xff] 0.0
          %390 = vst [vmem:[#allocation2 + $0x48] sm:$0xff] 0.0
          %391 = vst [vmem:[#allocation2 + $0x50] sm:$0xff] 0.0
          %392 = vst [vmem:[#allocation2 + $0x58] sm:$0xff] 0.0
          %393 = vst [vmem:[#allocation2 + $0x60] sm:$0xff] 0.0
          %394 = vst [vmem:[#allocation2 + $0x68] sm:$0xff] 0.0
          %395 = vst [vmem:[#allocation2 + $0x70] sm:$0xff] 0.0
          %396 = vst [vmem:[#allocation2 + $0x78] sm:$0xff] 0.0
          %397 = vst [vmem:[#allocation2 + $0x80] sm:$0xff] 0.0
          %398 = vst [vmem:[#allocation2 + $0x88] sm:$0xff] 0.0
          %399 = vst [vmem:[#allocation2 + $0x90] sm:$0xff] 0.0
          %400 = vst [vmem:[#allocation2 + $0x98] sm:$0xff] 0.0
          %401 = vst [vmem:[#allocation2 + $0xa0] sm:$0xff] 0.0
          %402 = vst [vmem:[#allocation2 + $0xa8] sm:$0xff] 0.0
          %403 = vst [vmem:[#allocation2 + $0xb0] sm:$0xff] 0.0
          %404 = vst [vmem:[#allocation2 + $0xb8] sm:$0xff] 0.0
          %405 = vst [vmem:[#allocation2 + $0xc0] sm:$0xff] 0.0
          %406 = vst [vmem:[#allocation2 + $0xc8] sm:$0xff] 0.0
          %407 = vst [vmem:[#allocation2 + $0xd0] sm:$0xff] 0.0
          %408 = vst [vmem:[#allocation2 + $0xd8] sm:$0xff] 0.0
          %409 = vst [vmem:[#allocation2 + $0xe0] sm:$0xff] 0.0
          %410 = vst [vmem:[#allocation2 + $0xe8] sm:$0xff] 0.0
          %411 = vst [vmem:[#allocation2 + $0xf0] sm:$0xff] 0.0
          %412 = vst [vmem:[#allocation2 + $0xf8] sm:$0xff] 0.0
        $region55: #{discriminator_forward.11} parent=46 // pred_fallthru
          _
        %v413 = vld [vmem:[#allocation2] sm:$0xff]
        %v414 = vld [vmem:[#allocation2 + $0x8] sm:$0xff]
        %v415 = vld [vmem:[#allocation2 + $0x10] sm:$0xff]
        %v416 = vld [vmem:[#allocation2 + $0x18] sm:$0xff]
        %v417 = vld [vmem:[#allocation2 + $0x20] sm:$0xff]
        %v418 = vld [vmem:[#allocation2 + $0x28] sm:$0xff]
        %v419 = vld [vmem:[#allocation2 + $0x30] sm:$0xff]
        %v420 = vld [vmem:[#allocation2 + $0x38] sm:$0xff]
        %v421 = vld [vmem:[#allocation2 + $0x40] sm:$0xff]
        %v422 = vld [vmem:[#allocation2 + $0x48] sm:$0xff]
        %v423 = vld [vmem:[#allocation2 + $0x50] sm:$0xff]
        %v424 = vld [vmem:[#allocation2 + $0x58] sm:$0xff]
        %v425 = vld [vmem:[#allocation2 + $0x60] sm:$0xff]
        %v426 = vld [vmem:[#allocation2 + $0x68] sm:$0xff]
        %v427 = vld [vmem:[#allocation2 + $0x70] sm:$0xff]
        %v428 = vld [vmem:[#allocation2 + $0x78] sm:$0xff]
        %v429 = vld [vmem:[#allocation2 + $0x80] sm:$0xff]
        %v430 = vld [vmem:[#allocation2 + $0x88] sm:$0xff]
        %v431 = vld [vmem:[#allocation2 + $0x90] sm:$0xff]
        %v432 = vld [vmem:[#allocation2 + $0x98] sm:$0xff]
        %v433 = vld [vmem:[#allocation2 + $0xa0] sm:$0xff]
        %v434 = vld [vmem:[#allocation2 + $0xa8] sm:$0xff]
        %v435 = vld [vmem:[#allocation2 + $0xb0] sm:$0xff]
        %v436 = vld [vmem:[#allocation2 + $0xb8] sm:$0xff]
        %v437 = vld [vmem:[#allocation2 + $0xc0] sm:$0xff]
        %v438 = vld [vmem:[#allocation2 + $0xc8] sm:$0xff]
        %v439 = vld [vmem:[#allocation2 + $0xd0] sm:$0xff]
        %v440 = vld [vmem:[#allocation2 + $0xd8] sm:$0xff]
        %v441 = vld [vmem:[#allocation2 + $0xe0] sm:$0xff]
        %v442 = vld [vmem:[#allocation2 + $0xe8] sm:$0xff]
        %v443 = vld [vmem:[#allocation2 + $0xf0] sm:$0xff]
        %v444 = vld [vmem:[#allocation2 + $0xf8] sm:$0xff]
        %v445 = vld [vmem:[%s323] sm:$0xff]
        %v446 = vld [vmem:[%s323 + $0x8] sm:$0xff]
        %v447 = vld [vmem:[%s323 + $0x10] sm:$0xff]
        %v448 = vld [vmem:[%s323 + $0x18] sm:$0xff]
        %v449 = vld [vmem:[%s323 + $0x20] sm:$0xff]
        %v450 = vld [vmem:[%s323 + $0x28] sm:$0xff]
        %v451 = vld [vmem:[%s323 + $0x30] sm:$0xff]
        %v452 = vld [vmem:[%s323 + $0x38] sm:$0xff]
        %v453 = vld [vmem:[%s323 + $0x40] sm:$0xff]
        %v454 = vld [vmem:[%s323 + $0x48] sm:$0xff]
        %v455 = vld [vmem:[%s323 + $0x50] sm:$0xff]
        %v456 = vld [vmem:[%s323 + $0x58] sm:$0xff]
        %v457 = vld [vmem:[%s323 + $0x60] sm:$0xff]
        %v458 = vld [vmem:[%s323 + $0x68] sm:$0xff]
        %v459 = vld [vmem:[%s323 + $0x70] sm:$0xff]
        %v460 = vld [vmem:[%s323 + $0x78] sm:$0xff]
        %v461 = vld [vmem:[%s323 + $0x80] sm:$0xff]
        %v462 = vld [vmem:[%s323 + $0x88] sm:$0xff]
        %v463 = vld [vmem:[%s323 + $0x90] sm:$0xff]
        %v464 = vld [vmem:[%s323 + $0x98] sm:$0xff]
        %v465 = vld [vmem:[%s323 + $0xa0] sm:$0xff]
        %v466 = vld [vmem:[%s323 + $0xa8] sm:$0xff]
        %v467 = vld [vmem:[%s323 + $0xb0] sm:$0xff]
        %v468 = vld [vmem:[%s323 + $0xb8] sm:$0xff]
        %v469 = vld [vmem:[%s323 + $0xc0] sm:$0xff]
        %v470 = vld [vmem:[%s323 + $0xc8] sm:$0xff]
        %v471 = vld [vmem:[%s323 + $0xd0] sm:$0xff]
        %v472 = vld [vmem:[%s323 + $0xd8] sm:$0xff]
        %v473 = vld [vmem:[%s323 + $0xe0] sm:$0xff]
        %v474 = vld [vmem:[%s323 + $0xe8] sm:$0xff]
        %v475 = vld [vmem:[%s323 + $0xf0] sm:$0xff]
        %v476 = vld [vmem:[%s323 + $0xf8] sm:$0xff]
        %v477 = vld [vmem:[%s323 + $0x100] sm:$0xff]
        %v478 = vld [vmem:[%s323 + $0x108] sm:$0xff]
        %v479 = vld [vmem:[%s323 + $0x110] sm:$0xff]
        %v480 = vld [vmem:[%s323 + $0x118] sm:$0xff]
        %v481 = vld [vmem:[%s323 + $0x120] sm:$0xff]
        %v482 = vld [vmem:[%s323 + $0x128] sm:$0xff]
        %v483 = vld [vmem:[%s323 + $0x130] sm:$0xff]
        %v484 = vld [vmem:[%s323 + $0x138] sm:$0xff]
        %v485 = vld [vmem:[%s323 + $0x140] sm:$0xff]
        %v486 = vld [vmem:[%s323 + $0x148] sm:$0xff]
        %v487 = vld [vmem:[%s323 + $0x150] sm:$0xff]
        %v488 = vld [vmem:[%s323 + $0x158] sm:$0xff]
        %v489 = vld [vmem:[%s323 + $0x160] sm:$0xff]
        %v490 = vld [vmem:[%s323 + $0x168] sm:$0xff]
        %v491 = vld [vmem:[%s323 + $0x170] sm:$0xff]
        %v492 = vld [vmem:[%s323 + $0x178] sm:$0xff]
        %v493 = vld [vmem:[%s323 + $0x180] sm:$0xff]
        %v494 = vld [vmem:[%s323 + $0x188] sm:$0xff]
        %v495 = vld [vmem:[%s323 + $0x190] sm:$0xff]
        %v496 = vld [vmem:[%s323 + $0x198] sm:$0xff]
        %v497 = vld [vmem:[%s323 + $0x1a0] sm:$0xff]
        %v498 = vld [vmem:[%s323 + $0x1a8] sm:$0xff]
        %v499 = vld [vmem:[%s323 + $0x1b0] sm:$0xff]
        %v500 = vld [vmem:[%s323 + $0x1b8] sm:$0xff]
        %v501 = vld [vmem:[%s323 + $0x1c0] sm:$0xff]
        %v502 = vld [vmem:[%s323 + $0x1c8] sm:$0xff]
        %v503 = vld [vmem:[%s323 + $0x1d0] sm:$0xff]
        %v504 = vld [vmem:[%s323 + $0x1d8] sm:$0xff]
        %v505 = vld [vmem:[%s323 + $0x1e0] sm:$0xff]
        %v506 = vld [vmem:[%s323 + $0x1e8] sm:$0xff]
        %v507 = vld [vmem:[%s323 + $0x1f0] sm:$0xff]
        %v508 = vld [vmem:[%s323 + $0x1f8] sm:$0xff]
        %v509 = vld [vmem:[%s363] sm:$0xff]
        %v510 = vld [vmem:[%s363 + $0x8] sm:$0xff]
        %v511 = vld [vmem:[%s363 + $0x10] sm:$0xff]
        %v512 = vld [vmem:[%s363 + $0x18] sm:$0xff]
        %v513 = vld [vmem:[%s363 + $0x20] sm:$0xff]
        %v514 = vld [vmem:[%s363 + $0x28] sm:$0xff]
        %v515 = vld [vmem:[%s363 + $0x30] sm:$0xff]
        %v516 = vld [vmem:[%s363 + $0x38] sm:$0xff]
        %v517 = vld [vmem:[%s363 + $0x40] sm:$0xff]
        %v518 = vld [vmem:[%s363 + $0x48] sm:$0xff]
        %v519 = vld [vmem:[%s363 + $0x50] sm:$0xff]
        %v520 = vld [vmem:[%s363 + $0x58] sm:$0xff]
        %v521 = vld [vmem:[%s363 + $0x60] sm:$0xff]
        %v522 = vld [vmem:[%s363 + $0x68] sm:$0xff]
        %v523 = vld [vmem:[%s363 + $0x70] sm:$0xff]
        %v524 = vld [vmem:[%s363 + $0x78] sm:$0xff]
        %v525 = vld [vmem:[%s363 + $0x80] sm:$0xff]
        %v526 = vld [vmem:[%s363 + $0x88] sm:$0xff]
        %v527 = vld [vmem:[%s363 + $0x90] sm:$0xff]
        %v528 = vld [vmem:[%s363 + $0x98] sm:$0xff]
        %v529 = vld [vmem:[%s363 + $0xa0] sm:$0xff]
        %v530 = vld [vmem:[%s363 + $0xa8] sm:$0xff]
        %v531 = vld [vmem:[%s363 + $0xb0] sm:$0xff]
        %v532 = vld [vmem:[%s363 + $0xb8] sm:$0xff]
        %v533 = vld [vmem:[%s363 + $0xc0] sm:$0xff]
        %v534 = vld [vmem:[%s363 + $0xc8] sm:$0xff]
        %v535 = vld [vmem:[%s363 + $0xd0] sm:$0xff]
        %v536 = vld [vmem:[%s363 + $0xd8] sm:$0xff]
        %v537 = vld [vmem:[%s363 + $0xe0] sm:$0xff]
        %v538 = vld [vmem:[%s363 + $0xe8] sm:$0xff]
        %v539 = vld [vmem:[%s363 + $0xf0] sm:$0xff]
        %v540 = vld [vmem:[%s363 + $0xf8] sm:$0xff]
        %v541 = vld [vmem:[%s363 + $0x100] sm:$0xff]
        %v542 = vld [vmem:[%s363 + $0x108] sm:$0xff]
        %v543 = vld [vmem:[%s363 + $0x110] sm:$0xff]
        %v544 = vld [vmem:[%s363 + $0x118] sm:$0xff]
        %v545 = vld [vmem:[%s363 + $0x120] sm:$0xff]
        %v546 = vld [vmem:[%s363 + $0x128] sm:$0xff]
        %v547 = vld [vmem:[%s363 + $0x130] sm:$0xff]
        %v548 = vld [vmem:[%s363 + $0x138] sm:$0xff]
        %v549 = vld [vmem:[%s363 + $0x140] sm:$0xff]
        %v550 = vld [vmem:[%s363 + $0x148] sm:$0xff]
        %v551 = vld [vmem:[%s363 + $0x150] sm:$0xff]
        %v552 = vld [vmem:[%s363 + $0x158] sm:$0xff]
        %v553 = vld [vmem:[%s363 + $0x160] sm:$0xff]
        %v554 = vld [vmem:[%s363 + $0x168] sm:$0xff]
        %v555 = vld [vmem:[%s363 + $0x170] sm:$0xff]
        %v556 = vld [vmem:[%s363 + $0x178] sm:$0xff]
        %v557 = vld [vmem:[%s363 + $0x180] sm:$0xff]
        %v558 = vld [vmem:[%s363 + $0x188] sm:$0xff]
        %v559 = vld [vmem:[%s363 + $0x190] sm:$0xff]
        %v560 = vld [vmem:[%s363 + $0x198] sm:$0xff]
        %v561 = vld [vmem:[%s363 + $0x1a0] sm:$0xff]
        %v562 = vld [vmem:[%s363 + $0x1a8] sm:$0xff]
        %v563 = vld [vmem:[%s363 + $0x1b0] sm:$0xff]
        %v564 = vld [vmem:[%s363 + $0x1b8] sm:$0xff]
        %v565 = vld [vmem:[%s363 + $0x1c0] sm:$0xff]
        %v566 = vld [vmem:[%s363 + $0x1c8] sm:$0xff]
        %v567 = vld [vmem:[%s363 + $0x1d0] sm:$0xff]
        %v568 = vld [vmem:[%s363 + $0x1d8] sm:$0xff]
        %v569 = vld [vmem:[%s363 + $0x1e0] sm:$0xff]
        %v570 = vld [vmem:[%s363 + $0x1e8] sm:$0xff]
        %v571 = vld [vmem:[%s363 + $0x1f0] sm:$0xff]
        %v572 = vld [vmem:[%s363 + $0x1f8] sm:$0xff]
        %v573 = vld [vmem:[%s363 + $0x200] sm:$0xff]
        %v574 = vld [vmem:[%s363 + $0x208] sm:$0xff]
        %v575 = vld [vmem:[%s363 + $0x210] sm:$0xff]
        %v576 = vld [vmem:[%s363 + $0x218] sm:$0xff]
        %v577 = vld [vmem:[%s363 + $0x220] sm:$0xff]
        %v578 = vld [vmem:[%s363 + $0x228] sm:$0xff]
        %v579 = vld [vmem:[%s363 + $0x230] sm:$0xff]
        %v580 = vld [vmem:[%s363 + $0x238] sm:$0xff]
        %v581 = vld [vmem:[%s363 + $0x240] sm:$0xff]
        %v582 = vld [vmem:[%s363 + $0x248] sm:$0xff]
        %v583 = vld [vmem:[%s363 + $0x250] sm:$0xff]
        %v584 = vld [vmem:[%s363 + $0x258] sm:$0xff]
        %v585 = vld [vmem:[%s363 + $0x260] sm:$0xff]
        %v586 = vld [vmem:[%s363 + $0x268] sm:$0xff]
        %v587 = vld [vmem:[%s363 + $0x270] sm:$0xff]
        %v588 = vld [vmem:[%s363 + $0x278] sm:$0xff]
        %v589 = vld [vmem:[%s363 + $0x280] sm:$0xff]
        %v590 = vld [vmem:[%s363 + $0x288] sm:$0xff]
        %v591 = vld [vmem:[%s363 + $0x290] sm:$0xff]
        %v592 = vld [vmem:[%s363 + $0x298] sm:$0xff]
        %v593 = vld [vmem:[%s363 + $0x2a0] sm:$0xff]
        %v594 = vld [vmem:[%s363 + $0x2a8] sm:$0xff]
        %v595 = vld [vmem:[%s363 + $0x2b0] sm:$0xff]
        %v596 = vld [vmem:[%s363 + $0x2b8] sm:$0xff]
        %v597 = vld [vmem:[%s363 + $0x2c0] sm:$0xff]
        %v598 = vld [vmem:[%s363 + $0x2c8] sm:$0xff]
        %v599 = vld [vmem:[%s363 + $0x2d0] sm:$0xff]
        %v600 = vld [vmem:[%s363 + $0x2d8] sm:$0xff]
        %v601 = vld [vmem:[%s363 + $0x2e0] sm:$0xff]
        %v602 = vld [vmem:[%s363 + $0x2e8] sm:$0xff]
        %v603 = vld [vmem:[%s363 + $0x2f0] sm:$0xff]
        %v604 = vld [vmem:[%s363 + $0x2f8] sm:$0xff]
        %v605 = vld [vmem:[%s363 + $0x300] sm:$0xff]
        %v606 = vld [vmem:[%s363 + $0x308] sm:$0xff]
        %v607 = vld [vmem:[%s363 + $0x310] sm:$0xff]
        %v608 = vld [vmem:[%s363 + $0x318] sm:$0xff]
        %v609 = vld [vmem:[%s363 + $0x320] sm:$0xff]
        %v610 = vld [vmem:[%s363 + $0x328] sm:$0xff]
        %v611 = vld [vmem:[%s363 + $0x330] sm:$0xff]
        %v612 = vld [vmem:[%s363 + $0x338] sm:$0xff]
        %v613 = vld [vmem:[%s363 + $0x340] sm:$0xff]
        %v614 = vld [vmem:[%s363 + $0x348] sm:$0xff]
        %v615 = vld [vmem:[%s363 + $0x350] sm:$0xff]
        %v616 = vld [vmem:[%s363 + $0x358] sm:$0xff]
        %v617 = vld [vmem:[%s363 + $0x360] sm:$0xff]
        %v618 = vld [vmem:[%s363 + $0x368] sm:$0xff]
        %v619 = vld [vmem:[%s363 + $0x370] sm:$0xff]
        %v620 = vld [vmem:[%s363 + $0x378] sm:$0xff]
        %v621 = vld [vmem:[%s363 + $0x380] sm:$0xff]
        %v622 = vld [vmem:[%s363 + $0x388] sm:$0xff]
        %v623 = vld [vmem:[%s363 + $0x390] sm:$0xff]
        %v624 = vld [vmem:[%s363 + $0x398] sm:$0xff]
        %v625 = vld [vmem:[%s363 + $0x3a0] sm:$0xff]
        %v626 = vld [vmem:[%s363 + $0x3a8] sm:$0xff]
        %v627 = vld [vmem:[%s363 + $0x3b0] sm:$0xff]
        %v628 = vld [vmem:[%s363 + $0x3b8] sm:$0xff]
        %v629 = vld [vmem:[%s363 + $0x3c0] sm:$0xff]
        %v630 = vld [vmem:[%s363 + $0x3c8] sm:$0xff]
        %v631 = vld [vmem:[%s363 + $0x3d0] sm:$0xff]
        %v632 = vld [vmem:[%s363 + $0x3d8] sm:$0xff]
        %v633 = vld [vmem:[%s363 + $0x3e0] sm:$0xff]
        %v634 = vld [vmem:[%s363 + $0x3e8] sm:$0xff]
        %v635 = vld [vmem:[%s363 + $0x3f0] sm:$0xff]
        %v636 = vld [vmem:[%s363 + $0x3f8] sm:$0xff]
        %v701 = vunpack.c.l.b16 %v445
        %v702 = vunpack.c.h.b16 %v445
        %v703 = vunpack.c.l.b16 %v446
        %v704 = vunpack.c.h.b16 %v446
        %v705 = vunpack.c.l.b16 %v447
        %v706 = vunpack.c.h.b16 %v447
        %v707 = vunpack.c.l.b16 %v448
        %v708 = vunpack.c.h.b16 %v448
        %v709 = vunpack.c.l.b16 %v449
        %v710 = vunpack.c.h.b16 %v449
        %v711 = vunpack.c.l.b16 %v450
        %v712 = vunpack.c.h.b16 %v450
        %v713 = vunpack.c.l.b16 %v451
        %v714 = vunpack.c.h.b16 %v451
        %v715 = vunpack.c.l.b16 %v452
        %v716 = vunpack.c.h.b16 %v452
        %v717 = vunpack.c.l.b16 %v453
        %v718 = vunpack.c.h.b16 %v453
        %v719 = vunpack.c.l.b16 %v454
        %v720 = vunpack.c.h.b16 %v454
        %v721 = vunpack.c.l.b16 %v455
        %v722 = vunpack.c.h.b16 %v455
        %v723 = vunpack.c.l.b16 %v456
        %v724 = vunpack.c.h.b16 %v456
        %v725 = vunpack.c.l.b16 %v457
        %v726 = vunpack.c.h.b16 %v457
        %v727 = vunpack.c.l.b16 %v458
        %v728 = vunpack.c.h.b16 %v458
        %v729 = vunpack.c.l.b16 %v459
        %v730 = vunpack.c.h.b16 %v459
        %v731 = vunpack.c.l.b16 %v460
        %v732 = vunpack.c.h.b16 %v460
        %v733 = vunpack.c.l.b16 %v461
        %v734 = vunpack.c.h.b16 %v461
        %v735 = vunpack.c.l.b16 %v462
        %v736 = vunpack.c.h.b16 %v462
        %v737 = vunpack.c.l.b16 %v463
        %v738 = vunpack.c.h.b16 %v463
        %v739 = vunpack.c.l.b16 %v464
        %v740 = vunpack.c.h.b16 %v464
        %v741 = vunpack.c.l.b16 %v465
        %v742 = vunpack.c.h.b16 %v465
        %v743 = vunpack.c.l.b16 %v466
        %v744 = vunpack.c.h.b16 %v466
        %v745 = vunpack.c.l.b16 %v467
        %v746 = vunpack.c.h.b16 %v467
        %v747 = vunpack.c.l.b16 %v468
        %v748 = vunpack.c.h.b16 %v468
        %v749 = vunpack.c.l.b16 %v469
        %v750 = vunpack.c.h.b16 %v469
        %v751 = vunpack.c.l.b16 %v470
        %v752 = vunpack.c.h.b16 %v470
        %v753 = vunpack.c.l.b16 %v471
        %v754 = vunpack.c.h.b16 %v471
        %v755 = vunpack.c.l.b16 %v472
        %v756 = vunpack.c.h.b16 %v472
        %v757 = vunpack.c.l.b16 %v473
        %v758 = vunpack.c.h.b16 %v473
        %v759 = vunpack.c.l.b16 %v474
        %v760 = vunpack.c.h.b16 %v474
        %v761 = vunpack.c.l.b16 %v475
        %v762 = vunpack.c.h.b16 %v475
        %v763 = vunpack.c.l.b16 %v476
        %v764 = vunpack.c.h.b16 %v476
        %v765 = vunpack.c.l.b16 %v477
        %v766 = vunpack.c.h.b16 %v477
        %v767 = vunpack.c.l.b16 %v478
        %v768 = vunpack.c.h.b16 %v478
        %v769 = vunpack.c.l.b16 %v479
        %v770 = vunpack.c.h.b16 %v479
        %v771 = vunpack.c.l.b16 %v480
        %v772 = vunpack.c.h.b16 %v480
        %v773 = vunpack.c.l.b16 %v481
        %v774 = vunpack.c.h.b16 %v481
        %v775 = vunpack.c.l.b16 %v482
        %v776 = vunpack.c.h.b16 %v482
        %v777 = vunpack.c.l.b16 %v483
        %v778 = vunpack.c.h.b16 %v483
        %v779 = vunpack.c.l.b16 %v484
        %v780 = vunpack.c.h.b16 %v484
        %v781 = vunpack.c.l.b16 %v485
        %v782 = vunpack.c.h.b16 %v485
        %v783 = vunpack.c.l.b16 %v486
        %v784 = vunpack.c.h.b16 %v486
        %v785 = vunpack.c.l.b16 %v487
        %v786 = vunpack.c.h.b16 %v487
        %v787 = vunpack.c.l.b16 %v488
        %v788 = vunpack.c.h.b16 %v488
        %v789 = vunpack.c.l.b16 %v489
        %v790 = vunpack.c.h.b16 %v489
        %v791 = vunpack.c.l.b16 %v490
        %v792 = vunpack.c.h.b16 %v490
        %v793 = vunpack.c.l.b16 %v491
        %v794 = vunpack.c.h.b16 %v491
        %v795 = vunpack.c.l.b16 %v492
        %v796 = vunpack.c.h.b16 %v492
        %v797 = vunpack.c.l.b16 %v493
        %v798 = vunpack.c.h.b16 %v493
        %v799 = vunpack.c.l.b16 %v494
        %v800 = vunpack.c.h.b16 %v494
        %v801 = vunpack.c.l.b16 %v495
        %v802 = vunpack.c.h.b16 %v495
        %v803 = vunpack.c.l.b16 %v496
        %v804 = vunpack.c.h.b16 %v496
        %v805 = vunpack.c.l.b16 %v497
        %v806 = vunpack.c.h.b16 %v497
        %v807 = vunpack.c.l.b16 %v498
        %v808 = vunpack.c.h.b16 %v498
        %v809 = vunpack.c.l.b16 %v499
        %v810 = vunpack.c.h.b16 %v499
        %v811 = vunpack.c.l.b16 %v500
        %v812 = vunpack.c.h.b16 %v500
        %v813 = vunpack.c.l.b16 %v501
        %v814 = vunpack.c.h.b16 %v501
        %v815 = vunpack.c.l.b16 %v502
        %v816 = vunpack.c.h.b16 %v502
        %v817 = vunpack.c.l.b16 %v503
        %v818 = vunpack.c.h.b16 %v503
        %v819 = vunpack.c.l.b16 %v504
        %v820 = vunpack.c.h.b16 %v504
        %v821 = vunpack.c.l.b16 %v505
        %v822 = vunpack.c.h.b16 %v505
        %v823 = vunpack.c.l.b16 %v506
        %v824 = vunpack.c.h.b16 %v506
        %v825 = vunpack.c.l.b16 %v507
        %v826 = vunpack.c.h.b16 %v507
        %v827 = vunpack.c.l.b16 %v508
        %v828 = vunpack.c.h.b16 %v508
        %v829 = vpack.c.b16 %v709, %v701
        %v830 = vpack.c.b16 %v710, %v702
        %v831 = vpack.c.b16 %v711, %v703
        %v832 = vpack.c.b16 %v712, %v704
        %v833 = vpack.c.b16 %v713, %v705
        %v834 = vpack.c.b16 %v714, %v706
        %v835 = vpack.c.b16 %v715, %v707
        %v836 = vpack.c.b16 %v716, %v708
        %v837 = vpack.c.b16 %v725, %v717
        %v838 = vpack.c.b16 %v726, %v718
        %v839 = vpack.c.b16 %v727, %v719
        %v840 = vpack.c.b16 %v728, %v720
        %v841 = vpack.c.b16 %v729, %v721
        %v842 = vpack.c.b16 %v730, %v722
        %v843 = vpack.c.b16 %v731, %v723
        %v844 = vpack.c.b16 %v732, %v724
        %v845 = vpack.c.b16 %v741, %v733
        %v846 = vpack.c.b16 %v742, %v734
        %v847 = vpack.c.b16 %v743, %v735
        %v848 = vpack.c.b16 %v744, %v736
        %v849 = vpack.c.b16 %v745, %v737
        %v850 = vpack.c.b16 %v746, %v738
        %v851 = vpack.c.b16 %v747, %v739
        %v852 = vpack.c.b16 %v748, %v740
        %v853 = vpack.c.b16 %v757, %v749
        %v854 = vpack.c.b16 %v758, %v750
        %v855 = vpack.c.b16 %v759, %v751
        %v856 = vpack.c.b16 %v760, %v752
        %v857 = vpack.c.b16 %v761, %v753
        %v858 = vpack.c.b16 %v762, %v754
        %v859 = vpack.c.b16 %v763, %v755
        %v860 = vpack.c.b16 %v764, %v756
        %v861 = vpack.c.b16 %v773, %v765
        %v862 = vpack.c.b16 %v774, %v766
        %v863 = vpack.c.b16 %v775, %v767
        %v864 = vpack.c.b16 %v776, %v768
        %v865 = vpack.c.b16 %v777, %v769
        %v866 = vpack.c.b16 %v778, %v770
        %v867 = vpack.c.b16 %v779, %v771
        %v868 = vpack.c.b16 %v780, %v772
        %v869 = vpack.c.b16 %v789, %v781
        %v870 = vpack.c.b16 %v790, %v782
        %v871 = vpack.c.b16 %v791, %v783
        %v872 = vpack.c.b16 %v792, %v784
        %v873 = vpack.c.b16 %v793, %v785
        %v874 = vpack.c.b16 %v794, %v786
        %v875 = vpack.c.b16 %v795, %v787
        %v876 = vpack.c.b16 %v796, %v788
        %v877 = vpack.c.b16 %v805, %v797
        %v878 = vpack.c.b16 %v806, %v798
        %v879 = vpack.c.b16 %v807, %v799
        %v880 = vpack.c.b16 %v808, %v800
        %v881 = vpack.c.b16 %v809, %v801
        %v882 = vpack.c.b16 %v810, %v802
        %v883 = vpack.c.b16 %v811, %v803
        %v884 = vpack.c.b16 %v812, %v804
        %v885 = vpack.c.b16 %v821, %v813
        %v886 = vpack.c.b16 %v822, %v814
        %v887 = vpack.c.b16 %v823, %v815
        %v888 = vpack.c.b16 %v824, %v816
        %v889 = vpack.c.b16 %v825, %v817
        %v890 = vpack.c.b16 %v826, %v818
        %v891 = vpack.c.b16 %v827, %v819
        %v892 = vpack.c.b16 %v828, %v820
        %v1085 = vunpack.c.l.b16 %v509
        %v1086 = vunpack.c.h.b16 %v509
        %v1087 = vunpack.c.l.b16 %v510
        %v1088 = vunpack.c.h.b16 %v510
        %v1089 = vunpack.c.l.b16 %v511
        %v1090 = vunpack.c.h.b16 %v511
        %v1091 = vunpack.c.l.b16 %v512
        %v1092 = vunpack.c.h.b16 %v512
        %v1093 = vunpack.c.l.b16 %v513
        %v1094 = vunpack.c.h.b16 %v513
        %v1095 = vunpack.c.l.b16 %v514
        %v1096 = vunpack.c.h.b16 %v514
        %v1097 = vunpack.c.l.b16 %v515
        %v1098 = vunpack.c.h.b16 %v515
        %v1099 = vunpack.c.l.b16 %v516
        %v1100 = vunpack.c.h.b16 %v516
        %v1101 = vunpack.c.l.b16 %v517
        %v1102 = vunpack.c.h.b16 %v517
        %v1103 = vunpack.c.l.b16 %v518
        %v1104 = vunpack.c.h.b16 %v518
        %v1105 = vunpack.c.l.b16 %v519
        %v1106 = vunpack.c.h.b16 %v519
        %v1107 = vunpack.c.l.b16 %v520
        %v1108 = vunpack.c.h.b16 %v520
        %v1109 = vunpack.c.l.b16 %v521
        %v1110 = vunpack.c.h.b16 %v521
        %v1111 = vunpack.c.l.b16 %v522
        %v1112 = vunpack.c.h.b16 %v522
        %v1113 = vunpack.c.l.b16 %v523
        %v1114 = vunpack.c.h.b16 %v523
        %v1115 = vunpack.c.l.b16 %v524
        %v1116 = vunpack.c.h.b16 %v524
        %v1117 = vunpack.c.l.b16 %v525
        %v1118 = vunpack.c.h.b16 %v525
        %v1119 = vunpack.c.l.b16 %v526
        %v1120 = vunpack.c.h.b16 %v526
        %v1121 = vunpack.c.l.b16 %v527
        %v1122 = vunpack.c.h.b16 %v527
        %v1123 = vunpack.c.l.b16 %v528
        %v1124 = vunpack.c.h.b16 %v528
        %v1125 = vunpack.c.l.b16 %v529
        %v1126 = vunpack.c.h.b16 %v529
        %v1127 = vunpack.c.l.b16 %v530
        %v1128 = vunpack.c.h.b16 %v530
        %v1129 = vunpack.c.l.b16 %v531
        %v1130 = vunpack.c.h.b16 %v531
        %v1131 = vunpack.c.l.b16 %v532
        %v1132 = vunpack.c.h.b16 %v532
        %v1133 = vunpack.c.l.b16 %v533
        %v1134 = vunpack.c.h.b16 %v533
        %v1135 = vunpack.c.l.b16 %v534
        %v1136 = vunpack.c.h.b16 %v534
        %v1137 = vunpack.c.l.b16 %v535
        %v1138 = vunpack.c.h.b16 %v535
        %v1139 = vunpack.c.l.b16 %v536
        %v1140 = vunpack.c.h.b16 %v536
        %v1141 = vunpack.c.l.b16 %v537
        %v1142 = vunpack.c.h.b16 %v537
        %v1143 = vunpack.c.l.b16 %v538
        %v1144 = vunpack.c.h.b16 %v538
        %v1145 = vunpack.c.l.b16 %v539
        %v1146 = vunpack.c.h.b16 %v539
        %v1147 = vunpack.c.l.b16 %v540
        %v1148 = vunpack.c.h.b16 %v540
        %v1149 = vunpack.c.l.b16 %v541
        %v1150 = vunpack.c.h.b16 %v541
        %v1151 = vunpack.c.l.b16 %v542
        %v1152 = vunpack.c.h.b16 %v542
        %v1153 = vunpack.c.l.b16 %v543
        %v1154 = vunpack.c.h.b16 %v543
        %v1155 = vunpack.c.l.b16 %v544
        %v1156 = vunpack.c.h.b16 %v544
        %v1157 = vunpack.c.l.b16 %v545
        %v1158 = vunpack.c.h.b16 %v545
        %v1159 = vunpack.c.l.b16 %v546
        %v1160 = vunpack.c.h.b16 %v546
        %v1161 = vunpack.c.l.b16 %v547
        %v1162 = vunpack.c.h.b16 %v547
        %v1163 = vunpack.c.l.b16 %v548
        %v1164 = vunpack.c.h.b16 %v548
        %v1165 = vunpack.c.l.b16 %v549
        %v1166 = vunpack.c.h.b16 %v549
        %v1167 = vunpack.c.l.b16 %v550
        %v1168 = vunpack.c.h.b16 %v550
        %v1169 = vunpack.c.l.b16 %v551
        %v1170 = vunpack.c.h.b16 %v551
        %v1171 = vunpack.c.l.b16 %v552
        %v1172 = vunpack.c.h.b16 %v552
        %v1173 = vunpack.c.l.b16 %v553
        %v1174 = vunpack.c.h.b16 %v553
        %v1175 = vunpack.c.l.b16 %v554
        %v1176 = vunpack.c.h.b16 %v554
        %v1177 = vunpack.c.l.b16 %v555
        %v1178 = vunpack.c.h.b16 %v555
        %v1179 = vunpack.c.l.b16 %v556
        %v1180 = vunpack.c.h.b16 %v556
        %v1181 = vunpack.c.l.b16 %v557
        %v1182 = vunpack.c.h.b16 %v557
        %v1183 = vunpack.c.l.b16 %v558
        %v1184 = vunpack.c.h.b16 %v558
        %v1185 = vunpack.c.l.b16 %v559
        %v1186 = vunpack.c.h.b16 %v559
        %v1187 = vunpack.c.l.b16 %v560
        %v1188 = vunpack.c.h.b16 %v560
        %v1189 = vunpack.c.l.b16 %v561
        %v1190 = vunpack.c.h.b16 %v561
        %v1191 = vunpack.c.l.b16 %v562
        %v1192 = vunpack.c.h.b16 %v562
        %v1193 = vunpack.c.l.b16 %v563
        %v1194 = vunpack.c.h.b16 %v563
        %v1195 = vunpack.c.l.b16 %v564
        %v1196 = vunpack.c.h.b16 %v564
        %v1197 = vunpack.c.l.b16 %v565
        %v1198 = vunpack.c.h.b16 %v565
        %v1199 = vunpack.c.l.b16 %v566
        %v1200 = vunpack.c.h.b16 %v566
        %v1201 = vunpack.c.l.b16 %v567
        %v1202 = vunpack.c.h.b16 %v567
        %v1203 = vunpack.c.l.b16 %v568
        %v1204 = vunpack.c.h.b16 %v568
        %v1205 = vunpack.c.l.b16 %v569
        %v1206 = vunpack.c.h.b16 %v569
        %v1207 = vunpack.c.l.b16 %v570
        %v1208 = vunpack.c.h.b16 %v570
        %v1209 = vunpack.c.l.b16 %v571
        %v1210 = vunpack.c.h.b16 %v571
        %v1211 = vunpack.c.l.b16 %v572
        %v1212 = vunpack.c.h.b16 %v572
        %v1213 = vunpack.c.l.b16 %v573
        %v1214 = vunpack.c.h.b16 %v573
        %v1215 = vunpack.c.l.b16 %v574
        %v1216 = vunpack.c.h.b16 %v574
        %v1217 = vunpack.c.l.b16 %v575
        %v1218 = vunpack.c.h.b16 %v575
        %v1219 = vunpack.c.l.b16 %v576
        %v1220 = vunpack.c.h.b16 %v576
        %v1221 = vunpack.c.l.b16 %v577
        %v1222 = vunpack.c.h.b16 %v577
        %v1223 = vunpack.c.l.b16 %v578
        %v1224 = vunpack.c.h.b16 %v578
        %v1225 = vunpack.c.l.b16 %v579
        %v1226 = vunpack.c.h.b16 %v579
        %v1227 = vunpack.c.l.b16 %v580
        %v1228 = vunpack.c.h.b16 %v580
        %v1229 = vunpack.c.l.b16 %v581
        %v1230 = vunpack.c.h.b16 %v581
        %v1231 = vunpack.c.l.b16 %v582
        %v1232 = vunpack.c.h.b16 %v582
        %v1233 = vunpack.c.l.b16 %v583
        %v1234 = vunpack.c.h.b16 %v583
        %v1235 = vunpack.c.l.b16 %v584
        %v1236 = vunpack.c.h.b16 %v584
        %v1237 = vunpack.c.l.b16 %v585
        %v1238 = vunpack.c.h.b16 %v585
        %v1239 = vunpack.c.l.b16 %v586
        %v1240 = vunpack.c.h.b16 %v586
        %v1241 = vunpack.c.l.b16 %v587
        %v1242 = vunpack.c.h.b16 %v587
        %v1243 = vunpack.c.l.b16 %v588
        %v1244 = vunpack.c.h.b16 %v588
        %v1245 = vunpack.c.l.b16 %v589
        %v1246 = vunpack.c.h.b16 %v589
        %v1247 = vunpack.c.l.b16 %v590
        %v1248 = vunpack.c.h.b16 %v590
        %v1249 = vunpack.c.l.b16 %v591
        %v1250 = vunpack.c.h.b16 %v591
        %v1251 = vunpack.c.l.b16 %v592
        %v1252 = vunpack.c.h.b16 %v592
        %v1253 = vunpack.c.l.b16 %v593
        %v1254 = vunpack.c.h.b16 %v593
        %v1255 = vunpack.c.l.b16 %v594
        %v1256 = vunpack.c.h.b16 %v594
        %v1257 = vunpack.c.l.b16 %v595
        %v1258 = vunpack.c.h.b16 %v595
        %v1259 = vunpack.c.l.b16 %v596
        %v1260 = vunpack.c.h.b16 %v596
        %v1261 = vunpack.c.l.b16 %v597
        %v1262 = vunpack.c.h.b16 %v597
        %v1263 = vunpack.c.l.b16 %v598
        %v1264 = vunpack.c.h.b16 %v598
        %v1265 = vunpack.c.l.b16 %v599
        %v1266 = vunpack.c.h.b16 %v599
        %v1267 = vunpack.c.l.b16 %v600
        %v1268 = vunpack.c.h.b16 %v600
        %v1269 = vunpack.c.l.b16 %v601
        %v1270 = vunpack.c.h.b16 %v601
        %v1271 = vunpack.c.l.b16 %v602
        %v1272 = vunpack.c.h.b16 %v602
        %v1273 = vunpack.c.l.b16 %v603
        %v1274 = vunpack.c.h.b16 %v603
        %v1275 = vunpack.c.l.b16 %v604
        %v1276 = vunpack.c.h.b16 %v604
        %v1277 = vunpack.c.l.b16 %v605
        %v1278 = vunpack.c.h.b16 %v605
        %v1279 = vunpack.c.l.b16 %v606
        %v1280 = vunpack.c.h.b16 %v606
        %v1281 = vunpack.c.l.b16 %v607
        %v1282 = vunpack.c.h.b16 %v607
        %v1283 = vunpack.c.l.b16 %v608
        %v1284 = vunpack.c.h.b16 %v608
        %v1285 = vunpack.c.l.b16 %v609
        %v1286 = vunpack.c.h.b16 %v609
        %v1287 = vunpack.c.l.b16 %v610
        %v1288 = vunpack.c.h.b16 %v610
        %v1289 = vunpack.c.l.b16 %v611
        %v1290 = vunpack.c.h.b16 %v611
        %v1291 = vunpack.c.l.b16 %v612
        %v1292 = vunpack.c.h.b16 %v612
        %v1293 = vunpack.c.l.b16 %v613
        %v1294 = vunpack.c.h.b16 %v613
        %v1295 = vunpack.c.l.b16 %v614
        %v1296 = vunpack.c.h.b16 %v614
        %v1297 = vunpack.c.l.b16 %v615
        %v1298 = vunpack.c.h.b16 %v615
        %v1299 = vunpack.c.l.b16 %v616
        %v1300 = vunpack.c.h.b16 %v616
        %v1301 = vunpack.c.l.b16 %v617
        %v1302 = vunpack.c.h.b16 %v617
        %v1303 = vunpack.c.l.b16 %v618
        %v1304 = vunpack.c.h.b16 %v618
        %v1305 = vunpack.c.l.b16 %v619
        %v1306 = vunpack.c.h.b16 %v619
        %v1307 = vunpack.c.l.b16 %v620
        %v1308 = vunpack.c.h.b16 %v620
        %v1309 = vunpack.c.l.b16 %v621
        %v1310 = vunpack.c.h.b16 %v621
        %v1311 = vunpack.c.l.b16 %v622
        %v1312 = vunpack.c.h.b16 %v622
        %v1313 = vunpack.c.l.b16 %v623
        %v1314 = vunpack.c.h.b16 %v623
        %v1315 = vunpack.c.l.b16 %v624
        %v1316 = vunpack.c.h.b16 %v624
        %v1317 = vunpack.c.l.b16 %v625
        %v1318 = vunpack.c.h.b16 %v625
        %v1319 = vunpack.c.l.b16 %v626
        %v1320 = vunpack.c.h.b16 %v626
        %v1321 = vunpack.c.l.b16 %v627
        %v1322 = vunpack.c.h.b16 %v627
        %v1323 = vunpack.c.l.b16 %v628
        %v1324 = vunpack.c.h.b16 %v628
        %v1325 = vunpack.c.l.b16 %v629
        %v1326 = vunpack.c.h.b16 %v629
        %v1327 = vunpack.c.l.b16 %v630
        %v1328 = vunpack.c.h.b16 %v630
        %v1329 = vunpack.c.l.b16 %v631
        %v1330 = vunpack.c.h.b16 %v631
        %v1331 = vunpack.c.l.b16 %v632
        %v1332 = vunpack.c.h.b16 %v632
        %v1333 = vunpack.c.l.b16 %v633
        %v1334 = vunpack.c.h.b16 %v633
        %v1335 = vunpack.c.l.b16 %v634
        %v1336 = vunpack.c.h.b16 %v634
        %v1337 = vunpack.c.l.b16 %v635
        %v1338 = vunpack.c.h.b16 %v635
        %v1339 = vunpack.c.l.b16 %v636
        %v1340 = vunpack.c.h.b16 %v636
        %v1341 = vpack.c.b16 %v1087, %v1085
        %v1342 = vpack.c.b16 %v1088, %v1086
        %v1343 = vpack.c.b16 %v1091, %v1089
        %v1344 = vpack.c.b16 %v1092, %v1090
        %v1345 = vpack.c.b16 %v1095, %v1093
        %v1346 = vpack.c.b16 %v1096, %v1094
        %v1347 = vpack.c.b16 %v1099, %v1097
        %v1348 = vpack.c.b16 %v1100, %v1098
        %v1349 = vpack.c.b16 %v1103, %v1101
        %v1350 = vpack.c.b16 %v1104, %v1102
        %v1351 = vpack.c.b16 %v1107, %v1105
        %v1352 = vpack.c.b16 %v1108, %v1106
        %v1353 = vpack.c.b16 %v1111, %v1109
        %v1354 = vpack.c.b16 %v1112, %v1110
        %v1355 = vpack.c.b16 %v1115, %v1113
        %v1356 = vpack.c.b16 %v1116, %v1114
        %v1357 = vpack.c.b16 %v1119, %v1117
        %v1358 = vpack.c.b16 %v1120, %v1118
        %v1359 = vpack.c.b16 %v1123, %v1121
        %v1360 = vpack.c.b16 %v1124, %v1122
        %v1361 = vpack.c.b16 %v1127, %v1125
        %v1362 = vpack.c.b16 %v1128, %v1126
        %v1363 = vpack.c.b16 %v1131, %v1129
        %v1364 = vpack.c.b16 %v1132, %v1130
        %v1365 = vpack.c.b16 %v1135, %v1133
        %v1366 = vpack.c.b16 %v1136, %v1134
        %v1367 = vpack.c.b16 %v1139, %v1137
        %v1368 = vpack.c.b16 %v1140, %v1138
        %v1369 = vpack.c.b16 %v1143, %v1141
        %v1370 = vpack.c.b16 %v1144, %v1142
        %v1371 = vpack.c.b16 %v1147, %v1145
        %v1372 = vpack.c.b16 %v1148, %v1146
        %v1373 = vpack.c.b16 %v1151, %v1149
        %v1374 = vpack.c.b16 %v1152, %v1150
        %v1375 = vpack.c.b16 %v1155, %v1153
        %v1376 = vpack.c.b16 %v1156, %v1154
        %v1377 = vpack.c.b16 %v1159, %v1157
        %v1378 = vpack.c.b16 %v1160, %v1158
        %v1379 = vpack.c.b16 %v1163, %v1161
        %v1380 = vpack.c.b16 %v1164, %v1162
        %v1381 = vpack.c.b16 %v1167, %v1165
        %v1382 = vpack.c.b16 %v1168, %v1166
        %v1383 = vpack.c.b16 %v1171, %v1169
        %v1384 = vpack.c.b16 %v1172, %v1170
        %v1385 = vpack.c.b16 %v1175, %v1173
        %v1386 = vpack.c.b16 %v1176, %v1174
        %v1387 = vpack.c.b16 %v1179, %v1177
        %v1388 = vpack.c.b16 %v1180, %v1178
        %v1389 = vpack.c.b16 %v1183, %v1181
        %v1390 = vpack.c.b16 %v1184, %v1182
        %v1391 = vpack.c.b16 %v1187, %v1185
        %v1392 = vpack.c.b16 %v1188, %v1186
        %v1393 = vpack.c.b16 %v1191, %v1189
        %v1394 = vpack.c.b16 %v1192, %v1190
        %v1395 = vpack.c.b16 %v1195, %v1193
        %v1396 = vpack.c.b16 %v1196, %v1194
        %v1397 = vpack.c.b16 %v1199, %v1197
        %v1398 = vpack.c.b16 %v1200, %v1198
        %v1399 = vpack.c.b16 %v1203, %v1201
        %v1400 = vpack.c.b16 %v1204, %v1202
        %v1401 = vpack.c.b16 %v1207, %v1205
        %v1402 = vpack.c.b16 %v1208, %v1206
        %v1403 = vpack.c.b16 %v1211, %v1209
        %v1404 = vpack.c.b16 %v1212, %v1210
        %v1405 = vpack.c.b16 %v1215, %v1213
        %v1406 = vpack.c.b16 %v1216, %v1214
        %v1407 = vpack.c.b16 %v1219, %v1217
        %v1408 = vpack.c.b16 %v1220, %v1218
        %v1409 = vpack.c.b16 %v1223, %v1221
        %v1410 = vpack.c.b16 %v1224, %v1222
        %v1411 = vpack.c.b16 %v1227, %v1225
        %v1412 = vpack.c.b16 %v1228, %v1226
        %v1413 = vpack.c.b16 %v1231, %v1229
        %v1414 = vpack.c.b16 %v1232, %v1230
        %v1415 = vpack.c.b16 %v1235, %v1233
        %v1416 = vpack.c.b16 %v1236, %v1234
        %v1417 = vpack.c.b16 %v1239, %v1237
        %v1418 = vpack.c.b16 %v1240, %v1238
        %v1419 = vpack.c.b16 %v1243, %v1241
        %v1420 = vpack.c.b16 %v1244, %v1242
        %v1421 = vpack.c.b16 %v1247, %v1245
        %v1422 = vpack.c.b16 %v1248, %v1246
        %v1423 = vpack.c.b16 %v1251, %v1249
        %v1424 = vpack.c.b16 %v1252, %v1250
        %v1425 = vpack.c.b16 %v1255, %v1253
        %v1426 = vpack.c.b16 %v1256, %v1254
        %v1427 = vpack.c.b16 %v1259, %v1257
        %v1428 = vpack.c.b16 %v1260, %v1258
        %v1429 = vpack.c.b16 %v1263, %v1261
        %v1430 = vpack.c.b16 %v1264, %v1262
        %v1431 = vpack.c.b16 %v1267, %v1265
        %v1432 = vpack.c.b16 %v1268, %v1266
        %v1433 = vpack.c.b16 %v1271, %v1269
        %v1434 = vpack.c.b16 %v1272, %v1270
        %v1435 = vpack.c.b16 %v1275, %v1273
        %v1436 = vpack.c.b16 %v1276, %v1274
        %v1437 = vpack.c.b16 %v1279, %v1277
        %v1438 = vpack.c.b16 %v1280, %v1278
        %v1439 = vpack.c.b16 %v1283, %v1281
        %v1440 = vpack.c.b16 %v1284, %v1282
        %v1441 = vpack.c.b16 %v1287, %v1285
        %v1442 = vpack.c.b16 %v1288, %v1286
        %v1443 = vpack.c.b16 %v1291, %v1289
        %v1444 = vpack.c.b16 %v1292, %v1290
        %v1445 = vpack.c.b16 %v1295, %v1293
        %v1446 = vpack.c.b16 %v1296, %v1294
        %v1447 = vpack.c.b16 %v1299, %v1297
        %v1448 = vpack.c.b16 %v1300, %v1298
        %v1449 = vpack.c.b16 %v1303, %v1301
        %v1450 = vpack.c.b16 %v1304, %v1302
        %v1451 = vpack.c.b16 %v1307, %v1305
        %v1452 = vpack.c.b16 %v1308, %v1306
        %v1453 = vpack.c.b16 %v1311, %v1309
        %v1454 = vpack.c.b16 %v1312, %v1310
        %v1455 = vpack.c.b16 %v1315, %v1313
        %v1456 = vpack.c.b16 %v1316, %v1314
        %v1457 = vpack.c.b16 %v1319, %v1317
        %v1458 = vpack.c.b16 %v1320, %v1318
        %v1459 = vpack.c.b16 %v1323, %v1321
        %v1460 = vpack.c.b16 %v1324, %v1322
        %v1461 = vpack.c.b16 %v1327, %v1325
        %v1462 = vpack.c.b16 %v1328, %v1326
        %v1463 = vpack.c.b16 %v1331, %v1329
        %v1464 = vpack.c.b16 %v1332, %v1330
        %v1465 = vpack.c.b16 %v1335, %v1333
        %v1466 = vpack.c.b16 %v1336, %v1334
        %v1467 = vpack.c.b16 %v1339, %v1337
        %v1468 = vpack.c.b16 %v1340, %v1338
        %1597 = vmatprep.subr.bf16.mxu0 %v1356
        %1598 = vmatpush1.bf16.msra.mxu0 %v1355
        %1599 = vmatprep.subr.bf16.mxu0 %v1354
        %1600 = vmatpush1.bf16.msra.mxu0 %v1353
        %1601 = vmatprep.subr.bf16.mxu0 %v1352
        %1602 = vmatpush1.bf16.msra.mxu0 %v1351
        %1603 = vmatprep.subr.bf16.mxu0 %v1350
        %1604 = vmatpush1.bf16.msra.mxu0 %v1349
        %1605 = vmatprep.subr.bf16.mxu0 %v1348
        %1606 = vmatpush1.bf16.msra.mxu0 %v1347
        %1607 = vmatprep.subr.bf16.mxu0 %v1346
        %1608 = vmatpush1.bf16.msra.mxu0 %v1345
        %1609 = vmatprep.subr.bf16.mxu0 %v1344
        %1610 = vmatpush1.bf16.msra.mxu0 %v1343
        %1611 = vmatprep.subr.bf16.mxu0 %v1342
        %1612 = vmatpush1.bf16.msra.mxu0 %v1341
        %1613 = vmatprep.subr.bf16.mxu0 %v1372
        %1614 = vmatpush2.bf16.msra.mxu0 %v1371
        %1615 = vmatprep.subr.bf16.mxu0 %v1370
        %1616 = vmatpush2.bf16.msra.mxu0 %v1369
        %1617 = vmatprep.subr.bf16.mxu0 %v1368
        %1618 = vmatpush2.bf16.msra.mxu0 %v1367
        %1619 = vmatprep.subr.bf16.mxu0 %v1366
        %1620 = vmatpush2.bf16.msra.mxu0 %v1365
        %1621 = vmatprep.subr.bf16.mxu0 %v1364
        %1622 = vmatpush2.bf16.msra.mxu0 %v1363
        %1623 = vmatprep.subr.bf16.mxu0 %v1362
        %1624 = vmatpush2.bf16.msra.mxu0 %v1361
        %1625 = vmatprep.subr.bf16.mxu0 %v1360
        %1626 = vmatpush2.bf16.msra.mxu0 %v1359
        %1627 = vmatprep.subr.bf16.mxu0 %v1358
        %1628 = vmatpush2.bf16.msra.mxu0 %v1357
        %1629 = vmatprep.mubr.bf16.mxu0 %v830
        %1630 = vmatmul.mubr.bf16.gmra.mxu0 %v829
        %v1631 = vpop.f32.mrf.mxu0
        %v1632 = vadd.f32 0.0, %v1631
        %v1633 = vpop.f32.mrf.mxu0
        %v1634 = vadd.f32 0.0, %v1633
        %v1635 = vpop.f32.mrf.mxu0
        %v1636 = vadd.f32 0.0, %v1635
        %v1637 = vpop.f32.mrf.mxu0
        %v1638 = vadd.f32 0.0, %v1637
        %1639 = vmatprep.mubr.bf16.mxu0 %v838
        %1640 = vmatmul.mubr.bf16.gmra.mxu0 %v837
        %v1641 = vpop.f32.mrf.mxu0
        %v1642 = vadd.f32 0.0, %v1641
        %v1643 = vpop.f32.mrf.mxu0
        %v1644 = vadd.f32 0.0, %v1643
        %v1645 = vpop.f32.mrf.mxu0
        %v1646 = vadd.f32 0.0, %v1645
        %v1647 = vpop.f32.mrf.mxu0
        %v1648 = vadd.f32 0.0, %v1647
        %1649 = vmatprep.mubr.bf16.mxu0 %v846
        %1650 = vmatmul.mubr.bf16.gmra.mxu0 %v845
        %v1651 = vpop.f32.mrf.mxu0
        %v1652 = vadd.f32 0.0, %v1651
        %v1653 = vpop.f32.mrf.mxu0
        %v1654 = vadd.f32 0.0, %v1653
        %v1655 = vpop.f32.mrf.mxu0
        %v1656 = vadd.f32 0.0, %v1655
        %v1657 = vpop.f32.mrf.mxu0
        %v1658 = vadd.f32 0.0, %v1657
        %1659 = vmatprep.mubr.bf16.mxu0 %v854
        %1660 = vmatmul.mubr.bf16.gmra.mxu0 %v853
        %v1661 = vpop.f32.mrf.mxu0
        %v1662 = vadd.f32 0.0, %v1661
        %v1663 = vpop.f32.mrf.mxu0
        %v1664 = vadd.f32 0.0, %v1663
        %v1665 = vpop.f32.mrf.mxu0
        %v1666 = vadd.f32 0.0, %v1665
        %v1667 = vpop.f32.mrf.mxu0
        %v1668 = vadd.f32 0.0, %v1667
        %1669 = vmatprep.mubr.bf16.mxu0 %v862
        %1670 = vmatmul.mubr.bf16.gmra.mxu0 %v861
        %v1671 = vpop.f32.mrf.mxu0
        %v1672 = vadd.f32 0.0, %v1671
        %v1673 = vpop.f32.mrf.mxu0
        %v1674 = vadd.f32 0.0, %v1673
        %v1675 = vpop.f32.mrf.mxu0
        %v1676 = vadd.f32 0.0, %v1675
        %v1677 = vpop.f32.mrf.mxu0
        %v1678 = vadd.f32 0.0, %v1677
        %1679 = vmatprep.mubr.bf16.mxu0 %v870
        %1680 = vmatmul.mubr.bf16.gmra.mxu0 %v869
        %v1681 = vpop.f32.mrf.mxu0
        %v1682 = vadd.f32 0.0, %v1681
        %v1683 = vpop.f32.mrf.mxu0
        %v1684 = vadd.f32 0.0, %v1683
        %v1685 = vpop.f32.mrf.mxu0
        %v1686 = vadd.f32 0.0, %v1685
        %v1687 = vpop.f32.mrf.mxu0
        %v1688 = vadd.f32 0.0, %v1687
        %1689 = vmatprep.mubr.bf16.mxu0 %v878
        %1690 = vmatmul.mubr.bf16.gmra.mxu0 %v877
        %v1691 = vpop.f32.mrf.mxu0
        %v1692 = vadd.f32 0.0, %v1691
        %v1693 = vpop.f32.mrf.mxu0
        %v1694 = vadd.f32 0.0, %v1693
        %v1695 = vpop.f32.mrf.mxu0
        %v1696 = vadd.f32 0.0, %v1695
        %v1697 = vpop.f32.mrf.mxu0
        %v1698 = vadd.f32 0.0, %v1697
        %1699 = vmatprep.mubr.bf16.mxu0 %v886
        %1700 = vmatmul.mubr.bf16.gmra.mxu0 %v885
        %v1701 = vpop.f32.mrf.mxu0
        %v1702 = vadd.f32 0.0, %v1701
        %v1703 = vpop.f32.mrf.mxu0
        %v1704 = vadd.f32 0.0, %v1703
        %v1705 = vpop.f32.mrf.mxu0
        %v1706 = vadd.f32 0.0, %v1705
        %v1707 = vpop.f32.mrf.mxu0
        %v1708 = vadd.f32 0.0, %v1707
        %1709 = vdwg.mxu0
        %1710 = vmatprep.subr.bf16.mxu0 %v1388
        %1711 = vmatpush1.bf16.msra.mxu0 %v1387
        %1712 = vmatprep.subr.bf16.mxu0 %v1386
        %1713 = vmatpush1.bf16.msra.mxu0 %v1385
        %1714 = vmatprep.subr.bf16.mxu0 %v1384
        %1715 = vmatpush1.bf16.msra.mxu0 %v1383
        %1716 = vmatprep.subr.bf16.mxu0 %v1382
        %1717 = vmatpush1.bf16.msra.mxu0 %v1381
        %1718 = vmatprep.subr.bf16.mxu0 %v1380
        %1719 = vmatpush1.bf16.msra.mxu0 %v1379
        %1720 = vmatprep.subr.bf16.mxu0 %v1378
        %1721 = vmatpush1.bf16.msra.mxu0 %v1377
        %1722 = vmatprep.subr.bf16.mxu0 %v1376
        %1723 = vmatpush1.bf16.msra.mxu0 %v1375
        %1724 = vmatprep.subr.bf16.mxu0 %v1374
        %1725 = vmatpush1.bf16.msra.mxu0 %v1373
        %1726 = vmatprep.subr.bf16.mxu0 %v1404
        %1727 = vmatpush2.bf16.msra.mxu0 %v1403
        %1728 = vmatprep.subr.bf16.mxu0 %v1402
        %1729 = vmatpush2.bf16.msra.mxu0 %v1401
        %1730 = vmatprep.subr.bf16.mxu0 %v1400
        %1731 = vmatpush2.bf16.msra.mxu0 %v1399
        %1732 = vmatprep.subr.bf16.mxu0 %v1398
        %1733 = vmatpush2.bf16.msra.mxu0 %v1397
        %1734 = vmatprep.subr.bf16.mxu0 %v1396
        %1735 = vmatpush2.bf16.msra.mxu0 %v1395
        %1736 = vmatprep.subr.bf16.mxu0 %v1394
        %1737 = vmatpush2.bf16.msra.mxu0 %v1393
        %1738 = vmatprep.subr.bf16.mxu0 %v1392
        %1739 = vmatpush2.bf16.msra.mxu0 %v1391
        %1740 = vmatprep.subr.bf16.mxu0 %v1390
        %1741 = vmatpush2.bf16.msra.mxu0 %v1389
        %1742 = vmatprep.mubr.bf16.mxu0 %v832
        %1743 = vmatmul.mubr.bf16.gmra.mxu0 %v831
        %v1744 = vpop.f32.mrf.mxu0
        %v1745 = vadd.f32 %v1632, %v1744
        %v1746 = vpop.f32.mrf.mxu0
        %v1747 = vadd.f32 %v1634, %v1746
        %v1748 = vpop.f32.mrf.mxu0
        %v1749 = vadd.f32 %v1636, %v1748
        %v1750 = vpop.f32.mrf.mxu0
        %v1751 = vadd.f32 %v1638, %v1750
        %1752 = vmatprep.mubr.bf16.mxu0 %v840
        %1753 = vmatmul.mubr.bf16.gmra.mxu0 %v839
        %v1754 = vpop.f32.mrf.mxu0
        %v1755 = vadd.f32 %v1642, %v1754
        %v1756 = vpop.f32.mrf.mxu0
        %v1757 = vadd.f32 %v1644, %v1756
        %v1758 = vpop.f32.mrf.mxu0
        %v1759 = vadd.f32 %v1646, %v1758
        %v1760 = vpop.f32.mrf.mxu0
        %v1761 = vadd.f32 %v1648, %v1760
        %1762 = vmatprep.mubr.bf16.mxu0 %v848
        %1763 = vmatmul.mubr.bf16.gmra.mxu0 %v847
        %v1764 = vpop.f32.mrf.mxu0
        %v1765 = vadd.f32 %v1652, %v1764
        %v1766 = vpop.f32.mrf.mxu0
        %v1767 = vadd.f32 %v1654, %v1766
        %v1768 = vpop.f32.mrf.mxu0
        %v1769 = vadd.f32 %v1656, %v1768
        %v1770 = vpop.f32.mrf.mxu0
        %v1771 = vadd.f32 %v1658, %v1770
        %1772 = vmatprep.mubr.bf16.mxu0 %v856
        %1773 = vmatmul.mubr.bf16.gmra.mxu0 %v855
        %v1774 = vpop.f32.mrf.mxu0
        %v1775 = vadd.f32 %v1662, %v1774
        %v1776 = vpop.f32.mrf.mxu0
        %v1777 = vadd.f32 %v1664, %v1776
        %v1778 = vpop.f32.mrf.mxu0
        %v1779 = vadd.f32 %v1666, %v1778
        %v1780 = vpop.f32.mrf.mxu0
        %v1781 = vadd.f32 %v1668, %v1780
        %1782 = vmatprep.mubr.bf16.mxu0 %v864
        %1783 = vmatmul.mubr.bf16.gmra.mxu0 %v863
        %v1784 = vpop.f32.mrf.mxu0
        %v1785 = vadd.f32 %v1672, %v1784
        %v1786 = vpop.f32.mrf.mxu0
        %v1787 = vadd.f32 %v1674, %v1786
        %v1788 = vpop.f32.mrf.mxu0
        %v1789 = vadd.f32 %v1676, %v1788
        %v1790 = vpop.f32.mrf.mxu0
        %v1791 = vadd.f32 %v1678, %v1790
        %1792 = vmatprep.mubr.bf16.mxu0 %v872
        %1793 = vmatmul.mubr.bf16.gmra.mxu0 %v871
        %v1794 = vpop.f32.mrf.mxu0
        %v1795 = vadd.f32 %v1682, %v1794
        %v1796 = vpop.f32.mrf.mxu0
        %v1797 = vadd.f32 %v1684, %v1796
        %v1798 = vpop.f32.mrf.mxu0
        %v1799 = vadd.f32 %v1686, %v1798
        %v1800 = vpop.f32.mrf.mxu0
        %v1801 = vadd.f32 %v1688, %v1800
        %1802 = vmatprep.mubr.bf16.mxu0 %v880
        %1803 = vmatmul.mubr.bf16.gmra.mxu0 %v879
        %v1804 = vpop.f32.mrf.mxu0
        %v1805 = vadd.f32 %v1692, %v1804
        %v1806 = vpop.f32.mrf.mxu0
        %v1807 = vadd.f32 %v1694, %v1806
        %v1808 = vpop.f32.mrf.mxu0
        %v1809 = vadd.f32 %v1696, %v1808
        %v1810 = vpop.f32.mrf.mxu0
        %v1811 = vadd.f32 %v1698, %v1810
        %1812 = vmatprep.mubr.bf16.mxu0 %v888
        %1813 = vmatmul.mubr.bf16.gmra.mxu0 %v887
        %v1814 = vpop.f32.mrf.mxu0
        %v1815 = vadd.f32 %v1702, %v1814
        %v1816 = vpop.f32.mrf.mxu0
        %v1817 = vadd.f32 %v1704, %v1816
        %v1818 = vpop.f32.mrf.mxu0
        %v1819 = vadd.f32 %v1706, %v1818
        %v1820 = vpop.f32.mrf.mxu0
        %v1821 = vadd.f32 %v1708, %v1820
        %1822 = vdwg.mxu0
        %1823 = vmatprep.subr.bf16.mxu0 %v1420
        %1824 = vmatpush1.bf16.msra.mxu0 %v1419
        %1825 = vmatprep.subr.bf16.mxu0 %v1418
        %1826 = vmatpush1.bf16.msra.mxu0 %v1417
        %1827 = vmatprep.subr.bf16.mxu0 %v1416
        %1828 = vmatpush1.bf16.msra.mxu0 %v1415
        %1829 = vmatprep.subr.bf16.mxu0 %v1414
        %1830 = vmatpush1.bf16.msra.mxu0 %v1413
        %1831 = vmatprep.subr.bf16.mxu0 %v1412
        %1832 = vmatpush1.bf16.msra.mxu0 %v1411
        %1833 = vmatprep.subr.bf16.mxu0 %v1410
        %1834 = vmatpush1.bf16.msra.mxu0 %v1409
        %1835 = vmatprep.subr.bf16.mxu0 %v1408
        %1836 = vmatpush1.bf16.msra.mxu0 %v1407
        %1837 = vmatprep.subr.bf16.mxu0 %v1406
        %1838 = vmatpush1.bf16.msra.mxu0 %v1405
        %1839 = vmatprep.subr.bf16.mxu0 %v1436
        %1840 = vmatpush2.bf16.msra.mxu0 %v1435
        %1841 = vmatprep.subr.bf16.mxu0 %v1434
        %1842 = vmatpush2.bf16.msra.mxu0 %v1433
        %1843 = vmatprep.subr.bf16.mxu0 %v1432
        %1844 = vmatpush2.bf16.msra.mxu0 %v1431
        %1845 = vmatprep.subr.bf16.mxu0 %v1430
        %1846 = vmatpush2.bf16.msra.mxu0 %v1429
        %1847 = vmatprep.subr.bf16.mxu0 %v1428
        %1848 = vmatpush2.bf16.msra.mxu0 %v1427
        %1849 = vmatprep.subr.bf16.mxu0 %v1426
        %1850 = vmatpush2.bf16.msra.mxu0 %v1425
        %1851 = vmatprep.subr.bf16.mxu0 %v1424
        %1852 = vmatpush2.bf16.msra.mxu0 %v1423
        %1853 = vmatprep.subr.bf16.mxu0 %v1422
        %1854 = vmatpush2.bf16.msra.mxu0 %v1421
        %1855 = vmatprep.mubr.bf16.mxu0 %v834
        %1856 = vmatmul.mubr.bf16.gmra.mxu0 %v833
        %v1857 = vpop.f32.mrf.mxu0
        %v1858 = vadd.f32 %v1745, %v1857
        %v1859 = vpop.f32.mrf.mxu0
        %v1860 = vadd.f32 %v1747, %v1859
        %v1861 = vpop.f32.mrf.mxu0
        %v1862 = vadd.f32 %v1749, %v1861
        %v1863 = vpop.f32.mrf.mxu0
        %v1864 = vadd.f32 %v1751, %v1863
        %1865 = vmatprep.mubr.bf16.mxu0 %v842
        %1866 = vmatmul.mubr.bf16.gmra.mxu0 %v841
        %v1867 = vpop.f32.mrf.mxu0
        %v1868 = vadd.f32 %v1755, %v1867
        %v1869 = vpop.f32.mrf.mxu0
        %v1870 = vadd.f32 %v1757, %v1869
        %v1871 = vpop.f32.mrf.mxu0
        %v1872 = vadd.f32 %v1759, %v1871
        %v1873 = vpop.f32.mrf.mxu0
        %v1874 = vadd.f32 %v1761, %v1873
        %1875 = vmatprep.mubr.bf16.mxu0 %v850
        %1876 = vmatmul.mubr.bf16.gmra.mxu0 %v849
        %v1877 = vpop.f32.mrf.mxu0
        %v1878 = vadd.f32 %v1765, %v1877
        %v1879 = vpop.f32.mrf.mxu0
        %v1880 = vadd.f32 %v1767, %v1879
        %v1881 = vpop.f32.mrf.mxu0
        %v1882 = vadd.f32 %v1769, %v1881
        %v1883 = vpop.f32.mrf.mxu0
        %v1884 = vadd.f32 %v1771, %v1883
        %1885 = vmatprep.mubr.bf16.mxu0 %v858
        %1886 = vmatmul.mubr.bf16.gmra.mxu0 %v857
        %v1887 = vpop.f32.mrf.mxu0
        %v1888 = vadd.f32 %v1775, %v1887
        %v1889 = vpop.f32.mrf.mxu0
        %v1890 = vadd.f32 %v1777, %v1889
        %v1891 = vpop.f32.mrf.mxu0
        %v1892 = vadd.f32 %v1779, %v1891
        %v1893 = vpop.f32.mrf.mxu0
        %v1894 = vadd.f32 %v1781, %v1893
        %1895 = vmatprep.mubr.bf16.mxu0 %v866
        %1896 = vmatmul.mubr.bf16.gmra.mxu0 %v865
        %v1897 = vpop.f32.mrf.mxu0
        %v1898 = vadd.f32 %v1785, %v1897
        %v1899 = vpop.f32.mrf.mxu0
        %v1900 = vadd.f32 %v1787, %v1899
        %v1901 = vpop.f32.mrf.mxu0
        %v1902 = vadd.f32 %v1789, %v1901
        %v1903 = vpop.f32.mrf.mxu0
        %v1904 = vadd.f32 %v1791, %v1903
        %1905 = vmatprep.mubr.bf16.mxu0 %v874
        %1906 = vmatmul.mubr.bf16.gmra.mxu0 %v873
        %v1907 = vpop.f32.mrf.mxu0
        %v1908 = vadd.f32 %v1795, %v1907
        %v1909 = vpop.f32.mrf.mxu0
        %v1910 = vadd.f32 %v1797, %v1909
        %v1911 = vpop.f32.mrf.mxu0
        %v1912 = vadd.f32 %v1799, %v1911
        %v1913 = vpop.f32.mrf.mxu0
        %v1914 = vadd.f32 %v1801, %v1913
        %1915 = vmatprep.mubr.bf16.mxu0 %v882
        %1916 = vmatmul.mubr.bf16.gmra.mxu0 %v881
        %v1917 = vpop.f32.mrf.mxu0
        %v1918 = vadd.f32 %v1805, %v1917
        %v1919 = vpop.f32.mrf.mxu0
        %v1920 = vadd.f32 %v1807, %v1919
        %v1921 = vpop.f32.mrf.mxu0
        %v1922 = vadd.f32 %v1809, %v1921
        %v1923 = vpop.f32.mrf.mxu0
        %v1924 = vadd.f32 %v1811, %v1923
        %1925 = vmatprep.mubr.bf16.mxu0 %v890
        %1926 = vmatmul.mubr.bf16.gmra.mxu0 %v889
        %v1927 = vpop.f32.mrf.mxu0
        %v1928 = vadd.f32 %v1815, %v1927
        %v1929 = vpop.f32.mrf.mxu0
        %v1930 = vadd.f32 %v1817, %v1929
        %v1931 = vpop.f32.mrf.mxu0
        %v1932 = vadd.f32 %v1819, %v1931
        %v1933 = vpop.f32.mrf.mxu0
        %v1934 = vadd.f32 %v1821, %v1933
        %1935 = vdwg.mxu0
        %1936 = vmatprep.subr.bf16.mxu0 %v1452
        %1937 = vmatpush1.bf16.msra.mxu0 %v1451
        %1938 = vmatprep.subr.bf16.mxu0 %v1450
        %1939 = vmatpush1.bf16.msra.mxu0 %v1449
        %1940 = vmatprep.subr.bf16.mxu0 %v1448
        %1941 = vmatpush1.bf16.msra.mxu0 %v1447
        %1942 = vmatprep.subr.bf16.mxu0 %v1446
        %1943 = vmatpush1.bf16.msra.mxu0 %v1445
        %1944 = vmatprep.subr.bf16.mxu0 %v1444
        %1945 = vmatpush1.bf16.msra.mxu0 %v1443
        %1946 = vmatprep.subr.bf16.mxu0 %v1442
        %1947 = vmatpush1.bf16.msra.mxu0 %v1441
        %1948 = vmatprep.subr.bf16.mxu0 %v1440
        %1949 = vmatpush1.bf16.msra.mxu0 %v1439
        %1950 = vmatprep.subr.bf16.mxu0 %v1438
        %1951 = vmatpush1.bf16.msra.mxu0 %v1437
        %1952 = vmatprep.subr.bf16.mxu0 %v1468
        %1953 = vmatpush2.bf16.msra.mxu0 %v1467
        %1954 = vmatprep.subr.bf16.mxu0 %v1466
        %1955 = vmatpush2.bf16.msra.mxu0 %v1465
        %1956 = vmatprep.subr.bf16.mxu0 %v1464
        %1957 = vmatpush2.bf16.msra.mxu0 %v1463
        %1958 = vmatprep.subr.bf16.mxu0 %v1462
        %1959 = vmatpush2.bf16.msra.mxu0 %v1461
        %1960 = vmatprep.subr.bf16.mxu0 %v1460
        %1961 = vmatpush2.bf16.msra.mxu0 %v1459
        %1962 = vmatprep.subr.bf16.mxu0 %v1458
        %1963 = vmatpush2.bf16.msra.mxu0 %v1457
        %1964 = vmatprep.subr.bf16.mxu0 %v1456
        %1965 = vmatpush2.bf16.msra.mxu0 %v1455
        %1966 = vmatprep.subr.bf16.mxu0 %v1454
        %1967 = vmatpush2.bf16.msra.mxu0 %v1453
        %1968 = vmatprep.mubr.bf16.mxu0 %v836
        %1969 = vmatmul.mubr.bf16.gmra.mxu0 %v835
        %v1970 = vpop.f32.mrf.mxu0
        %v1971 = vadd.f32 %v1858, %v1970
        %v1972 = vpop.f32.mrf.mxu0
        %v1973 = vadd.f32 %v1860, %v1972
        %v1974 = vpop.f32.mrf.mxu0
        %v1975 = vadd.f32 %v1862, %v1974
        %v1976 = vpop.f32.mrf.mxu0
        %v1977 = vadd.f32 %v1864, %v1976
        %1978 = vmatprep.mubr.bf16.mxu0 %v844
        %1979 = vmatmul.mubr.bf16.gmra.mxu0 %v843
        %v1980 = vpop.f32.mrf.mxu0
        %v1981 = vadd.f32 %v1868, %v1980
        %v1982 = vpop.f32.mrf.mxu0
        %v1983 = vadd.f32 %v1870, %v1982
        %v1984 = vpop.f32.mrf.mxu0
        %v1985 = vadd.f32 %v1872, %v1984
        %v1986 = vpop.f32.mrf.mxu0
        %v1987 = vadd.f32 %v1874, %v1986
        %1988 = vmatprep.mubr.bf16.mxu0 %v852
        %1989 = vmatmul.mubr.bf16.gmra.mxu0 %v851
        %v1990 = vpop.f32.mrf.mxu0
        %v1991 = vadd.f32 %v1878, %v1990
        %v1992 = vpop.f32.mrf.mxu0
        %v1993 = vadd.f32 %v1880, %v1992
        %v1994 = vpop.f32.mrf.mxu0
        %v1995 = vadd.f32 %v1882, %v1994
        %v1996 = vpop.f32.mrf.mxu0
        %v1997 = vadd.f32 %v1884, %v1996
        %1998 = vmatprep.mubr.bf16.mxu0 %v860
        %1999 = vmatmul.mubr.bf16.gmra.mxu0 %v859
        %v2000 = vpop.f32.mrf.mxu0
        %v2001 = vadd.f32 %v1888, %v2000
        %v2002 = vpop.f32.mrf.mxu0
        %v2003 = vadd.f32 %v1890, %v2002
        %v2004 = vpop.f32.mrf.mxu0
        %v2005 = vadd.f32 %v1892, %v2004
        %v2006 = vpop.f32.mrf.mxu0
        %v2007 = vadd.f32 %v1894, %v2006
        %2008 = vmatprep.mubr.bf16.mxu0 %v868
        %2009 = vmatmul.mubr.bf16.gmra.mxu0 %v867
        %v2010 = vpop.f32.mrf.mxu0
        %v2011 = vadd.f32 %v1898, %v2010
        %v2012 = vpop.f32.mrf.mxu0
        %v2013 = vadd.f32 %v1900, %v2012
        %v2014 = vpop.f32.mrf.mxu0
        %v2015 = vadd.f32 %v1902, %v2014
        %v2016 = vpop.f32.mrf.mxu0
        %v2017 = vadd.f32 %v1904, %v2016
        %2018 = vmatprep.mubr.bf16.mxu0 %v876
        %2019 = vmatmul.mubr.bf16.gmra.mxu0 %v875
        %v2020 = vpop.f32.mrf.mxu0
        %v2021 = vadd.f32 %v1908, %v2020
        %v2022 = vpop.f32.mrf.mxu0
        %v2023 = vadd.f32 %v1910, %v2022
        %v2024 = vpop.f32.mrf.mxu0
        %v2025 = vadd.f32 %v1912, %v2024
        %v2026 = vpop.f32.mrf.mxu0
        %v2027 = vadd.f32 %v1914, %v2026
        %2028 = vmatprep.mubr.bf16.mxu0 %v884
        %2029 = vmatmul.mubr.bf16.gmra.mxu0 %v883
        %v2030 = vpop.f32.mrf.mxu0
        %v2031 = vadd.f32 %v1918, %v2030
        %v2032 = vpop.f32.mrf.mxu0
        %v2033 = vadd.f32 %v1920, %v2032
        %v2034 = vpop.f32.mrf.mxu0
        %v2035 = vadd.f32 %v1922, %v2034
        %v2036 = vpop.f32.mrf.mxu0
        %v2037 = vadd.f32 %v1924, %v2036
        %2038 = vmatprep.mubr.bf16.mxu0 %v892
        %2039 = vmatmul.mubr.bf16.gmra.mxu0 %v891
        %v2040 = vpop.f32.mrf.mxu0
        %v2041 = vadd.f32 %v1928, %v2040
        %v2042 = vpop.f32.mrf.mxu0
        %v2043 = vadd.f32 %v1930, %v2042
        %v2044 = vpop.f32.mrf.mxu0
        %v2045 = vadd.f32 %v1932, %v2044
        %v2046 = vpop.f32.mrf.mxu0
        %v2047 = vadd.f32 %v1934, %v2046
        %2048 = vdwg.mxu0
        %v2049 = vadd.f32 %v413, %v1971
        %v2050 = vadd.f32 %v414, %v1973
        %v2051 = vadd.f32 %v415, %v1975
        %v2052 = vadd.f32 %v416, %v1977
        %v2053 = vadd.f32 %v417, %v1981
        %v2054 = vadd.f32 %v418, %v1983
        %v2055 = vadd.f32 %v419, %v1985
        %v2056 = vadd.f32 %v420, %v1987
        %v2057 = vadd.f32 %v421, %v1991
        %v2058 = vadd.f32 %v422, %v1993
        %v2059 = vadd.f32 %v423, %v1995
        %v2060 = vadd.f32 %v424, %v1997
        %v2061 = vadd.f32 %v425, %v2001
        %v2062 = vadd.f32 %v426, %v2003
        %v2063 = vadd.f32 %v427, %v2005
        %v2064 = vadd.f32 %v428, %v2007
        %v2065 = vadd.f32 %v429, %v2011
        %v2066 = vadd.f32 %v430, %v2013
        %v2067 = vadd.f32 %v431, %v2015
        %v2068 = vadd.f32 %v432, %v2017
        %v2069 = vadd.f32 %v433, %v2021
        %v2070 = vadd.f32 %v434, %v2023
        %v2071 = vadd.f32 %v435, %v2025
        %v2072 = vadd.f32 %v436, %v2027
        %v2073 = vadd.f32 %v437, %v2031
        %v2074 = vadd.f32 %v438, %v2033
        %v2075 = vadd.f32 %v439, %v2035
        %v2076 = vadd.f32 %v440, %v2037
        %v2077 = vadd.f32 %v441, %v2041
        %v2078 = vadd.f32 %v442, %v2043
        %v2079 = vadd.f32 %v443, %v2045
        %v2080 = vadd.f32 %v444, %v2047
        %2081 = vst [vmem:[#allocation2] sm:$0xff] %v2049
        %2082 = vst [vmem:[#allocation2 + $0x8] sm:$0xff] %v2050
        %2083 = vst [vmem:[#allocation2 + $0x10] sm:$0xff] %v2051
        %2084 = vst [vmem:[#allocation2 + $0x18] sm:$0xff] %v2052
        %2085 = vst [vmem:[#allocation2 + $0x20] sm:$0xff] %v2053
        %2086 = vst [vmem:[#allocation2 + $0x28] sm:$0xff] %v2054
        %2087 = vst [vmem:[#allocation2 + $0x30] sm:$0xff] %v2055
        %2088 = vst [vmem:[#allocation2 + $0x38] sm:$0xff] %v2056
        %2089 = vst [vmem:[#allocation2 + $0x40] sm:$0xff] %v2057
        %2090 = vst [vmem:[#allocation2 + $0x48] sm:$0xff] %v2058
        %2091 = vst [vmem:[#allocation2 + $0x50] sm:$0xff] %v2059
        %2092 = vst [vmem:[#allocation2 + $0x58] sm:$0xff] %v2060
        %2093 = vst [vmem:[#allocation2 + $0x60] sm:$0xff] %v2061
        %2094 = vst [vmem:[#allocation2 + $0x68] sm:$0xff] %v2062
        %2095 = vst [vmem:[#allocation2 + $0x70] sm:$0xff] %v2063
        %2096 = vst [vmem:[#allocation2 + $0x78] sm:$0xff] %v2064
        %2097 = vst [vmem:[#allocation2 + $0x80] sm:$0xff] %v2065
        %2098 = vst [vmem:[#allocation2 + $0x88] sm:$0xff] %v2066
        %2099 = vst [vmem:[#allocation2 + $0x90] sm:$0xff] %v2067
        %2100 = vst [vmem:[#allocation2 + $0x98] sm:$0xff] %v2068
        %2101 = vst [vmem:[#allocation2 + $0xa0] sm:$0xff] %v2069
        %2102 = vst [vmem:[#allocation2 + $0xa8] sm:$0xff] %v2070
        %2103 = vst [vmem:[#allocation2 + $0xb0] sm:$0xff] %v2071
        %2104 = vst [vmem:[#allocation2 + $0xb8] sm:$0xff] %v2072
        %2105 = vst [vmem:[#allocation2 + $0xc0] sm:$0xff] %v2073
        %2106 = vst [vmem:[#allocation2 + $0xc8] sm:$0xff] %v2074
        %2107 = vst [vmem:[#allocation2 + $0xd0] sm:$0xff] %v2075
        %2108 = vst [vmem:[#allocation2 + $0xd8] sm:$0xff] %v2076
        %2109 = vst [vmem:[#allocation2 + $0xe0] sm:$0xff] %v2077
        %2110 = vst [vmem:[#allocation2 + $0xe8] sm:$0xff] %v2078
        %2111 = vst [vmem:[#allocation2 + $0xf0] sm:$0xff] %v2079
        %2112 = vst [vmem:[#allocation2 + $0xf8] sm:$0xff] %v2080
        %p2113 = scmp.eq.s32.totalorder %s20, 1
        // Predicated region
        $region56: #{discriminator_forward.11} parent=46 // pred_check
          %p2114 = pneg %p2113
        $region57: #{discriminator_forward.11} parent=46 // pred_check_branch
          %2116 = sbr.rel (%p2114) target = $region59
        $region58: #{discriminator_forward.11} parent=46 // pred_region
          %v2117 = vld [vmem:[#allocation2] sm:$0xff]
          %v2118 = vld [vmem:[#allocation2 + $0x8] sm:$0xff]
          %v2119 = vld [vmem:[#allocation2 + $0x10] sm:$0xff]
          %v2120 = vld [vmem:[#allocation2 + $0x18] sm:$0xff]
          %v2121 = vld [vmem:[#allocation2 + $0x20] sm:$0xff]
          %v2122 = vld [vmem:[#allocation2 + $0x28] sm:$0xff]
          %v2123 = vld [vmem:[#allocation2 + $0x30] sm:$0xff]
          %v2124 = vld [vmem:[#allocation2 + $0x38] sm:$0xff]
          %v2125 = vld [vmem:[#allocation2 + $0x40] sm:$0xff]
          %v2126 = vld [vmem:[#allocation2 + $0x48] sm:$0xff]
          %v2127 = vld [vmem:[#allocation2 + $0x50] sm:$0xff]
          %v2128 = vld [vmem:[#allocation2 + $0x58] sm:$0xff]
          %v2129 = vld [vmem:[#allocation2 + $0x60] sm:$0xff]
          %v2130 = vld [vmem:[#allocation2 + $0x68] sm:$0xff]
          %v2131 = vld [vmem:[#allocation2 + $0x70] sm:$0xff]
          %v2132 = vld [vmem:[#allocation2 + $0x78] sm:$0xff]
          %v2133 = vld [vmem:[#allocation2 + $0x80] sm:$0xff]
          %v2134 = vld [vmem:[#allocation2 + $0x88] sm:$0xff]
          %v2135 = vld [vmem:[#allocation2 + $0x90] sm:$0xff]
          %v2136 = vld [vmem:[#allocation2 + $0x98] sm:$0xff]
          %v2137 = vld [vmem:[#allocation2 + $0xa0] sm:$0xff]
          %v2138 = vld [vmem:[#allocation2 + $0xa8] sm:$0xff]
          %v2139 = vld [vmem:[#allocation2 + $0xb0] sm:$0xff]
          %v2140 = vld [vmem:[#allocation2 + $0xb8] sm:$0xff]
          %v2141 = vld [vmem:[#allocation2 + $0xc0] sm:$0xff]
          %v2142 = vld [vmem:[#allocation2 + $0xc8] sm:$0xff]
          %v2143 = vld [vmem:[#allocation2 + $0xd0] sm:$0xff]
          %v2144 = vld [vmem:[#allocation2 + $0xd8] sm:$0xff]
          %v2145 = vld [vmem:[#allocation2 + $0xe0] sm:$0xff]
          %v2146 = vld [vmem:[#allocation2 + $0xe8] sm:$0xff]
          %v2147 = vld [vmem:[#allocation2 + $0xf0] sm:$0xff]
          %v2148 = vld [vmem:[#allocation2 + $0xf8] sm:$0xff]
          %v2149 = vadd.f32 %v2117, %v2119
          %v2150 = vadd.f32 %v2149, %v2121
          %v2151 = vadd.f32 %v2150, %v2123
          %v2152 = vadd.f32 %v2151, %v2125
          %v2153 = vadd.f32 %v2152, %v2127
          %v2154 = vadd.f32 %v2153, %v2129
          %v2155 = vadd.f32 %v2154, %v2131
          %v2156 = vadd.f32 %v2155, %v2133
          %v2157 = vadd.f32 %v2156, %v2135
          %v2158 = vadd.f32 %v2157, %v2137
          %v2159 = vadd.f32 %v2158, %v2139
          %v2160 = vadd.f32 %v2159, %v2141
          %v2161 = vadd.f32 %v2160, %v2143
          %v2162 = vadd.f32 %v2161, %v2145
          %v2163 = vadd.f32 %v2162, %v2147
          %v2164 = vrot.slane %v2163, 4
          %v2165 = vadd.f32 %v2163, %v2164
          %v2166 = vrot.slane %v2165, 2
          %v2167 = vadd.f32 %v2165, %v2166
          %v2168 = vrot.slane %v2167, 1
          %v2169 = vadd.f32 %v2167, %v2168
          %v2170 = vadd.f32 %v2118, %v2120
          %v2171 = vadd.f32 %v2170, %v2122
          %v2172 = vadd.f32 %v2171, %v2124
          %v2173 = vadd.f32 %v2172, %v2126
          %v2174 = vadd.f32 %v2173, %v2128
          %v2175 = vadd.f32 %v2174, %v2130
          %v2176 = vadd.f32 %v2175, %v2132
          %v2177 = vadd.f32 %v2176, %v2134
          %v2178 = vadd.f32 %v2177, %v2136
          %v2179 = vadd.f32 %v2178, %v2138
          %v2180 = vadd.f32 %v2179, %v2140
          %v2181 = vadd.f32 %v2180, %v2142
          %v2182 = vadd.f32 %v2181, %v2144
          %v2183 = vadd.f32 %v2182, %v2146
          %v2184 = vadd.f32 %v2183, %v2148
          %v2185 = vrot.slane %v2184, 4
          %v2186 = vadd.f32 %v2184, %v2185
          %v2187 = vrot.slane %v2186, 2
          %v2188 = vadd.f32 %v2186, %v2187
          %v2189 = vrot.slane %v2188, 1
          %v2190 = vadd.f32 %v2188, %v2189
          %v2191 = vmul.f32 %v2117, %v2117
          %v2192 = vmul.f32 %v2118, %v2118
          %v2193 = vmul.f32 %v2119, %v2119
          %v2194 = vmul.f32 %v2120, %v2120
          %v2195 = vmul.f32 %v2121, %v2121
          %v2196 = vmul.f32 %v2122, %v2122
          %v2197 = vmul.f32 %v2123, %v2123
          %v2198 = vmul.f32 %v2124, %v2124
          %v2199 = vmul.f32 %v2125, %v2125
          %v2200 = vmul.f32 %v2126, %v2126
          %v2201 = vmul.f32 %v2127, %v2127
          %v2202 = vmul.f32 %v2128, %v2128
          %v2203 = vmul.f32 %v2129, %v2129
          %v2204 = vmul.f32 %v2130, %v2130
          %v2205 = vmul.f32 %v2131, %v2131
          %v2206 = vmul.f32 %v2132, %v2132
          %v2207 = vmul.f32 %v2133, %v2133
          %v2208 = vmul.f32 %v2134, %v2134
          %v2209 = vmul.f32 %v2135, %v2135
          %v2210 = vmul.f32 %v2136, %v2136
          %v2211 = vmul.f32 %v2137, %v2137
          %v2212 = vmul.f32 %v2138, %v2138
          %v2213 = vmul.f32 %v2139, %v2139
          %v2214 = vmul.f32 %v2140, %v2140
          %v2215 = vmul.f32 %v2141, %v2141
          %v2216 = vmul.f32 %v2142, %v2142
          %v2217 = vmul.f32 %v2143, %v2143
          %v2218 = vmul.f32 %v2144, %v2144
          %v2219 = vmul.f32 %v2145, %v2145
          %v2220 = vmul.f32 %v2146, %v2146
          %v2221 = vmul.f32 %v2147, %v2147
          %v2222 = vmul.f32 %v2148, %v2148
          %v2223 = vadd.f32 %v2191, %v2193
          %v2224 = vadd.f32 %v2223, %v2195
          %v2225 = vadd.f32 %v2224, %v2197
          %v2226 = vadd.f32 %v2225, %v2199
          %v2227 = vadd.f32 %v2226, %v2201
          %v2228 = vadd.f32 %v2227, %v2203
          %v2229 = vadd.f32 %v2228, %v2205
          %v2230 = vadd.f32 %v2229, %v2207
          %v2231 = vadd.f32 %v2230, %v2209
          %v2232 = vadd.f32 %v2231, %v2211
          %v2233 = vadd.f32 %v2232, %v2213
          %v2234 = vadd.f32 %v2233, %v2215
          %v2235 = vadd.f32 %v2234, %v2217
          %v2236 = vadd.f32 %v2235, %v2219
          %v2237 = vadd.f32 %v2236, %v2221
          %v2238 = vrot.slane %v2237, 4
          %v2239 = vadd.f32 %v2237, %v2238
          %v2240 = vrot.slane %v2239, 2
          %v2241 = vadd.f32 %v2239, %v2240
          %v2242 = vrot.slane %v2241, 1
          %v2243 = vadd.f32 %v2241, %v2242
          %v2244 = vadd.f32 %v2192, %v2194
          %v2245 = vadd.f32 %v2244, %v2196
          %v2246 = vadd.f32 %v2245, %v2198
          %v2247 = vadd.f32 %v2246, %v2200
          %v2248 = vadd.f32 %v2247, %v2202
          %v2249 = vadd.f32 %v2248, %v2204
          %v2250 = vadd.f32 %v2249, %v2206
          %v2251 = vadd.f32 %v2250, %v2208
          %v2252 = vadd.f32 %v2251, %v2210
          %v2253 = vadd.f32 %v2252, %v2212
          %v2254 = vadd.f32 %v2253, %v2214
          %v2255 = vadd.f32 %v2254, %v2216
          %v2256 = vadd.f32 %v2255, %v2218
          %v2257 = vadd.f32 %v2256, %v2220
          %v2258 = vadd.f32 %v2257, %v2222
          %v2259 = vrot.slane %v2258, 4
          %v2260 = vadd.f32 %v2258, %v2259
          %v2261 = vrot.slane %v2260, 2
          %v2262 = vadd.f32 %v2260, %v2261
          %v2263 = vrot.slane %v2262, 1
          %v2264 = vadd.f32 %v2262, %v2263
          %v2265 = vlaneseq
          %v2266 = vshrl.u32 %v2265, 7
          %vm2267 = vcmp.eq.s32.totalorder %v2266, 0
          %vm2268 = vcmp.eq.s32.totalorder %v2266, 1
          %v2269 = vsel %vm2268, %v2243, 0.0
          %v2270 = vsel %vm2268, %v2264, 0.0
          %v2271 = vsel %vm2267, %v2169, %v2269
          %v2272 = vsel %vm2267, %v2190, %v2270
          %2273 = vst [vmem:[%s376] sm:$0xff] %v2271
          %2274 = vst [vmem:[%s376 + $0x8] sm:$0xff] %v2272
          %2275 = vst [vmem:[%s370] sm:$0xff] %v2117
          %2276 = vst [vmem:[%s370 + $0x8] sm:$0xff] %v2118
          %2277 = vst [vmem:[%s370 + $0x10] sm:$0xff] %v2119
          %2278 = vst [vmem:[%s370 + $0x18] sm:$0xff] %v2120
          %2279 = vst [vmem:[%s370 + $0x20] sm:$0xff] %v2121
          %2280 = vst [vmem:[%s370 + $0x28] sm:$0xff] %v2122
          %2281 = vst [vmem:[%s370 + $0x30] sm:$0xff] %v2123
          %2282 = vst [vmem:[%s370 + $0x38] sm:$0xff] %v2124
          %2283 = vst [vmem:[%s370 + $0x40] sm:$0xff] %v2125
          %2284 = vst [vmem:[%s370 + $0x48] sm:$0xff] %v2126
          %2285 = vst [vmem:[%s370 + $0x50] sm:$0xff] %v2127
          %2286 = vst [vmem:[%s370 + $0x58] sm:$0xff] %v2128
          %2287 = vst [vmem:[%s370 + $0x60] sm:$0xff] %v2129
          %2288 = vst [vmem:[%s370 + $0x68] sm:$0xff] %v2130
          %2289 = vst [vmem:[%s370 + $0x70] sm:$0xff] %v2131
          %2290 = vst [vmem:[%s370 + $0x78] sm:$0xff] %v2132
          %2291 = vst [vmem:[%s370 + $0x80] sm:$0xff] %v2133
          %2292 = vst [vmem:[%s370 + $0x88] sm:$0xff] %v2134
          %2293 = vst [vmem:[%s370 + $0x90] sm:$0xff] %v2135
          %2294 = vst [vmem:[%s370 + $0x98] sm:$0xff] %v2136
          %2295 = vst [vmem:[%s370 + $0xa0] sm:$0xff] %v2137
          %2296 = vst [vmem:[%s370 + $0xa8] sm:$0xff] %v2138
          %2297 = vst [vmem:[%s370 + $0xb0] sm:$0xff] %v2139
          %2298 = vst [vmem:[%s370 + $0xb8] sm:$0xff] %v2140
          %2299 = vst [vmem:[%s370 + $0xc0] sm:$0xff] %v2141
          %2300 = vst [vmem:[%s370 + $0xc8] sm:$0xff] %v2142
          %2301 = vst [vmem:[%s370 + $0xd0] sm:$0xff] %v2143
          %2302 = vst [vmem:[%s370 + $0xd8] sm:$0xff] %v2144
          %2303 = vst [vmem:[%s370 + $0xe0] sm:$0xff] %v2145
          %2304 = vst [vmem:[%s370 + $0xe8] sm:$0xff] %v2146
          %2305 = vst [vmem:[%s370 + $0xf0] sm:$0xff] %v2147
          %2306 = vst [vmem:[%s370 + $0xf8] sm:$0xff] %v2148
        $region59: #{discriminator_forward.11} parent=46 // pred_fallthru
          _
        %s2307 = smul.u32 16, %s19
        %p2308 = scmp.lt.s32.totalorder %s2307, 15
        %s2309 = scalar_select %p2308, %s2307, 15
        %s2310 = smul.addr %s2309, 2
        %s2311 = smul.addr %s2310, 8
        %s2312 = scalar_lea.vmem %s2, %s2311
        %p2313 = scmp.lt.s32.totalorder %s19, 0
        %s2314 = scalar_select %p2313, %s19, 0
        %s2315 = smul.addr %s2314, 2
        %s2316 = smul.addr %s2315, 8
        %s2317 = scalar_lea.vmem %s3, %s2316
        // Predicated region
        $region60: #{discriminator_forward.11} parent=46 // pred_check
          %p2318 = pneg %p99
        $region61: #{discriminator_forward.11} parent=46 // pred_check_branch
          %2320 = sbr.rel (%p2318) target = $region63
        $region62: #{discriminator_forward.11} parent=46 // pred_region
          %s2321 = smul.u32 16, %s19
        $region63: #{discriminator_forward.11} parent=46 // pred_fallthru
          _
        // Predicated region
        $region64: #{discriminator_forward.11} parent=46 // pred_check
          %p2322 = pneg %p125
        $region65: #{discriminator_forward.11} parent=46 // pred_check_branch
          %2324 = sbr.rel (%p2322) target = $region67
        $region66: #{discriminator_forward.11} parent=46 // pred_region
          _
        $region67: #{discriminator_forward.11} parent=46 // pred_fallthru
          _
        // Predicated region
        $region68: #{discriminator_forward.11} parent=46 // pred_check
          %p2325 = pneg %p99
        $region69: #{discriminator_forward.11} parent=46 // pred_check_branch
          %2327 = sbr.rel (%p2325) target = $region71
        $region70: #{discriminator_forward.11} parent=46 // pred_region
          %s2328 = smul.u32 16, %s19
          %p2329 = scmp.lt.s32.totalorder %s2328, 15
          %s2330 = scalar_select %p2329, %s2328, 15
          %s2331 = smul.addr %s2330, 2
          %s2332 = smul.addr %s2331, 8
          %s2333 = scalar_lea.vmem %s2, %s2332
        $region71: #{discriminator_forward.11} parent=46 // pred_fallthru
          _
        // Predicated region
        $region72: #{discriminator_forward.11} parent=46 // pred_check
          %p2334 = pneg %p125
        $region73: #{discriminator_forward.11} parent=46 // pred_check_branch
          %2336 = sbr.rel (%p2334) target = $region75
        $region74: #{discriminator_forward.11} parent=46 // pred_region
          %p2337 = scmp.lt.s32.totalorder %s19, 0
          %s2338 = scalar_select %p2337, %s19, 0
          %s2339 = smul.addr %s2338, 2
          %s2340 = smul.addr %s2339, 8
          %s2341 = scalar_lea.vmem %s3, %s2340
        $region75: #{discriminator_forward.11} parent=46 // pred_fallthru
          _
      $region47: #{discriminator_forward.11} parent=5 // pred_fallthru
        _
      %p2342 = scmp.le.s32.totalorder 2, %s10
      // Predicated region
      $region76: #{discriminator_forward.11} parent=5 // pred_check
        %p2343 = pneg %p2342
      $region77: #{discriminator_forward.11} parent=5 // pred_check_branch
        %2345 = sbr.rel (%p2343) target = $region79
      $region78: #{discriminator_forward.11} parent=5 // pred_region
        %s2346 = ssub.s32 %s10, 2
      $region79: #{discriminator_forward.11} parent=5 // pred_fallthru
        _
    $region6: #{discriminator_forward.11} parent=1 // loop_footer
      %s14 = sadd.s32 1, %s10
    $region7: #{discriminator_forward.11} parent=1 // loop_footer_branch
      %9 = sbr.rel target = $region3
    $region8: #{discriminator_forward.11} parent=1 // loop_exit
      _

// kernel: discriminator_forward.14
$region0: #{discriminator_forward.14}
  #allocation0 [shape = 'u32[]', space=smem, size = 0x4, offset = 0x4, fixed_abs, tag = 'smem constant byte address 0x4 - core index']
  #allocation1 [shape = 'u32[144,128]{1,0:T(1,128)}', space=vmem, size = 0x12000, scoped, tag = 'internal scratch']
  %s0 = inlined_call_operand.vmem [shape: f32[32,512], index: 0, kind: input, shape index: {}]
  %s1 = inlined_call_operand.vmem [shape: f32[1,512], index: 1, kind: input, shape index: {}]
  %s2 = inlined_call_operand.vmem [shape: f32[1,512], index: 2, kind: input, shape index: {}]
  %s3 = inlined_call_operand.vmem [shape: bf16[32,512], index: 3, kind: output, shape index: {}]
  %s4 = sld [smem:[#allocation0]]
  $region22: #{discriminator_forward.14} parent=0
    _
  %s6 = ssub.s32 1, %s4
  %s7 = scalar_select 0, %s6, %s4
  // Predicated region
  $region2: #{discriminator_forward.14} parent=0 // pred_check
    _
  $region3: #{discriminator_forward.14} parent=0 // pred_check_branch
    %9 = sbr.rel (0) target = $region5
  $region4: #{discriminator_forward.14} parent=0 // pred_region
    _
  $region5: #{discriminator_forward.14} parent=0 // pred_fallthru
    _
  // Predicated region
  $region6: #{discriminator_forward.14} parent=0 // pred_check
    _
  $region7: #{discriminator_forward.14} parent=0 // pred_check_branch
    %11 = sbr.rel (0) target = $region9
  $region8: #{discriminator_forward.14} parent=0 // pred_region
    _
  $region9: #{discriminator_forward.14} parent=0 // pred_fallthru
    _
  // Predicated region
  $region10: #{discriminator_forward.14} parent=0 // pred_check
    _
  $region11: #{discriminator_forward.14} parent=0 // pred_check_branch
    %13 = sbr.rel (0) target = $region13
  $region12: #{discriminator_forward.14} parent=0 // pred_region
    _
  $region13: #{discriminator_forward.14} parent=0 // pred_fallthru
    _
  %v14 = vld [vmem:[%s0] sm:$0xff]
  %v15 = vld [vmem:[%s0 + $0x8] sm:$0xff]
  %v16 = vld [vmem:[%s0 + $0x10] sm:$0xff]
  %v17 = vld [vmem:[%s0 + $0x18] sm:$0xff]
  %v18 = vld [vmem:[%s0 + $0x20] sm:$0xff]
  %v19 = vld [vmem:[%s0 + $0x28] sm:$0xff]
  %v20 = vld [vmem:[%s0 + $0x30] sm:$0xff]
  %v21 = vld [vmem:[%s0 + $0x38] sm:$0xff]
  %v22 = vld [vmem:[%s0 + $0x40] sm:$0xff]
  %v23 = vld [vmem:[%s0 + $0x48] sm:$0xff]
  %v24 = vld [vmem:[%s0 + $0x50] sm:$0xff]
  %v25 = vld [vmem:[%s0 + $0x58] sm:$0xff]
  %v26 = vld [vmem:[%s0 + $0x60] sm:$0xff]
  %v27 = vld [vmem:[%s0 + $0x68] sm:$0xff]
  %v28 = vld [vmem:[%s0 + $0x70] sm:$0xff]
  %v29 = vld [vmem:[%s0 + $0x78] sm:$0xff]
  %v30 = vld [vmem:[%s1] sm:$0xf]
  %v32 = vlaneseq
  %v33 = vshrl.u32 %v32, 7
  %v34 = vsub.s32 0, %v33
  %v35 = vrot.slane %v30, %v34
  %v36 = vlaneseq
  %v37 = vshrl.u32 %v36, 7
  %v38 = vsub.s32 1, %v37
  %v39 = vrot.slane %v30, %v38
  %v40 = vlaneseq
  %v41 = vshrl.u32 %v40, 7
  %v42 = vsub.s32 2, %v41
  %v43 = vrot.slane %v30, %v42
  %v44 = vlaneseq
  %v45 = vshrl.u32 %v44, 7
  %v46 = vsub.s32 3, %v45
  %v47 = vrot.slane %v30, %v46
  %v52 = vmul.f32 %v14, %v35
  %v53 = vmul.f32 %v15, %v39
  %v54 = vmul.f32 %v16, %v43
  %v55 = vmul.f32 %v17, %v47
  %v56 = vmul.f32 %v18, %v35
  %v57 = vmul.f32 %v19, %v39
  %v58 = vmul.f32 %v20, %v43
  %v59 = vmul.f32 %v21, %v47
  %v60 = vmul.f32 %v22, %v35
  %v61 = vmul.f32 %v23, %v39
  %v62 = vmul.f32 %v24, %v43
  %v63 = vmul.f32 %v25, %v47
  %v64 = vmul.f32 %v26, %v35
  %v65 = vmul.f32 %v27, %v39
  %v66 = vmul.f32 %v28, %v43
  %v67 = vmul.f32 %v29, %v47
  %v68 = vld [vmem:[%s2] sm:$0xf]
  %v70 = vlaneseq
  %v71 = vshrl.u32 %v70, 7
  %v72 = vsub.s32 0, %v71
  %v73 = vrot.slane %v68, %v72
  %v74 = vlaneseq
  %v75 = vshrl.u32 %v74, 7
  %v76 = vsub.s32 1, %v75
  %v77 = vrot.slane %v68, %v76
  %v78 = vlaneseq
  %v79 = vshrl.u32 %v78, 7
  %v80 = vsub.s32 2, %v79
  %v81 = vrot.slane %v68, %v80
  %v82 = vlaneseq
  %v83 = vshrl.u32 %v82, 7
  %v84 = vsub.s32 3, %v83
  %v85 = vrot.slane %v68, %v84
  %v90 = vadd.f32 %v52, %v73
  %v91 = vadd.f32 %v53, %v77
  %v92 = vadd.f32 %v54, %v81
  %v93 = vadd.f32 %v55, %v85
  %v94 = vadd.f32 %v56, %v73
  %v95 = vadd.f32 %v57, %v77
  %v96 = vadd.f32 %v58, %v81
  %v97 = vadd.f32 %v59, %v85
  %v98 = vadd.f32 %v60, %v73
  %v99 = vadd.f32 %v61, %v77
  %v100 = vadd.f32 %v62, %v81
  %v101 = vadd.f32 %v63, %v85
  %v102 = vadd.f32 %v64, %v73
  %v103 = vadd.f32 %v65, %v77
  %v104 = vadd.f32 %v66, %v81
  %v105 = vadd.f32 %v67, %v85
  %vm106 = vcmp.ge.f32.partialorder %v90, 0.0
  %vm107 = vcmp.ge.f32.partialorder %v91, 0.0
  %vm108 = vcmp.ge.f32.partialorder %v92, 0.0
  %vm109 = vcmp.ge.f32.partialorder %v93, 0.0
  %vm110 = vcmp.ge.f32.partialorder %v94, 0.0
  %vm111 = vcmp.ge.f32.partialorder %v95, 0.0
  %vm112 = vcmp.ge.f32.partialorder %v96, 0.0
  %vm113 = vcmp.ge.f32.partialorder %v97, 0.0
  %vm114 = vcmp.ge.f32.partialorder %v98, 0.0
  %vm115 = vcmp.ge.f32.partialorder %v99, 0.0
  %vm116 = vcmp.ge.f32.partialorder %v100, 0.0
  %vm117 = vcmp.ge.f32.partialorder %v101, 0.0
  %vm118 = vcmp.ge.f32.partialorder %v102, 0.0
  %vm119 = vcmp.ge.f32.partialorder %v103, 0.0
  %vm120 = vcmp.ge.f32.partialorder %v104, 0.0
  %vm121 = vcmp.ge.f32.partialorder %v105, 0.0
  %v122 = vmul.f32 %v90, 0.2
  %v123 = vmul.f32 %v91, 0.2
  %v124 = vmul.f32 %v92, 0.2
  %v125 = vmul.f32 %v93, 0.2
  %v126 = vmul.f32 %v94, 0.2
  %v127 = vmul.f32 %v95, 0.2
  %v128 = vmul.f32 %v96, 0.2
  %v129 = vmul.f32 %v97, 0.2
  %v130 = vmul.f32 %v98, 0.2
  %v131 = vmul.f32 %v99, 0.2
  %v132 = vmul.f32 %v100, 0.2
  %v133 = vmul.f32 %v101, 0.2
  %v134 = vmul.f32 %v102, 0.2
  %v135 = vmul.f32 %v103, 0.2
  %v136 = vmul.f32 %v104, 0.2
  %v137 = vmul.f32 %v105, 0.2
  %v138 = vsel %vm106, %v90, %v122
  %v139 = vsel %vm107, %v91, %v123
  %v140 = vsel %vm108, %v92, %v124
  %v141 = vsel %vm109, %v93, %v125
  %v142 = vsel %vm110, %v94, %v126
  %v143 = vsel %vm111, %v95, %v127
  %v144 = vsel %vm112, %v96, %v128
  %v145 = vsel %vm113, %v97, %v129
  %v146 = vsel %vm114, %v98, %v130
  %v147 = vsel %vm115, %v99, %v131
  %v148 = vsel %vm116, %v100, %v132
  %v149 = vsel %vm117, %v101, %v133
  %v150 = vsel %vm118, %v102, %v134
  %v151 = vsel %vm119, %v103, %v135
  %v152 = vsel %vm120, %v104, %v136
  %v153 = vsel %vm121, %v105, %v137
  %v154 = vpack.c.bf16 %v142, %v138
  %v155 = vpack.c.bf16 %v143, %v139
  %v156 = vpack.c.bf16 %v144, %v140
  %v157 = vpack.c.bf16 %v145, %v141
  %v158 = vpack.c.bf16 %v150, %v146
  %v159 = vpack.c.bf16 %v151, %v147
  %v160 = vpack.c.bf16 %v152, %v148
  %v161 = vpack.c.bf16 %v153, %v149
  %v170 = vunpack.c.l.b16 %v154
  %v171 = vunpack.c.l.b16 %v155
  %v172 = vunpack.c.l.b16 %v156
  %v173 = vunpack.c.l.b16 %v157
  %v174 = vunpack.c.h.b16 %v154
  %v175 = vunpack.c.h.b16 %v155
  %v176 = vunpack.c.h.b16 %v156
  %v177 = vunpack.c.h.b16 %v157
  %v178 = vunpack.c.l.b16 %v158
  %v179 = vunpack.c.l.b16 %v159
  %v180 = vunpack.c.l.b16 %v160
  %v181 = vunpack.c.l.b16 %v161
  %v182 = vunpack.c.h.b16 %v158
  %v183 = vunpack.c.h.b16 %v159
  %v184 = vunpack.c.h.b16 %v160
  %v185 = vunpack.c.h.b16 %v161
  %v186 = vpack.c.b16 %v171, %v170
  %v187 = vpack.c.b16 %v173, %v172
  %v188 = vpack.c.b16 %v175, %v174
  %v189 = vpack.c.b16 %v177, %v176
  %v190 = vpack.c.b16 %v179, %v178
  %v191 = vpack.c.b16 %v181, %v180
  %v192 = vpack.c.b16 %v183, %v182
  %v193 = vpack.c.b16 %v185, %v184
  %202 = vst [vmem:[%s3] sm:$0xff] %v186
  %203 = vst [vmem:[%s3 + $0x8] sm:$0xff] %v187
  %204 = vst [vmem:[%s3 + $0x10] sm:$0xff] %v188
  %205 = vst [vmem:[%s3 + $0x18] sm:$0xff] %v189
  %206 = vst [vmem:[%s3 + $0x20] sm:$0xff] %v190
  %207 = vst [vmem:[%s3 + $0x28] sm:$0xff] %v191
  %208 = vst [vmem:[%s3 + $0x30] sm:$0xff] %v192
  %209 = vst [vmem:[%s3 + $0x38] sm:$0xff] %v193
  // Predicated region
  $region14: #{discriminator_forward.14} parent=0 // pred_check
    _
  $region15: #{discriminator_forward.14} parent=0 // pred_check_branch
    %211 = sbr.rel (0) target = $region17
  $region16: #{discriminator_forward.14} parent=0 // pred_region
    _
  $region17: #{discriminator_forward.14} parent=0 // pred_fallthru
    _
  // Predicated region
  $region18: #{discriminator_forward.14} parent=0 // pred_check
    _
  $region19: #{discriminator_forward.14} parent=0 // pred_check_branch
    %213 = sbr.rel (0) target = $region21
  $region20: #{discriminator_forward.14} parent=0 // pred_region
    _
  $region21: #{discriminator_forward.14} parent=0 // pred_fallthru
    _

// kernel: discriminator_forward.13
$region0: #{discriminator_forward.13}
  #allocation0 [shape = 'u32[]', space=smem, size = 0x4, offset = 0x4, fixed_abs, tag = 'smem constant byte address 0x4 - core index']
  #allocation1 [shape = 'u32[144,128]{1,0:T(1,128)}', space=vmem, size = 0x12000, scoped, tag = 'internal scratch']
  #allocation2 [shape = 'f32[32,512]{1,0:T(8,128)}', space=vmem, size = 0x10000, scoped, tag = 'scratch operand']
  %s0 = inlined_call_operand.vmem [shape: bf16[32,4096], index: 0, kind: input, shape index: {}]
  %s1 = inlined_call_operand.vmem [shape: bf16[4096,512], index: 1, kind: input, shape index: {}]
  %s2 = inlined_call_operand.vmem [shape: f32[32,512], index: 2, kind: output, shape index: {0}]
  %s3 = inlined_call_operand.vmem [shape: f32[8,512], index: 3, kind: output, shape index: {1}]
  %4 = xla_tuple %s2, %s3
  %s5 = sld [smem:[#allocation0]]
  $region80: #{discriminator_forward.13} parent=0
    _
  %s7 = ssub.s32 1, %s5
  %s8 = scalar_select 0, %s7, %s5
  $region1: #{discriminator_forward.13} parent=0
    #allocation3 [shape = 'u8[131072]{0}', space=vmem, size = 0x20000, scoped, tag = 'input window, operand 0']
    loop: start=0, step=1, limit=6
    $region2: #{discriminator_forward.13} parent=1 // loop_pre_header
      _
    $region3: #{discriminator_forward.13} parent=1 // loop_header
      %s10 = sphi 0, %s14
      %p11 = scmp.ge.s32.totalorder %s10, 6
      %s17 = sphi 0, %s29
      %s18 = sphi 0, %s25
      %s19 = sphi 0, %s17
      %s20 = sphi 0, %s18
      %s21 = sphi 0, %s19
      %s22 = sphi 0, %s20
      %s34 = sphi 0, %s36
      %s37 = sphi 0, %s34
      %s38 = sphi 0, %s37
      %s54 = sphi 0, %s38
      %s60 = sphi 0, %s62
      %s63 = sphi 0, %s60
      %s64 = sphi 0, %s63
      %s80 = sphi 0, %s64
      %s86 = sphi 0, %s88
      %s89 = sphi 0, %s86
      %s90 = sphi 0, %s89
      %s106 = sphi 0, %s90
      %s112 = sphi 0, %s114
      %s115 = sphi 0, %s112
      %s116 = sphi 0, %s115
      %s132 = sphi 0, %s116
    $region4: #{discriminator_forward.13} parent=1 // loop_header_branch
      %13 = sbr.rel (%p11) target = $region8
    $region5: #{discriminator_forward.13} parent=1 // loop_body
      %s15 = ssub.s32 %s10, 1
      %s16 = ssub.s32 %s10, 2
      %s23 = sadd.s32 1, %s18
      %p24 = scmp.ge.s32.totalorder %s23, 4
      %s25 = scalar_select %p24, 0, %s23
      %s26 = sadd.s32 1, %s17
      %s27 = scalar_select %p24, %s26, %s17
      %p28 = scmp.ge.s32.totalorder %s27, 1
      %s29 = scalar_select %p28, 0, %s27
      %s30 = ssub.s32 %s17, %s29
      %s31 = ssub.s32 %s18, %s25
      %s32 = sor.u32 %s30, %s31
      %p33 = scmp.eq.s32.totalorder %s32, 0
      %s35 = sadd.s32 %s34, 1
      %s36 = scalar_select %p33, %s34, %s35
      %p39 = pneg %p33
      %p40 = scmp.eq.s32.totalorder %s10, 3
      %p41 = por %p39, %p40
      %p42 = scmp.ne.s32.totalorder %s34, %s37
      %p43 = scmp.eq.s32.totalorder %s10, 0
      %p44 = por %p42, %p43
      %p45 = scmp.ne.s32.totalorder %s34, %s37
      %p46 = scmp.eq.s32.totalorder %s15, 3
      %p47 = por %p45, %p46
      %p48 = scmp.ne.s32.totalorder %s37, %s38
      %p49 = scmp.eq.s32.totalorder %s15, 0
      %p50 = por %p48, %p49
      %p51 = scmp.ne.s32.totalorder %s37, %s38
      %p52 = scmp.eq.s32.totalorder %s16, 3
      %p53 = por %p51, %p52
      %p55 = scmp.ne.s32.totalorder %s38, %s54
      %p56 = scmp.eq.s32.totalorder %s16, 0
      %p57 = por %p55, %p56
      %s58 = ssub.s32 %s18, %s25
      %p59 = scmp.eq.s32.totalorder %s58, 0
      %s61 = sadd.s32 %s60, 1
      %s62 = scalar_select %p59, %s60, %s61
      %p65 = pneg %p59
      %p66 = scmp.eq.s32.totalorder %s10, 3
      %p67 = por %p65, %p66
      %p68 = scmp.ne.s32.totalorder %s60, %s63
      %p69 = scmp.eq.s32.totalorder %s10, 0
      %p70 = por %p68, %p69
      %p71 = scmp.ne.s32.totalorder %s60, %s63
      %p72 = scmp.eq.s32.totalorder %s15, 3
      %p73 = por %p71, %p72
      %p74 = scmp.ne.s32.totalorder %s63, %s64
      %p75 = scmp.eq.s32.totalorder %s15, 0
      %p76 = por %p74, %p75
      %p77 = scmp.ne.s32.totalorder %s63, %s64
      %p78 = scmp.eq.s32.totalorder %s16, 3
      %p79 = por %p77, %p78
      %p81 = scmp.ne.s32.totalorder %s64, %s80
      %p82 = scmp.eq.s32.totalorder %s16, 0
      %p83 = por %p81, %p82
      %s84 = ssub.s32 %s17, %s29
      %p85 = scmp.eq.s32.totalorder %s84, 0
      %s87 = sadd.s32 %s86, 1
      %s88 = scalar_select %p85, %s86, %s87
      %p91 = pneg %p85
      %p92 = scmp.eq.s32.totalorder %s10, 3
      %p93 = por %p91, %p92
      %p94 = scmp.ne.s32.totalorder %s86, %s89
      %p95 = scmp.eq.s32.totalorder %s10, 0
      %p96 = por %p94, %p95
      %p97 = scmp.ne.s32.totalorder %s86, %s89
      %p98 = scmp.eq.s32.totalorder %s15, 3
      %p99 = por %p97, %p98
      %p100 = scmp.ne.s32.totalorder %s89, %s90
      %p101 = scmp.eq.s32.totalorder %s15, 0
      %p102 = por %p100, %p101
      %p103 = scmp.ne.s32.totalorder %s89, %s90
      %p104 = scmp.eq.s32.totalorder %s16, 3
      %p105 = por %p103, %p104
      %p107 = scmp.ne.s32.totalorder %s90, %s106
      %p108 = scmp.eq.s32.totalorder %s16, 0
      %p109 = por %p107, %p108
      %s110 = ssub.s32 %s17, %s29
      %p111 = scmp.eq.s32.totalorder %s110, 0
      %s113 = sadd.s32 %s112, 1
      %s114 = scalar_select %p111, %s112, %s113
      %p117 = pneg %p111
      %p118 = scmp.eq.s32.totalorder %s10, 3
      %p119 = por %p117, %p118
      %p120 = scmp.ne.s32.totalorder %s112, %s115
      %p121 = scmp.eq.s32.totalorder %s10, 0
      %p122 = por %p120, %p121
      %p123 = scmp.ne.s32.totalorder %s112, %s115
      %p124 = scmp.eq.s32.totalorder %s15, 3
      %p125 = por %p123, %p124
      %p126 = scmp.ne.s32.totalorder %s115, %s116
      %p127 = scmp.eq.s32.totalorder %s15, 0
      %p128 = por %p126, %p127
      %p129 = scmp.ne.s32.totalorder %s115, %s116
      %p130 = scmp.eq.s32.totalorder %s16, 3
      %p131 = por %p129, %p130
      %p133 = scmp.ne.s32.totalorder %s116, %s132
      %p134 = scmp.eq.s32.totalorder %s16, 0
      %p135 = por %p133, %p134
      %p136 = scmp.le.s32.totalorder 1, %s10
      %p137 = scmp.lt.s32.totalorder %s10, 5
      %p138 = pnand %p136, %p137
      %p139 = pneg %p138
      // Predicated region
      $region9: #{discriminator_forward.13} parent=5 // pred_check
        _
      $region10: #{discriminator_forward.13} parent=5 // pred_check_branch
        %141 = sbr.rel (%p138) target = $region12
      $region11: #{discriminator_forward.13} parent=5 // pred_region
        %s142 = ssub.s32 %s10, 1
      $region12: #{discriminator_forward.13} parent=5 // pred_fallthru
        _
      %p143 = scmp.lt.s32.totalorder %s10, 4
      // Predicated region
      $region13: #{discriminator_forward.13} parent=5 // pred_check
        %p144 = pneg %p143
      $region14: #{discriminator_forward.13} parent=5 // pred_check_branch
        %146 = sbr.rel (%p144) target = $region16
      $region15: #{discriminator_forward.13} parent=5 // pred_region
        // Predicated region
        $region17: #{discriminator_forward.13} parent=15 // pred_check
          %p147 = pneg %p44
        $region18: #{discriminator_forward.13} parent=15 // pred_check_branch
          %149 = sbr.rel (%p147) target = $region20
        $region19: #{discriminator_forward.13} parent=15 // pred_region
          %s150 = sand.u32 %s34, 1
          %s151 = sand.u32 %s34, 1
          %s152 = smul.addr %s151, 128
          %s153 = scalar_lea.vmem [#allocation3], %s152
          %s154 = smul.u32 4, %s17
          %s155 = smul.u32 8, %s18
          %s156 = smul.addr %s154, 32
          %s157 = sadd.s32 %s155, %s156
          %s158 = smul.addr %s157, 4
          %s159 = scalar_lea.vmem %s0, %s158
          // Predicated region
          $region21: #{discriminator_forward.13} parent=19 // pred_check
            _
          $region22: #{discriminator_forward.13} parent=19 // pred_check_branch
            %161 = sbr.rel (0) target = $region24
          $region23: #{discriminator_forward.13} parent=19 // pred_region
            // Predicated region
            $region25: #{discriminator_forward.13} parent=23 // pred_check
              _
            $region26: #{discriminator_forward.13} parent=23 // pred_check_branch
              %163 = sbr.rel (0) target = $region28
            $region27: #{discriminator_forward.13} parent=23 // pred_region
              loop: start=0, step=1, limit=1
              $region29: #{discriminator_forward.13} parent=27 // loop_pre_header
                _
              $region30: #{discriminator_forward.13} parent=27 // loop_header
                %s165 = sphi 0, %s169
                %p166 = scmp.ge.s32.totalorder %s165, 1
                %s170 = sphi %s159, %s159
                %s171 = sphi %s153, %s153
              $region31: #{discriminator_forward.13} parent=27 // loop_header_branch
                %168 = sbr.rel (%p166) target = $region35
              $region32: #{discriminator_forward.13} parent=27 // loop_body
                %v172 = vld [vmem:[%s170] sm:$0xff]
                %173 = vst [vmem:[%s171] sm:$0xff] %v172
                %v174 = vld [vmem:[%s170 + $0x8] sm:$0xff]
                %175 = vst [vmem:[%s171 + $0x8] sm:$0xff] %v174
                %v176 = vld [vmem:[%s170 + $0x10] sm:$0xff]
                %177 = vst [vmem:[%s171 + $0x10] sm:$0xff] %v176
                %v178 = vld [vmem:[%s170 + $0x18] sm:$0xff]
                %179 = vst [vmem:[%s171 + $0x18] sm:$0xff] %v178
                %v180 = vld [vmem:[%s170 + $0x80] sm:$0xff]
                %181 = vst [vmem:[%s171 + $0x20] sm:$0xff] %v180
                %v182 = vld [vmem:[%s170 + $0x88] sm:$0xff]
                %183 = vst [vmem:[%s171 + $0x28] sm:$0xff] %v182
                %v184 = vld [vmem:[%s170 + $0x90] sm:$0xff]
                %185 = vst [vmem:[%s171 + $0x30] sm:$0xff] %v184
                %v186 = vld [vmem:[%s170 + $0x98] sm:$0xff]
                %187 = vst [vmem:[%s171 + $0x38] sm:$0xff] %v186
                %v188 = vld [vmem:[%s170 + $0x100] sm:$0xff]
                %189 = vst [vmem:[%s171 + $0x40] sm:$0xff] %v188
                %v190 = vld [vmem:[%s170 + $0x108] sm:$0xff]
                %191 = vst [vmem:[%s171 + $0x48] sm:$0xff] %v190
                %v192 = vld [vmem:[%s170 + $0x110] sm:$0xff]
                %193 = vst [vmem:[%s171 + $0x50] sm:$0xff] %v192
                %v194 = vld [vmem:[%s170 + $0x118] sm:$0xff]
                %195 = vst [vmem:[%s171 + $0x58] sm:$0xff] %v194
                %v196 = vld [vmem:[%s170 + $0x180] sm:$0xff]
                %197 = vst [vmem:[%s171 + $0x60] sm:$0xff] %v196
                %v198 = vld [vmem:[%s170 + $0x188] sm:$0xff]
                %199 = vst [vmem:[%s171 + $0x68] sm:$0xff] %v198
                %v200 = vld [vmem:[%s170 + $0x190] sm:$0xff]
                %201 = vst [vmem:[%s171 + $0x70] sm:$0xff] %v200
                %v202 = vld [vmem:[%s170 + $0x198] sm:$0xff]
                %203 = vst [vmem:[%s171 + $0x78] sm:$0xff] %v202
              $region33: #{discriminator_forward.13} parent=27 // loop_footer
                %s169 = sadd.s32 1, %s165
              $region34: #{discriminator_forward.13} parent=27 // loop_footer_branch
                %164 = sbr.rel target = $region30
              $region35: #{discriminator_forward.13} parent=27 // loop_exit
                _
            $region28: #{discriminator_forward.13} parent=23 // pred_fallthru
              _
            // Predicated region
            $region36: #{discriminator_forward.13} parent=23 // pred_check
              _
            $region37: #{discriminator_forward.13} parent=23 // pred_check_branch
              %205 = sbr.rel target = $region39
            $region38: #{discriminator_forward.13} parent=23 // pred_region
              _
            $region39: #{discriminator_forward.13} parent=23 // pred_fallthru
              _
          $region24: #{discriminator_forward.13} parent=19 // pred_fallthru
            _
          %206 = vnop
        $region20: #{discriminator_forward.13} parent=15 // pred_fallthru
          _
        // Predicated region
        $region40: #{discriminator_forward.13} parent=15 // pred_check
          %p207 = pneg %p70
        $region41: #{discriminator_forward.13} parent=15 // pred_check_branch
          %209 = sbr.rel (%p207) target = $region43
        $region42: #{discriminator_forward.13} parent=15 // pred_region
          %s210 = smul.u32 128, %s18
          %p211 = scmp.lt.s32.totalorder %s210, 511
          %s212 = scalar_select %p211, %s210, 511
          %s213 = smul.addr %s212, 4
          %s214 = smul.addr %s213, 4
          %s215 = scalar_lea.vmem %s1, %s214
          %s216 = smul.u32 128, %s18
        $region43: #{discriminator_forward.13} parent=15 // pred_fallthru
          _
      $region16: #{discriminator_forward.13} parent=5 // pred_fallthru
        _
      %p217 = scmp.le.s32.totalorder 1, %s10
      %p218 = scmp.lt.s32.totalorder %s10, 5
      %p219 = pnand %p217, %p218
      %p220 = pneg %p219
      // Predicated region
      $region44: #{discriminator_forward.13} parent=5 // pred_check
        _
      $region45: #{discriminator_forward.13} parent=5 // pred_check_branch
        %222 = sbr.rel (%p219) target = $region47
      $region46: #{discriminator_forward.13} parent=5 // pred_region
        %s223 = ssub.s32 %s10, 1
        %s224 = sand.u32 %s37, 1
        %s225 = sand.u32 %s37, 1
        %s226 = smul.addr %s225, 128
        %s227 = scalar_lea.vmem [#allocation3], %s226
        // Predicated region
        $region48: #{discriminator_forward.13} parent=46 // pred_check
          %p228 = pneg %p50
        $region49: #{discriminator_forward.13} parent=46 // pred_check_branch
          %230 = sbr.rel (%p228) target = $region51
        $region50: #{discriminator_forward.13} parent=46 // pred_region
          _
        $region51: #{discriminator_forward.13} parent=46 // pred_fallthru
          _
        %s231 = sand.u32 %s37, 1
        %s232 = sand.u32 %s37, 1
        %s233 = smul.addr %s232, 128
        %s234 = scalar_lea.vmem [#allocation3], %s233
        %p235 = pneg %p50
        %p236 = pneg %p47
        %s237 = smul.u32 128, %s20
        %p238 = scmp.lt.s32.totalorder %s237, 511
        %s239 = scalar_select %p238, %s237, 511
        %s240 = smul.addr %s239, 4
        %s241 = smul.addr %s240, 4
        %s242 = scalar_lea.vmem %s1, %s241
        %p243 = pneg %p76
        %p244 = pneg %p73
        %p245 = pneg %p102
        %p246 = pneg %p99
        %s247 = smul.u32 4, %s19
        %p248 = scmp.lt.s32.totalorder %s247, 3
        %s249 = scalar_select %p248, %s247, 3
        %s250 = smul.addr %s249, 4
        %s251 = smul.addr %s250, 8
        %s252 = scalar_lea.vmem %s2, %s251
        %p253 = pneg %p128
        %p254 = pneg %p125
        %p255 = scmp.lt.s32.totalorder %s19, 0
        %s256 = scalar_select %p255, %s19, 0
        %s257 = smul.addr %s256, 4
        %s258 = smul.addr %s257, 8
        %s259 = scalar_lea.vmem %s3, %s258
        %s260 = smul.u32 4, %s19
        %s261 = smul.u32 8, %s20
        %s262 = smul.u32 128, %s20
        %p263 = scmp.lt.s32.totalorder %s262, 511
        %s264 = scalar_select %p263, %s262, 511
        %s265 = smul.addr %s264, 4
        %s266 = smul.addr %s265, 4
        %s267 = scalar_lea.vmem %s1, %s266
        %s268 = smul.u32 128, %s20
        %s269 = smul.u32 4, %s19
        %p270 = scmp.lt.s32.totalorder %s269, 3
        %s271 = scalar_select %p270, %s269, 3
        %s272 = smul.addr %s271, 4
        %s273 = smul.addr %s272, 8
        %s274 = scalar_lea.vmem %s2, %s273
        %s275 = smul.u32 4, %s19
        %p276 = scmp.lt.s32.totalorder %s19, 0
        %s277 = scalar_select %p276, %s19, 0
        %s278 = smul.addr %s277, 4
        %s279 = smul.addr %s278, 8
        %s280 = scalar_lea.vmem %s3, %s279
        %p281 = scmp.eq.s32.totalorder %s20, 0
        // Predicated region
        $region52: #{discriminator_forward.13} parent=46 // pred_check
          %p282 = pneg %p281
        $region53: #{discriminator_forward.13} parent=46 // pred_check_branch
          %284 = sbr.rel (%p282) target = $region55
        $region54: #{discriminator_forward.13} parent=46 // pred_region
          %285 = vst [vmem:[#allocation2] sm:$0xff] 0.0
          %286 = vst [vmem:[#allocation2 + $0x8] sm:$0xff] 0.0
          %287 = vst [vmem:[#allocation2 + $0x10] sm:$0xff] 0.0
          %288 = vst [vmem:[#allocation2 + $0x18] sm:$0xff] 0.0
          %289 = vst [vmem:[#allocation2 + $0x20] sm:$0xff] 0.0
          %290 = vst [vmem:[#allocation2 + $0x28] sm:$0xff] 0.0
          %291 = vst [vmem:[#allocation2 + $0x30] sm:$0xff] 0.0
          %292 = vst [vmem:[#allocation2 + $0x38] sm:$0xff] 0.0
          %293 = vst [vmem:[#allocation2 + $0x40] sm:$0xff] 0.0
          %294 = vst [vmem:[#allocation2 + $0x48] sm:$0xff] 0.0
          %295 = vst [vmem:[#allocation2 + $0x50] sm:$0xff] 0.0
          %296 = vst [vmem:[#allocation2 + $0x58] sm:$0xff] 0.0
          %297 = vst [vmem:[#allocation2 + $0x60] sm:$0xff] 0.0
          %298 = vst [vmem:[#allocation2 + $0x68] sm:$0xff] 0.0
          %299 = vst [vmem:[#allocation2 + $0x70] sm:$0xff] 0.0
          %300 = vst [vmem:[#allocation2 + $0x78] sm:$0xff] 0.0
        $region55: #{discriminator_forward.13} parent=46 // pred_fallthru
          _
        %v301 = vld [vmem:[#allocation2] sm:$0xff]
        %v302 = vld [vmem:[#allocation2 + $0x8] sm:$0xff]
        %v303 = vld [vmem:[#allocation2 + $0x10] sm:$0xff]
        %v304 = vld [vmem:[#allocation2 + $0x18] sm:$0xff]
        %v305 = vld [vmem:[#allocation2 + $0x20] sm:$0xff]
        %v306 = vld [vmem:[#allocation2 + $0x28] sm:$0xff]
        %v307 = vld [vmem:[#allocation2 + $0x30] sm:$0xff]
        %v308 = vld [vmem:[#allocation2 + $0x38] sm:$0xff]
        %v309 = vld [vmem:[#allocation2 + $0x40] sm:$0xff]
        %v310 = vld [vmem:[#allocation2 + $0x48] sm:$0xff]
        %v311 = vld [vmem:[#allocation2 + $0x50] sm:$0xff]
        %v312 = vld [vmem:[#allocation2 + $0x58] sm:$0xff]
        %v313 = vld [vmem:[#allocation2 + $0x60] sm:$0xff]
        %v314 = vld [vmem:[#allocation2 + $0x68] sm:$0xff]
        %v315 = vld [vmem:[#allocation2 + $0x70] sm:$0xff]
        %v316 = vld [vmem:[#allocation2 + $0x78] sm:$0xff]
        %v317 = vld [vmem:[%s227] sm:$0xff]
        %v318 = vld [vmem:[%s227 + $0x8] sm:$0xff]
        %v319 = vld [vmem:[%s227 + $0x10] sm:$0xff]
        %v320 = vld [vmem:[%s227 + $0x18] sm:$0xff]
        %v321 = vld [vmem:[%s227 + $0x20] sm:$0xff]
        %v322 = vld [vmem:[%s227 + $0x28] sm:$0xff]
        %v323 = vld [vmem:[%s227 + $0x30] sm:$0xff]
        %v324 = vld [vmem:[%s227 + $0x38] sm:$0xff]
        %v325 = vld [vmem:[%s227 + $0x40] sm:$0xff]
        %v326 = vld [vmem:[%s227 + $0x48] sm:$0xff]
        %v327 = vld [vmem:[%s227 + $0x50] sm:$0xff]
        %v328 = vld [vmem:[%s227 + $0x58] sm:$0xff]
        %v329 = vld [vmem:[%s227 + $0x60] sm:$0xff]
        %v330 = vld [vmem:[%s227 + $0x68] sm:$0xff]
        %v331 = vld [vmem:[%s227 + $0x70] sm:$0xff]
        %v332 = vld [vmem:[%s227 + $0x78] sm:$0xff]
        %v333 = vld [vmem:[%s267] sm:$0xff]
        %v334 = vld [vmem:[%s267 + $0x8] sm:$0xff]
        %v335 = vld [vmem:[%s267 + $0x10] sm:$0xff]
        %v336 = vld [vmem:[%s267 + $0x18] sm:$0xff]
        %v337 = vld [vmem:[%s267 + $0x20] sm:$0xff]
        %v338 = vld [vmem:[%s267 + $0x28] sm:$0xff]
        %v339 = vld [vmem:[%s267 + $0x30] sm:$0xff]
        %v340 = vld [vmem:[%s267 + $0x38] sm:$0xff]
        %v341 = vld [vmem:[%s267 + $0x40] sm:$0xff]
        %v342 = vld [vmem:[%s267 + $0x48] sm:$0xff]
        %v343 = vld [vmem:[%s267 + $0x50] sm:$0xff]
        %v344 = vld [vmem:[%s267 + $0x58] sm:$0xff]
        %v345 = vld [vmem:[%s267 + $0x60] sm:$0xff]
        %v346 = vld [vmem:[%s267 + $0x68] sm:$0xff]
        %v347 = vld [vmem:[%s267 + $0x70] sm:$0xff]
        %v348 = vld [vmem:[%s267 + $0x78] sm:$0xff]
        %v349 = vld [vmem:[%s267 + $0x80] sm:$0xff]
        %v350 = vld [vmem:[%s267 + $0x88] sm:$0xff]
        %v351 = vld [vmem:[%s267 + $0x90] sm:$0xff]
        %v352 = vld [vmem:[%s267 + $0x98] sm:$0xff]
        %v353 = vld [vmem:[%s267 + $0xa0] sm:$0xff]
        %v354 = vld [vmem:[%s267 + $0xa8] sm:$0xff]
        %v355 = vld [vmem:[%s267 + $0xb0] sm:$0xff]
        %v356 = vld [vmem:[%s267 + $0xb8] sm:$0xff]
        %v357 = vld [vmem:[%s267 + $0xc0] sm:$0xff]
        %v358 = vld [vmem:[%s267 + $0xc8] sm:$0xff]
        %v359 = vld [vmem:[%s267 + $0xd0] sm:$0xff]
        %v360 = vld [vmem:[%s267 + $0xd8] sm:$0xff]
        %v361 = vld [vmem:[%s267 + $0xe0] sm:$0xff]
        %v362 = vld [vmem:[%s267 + $0xe8] sm:$0xff]
        %v363 = vld [vmem:[%s267 + $0xf0] sm:$0xff]
        %v364 = vld [vmem:[%s267 + $0xf8] sm:$0xff]
        %v365 = vld [vmem:[%s267 + $0x100] sm:$0xff]
        %v366 = vld [vmem:[%s267 + $0x108] sm:$0xff]
        %v367 = vld [vmem:[%s267 + $0x110] sm:$0xff]
        %v368 = vld [vmem:[%s267 + $0x118] sm:$0xff]
        %v369 = vld [vmem:[%s267 + $0x120] sm:$0xff]
        %v370 = vld [vmem:[%s267 + $0x128] sm:$0xff]
        %v371 = vld [vmem:[%s267 + $0x130] sm:$0xff]
        %v372 = vld [vmem:[%s267 + $0x138] sm:$0xff]
        %v373 = vld [vmem:[%s267 + $0x140] sm:$0xff]
        %v374 = vld [vmem:[%s267 + $0x148] sm:$0xff]
        %v375 = vld [vmem:[%s267 + $0x150] sm:$0xff]
        %v376 = vld [vmem:[%s267 + $0x158] sm:$0xff]
        %v377 = vld [vmem:[%s267 + $0x160] sm:$0xff]
        %v378 = vld [vmem:[%s267 + $0x168] sm:$0xff]
        %v379 = vld [vmem:[%s267 + $0x170] sm:$0xff]
        %v380 = vld [vmem:[%s267 + $0x178] sm:$0xff]
        %v381 = vld [vmem:[%s267 + $0x180] sm:$0xff]
        %v382 = vld [vmem:[%s267 + $0x188] sm:$0xff]
        %v383 = vld [vmem:[%s267 + $0x190] sm:$0xff]
        %v384 = vld [vmem:[%s267 + $0x198] sm:$0xff]
        %v385 = vld [vmem:[%s267 + $0x1a0] sm:$0xff]
        %v386 = vld [vmem:[%s267 + $0x1a8] sm:$0xff]
        %v387 = vld [vmem:[%s267 + $0x1b0] sm:$0xff]
        %v388 = vld [vmem:[%s267 + $0x1b8] sm:$0xff]
        %v389 = vld [vmem:[%s267 + $0x1c0] sm:$0xff]
        %v390 = vld [vmem:[%s267 + $0x1c8] sm:$0xff]
        %v391 = vld [vmem:[%s267 + $0x1d0] sm:$0xff]
        %v392 = vld [vmem:[%s267 + $0x1d8] sm:$0xff]
        %v393 = vld [vmem:[%s267 + $0x1e0] sm:$0xff]
        %v394 = vld [vmem:[%s267 + $0x1e8] sm:$0xff]
        %v395 = vld [vmem:[%s267 + $0x1f0] sm:$0xff]
        %v396 = vld [vmem:[%s267 + $0x1f8] sm:$0xff]
        %v397 = vld [vmem:[%s267 + $0x200] sm:$0xff]
        %v398 = vld [vmem:[%s267 + $0x208] sm:$0xff]
        %v399 = vld [vmem:[%s267 + $0x210] sm:$0xff]
        %v400 = vld [vmem:[%s267 + $0x218] sm:$0xff]
        %v401 = vld [vmem:[%s267 + $0x220] sm:$0xff]
        %v402 = vld [vmem:[%s267 + $0x228] sm:$0xff]
        %v403 = vld [vmem:[%s267 + $0x230] sm:$0xff]
        %v404 = vld [vmem:[%s267 + $0x238] sm:$0xff]
        %v405 = vld [vmem:[%s267 + $0x240] sm:$0xff]
        %v406 = vld [vmem:[%s267 + $0x248] sm:$0xff]
        %v407 = vld [vmem:[%s267 + $0x250] sm:$0xff]
        %v408 = vld [vmem:[%s267 + $0x258] sm:$0xff]
        %v409 = vld [vmem:[%s267 + $0x260] sm:$0xff]
        %v410 = vld [vmem:[%s267 + $0x268] sm:$0xff]
        %v411 = vld [vmem:[%s267 + $0x270] sm:$0xff]
        %v412 = vld [vmem:[%s267 + $0x278] sm:$0xff]
        %v413 = vld [vmem:[%s267 + $0x280] sm:$0xff]
        %v414 = vld [vmem:[%s267 + $0x288] sm:$0xff]
        %v415 = vld [vmem:[%s267 + $0x290] sm:$0xff]
        %v416 = vld [vmem:[%s267 + $0x298] sm:$0xff]
        %v417 = vld [vmem:[%s267 + $0x2a0] sm:$0xff]
        %v418 = vld [vmem:[%s267 + $0x2a8] sm:$0xff]
        %v419 = vld [vmem:[%s267 + $0x2b0] sm:$0xff]
        %v420 = vld [vmem:[%s267 + $0x2b8] sm:$0xff]
        %v421 = vld [vmem:[%s267 + $0x2c0] sm:$0xff]
        %v422 = vld [vmem:[%s267 + $0x2c8] sm:$0xff]
        %v423 = vld [vmem:[%s267 + $0x2d0] sm:$0xff]
        %v424 = vld [vmem:[%s267 + $0x2d8] sm:$0xff]
        %v425 = vld [vmem:[%s267 + $0x2e0] sm:$0xff]
        %v426 = vld [vmem:[%s267 + $0x2e8] sm:$0xff]
        %v427 = vld [vmem:[%s267 + $0x2f0] sm:$0xff]
        %v428 = vld [vmem:[%s267 + $0x2f8] sm:$0xff]
        %v429 = vld [vmem:[%s267 + $0x300] sm:$0xff]
        %v430 = vld [vmem:[%s267 + $0x308] sm:$0xff]
        %v431 = vld [vmem:[%s267 + $0x310] sm:$0xff]
        %v432 = vld [vmem:[%s267 + $0x318] sm:$0xff]
        %v433 = vld [vmem:[%s267 + $0x320] sm:$0xff]
        %v434 = vld [vmem:[%s267 + $0x328] sm:$0xff]
        %v435 = vld [vmem:[%s267 + $0x330] sm:$0xff]
        %v436 = vld [vmem:[%s267 + $0x338] sm:$0xff]
        %v437 = vld [vmem:[%s267 + $0x340] sm:$0xff]
        %v438 = vld [vmem:[%s267 + $0x348] sm:$0xff]
        %v439 = vld [vmem:[%s267 + $0x350] sm:$0xff]
        %v440 = vld [vmem:[%s267 + $0x358] sm:$0xff]
        %v441 = vld [vmem:[%s267 + $0x360] sm:$0xff]
        %v442 = vld [vmem:[%s267 + $0x368] sm:$0xff]
        %v443 = vld [vmem:[%s267 + $0x370] sm:$0xff]
        %v444 = vld [vmem:[%s267 + $0x378] sm:$0xff]
        %v445 = vld [vmem:[%s267 + $0x380] sm:$0xff]
        %v446 = vld [vmem:[%s267 + $0x388] sm:$0xff]
        %v447 = vld [vmem:[%s267 + $0x390] sm:$0xff]
        %v448 = vld [vmem:[%s267 + $0x398] sm:$0xff]
        %v449 = vld [vmem:[%s267 + $0x3a0] sm:$0xff]
        %v450 = vld [vmem:[%s267 + $0x3a8] sm:$0xff]
        %v451 = vld [vmem:[%s267 + $0x3b0] sm:$0xff]
        %v452 = vld [vmem:[%s267 + $0x3b8] sm:$0xff]
        %v453 = vld [vmem:[%s267 + $0x3c0] sm:$0xff]
        %v454 = vld [vmem:[%s267 + $0x3c8] sm:$0xff]
        %v455 = vld [vmem:[%s267 + $0x3d0] sm:$0xff]
        %v456 = vld [vmem:[%s267 + $0x3d8] sm:$0xff]
        %v457 = vld [vmem:[%s267 + $0x3e0] sm:$0xff]
        %v458 = vld [vmem:[%s267 + $0x3e8] sm:$0xff]
        %v459 = vld [vmem:[%s267 + $0x3f0] sm:$0xff]
        %v460 = vld [vmem:[%s267 + $0x3f8] sm:$0xff]
        %v461 = vld [vmem:[%s267 + $0x400] sm:$0xff]
        %v462 = vld [vmem:[%s267 + $0x408] sm:$0xff]
        %v463 = vld [vmem:[%s267 + $0x410] sm:$0xff]
        %v464 = vld [vmem:[%s267 + $0x418] sm:$0xff]
        %v465 = vld [vmem:[%s267 + $0x420] sm:$0xff]
        %v466 = vld [vmem:[%s267 + $0x428] sm:$0xff]
        %v467 = vld [vmem:[%s267 + $0x430] sm:$0xff]
        %v468 = vld [vmem:[%s267 + $0x438] sm:$0xff]
        %v469 = vld [vmem:[%s267 + $0x440] sm:$0xff]
        %v470 = vld [vmem:[%s267 + $0x448] sm:$0xff]
        %v471 = vld [vmem:[%s267 + $0x450] sm:$0xff]
        %v472 = vld [vmem:[%s267 + $0x458] sm:$0xff]
        %v473 = vld [vmem:[%s267 + $0x460] sm:$0xff]
        %v474 = vld [vmem:[%s267 + $0x468] sm:$0xff]
        %v475 = vld [vmem:[%s267 + $0x470] sm:$0xff]
        %v476 = vld [vmem:[%s267 + $0x478] sm:$0xff]
        %v477 = vld [vmem:[%s267 + $0x480] sm:$0xff]
        %v478 = vld [vmem:[%s267 + $0x488] sm:$0xff]
        %v479 = vld [vmem:[%s267 + $0x490] sm:$0xff]
        %v480 = vld [vmem:[%s267 + $0x498] sm:$0xff]
        %v481 = vld [vmem:[%s267 + $0x4a0] sm:$0xff]
        %v482 = vld [vmem:[%s267 + $0x4a8] sm:$0xff]
        %v483 = vld [vmem:[%s267 + $0x4b0] sm:$0xff]
        %v484 = vld [vmem:[%s267 + $0x4b8] sm:$0xff]
        %v485 = vld [vmem:[%s267 + $0x4c0] sm:$0xff]
        %v486 = vld [vmem:[%s267 + $0x4c8] sm:$0xff]
        %v487 = vld [vmem:[%s267 + $0x4d0] sm:$0xff]
        %v488 = vld [vmem:[%s267 + $0x4d8] sm:$0xff]
        %v489 = vld [vmem:[%s267 + $0x4e0] sm:$0xff]
        %v490 = vld [vmem:[%s267 + $0x4e8] sm:$0xff]
        %v491 = vld [vmem:[%s267 + $0x4f0] sm:$0xff]
        %v492 = vld [vmem:[%s267 + $0x4f8] sm:$0xff]
        %v493 = vld [vmem:[%s267 + $0x500] sm:$0xff]
        %v494 = vld [vmem:[%s267 + $0x508] sm:$0xff]
        %v495 = vld [vmem:[%s267 + $0x510] sm:$0xff]
        %v496 = vld [vmem:[%s267 + $0x518] sm:$0xff]
        %v497 = vld [vmem:[%s267 + $0x520] sm:$0xff]
        %v498 = vld [vmem:[%s267 + $0x528] sm:$0xff]
        %v499 = vld [vmem:[%s267 + $0x530] sm:$0xff]
        %v500 = vld [vmem:[%s267 + $0x538] sm:$0xff]
        %v501 = vld [vmem:[%s267 + $0x540] sm:$0xff]
        %v502 = vld [vmem:[%s267 + $0x548] sm:$0xff]
        %v503 = vld [vmem:[%s267 + $0x550] sm:$0xff]
        %v504 = vld [vmem:[%s267 + $0x558] sm:$0xff]
        %v505 = vld [vmem:[%s267 + $0x560] sm:$0xff]
        %v506 = vld [vmem:[%s267 + $0x568] sm:$0xff]
        %v507 = vld [vmem:[%s267 + $0x570] sm:$0xff]
        %v508 = vld [vmem:[%s267 + $0x578] sm:$0xff]
        %v509 = vld [vmem:[%s267 + $0x580] sm:$0xff]
        %v510 = vld [vmem:[%s267 + $0x588] sm:$0xff]
        %v511 = vld [vmem:[%s267 + $0x590] sm:$0xff]
        %v512 = vld [vmem:[%s267 + $0x598] sm:$0xff]
        %v513 = vld [vmem:[%s267 + $0x5a0] sm:$0xff]
        %v514 = vld [vmem:[%s267 + $0x5a8] sm:$0xff]
        %v515 = vld [vmem:[%s267 + $0x5b0] sm:$0xff]
        %v516 = vld [vmem:[%s267 + $0x5b8] sm:$0xff]
        %v517 = vld [vmem:[%s267 + $0x5c0] sm:$0xff]
        %v518 = vld [vmem:[%s267 + $0x5c8] sm:$0xff]
        %v519 = vld [vmem:[%s267 + $0x5d0] sm:$0xff]
        %v520 = vld [vmem:[%s267 + $0x5d8] sm:$0xff]
        %v521 = vld [vmem:[%s267 + $0x5e0] sm:$0xff]
        %v522 = vld [vmem:[%s267 + $0x5e8] sm:$0xff]
        %v523 = vld [vmem:[%s267 + $0x5f0] sm:$0xff]
        %v524 = vld [vmem:[%s267 + $0x5f8] sm:$0xff]
        %v525 = vld [vmem:[%s267 + $0x600] sm:$0xff]
        %v526 = vld [vmem:[%s267 + $0x608] sm:$0xff]
        %v527 = vld [vmem:[%s267 + $0x610] sm:$0xff]
        %v528 = vld [vmem:[%s267 + $0x618] sm:$0xff]
        %v529 = vld [vmem:[%s267 + $0x620] sm:$0xff]
        %v530 = vld [vmem:[%s267 + $0x628] sm:$0xff]
        %v531 = vld [vmem:[%s267 + $0x630] sm:$0xff]
        %v532 = vld [vmem:[%s267 + $0x638] sm:$0xff]
        %v533 = vld [vmem:[%s267 + $0x640] sm:$0xff]
        %v534 = vld [vmem:[%s267 + $0x648] sm:$0xff]
        %v535 = vld [vmem:[%s267 + $0x650] sm:$0xff]
        %v536 = vld [vmem:[%s267 + $0x658] sm:$0xff]
        %v537 = vld [vmem:[%s267 + $0x660] sm:$0xff]
        %v538 = vld [vmem:[%s267 + $0x668] sm:$0xff]
        %v539 = vld [vmem:[%s267 + $0x670] sm:$0xff]
        %v540 = vld [vmem:[%s267 + $0x678] sm:$0xff]
        %v541 = vld [vmem:[%s267 + $0x680] sm:$0xff]
        %v542 = vld [vmem:[%s267 + $0x688] sm:$0xff]
        %v543 = vld [vmem:[%s267 + $0x690] sm:$0xff]
        %v544 = vld [vmem:[%s267 + $0x698] sm:$0xff]
        %v545 = vld [vmem:[%s267 + $0x6a0] sm:$0xff]
        %v546 = vld [vmem:[%s267 + $0x6a8] sm:$0xff]
        %v547 = vld [vmem:[%s267 + $0x6b0] sm:$0xff]
        %v548 = vld [vmem:[%s267 + $0x6b8] sm:$0xff]
        %v549 = vld [vmem:[%s267 + $0x6c0] sm:$0xff]
        %v550 = vld [vmem:[%s267 + $0x6c8] sm:$0xff]
        %v551 = vld [vmem:[%s267 + $0x6d0] sm:$0xff]
        %v552 = vld [vmem:[%s267 + $0x6d8] sm:$0xff]
        %v553 = vld [vmem:[%s267 + $0x6e0] sm:$0xff]
        %v554 = vld [vmem:[%s267 + $0x6e8] sm:$0xff]
        %v555 = vld [vmem:[%s267 + $0x6f0] sm:$0xff]
        %v556 = vld [vmem:[%s267 + $0x6f8] sm:$0xff]
        %v557 = vld [vmem:[%s267 + $0x700] sm:$0xff]
        %v558 = vld [vmem:[%s267 + $0x708] sm:$0xff]
        %v559 = vld [vmem:[%s267 + $0x710] sm:$0xff]
        %v560 = vld [vmem:[%s267 + $0x718] sm:$0xff]
        %v561 = vld [vmem:[%s267 + $0x720] sm:$0xff]
        %v562 = vld [vmem:[%s267 + $0x728] sm:$0xff]
        %v563 = vld [vmem:[%s267 + $0x730] sm:$0xff]
        %v564 = vld [vmem:[%s267 + $0x738] sm:$0xff]
        %v565 = vld [vmem:[%s267 + $0x740] sm:$0xff]
        %v566 = vld [vmem:[%s267 + $0x748] sm:$0xff]
        %v567 = vld [vmem:[%s267 + $0x750] sm:$0xff]
        %v568 = vld [vmem:[%s267 + $0x758] sm:$0xff]
        %v569 = vld [vmem:[%s267 + $0x760] sm:$0xff]
        %v570 = vld [vmem:[%s267 + $0x768] sm:$0xff]
        %v571 = vld [vmem:[%s267 + $0x770] sm:$0xff]
        %v572 = vld [vmem:[%s267 + $0x778] sm:$0xff]
        %v573 = vld [vmem:[%s267 + $0x780] sm:$0xff]
        %v574 = vld [vmem:[%s267 + $0x788] sm:$0xff]
        %v575 = vld [vmem:[%s267 + $0x790] sm:$0xff]
        %v576 = vld [vmem:[%s267 + $0x798] sm:$0xff]
        %v577 = vld [vmem:[%s267 + $0x7a0] sm:$0xff]
        %v578 = vld [vmem:[%s267 + $0x7a8] sm:$0xff]
        %v579 = vld [vmem:[%s267 + $0x7b0] sm:$0xff]
        %v580 = vld [vmem:[%s267 + $0x7b8] sm:$0xff]
        %v581 = vld [vmem:[%s267 + $0x7c0] sm:$0xff]
        %v582 = vld [vmem:[%s267 + $0x7c8] sm:$0xff]
        %v583 = vld [vmem:[%s267 + $0x7d0] sm:$0xff]
        %v584 = vld [vmem:[%s267 + $0x7d8] sm:$0xff]
        %v585 = vld [vmem:[%s267 + $0x7e0] sm:$0xff]
        %v586 = vld [vmem:[%s267 + $0x7e8] sm:$0xff]
        %v587 = vld [vmem:[%s267 + $0x7f0] sm:$0xff]
        %v588 = vld [vmem:[%s267 + $0x7f8] sm:$0xff]
        %v605 = vunpack.c.l.b16 %v317
        %v606 = vunpack.c.h.b16 %v317
        %v607 = vunpack.c.l.b16 %v318
        %v608 = vunpack.c.h.b16 %v318
        %v609 = vunpack.c.l.b16 %v319
        %v610 = vunpack.c.h.b16 %v319
        %v611 = vunpack.c.l.b16 %v320
        %v612 = vunpack.c.h.b16 %v320
        %v613 = vunpack.c.l.b16 %v321
        %v614 = vunpack.c.h.b16 %v321
        %v615 = vunpack.c.l.b16 %v322
        %v616 = vunpack.c.h.b16 %v322
        %v617 = vunpack.c.l.b16 %v323
        %v618 = vunpack.c.h.b16 %v323
        %v619 = vunpack.c.l.b16 %v324
        %v620 = vunpack.c.h.b16 %v324
        %v621 = vunpack.c.l.b16 %v325
        %v622 = vunpack.c.h.b16 %v325
        %v623 = vunpack.c.l.b16 %v326
        %v624 = vunpack.c.h.b16 %v326
        %v625 = vunpack.c.l.b16 %v327
        %v626 = vunpack.c.h.b16 %v327
        %v627 = vunpack.c.l.b16 %v328
        %v628 = vunpack.c.h.b16 %v328
        %v629 = vunpack.c.l.b16 %v329
        %v630 = vunpack.c.h.b16 %v329
        %v631 = vunpack.c.l.b16 %v330
        %v632 = vunpack.c.h.b16 %v330
        %v633 = vunpack.c.l.b16 %v331
        %v634 = vunpack.c.h.b16 %v331
        %v635 = vunpack.c.l.b16 %v332
        %v636 = vunpack.c.h.b16 %v332
        %v637 = vpack.c.b16 %v613, %v605
        %v638 = vpack.c.b16 %v614, %v606
        %v639 = vpack.c.b16 %v615, %v607
        %v640 = vpack.c.b16 %v616, %v608
        %v641 = vpack.c.b16 %v617, %v609
        %v642 = vpack.c.b16 %v618, %v610
        %v643 = vpack.c.b16 %v619, %v611
        %v644 = vpack.c.b16 %v620, %v612
        %v645 = vpack.c.b16 %v629, %v621
        %v646 = vpack.c.b16 %v630, %v622
        %v647 = vpack.c.b16 %v631, %v623
        %v648 = vpack.c.b16 %v632, %v624
        %v649 = vpack.c.b16 %v633, %v625
        %v650 = vpack.c.b16 %v634, %v626
        %v651 = vpack.c.b16 %v635, %v627
        %v652 = vpack.c.b16 %v636, %v628
        %v925 = vunpack.c.l.b16 %v333
        %v926 = vunpack.c.h.b16 %v333
        %v927 = vunpack.c.l.b16 %v334
        %v928 = vunpack.c.h.b16 %v334
        %v929 = vunpack.c.l.b16 %v335
        %v930 = vunpack.c.h.b16 %v335
        %v931 = vunpack.c.l.b16 %v336
        %v932 = vunpack.c.h.b16 %v336
        %v933 = vunpack.c.l.b16 %v337
        %v934 = vunpack.c.h.b16 %v337
        %v935 = vunpack.c.l.b16 %v338
        %v936 = vunpack.c.h.b16 %v338
        %v937 = vunpack.c.l.b16 %v339
        %v938 = vunpack.c.h.b16 %v339
        %v939 = vunpack.c.l.b16 %v340
        %v940 = vunpack.c.h.b16 %v340
        %v941 = vunpack.c.l.b16 %v341
        %v942 = vunpack.c.h.b16 %v341
        %v943 = vunpack.c.l.b16 %v342
        %v944 = vunpack.c.h.b16 %v342
        %v945 = vunpack.c.l.b16 %v343
        %v946 = vunpack.c.h.b16 %v343
        %v947 = vunpack.c.l.b16 %v344
        %v948 = vunpack.c.h.b16 %v344
        %v949 = vunpack.c.l.b16 %v345
        %v950 = vunpack.c.h.b16 %v345
        %v951 = vunpack.c.l.b16 %v346
        %v952 = vunpack.c.h.b16 %v346
        %v953 = vunpack.c.l.b16 %v347
        %v954 = vunpack.c.h.b16 %v347
        %v955 = vunpack.c.l.b16 %v348
        %v956 = vunpack.c.h.b16 %v348
        %v957 = vunpack.c.l.b16 %v349
        %v958 = vunpack.c.h.b16 %v349
        %v959 = vunpack.c.l.b16 %v350
        %v960 = vunpack.c.h.b16 %v350
        %v961 = vunpack.c.l.b16 %v351
        %v962 = vunpack.c.h.b16 %v351
        %v963 = vunpack.c.l.b16 %v352
        %v964 = vunpack.c.h.b16 %v352
        %v965 = vunpack.c.l.b16 %v353
        %v966 = vunpack.c.h.b16 %v353
        %v967 = vunpack.c.l.b16 %v354
        %v968 = vunpack.c.h.b16 %v354
        %v969 = vunpack.c.l.b16 %v355
        %v970 = vunpack.c.h.b16 %v355
        %v971 = vunpack.c.l.b16 %v356
        %v972 = vunpack.c.h.b16 %v356
        %v973 = vunpack.c.l.b16 %v357
        %v974 = vunpack.c.h.b16 %v357
        %v975 = vunpack.c.l.b16 %v358
        %v976 = vunpack.c.h.b16 %v358
        %v977 = vunpack.c.l.b16 %v359
        %v978 = vunpack.c.h.b16 %v359
        %v979 = vunpack.c.l.b16 %v360
        %v980 = vunpack.c.h.b16 %v360
        %v981 = vunpack.c.l.b16 %v361
        %v982 = vunpack.c.h.b16 %v361
        %v983 = vunpack.c.l.b16 %v362
        %v984 = vunpack.c.h.b16 %v362
        %v985 = vunpack.c.l.b16 %v363
        %v986 = vunpack.c.h.b16 %v363
        %v987 = vunpack.c.l.b16 %v364
        %v988 = vunpack.c.h.b16 %v364
        %v989 = vunpack.c.l.b16 %v365
        %v990 = vunpack.c.h.b16 %v365
        %v991 = vunpack.c.l.b16 %v366
        %v992 = vunpack.c.h.b16 %v366
        %v993 = vunpack.c.l.b16 %v367
        %v994 = vunpack.c.h.b16 %v367
        %v995 = vunpack.c.l.b16 %v368
        %v996 = vunpack.c.h.b16 %v368
        %v997 = vunpack.c.l.b16 %v369
        %v998 = vunpack.c.h.b16 %v369
        %v999 = vunpack.c.l.b16 %v370
        %v1000 = vunpack.c.h.b16 %v370
        %v1001 = vunpack.c.l.b16 %v371
        %v1002 = vunpack.c.h.b16 %v371
        %v1003 = vunpack.c.l.b16 %v372
        %v1004 = vunpack.c.h.b16 %v372
        %v1005 = vunpack.c.l.b16 %v373
        %v1006 = vunpack.c.h.b16 %v373
        %v1007 = vunpack.c.l.b16 %v374
        %v1008 = vunpack.c.h.b16 %v374
        %v1009 = vunpack.c.l.b16 %v375
        %v1010 = vunpack.c.h.b16 %v375
        %v1011 = vunpack.c.l.b16 %v376
        %v1012 = vunpack.c.h.b16 %v376
        %v1013 = vunpack.c.l.b16 %v377
        %v1014 = vunpack.c.h.b16 %v377
        %v1015 = vunpack.c.l.b16 %v378
        %v1016 = vunpack.c.h.b16 %v378
        %v1017 = vunpack.c.l.b16 %v379
        %v1018 = vunpack.c.h.b16 %v379
        %v1019 = vunpack.c.l.b16 %v380
        %v1020 = vunpack.c.h.b16 %v380
        %v1021 = vunpack.c.l.b16 %v381
        %v1022 = vunpack.c.h.b16 %v381
        %v1023 = vunpack.c.l.b16 %v382
        %v1024 = vunpack.c.h.b16 %v382
        %v1025 = vunpack.c.l.b16 %v383
        %v1026 = vunpack.c.h.b16 %v383
        %v1027 = vunpack.c.l.b16 %v384
        %v1028 = vunpack.c.h.b16 %v384
        %v1029 = vunpack.c.l.b16 %v385
        %v1030 = vunpack.c.h.b16 %v385
        %v1031 = vunpack.c.l.b16 %v386
        %v1032 = vunpack.c.h.b16 %v386
        %v1033 = vunpack.c.l.b16 %v387
        %v1034 = vunpack.c.h.b16 %v387
        %v1035 = vunpack.c.l.b16 %v388
        %v1036 = vunpack.c.h.b16 %v388
        %v1037 = vunpack.c.l.b16 %v389
        %v1038 = vunpack.c.h.b16 %v389
        %v1039 = vunpack.c.l.b16 %v390
        %v1040 = vunpack.c.h.b16 %v390
        %v1041 = vunpack.c.l.b16 %v391
        %v1042 = vunpack.c.h.b16 %v391
        %v1043 = vunpack.c.l.b16 %v392
        %v1044 = vunpack.c.h.b16 %v392
        %v1045 = vunpack.c.l.b16 %v393
        %v1046 = vunpack.c.h.b16 %v393
        %v1047 = vunpack.c.l.b16 %v394
        %v1048 = vunpack.c.h.b16 %v394
        %v1049 = vunpack.c.l.b16 %v395
        %v1050 = vunpack.c.h.b16 %v395
        %v1051 = vunpack.c.l.b16 %v396
        %v1052 = vunpack.c.h.b16 %v396
        %v1053 = vunpack.c.l.b16 %v397
        %v1054 = vunpack.c.h.b16 %v397
        %v1055 = vunpack.c.l.b16 %v398
        %v1056 = vunpack.c.h.b16 %v398
        %v1057 = vunpack.c.l.b16 %v399
        %v1058 = vunpack.c.h.b16 %v399
        %v1059 = vunpack.c.l.b16 %v400
        %v1060 = vunpack.c.h.b16 %v400
        %v1061 = vunpack.c.l.b16 %v401
        %v1062 = vunpack.c.h.b16 %v401
        %v1063 = vunpack.c.l.b16 %v402
        %v1064 = vunpack.c.h.b16 %v402
        %v1065 = vunpack.c.l.b16 %v403
        %v1066 = vunpack.c.h.b16 %v403
        %v1067 = vunpack.c.l.b16 %v404
        %v1068 = vunpack.c.h.b16 %v404
        %v1069 = vunpack.c.l.b16 %v405
        %v1070 = vunpack.c.h.b16 %v405
        %v1071 = vunpack.c.l.b16 %v406
        %v1072 = vunpack.c.h.b16 %v406
        %v1073 = vunpack.c.l.b16 %v407
        %v1074 = vunpack.c.h.b16 %v407
        %v1075 = vunpack.c.l.b16 %v408
        %v1076 = vunpack.c.h.b16 %v408
        %v1077 = vunpack.c.l.b16 %v409
        %v1078 = vunpack.c.h.b16 %v409
        %v1079 = vunpack.c.l.b16 %v410
        %v1080 = vunpack.c.h.b16 %v410
        %v1081 = vunpack.c.l.b16 %v411
        %v1082 = vunpack.c.h.b16 %v411
        %v1083 = vunpack.c.l.b16 %v412
        %v1084 = vunpack.c.h.b16 %v412
        %v1085 = vunpack.c.l.b16 %v413
        %v1086 = vunpack.c.h.b16 %v413
        %v1087 = vunpack.c.l.b16 %v414
        %v1088 = vunpack.c.h.b16 %v414
        %v1089 = vunpack.c.l.b16 %v415
        %v1090 = vunpack.c.h.b16 %v415
        %v1091 = vunpack.c.l.b16 %v416
        %v1092 = vunpack.c.h.b16 %v416
        %v1093 = vunpack.c.l.b16 %v417
        %v1094 = vunpack.c.h.b16 %v417
        %v1095 = vunpack.c.l.b16 %v418
        %v1096 = vunpack.c.h.b16 %v418
        %v1097 = vunpack.c.l.b16 %v419
        %v1098 = vunpack.c.h.b16 %v419
        %v1099 = vunpack.c.l.b16 %v420
        %v1100 = vunpack.c.h.b16 %v420
        %v1101 = vunpack.c.l.b16 %v421
        %v1102 = vunpack.c.h.b16 %v421
        %v1103 = vunpack.c.l.b16 %v422
        %v1104 = vunpack.c.h.b16 %v422
        %v1105 = vunpack.c.l.b16 %v423
        %v1106 = vunpack.c.h.b16 %v423
        %v1107 = vunpack.c.l.b16 %v424
        %v1108 = vunpack.c.h.b16 %v424
        %v1109 = vunpack.c.l.b16 %v425
        %v1110 = vunpack.c.h.b16 %v425
        %v1111 = vunpack.c.l.b16 %v426
        %v1112 = vunpack.c.h.b16 %v426
        %v1113 = vunpack.c.l.b16 %v427
        %v1114 = vunpack.c.h.b16 %v427
        %v1115 = vunpack.c.l.b16 %v428
        %v1116 = vunpack.c.h.b16 %v428
        %v1117 = vunpack.c.l.b16 %v429
        %v1118 = vunpack.c.h.b16 %v429
        %v1119 = vunpack.c.l.b16 %v430
        %v1120 = vunpack.c.h.b16 %v430
        %v1121 = vunpack.c.l.b16 %v431
        %v1122 = vunpack.c.h.b16 %v431
        %v1123 = vunpack.c.l.b16 %v432
        %v1124 = vunpack.c.h.b16 %v432
        %v1125 = vunpack.c.l.b16 %v433
        %v1126 = vunpack.c.h.b16 %v433
        %v1127 = vunpack.c.l.b16 %v434
        %v1128 = vunpack.c.h.b16 %v434
        %v1129 = vunpack.c.l.b16 %v435
        %v1130 = vunpack.c.h.b16 %v435
        %v1131 = vunpack.c.l.b16 %v436
        %v1132 = vunpack.c.h.b16 %v436
        %v1133 = vunpack.c.l.b16 %v437
        %v1134 = vunpack.c.h.b16 %v437
        %v1135 = vunpack.c.l.b16 %v438
        %v1136 = vunpack.c.h.b16 %v438
        %v1137 = vunpack.c.l.b16 %v439
        %v1138 = vunpack.c.h.b16 %v439
        %v1139 = vunpack.c.l.b16 %v440
        %v1140 = vunpack.c.h.b16 %v440
        %v1141 = vunpack.c.l.b16 %v441
        %v1142 = vunpack.c.h.b16 %v441
        %v1143 = vunpack.c.l.b16 %v442
        %v1144 = vunpack.c.h.b16 %v442
        %v1145 = vunpack.c.l.b16 %v443
        %v1146 = vunpack.c.h.b16 %v443
        %v1147 = vunpack.c.l.b16 %v444
        %v1148 = vunpack.c.h.b16 %v444
        %v1149 = vunpack.c.l.b16 %v445
        %v1150 = vunpack.c.h.b16 %v445
        %v1151 = vunpack.c.l.b16 %v446
        %v1152 = vunpack.c.h.b16 %v446
        %v1153 = vunpack.c.l.b16 %v447
        %v1154 = vunpack.c.h.b16 %v447
        %v1155 = vunpack.c.l.b16 %v448
        %v1156 = vunpack.c.h.b16 %v448
        %v1157 = vunpack.c.l.b16 %v449
        %v1158 = vunpack.c.h.b16 %v449
        %v1159 = vunpack.c.l.b16 %v450
        %v1160 = vunpack.c.h.b16 %v450
        %v1161 = vunpack.c.l.b16 %v451
        %v1162 = vunpack.c.h.b16 %v451
        %v1163 = vunpack.c.l.b16 %v452
        %v1164 = vunpack.c.h.b16 %v452
        %v1165 = vunpack.c.l.b16 %v453
        %v1166 = vunpack.c.h.b16 %v453
        %v1167 = vunpack.c.l.b16 %v454
        %v1168 = vunpack.c.h.b16 %v454
        %v1169 = vunpack.c.l.b16 %v455
        %v1170 = vunpack.c.h.b16 %v455
        %v1171 = vunpack.c.l.b16 %v456
        %v1172 = vunpack.c.h.b16 %v456
        %v1173 = vunpack.c.l.b16 %v457
        %v1174 = vunpack.c.h.b16 %v457
        %v1175 = vunpack.c.l.b16 %v458
        %v1176 = vunpack.c.h.b16 %v458
        %v1177 = vunpack.c.l.b16 %v459
        %v1178 = vunpack.c.h.b16 %v459
        %v1179 = vunpack.c.l.b16 %v460
        %v1180 = vunpack.c.h.b16 %v460
        %v1181 = vunpack.c.l.b16 %v461
        %v1182 = vunpack.c.h.b16 %v461
        %v1183 = vunpack.c.l.b16 %v462
        %v1184 = vunpack.c.h.b16 %v462
        %v1185 = vunpack.c.l.b16 %v463
        %v1186 = vunpack.c.h.b16 %v463
        %v1187 = vunpack.c.l.b16 %v464
        %v1188 = vunpack.c.h.b16 %v464
        %v1189 = vunpack.c.l.b16 %v465
        %v1190 = vunpack.c.h.b16 %v465
        %v1191 = vunpack.c.l.b16 %v466
        %v1192 = vunpack.c.h.b16 %v466
        %v1193 = vunpack.c.l.b16 %v467
        %v1194 = vunpack.c.h.b16 %v467
        %v1195 = vunpack.c.l.b16 %v468
        %v1196 = vunpack.c.h.b16 %v468
        %v1197 = vunpack.c.l.b16 %v469
        %v1198 = vunpack.c.h.b16 %v469
        %v1199 = vunpack.c.l.b16 %v470
        %v1200 = vunpack.c.h.b16 %v470
        %v1201 = vunpack.c.l.b16 %v471
        %v1202 = vunpack.c.h.b16 %v471
        %v1203 = vunpack.c.l.b16 %v472
        %v1204 = vunpack.c.h.b16 %v472
        %v1205 = vunpack.c.l.b16 %v473
        %v1206 = vunpack.c.h.b16 %v473
        %v1207 = vunpack.c.l.b16 %v474
        %v1208 = vunpack.c.h.b16 %v474
        %v1209 = vunpack.c.l.b16 %v475
        %v1210 = vunpack.c.h.b16 %v475
        %v1211 = vunpack.c.l.b16 %v476
        %v1212 = vunpack.c.h.b16 %v476
        %v1213 = vunpack.c.l.b16 %v477
        %v1214 = vunpack.c.h.b16 %v477
        %v1215 = vunpack.c.l.b16 %v478
        %v1216 = vunpack.c.h.b16 %v478
        %v1217 = vunpack.c.l.b16 %v479
        %v1218 = vunpack.c.h.b16 %v479
        %v1219 = vunpack.c.l.b16 %v480
        %v1220 = vunpack.c.h.b16 %v480
        %v1221 = vunpack.c.l.b16 %v481
        %v1222 = vunpack.c.h.b16 %v481
        %v1223 = vunpack.c.l.b16 %v482
        %v1224 = vunpack.c.h.b16 %v482
        %v1225 = vunpack.c.l.b16 %v483
        %v1226 = vunpack.c.h.b16 %v483
        %v1227 = vunpack.c.l.b16 %v484
        %v1228 = vunpack.c.h.b16 %v484
        %v1229 = vunpack.c.l.b16 %v485
        %v1230 = vunpack.c.h.b16 %v485
        %v1231 = vunpack.c.l.b16 %v486
        %v1232 = vunpack.c.h.b16 %v486
        %v1233 = vunpack.c.l.b16 %v487
        %v1234 = vunpack.c.h.b16 %v487
        %v1235 = vunpack.c.l.b16 %v488
        %v1236 = vunpack.c.h.b16 %v488
        %v1237 = vunpack.c.l.b16 %v489
        %v1238 = vunpack.c.h.b16 %v489
        %v1239 = vunpack.c.l.b16 %v490
        %v1240 = vunpack.c.h.b16 %v490
        %v1241 = vunpack.c.l.b16 %v491
        %v1242 = vunpack.c.h.b16 %v491
        %v1243 = vunpack.c.l.b16 %v492
        %v1244 = vunpack.c.h.b16 %v492
        %v1245 = vunpack.c.l.b16 %v493
        %v1246 = vunpack.c.h.b16 %v493
        %v1247 = vunpack.c.l.b16 %v494
        %v1248 = vunpack.c.h.b16 %v494
        %v1249 = vunpack.c.l.b16 %v495
        %v1250 = vunpack.c.h.b16 %v495
        %v1251 = vunpack.c.l.b16 %v496
        %v1252 = vunpack.c.h.b16 %v496
        %v1253 = vunpack.c.l.b16 %v497
        %v1254 = vunpack.c.h.b16 %v497
        %v1255 = vunpack.c.l.b16 %v498
        %v1256 = vunpack.c.h.b16 %v498
        %v1257 = vunpack.c.l.b16 %v499
        %v1258 = vunpack.c.h.b16 %v499
        %v1259 = vunpack.c.l.b16 %v500
        %v1260 = vunpack.c.h.b16 %v500
        %v1261 = vunpack.c.l.b16 %v501
        %v1262 = vunpack.c.h.b16 %v501
        %v1263 = vunpack.c.l.b16 %v502
        %v1264 = vunpack.c.h.b16 %v502
        %v1265 = vunpack.c.l.b16 %v503
        %v1266 = vunpack.c.h.b16 %v503
        %v1267 = vunpack.c.l.b16 %v504
        %v1268 = vunpack.c.h.b16 %v504
        %v1269 = vunpack.c.l.b16 %v505
        %v1270 = vunpack.c.h.b16 %v505
        %v1271 = vunpack.c.l.b16 %v506
        %v1272 = vunpack.c.h.b16 %v506
        %v1273 = vunpack.c.l.b16 %v507
        %v1274 = vunpack.c.h.b16 %v507
        %v1275 = vunpack.c.l.b16 %v508
        %v1276 = vunpack.c.h.b16 %v508
        %v1277 = vunpack.c.l.b16 %v509
        %v1278 = vunpack.c.h.b16 %v509
        %v1279 = vunpack.c.l.b16 %v510
        %v1280 = vunpack.c.h.b16 %v510
        %v1281 = vunpack.c.l.b16 %v511
        %v1282 = vunpack.c.h.b16 %v511
        %v1283 = vunpack.c.l.b16 %v512
        %v1284 = vunpack.c.h.b16 %v512
        %v1285 = vunpack.c.l.b16 %v513
        %v1286 = vunpack.c.h.b16 %v513
        %v1287 = vunpack.c.l.b16 %v514
        %v1288 = vunpack.c.h.b16 %v514
        %v1289 = vunpack.c.l.b16 %v515
        %v1290 = vunpack.c.h.b16 %v515
        %v1291 = vunpack.c.l.b16 %v516
        %v1292 = vunpack.c.h.b16 %v516
        %v1293 = vunpack.c.l.b16 %v517
        %v1294 = vunpack.c.h.b16 %v517
        %v1295 = vunpack.c.l.b16 %v518
        %v1296 = vunpack.c.h.b16 %v518
        %v1297 = vunpack.c.l.b16 %v519
        %v1298 = vunpack.c.h.b16 %v519
        %v1299 = vunpack.c.l.b16 %v520
        %v1300 = vunpack.c.h.b16 %v520
        %v1301 = vunpack.c.l.b16 %v521
        %v1302 = vunpack.c.h.b16 %v521
        %v1303 = vunpack.c.l.b16 %v522
        %v1304 = vunpack.c.h.b16 %v522
        %v1305 = vunpack.c.l.b16 %v523
        %v1306 = vunpack.c.h.b16 %v523
        %v1307 = vunpack.c.l.b16 %v524
        %v1308 = vunpack.c.h.b16 %v524
        %v1309 = vunpack.c.l.b16 %v525
        %v1310 = vunpack.c.h.b16 %v525
        %v1311 = vunpack.c.l.b16 %v526
        %v1312 = vunpack.c.h.b16 %v526
        %v1313 = vunpack.c.l.b16 %v527
        %v1314 = vunpack.c.h.b16 %v527
        %v1315 = vunpack.c.l.b16 %v528
        %v1316 = vunpack.c.h.b16 %v528
        %v1317 = vunpack.c.l.b16 %v529
        %v1318 = vunpack.c.h.b16 %v529
        %v1319 = vunpack.c.l.b16 %v530
        %v1320 = vunpack.c.h.b16 %v530
        %v1321 = vunpack.c.l.b16 %v531
        %v1322 = vunpack.c.h.b16 %v531
        %v1323 = vunpack.c.l.b16 %v532
        %v1324 = vunpack.c.h.b16 %v532
        %v1325 = vunpack.c.l.b16 %v533
        %v1326 = vunpack.c.h.b16 %v533
        %v1327 = vunpack.c.l.b16 %v534
        %v1328 = vunpack.c.h.b16 %v534
        %v1329 = vunpack.c.l.b16 %v535
        %v1330 = vunpack.c.h.b16 %v535
        %v1331 = vunpack.c.l.b16 %v536
        %v1332 = vunpack.c.h.b16 %v536
        %v1333 = vunpack.c.l.b16 %v537
        %v1334 = vunpack.c.h.b16 %v537
        %v1335 = vunpack.c.l.b16 %v538
        %v1336 = vunpack.c.h.b16 %v538
        %v1337 = vunpack.c.l.b16 %v539
        %v1338 = vunpack.c.h.b16 %v539
        %v1339 = vunpack.c.l.b16 %v540
        %v1340 = vunpack.c.h.b16 %v540
        %v1341 = vunpack.c.l.b16 %v541
        %v1342 = vunpack.c.h.b16 %v541
        %v1343 = vunpack.c.l.b16 %v542
        %v1344 = vunpack.c.h.b16 %v542
        %v1345 = vunpack.c.l.b16 %v543
        %v1346 = vunpack.c.h.b16 %v543
        %v1347 = vunpack.c.l.b16 %v544
        %v1348 = vunpack.c.h.b16 %v544
        %v1349 = vunpack.c.l.b16 %v545
        %v1350 = vunpack.c.h.b16 %v545
        %v1351 = vunpack.c.l.b16 %v546
        %v1352 = vunpack.c.h.b16 %v546
        %v1353 = vunpack.c.l.b16 %v547
        %v1354 = vunpack.c.h.b16 %v547
        %v1355 = vunpack.c.l.b16 %v548
        %v1356 = vunpack.c.h.b16 %v548
        %v1357 = vunpack.c.l.b16 %v549
        %v1358 = vunpack.c.h.b16 %v549
        %v1359 = vunpack.c.l.b16 %v550
        %v1360 = vunpack.c.h.b16 %v550
        %v1361 = vunpack.c.l.b16 %v551
        %v1362 = vunpack.c.h.b16 %v551
        %v1363 = vunpack.c.l.b16 %v552
        %v1364 = vunpack.c.h.b16 %v552
        %v1365 = vunpack.c.l.b16 %v553
        %v1366 = vunpack.c.h.b16 %v553
        %v1367 = vunpack.c.l.b16 %v554
        %v1368 = vunpack.c.h.b16 %v554
        %v1369 = vunpack.c.l.b16 %v555
        %v1370 = vunpack.c.h.b16 %v555
        %v1371 = vunpack.c.l.b16 %v556
        %v1372 = vunpack.c.h.b16 %v556
        %v1373 = vunpack.c.l.b16 %v557
        %v1374 = vunpack.c.h.b16 %v557
        %v1375 = vunpack.c.l.b16 %v558
        %v1376 = vunpack.c.h.b16 %v558
        %v1377 = vunpack.c.l.b16 %v559
        %v1378 = vunpack.c.h.b16 %v559
        %v1379 = vunpack.c.l.b16 %v560
        %v1380 = vunpack.c.h.b16 %v560
        %v1381 = vunpack.c.l.b16 %v561
        %v1382 = vunpack.c.h.b16 %v561
        %v1383 = vunpack.c.l.b16 %v562
        %v1384 = vunpack.c.h.b16 %v562
        %v1385 = vunpack.c.l.b16 %v563
        %v1386 = vunpack.c.h.b16 %v563
        %v1387 = vunpack.c.l.b16 %v564
        %v1388 = vunpack.c.h.b16 %v564
        %v1389 = vunpack.c.l.b16 %v565
        %v1390 = vunpack.c.h.b16 %v565
        %v1391 = vunpack.c.l.b16 %v566
        %v1392 = vunpack.c.h.b16 %v566
        %v1393 = vunpack.c.l.b16 %v567
        %v1394 = vunpack.c.h.b16 %v567
        %v1395 = vunpack.c.l.b16 %v568
        %v1396 = vunpack.c.h.b16 %v568
        %v1397 = vunpack.c.l.b16 %v569
        %v1398 = vunpack.c.h.b16 %v569
        %v1399 = vunpack.c.l.b16 %v570
        %v1400 = vunpack.c.h.b16 %v570
        %v1401 = vunpack.c.l.b16 %v571
        %v1402 = vunpack.c.h.b16 %v571
        %v1403 = vunpack.c.l.b16 %v572
        %v1404 = vunpack.c.h.b16 %v572
        %v1405 = vunpack.c.l.b16 %v573
        %v1406 = vunpack.c.h.b16 %v573
        %v1407 = vunpack.c.l.b16 %v574
        %v1408 = vunpack.c.h.b16 %v574
        %v1409 = vunpack.c.l.b16 %v575
        %v1410 = vunpack.c.h.b16 %v575
        %v1411 = vunpack.c.l.b16 %v576
        %v1412 = vunpack.c.h.b16 %v576
        %v1413 = vunpack.c.l.b16 %v577
        %v1414 = vunpack.c.h.b16 %v577
        %v1415 = vunpack.c.l.b16 %v578
        %v1416 = vunpack.c.h.b16 %v578
        %v1417 = vunpack.c.l.b16 %v579
        %v1418 = vunpack.c.h.b16 %v579
        %v1419 = vunpack.c.l.b16 %v580
        %v1420 = vunpack.c.h.b16 %v580
        %v1421 = vunpack.c.l.b16 %v581
        %v1422 = vunpack.c.h.b16 %v581
        %v1423 = vunpack.c.l.b16 %v582
        %v1424 = vunpack.c.h.b16 %v582
        %v1425 = vunpack.c.l.b16 %v583
        %v1426 = vunpack.c.h.b16 %v583
        %v1427 = vunpack.c.l.b16 %v584
        %v1428 = vunpack.c.h.b16 %v584
        %v1429 = vunpack.c.l.b16 %v585
        %v1430 = vunpack.c.h.b16 %v585
        %v1431 = vunpack.c.l.b16 %v586
        %v1432 = vunpack.c.h.b16 %v586
        %v1433 = vunpack.c.l.b16 %v587
        %v1434 = vunpack.c.h.b16 %v587
        %v1435 = vunpack.c.l.b16 %v588
        %v1436 = vunpack.c.h.b16 %v588
        %v1437 = vpack.c.b16 %v929, %v925
        %v1438 = vpack.c.b16 %v930, %v926
        %v1439 = vpack.c.b16 %v931, %v927
        %v1440 = vpack.c.b16 %v932, %v928
        %v1441 = vpack.c.b16 %v937, %v933
        %v1442 = vpack.c.b16 %v938, %v934
        %v1443 = vpack.c.b16 %v939, %v935
        %v1444 = vpack.c.b16 %v940, %v936
        %v1445 = vpack.c.b16 %v945, %v941
        %v1446 = vpack.c.b16 %v946, %v942
        %v1447 = vpack.c.b16 %v947, %v943
        %v1448 = vpack.c.b16 %v948, %v944
        %v1449 = vpack.c.b16 %v953, %v949
        %v1450 = vpack.c.b16 %v954, %v950
        %v1451 = vpack.c.b16 %v955, %v951
        %v1452 = vpack.c.b16 %v956, %v952
        %v1453 = vpack.c.b16 %v961, %v957
        %v1454 = vpack.c.b16 %v962, %v958
        %v1455 = vpack.c.b16 %v963, %v959
        %v1456 = vpack.c.b16 %v964, %v960
        %v1457 = vpack.c.b16 %v969, %v965
        %v1458 = vpack.c.b16 %v970, %v966
        %v1459 = vpack.c.b16 %v971, %v967
        %v1460 = vpack.c.b16 %v972, %v968
        %v1461 = vpack.c.b16 %v977, %v973
        %v1462 = vpack.c.b16 %v978, %v974
        %v1463 = vpack.c.b16 %v979, %v975
        %v1464 = vpack.c.b16 %v980, %v976
        %v1465 = vpack.c.b16 %v985, %v981
        %v1466 = vpack.c.b16 %v986, %v982
        %v1467 = vpack.c.b16 %v987, %v983
        %v1468 = vpack.c.b16 %v988, %v984
        %v1469 = vpack.c.b16 %v993, %v989
        %v1470 = vpack.c.b16 %v994, %v990
        %v1471 = vpack.c.b16 %v995, %v991
        %v1472 = vpack.c.b16 %v996, %v992
        %v1473 = vpack.c.b16 %v1001, %v997
        %v1474 = vpack.c.b16 %v1002, %v998
        %v1475 = vpack.c.b16 %v1003, %v999
        %v1476 = vpack.c.b16 %v1004, %v1000
        %v1477 = vpack.c.b16 %v1009, %v1005
        %v1478 = vpack.c.b16 %v1010, %v1006
        %v1479 = vpack.c.b16 %v1011, %v1007
        %v1480 = vpack.c.b16 %v1012, %v1008
        %v1481 = vpack.c.b16 %v1017, %v1013
        %v1482 = vpack.c.b16 %v1018, %v1014
        %v1483 = vpack.c.b16 %v1019, %v1015
        %v1484 = vpack.c.b16 %v1020, %v1016
        %v1485 = vpack.c.b16 %v1025, %v1021
        %v1486 = vpack.c.b16 %v1026, %v1022
        %v1487 = vpack.c.b16 %v1027, %v1023
        %v1488 = vpack.c.b16 %v1028, %v1024
        %v1489 = vpack.c.b16 %v1033, %v1029
        %v1490 = vpack.c.b16 %v1034, %v1030
        %v1491 = vpack.c.b16 %v1035, %v1031
        %v1492 = vpack.c.b16 %v1036, %v1032
        %v1493 = vpack.c.b16 %v1041, %v1037
        %v1494 = vpack.c.b16 %v1042, %v1038
        %v1495 = vpack.c.b16 %v1043, %v1039
        %v1496 = vpack.c.b16 %v1044, %v1040
        %v1497 = vpack.c.b16 %v1049, %v1045
        %v1498 = vpack.c.b16 %v1050, %v1046
        %v1499 = vpack.c.b16 %v1051, %v1047
        %v1500 = vpack.c.b16 %v1052, %v1048
        %v1501 = vpack.c.b16 %v1057, %v1053
        %v1502 = vpack.c.b16 %v1058, %v1054
        %v1503 = vpack.c.b16 %v1059, %v1055
        %v1504 = vpack.c.b16 %v1060, %v1056
        %v1505 = vpack.c.b16 %v1065, %v1061
        %v1506 = vpack.c.b16 %v1066, %v1062
        %v1507 = vpack.c.b16 %v1067, %v1063
        %v1508 = vpack.c.b16 %v1068, %v1064
        %v1509 = vpack.c.b16 %v1073, %v1069
        %v1510 = vpack.c.b16 %v1074, %v1070
        %v1511 = vpack.c.b16 %v1075, %v1071
        %v1512 = vpack.c.b16 %v1076, %v1072
        %v1513 = vpack.c.b16 %v1081, %v1077
        %v1514 = vpack.c.b16 %v1082, %v1078
        %v1515 = vpack.c.b16 %v1083, %v1079
        %v1516 = vpack.c.b16 %v1084, %v1080
        %v1517 = vpack.c.b16 %v1089, %v1085
        %v1518 = vpack.c.b16 %v1090, %v1086
        %v1519 = vpack.c.b16 %v1091, %v1087
        %v1520 = vpack.c.b16 %v1092, %v1088
        %v1521 = vpack.c.b16 %v1097, %v1093
        %v1522 = vpack.c.b16 %v1098, %v1094
        %v1523 = vpack.c.b16 %v1099, %v1095
        %v1524 = vpack.c.b16 %v1100, %v1096
        %v1525 = vpack.c.b16 %v1105, %v1101
        %v1526 = vpack.c.b16 %v1106, %v1102
        %v1527 = vpack.c.b16 %v1107, %v1103
        %v1528 = vpack.c.b16 %v1108, %v1104
        %v1529 = vpack.c.b16 %v1113, %v1109
        %v1530 = vpack.c.b16 %v1114, %v1110
        %v1531 = vpack.c.b16 %v1115, %v1111
        %v1532 = vpack.c.b16 %v1116, %v1112
        %v1533 = vpack.c.b16 %v1121, %v1117
        %v1534 = vpack.c.b16 %v1122, %v1118
        %v1535 = vpack.c.b16 %v1123, %v1119
        %v1536 = vpack.c.b16 %v1124, %v1120
        %v1537 = vpack.c.b16 %v1129, %v1125
        %v1538 = vpack.c.b16 %v1130, %v1126
        %v1539 = vpack.c.b16 %v1131, %v1127
        %v1540 = vpack.c.b16 %v1132, %v1128
        %v1541 = vpack.c.b16 %v1137, %v1133
        %v1542 = vpack.c.b16 %v1138, %v1134
        %v1543 = vpack.c.b16 %v1139, %v1135
        %v1544 = vpack.c.b16 %v1140, %v1136
        %v1545 = vpack.c.b16 %v1145, %v1141
        %v1546 = vpack.c.b16 %v1146, %v1142
        %v1547 = vpack.c.b16 %v1147, %v1143
        %v1548 = vpack.c.b16 %v1148, %v1144
        %v1549 = vpack.c.b16 %v1153, %v1149
        %v1550 = vpack.c.b16 %v1154, %v1150
        %v1551 = vpack.c.b16 %v1155, %v1151
        %v1552 = vpack.c.b16 %v1156, %v1152
        %v1553 = vpack.c.b16 %v1161, %v1157
        %v1554 = vpack.c.b16 %v1162, %v1158
        %v1555 = vpack.c.b16 %v1163, %v1159
        %v1556 = vpack.c.b16 %v1164, %v1160
        %v1557 = vpack.c.b16 %v1169, %v1165
        %v1558 = vpack.c.b16 %v1170, %v1166
        %v1559 = vpack.c.b16 %v1171, %v1167
        %v1560 = vpack.c.b16 %v1172, %v1168
        %v1561 = vpack.c.b16 %v1177, %v1173
        %v1562 = vpack.c.b16 %v1178, %v1174
        %v1563 = vpack.c.b16 %v1179, %v1175
        %v1564 = vpack.c.b16 %v1180, %v1176
        %v1565 = vpack.c.b16 %v1185, %v1181
        %v1566 = vpack.c.b16 %v1186, %v1182
        %v1567 = vpack.c.b16 %v1187, %v1183
        %v1568 = vpack.c.b16 %v1188, %v1184
        %v1569 = vpack.c.b16 %v1193, %v1189
        %v1570 = vpack.c.b16 %v1194, %v1190
        %v1571 = vpack.c.b16 %v1195, %v1191
        %v1572 = vpack.c.b16 %v1196, %v1192
        %v1573 = vpack.c.b16 %v1201, %v1197
        %v1574 = vpack.c.b16 %v1202, %v1198
        %v1575 = vpack.c.b16 %v1203, %v1199
        %v1576 = vpack.c.b16 %v1204, %v1200
        %v1577 = vpack.c.b16 %v1209, %v1205
        %v1578 = vpack.c.b16 %v1210, %v1206
        %v1579 = vpack.c.b16 %v1211, %v1207
        %v1580 = vpack.c.b16 %v1212, %v1208
        %v1581 = vpack.c.b16 %v1217, %v1213
        %v1582 = vpack.c.b16 %v1218, %v1214
        %v1583 = vpack.c.b16 %v1219, %v1215
        %v1584 = vpack.c.b16 %v1220, %v1216
        %v1585 = vpack.c.b16 %v1225, %v1221
        %v1586 = vpack.c.b16 %v1226, %v1222
        %v1587 = vpack.c.b16 %v1227, %v1223
        %v1588 = vpack.c.b16 %v1228, %v1224
        %v1589 = vpack.c.b16 %v1233, %v1229
        %v1590 = vpack.c.b16 %v1234, %v1230
        %v1591 = vpack.c.b16 %v1235, %v1231
        %v1592 = vpack.c.b16 %v1236, %v1232
        %v1593 = vpack.c.b16 %v1241, %v1237
        %v1594 = vpack.c.b16 %v1242, %v1238
        %v1595 = vpack.c.b16 %v1243, %v1239
        %v1596 = vpack.c.b16 %v1244, %v1240
        %v1597 = vpack.c.b16 %v1249, %v1245
        %v1598 = vpack.c.b16 %v1250, %v1246
        %v1599 = vpack.c.b16 %v1251, %v1247
        %v1600 = vpack.c.b16 %v1252, %v1248
        %v1601 = vpack.c.b16 %v1257, %v1253
        %v1602 = vpack.c.b16 %v1258, %v1254
        %v1603 = vpack.c.b16 %v1259, %v1255
        %v1604 = vpack.c.b16 %v1260, %v1256
        %v1605 = vpack.c.b16 %v1265, %v1261
        %v1606 = vpack.c.b16 %v1266, %v1262
        %v1607 = vpack.c.b16 %v1267, %v1263
        %v1608 = vpack.c.b16 %v1268, %v1264
        %v1609 = vpack.c.b16 %v1273, %v1269
        %v1610 = vpack.c.b16 %v1274, %v1270
        %v1611 = vpack.c.b16 %v1275, %v1271
        %v1612 = vpack.c.b16 %v1276, %v1272
        %v1613 = vpack.c.b16 %v1281, %v1277
        %v1614 = vpack.c.b16 %v1282, %v1278
        %v1615 = vpack.c.b16 %v1283, %v1279
        %v1616 = vpack.c.b16 %v1284, %v1280
        %v1617 = vpack.c.b16 %v1289, %v1285
        %v1618 = vpack.c.b16 %v1290, %v1286
        %v1619 = vpack.c.b16 %v1291, %v1287
        %v1620 = vpack.c.b16 %v1292, %v1288
        %v1621 = vpack.c.b16 %v1297, %v1293
        %v1622 = vpack.c.b16 %v1298, %v1294
        %v1623 = vpack.c.b16 %v1299, %v1295
        %v1624 = vpack.c.b16 %v1300, %v1296
        %v1625 = vpack.c.b16 %v1305, %v1301
        %v1626 = vpack.c.b16 %v1306, %v1302
        %v1627 = vpack.c.b16 %v1307, %v1303
        %v1628 = vpack.c.b16 %v1308, %v1304
        %v1629 = vpack.c.b16 %v1313, %v1309
        %v1630 = vpack.c.b16 %v1314, %v1310
        %v1631 = vpack.c.b16 %v1315, %v1311
        %v1632 = vpack.c.b16 %v1316, %v1312
        %v1633 = vpack.c.b16 %v1321, %v1317
        %v1634 = vpack.c.b16 %v1322, %v1318
        %v1635 = vpack.c.b16 %v1323, %v1319
        %v1636 = vpack.c.b16 %v1324, %v1320
        %v1637 = vpack.c.b16 %v1329, %v1325
        %v1638 = vpack.c.b16 %v1330, %v1326
        %v1639 = vpack.c.b16 %v1331, %v1327
        %v1640 = vpack.c.b16 %v1332, %v1328
        %v1641 = vpack.c.b16 %v1337, %v1333
        %v1642 = vpack.c.b16 %v1338, %v1334
        %v1643 = vpack.c.b16 %v1339, %v1335
        %v1644 = vpack.c.b16 %v1340, %v1336
        %v1645 = vpack.c.b16 %v1345, %v1341
        %v1646 = vpack.c.b16 %v1346, %v1342
        %v1647 = vpack.c.b16 %v1347, %v1343
        %v1648 = vpack.c.b16 %v1348, %v1344
        %v1649 = vpack.c.b16 %v1353, %v1349
        %v1650 = vpack.c.b16 %v1354, %v1350
        %v1651 = vpack.c.b16 %v1355, %v1351
        %v1652 = vpack.c.b16 %v1356, %v1352
        %v1653 = vpack.c.b16 %v1361, %v1357
        %v1654 = vpack.c.b16 %v1362, %v1358
        %v1655 = vpack.c.b16 %v1363, %v1359
        %v1656 = vpack.c.b16 %v1364, %v1360
        %v1657 = vpack.c.b16 %v1369, %v1365
        %v1658 = vpack.c.b16 %v1370, %v1366
        %v1659 = vpack.c.b16 %v1371, %v1367
        %v1660 = vpack.c.b16 %v1372, %v1368
        %v1661 = vpack.c.b16 %v1377, %v1373
        %v1662 = vpack.c.b16 %v1378, %v1374
        %v1663 = vpack.c.b16 %v1379, %v1375
        %v1664 = vpack.c.b16 %v1380, %v1376
        %v1665 = vpack.c.b16 %v1385, %v1381
        %v1666 = vpack.c.b16 %v1386, %v1382
        %v1667 = vpack.c.b16 %v1387, %v1383
        %v1668 = vpack.c.b16 %v1388, %v1384
        %v1669 = vpack.c.b16 %v1393, %v1389
        %v1670 = vpack.c.b16 %v1394, %v1390
        %v1671 = vpack.c.b16 %v1395, %v1391
        %v1672 = vpack.c.b16 %v1396, %v1392
        %v1673 = vpack.c.b16 %v1401, %v1397
        %v1674 = vpack.c.b16 %v1402, %v1398
        %v1675 = vpack.c.b16 %v1403, %v1399
        %v1676 = vpack.c.b16 %v1404, %v1400
        %v1677 = vpack.c.b16 %v1409, %v1405
        %v1678 = vpack.c.b16 %v1410, %v1406
        %v1679 = vpack.c.b16 %v1411, %v1407
        %v1680 = vpack.c.b16 %v1412, %v1408
        %v1681 = vpack.c.b16 %v1417, %v1413
        %v1682 = vpack.c.b16 %v1418, %v1414
        %v1683 = vpack.c.b16 %v1419, %v1415
        %v1684 = vpack.c.b16 %v1420, %v1416
        %v1685 = vpack.c.b16 %v1425, %v1421
        %v1686 = vpack.c.b16 %v1426, %v1422
        %v1687 = vpack.c.b16 %v1427, %v1423
        %v1688 = vpack.c.b16 %v1428, %v1424
        %v1689 = vpack.c.b16 %v1433, %v1429
        %v1690 = vpack.c.b16 %v1434, %v1430
        %v1691 = vpack.c.b16 %v1435, %v1431
        %v1692 = vpack.c.b16 %v1436, %v1432
        %1949 = vmatprep.subr.bf16.mxu0 %v1466
        %1950 = vmatpush1.bf16.msra.mxu0 %v1465
        %1951 = vmatprep.subr.bf16.mxu0 %v1462
        %1952 = vmatpush1.bf16.msra.mxu0 %v1461
        %1953 = vmatprep.subr.bf16.mxu0 %v1458
        %1954 = vmatpush1.bf16.msra.mxu0 %v1457
        %1955 = vmatprep.subr.bf16.mxu0 %v1454
        %1956 = vmatpush1.bf16.msra.mxu0 %v1453
        %1957 = vmatprep.subr.bf16.mxu0 %v1450
        %1958 = vmatpush1.bf16.msra.mxu0 %v1449
        %1959 = vmatprep.subr.bf16.mxu0 %v1446
        %1960 = vmatpush1.bf16.msra.mxu0 %v1445
        %1961 = vmatprep.subr.bf16.mxu0 %v1442
        %1962 = vmatpush1.bf16.msra.mxu0 %v1441
        %1963 = vmatprep.subr.bf16.mxu0 %v1438
        %1964 = vmatpush1.bf16.msra.mxu0 %v1437
        %1965 = vmatprep.subr.bf16.mxu0 %v1498
        %1966 = vmatpush2.bf16.msra.mxu0 %v1497
        %1967 = vmatprep.subr.bf16.mxu0 %v1494
        %1968 = vmatpush2.bf16.msra.mxu0 %v1493
        %1969 = vmatprep.subr.bf16.mxu0 %v1490
        %1970 = vmatpush2.bf16.msra.mxu0 %v1489
        %1971 = vmatprep.subr.bf16.mxu0 %v1486
        %1972 = vmatpush2.bf16.msra.mxu0 %v1485
        %1973 = vmatprep.subr.bf16.mxu0 %v1482
        %1974 = vmatpush2.bf16.msra.mxu0 %v1481
        %1975 = vmatprep.subr.bf16.mxu0 %v1478
        %1976 = vmatpush2.bf16.msra.mxu0 %v1477
        %1977 = vmatprep.subr.bf16.mxu0 %v1474
        %1978 = vmatpush2.bf16.msra.mxu0 %v1473
        %1979 = vmatprep.subr.bf16.mxu0 %v1470
        %1980 = vmatpush2.bf16.msra.mxu0 %v1469
        %1981 = vmatprep.mubr.bf16.mxu0 %v638
        %1982 = vmatmul.mubr.bf16.gmra.mxu0 %v637
        %v1983 = vpop.f32.mrf.mxu0
        %v1984 = vadd.f32 0.0, %v1983
        %v1985 = vpop.f32.mrf.mxu0
        %v1986 = vadd.f32 0.0, %v1985
        %v1987 = vpop.f32.mrf.mxu0
        %v1988 = vadd.f32 0.0, %v1987
        %v1989 = vpop.f32.mrf.mxu0
        %v1990 = vadd.f32 0.0, %v1989
        %1991 = vmatprep.mubr.bf16.mxu0 %v646
        %1992 = vmatmul.mubr.bf16.gmra.mxu0 %v645
        %v1993 = vpop.f32.mrf.mxu0
        %v1994 = vadd.f32 0.0, %v1993
        %v1995 = vpop.f32.mrf.mxu0
        %v1996 = vadd.f32 0.0, %v1995
        %v1997 = vpop.f32.mrf.mxu0
        %v1998 = vadd.f32 0.0, %v1997
        %v1999 = vpop.f32.mrf.mxu0
        %v2000 = vadd.f32 0.0, %v1999
        %2001 = vdwg.mxu0
        %2002 = vmatprep.subr.bf16.mxu0 %v1530
        %2003 = vmatpush1.bf16.msra.mxu0 %v1529
        %2004 = vmatprep.subr.bf16.mxu0 %v1526
        %2005 = vmatpush1.bf16.msra.mxu0 %v1525
        %2006 = vmatprep.subr.bf16.mxu0 %v1522
        %2007 = vmatpush1.bf16.msra.mxu0 %v1521
        %2008 = vmatprep.subr.bf16.mxu0 %v1518
        %2009 = vmatpush1.bf16.msra.mxu0 %v1517
        %2010 = vmatprep.subr.bf16.mxu0 %v1514
        %2011 = vmatpush1.bf16.msra.mxu0 %v1513
        %2012 = vmatprep.subr.bf16.mxu0 %v1510
        %2013 = vmatpush1.bf16.msra.mxu0 %v1509
        %2014 = vmatprep.subr.bf16.mxu0 %v1506
        %2015 = vmatpush1.bf16.msra.mxu0 %v1505
        %2016 = vmatprep.subr.bf16.mxu0 %v1502
        %2017 = vmatpush1.bf16.msra.mxu0 %v1501
        %2018 = vmatprep.subr.bf16.mxu0 %v1562
        %2019 = vmatpush2.bf16.msra.mxu0 %v1561
        %2020 = vmatprep.subr.bf16.mxu0 %v1558
        %2021 = vmatpush2.bf16.msra.mxu0 %v1557
        %2022 = vmatprep.subr.bf16.mxu0 %v1554
        %2023 = vmatpush2.bf16.msra.mxu0 %v1553
        %2024 = vmatprep.subr.bf16.mxu0 %v1550
        %2025 = vmatpush2.bf16.msra.mxu0 %v1549
        %2026 = vmatprep.subr.bf16.mxu0 %v1546
        %2027 = vmatpush2.bf16.msra.mxu0 %v1545
        %2028 = vmatprep.subr.bf16.mxu0 %v1542
        %2029 = vmatpush2.bf16.msra.mxu0 %v1541
        %2030 = vmatprep.subr.bf16.mxu0 %v1538
        %2031 = vmatpush2.bf16.msra.mxu0 %v1537
        %2032 = vmatprep.subr.bf16.mxu0 %v1534
        %2033 = vmatpush2.bf16.msra.mxu0 %v1533
        %2034 = vmatprep.mubr.bf16.mxu0 %v640
        %2035 = vmatmul.mubr.bf16.gmra.mxu0 %v639
        %v2036 = vpop.f32.mrf.mxu0
        %v2037 = vadd.f32 %v1984, %v2036
        %v2038 = vpop.f32.mrf.mxu0
        %v2039 = vadd.f32 %v1986, %v2038
        %v2040 = vpop.f32.mrf.mxu0
        %v2041 = vadd.f32 %v1988, %v2040
        %v2042 = vpop.f32.mrf.mxu0
        %v2043 = vadd.f32 %v1990, %v2042
        %2044 = vmatprep.mubr.bf16.mxu0 %v648
        %2045 = vmatmul.mubr.bf16.gmra.mxu0 %v647
        %v2046 = vpop.f32.mrf.mxu0
        %v2047 = vadd.f32 %v1994, %v2046
        %v2048 = vpop.f32.mrf.mxu0
        %v2049 = vadd.f32 %v1996, %v2048
        %v2050 = vpop.f32.mrf.mxu0
        %v2051 = vadd.f32 %v1998, %v2050
        %v2052 = vpop.f32.mrf.mxu0
        %v2053 = vadd.f32 %v2000, %v2052
        %2054 = vdwg.mxu0
        %2055 = vmatprep.subr.bf16.mxu0 %v1594
        %2056 = vmatpush1.bf16.msra.mxu0 %v1593
        %2057 = vmatprep.subr.bf16.mxu0 %v1590
        %2058 = vmatpush1.bf16.msra.mxu0 %v1589
        %2059 = vmatprep.subr.bf16.mxu0 %v1586
        %2060 = vmatpush1.bf16.msra.mxu0 %v1585
        %2061 = vmatprep.subr.bf16.mxu0 %v1582
        %2062 = vmatpush1.bf16.msra.mxu0 %v1581
        %2063 = vmatprep.subr.bf16.mxu0 %v1578
        %2064 = vmatpush1.bf16.msra.mxu0 %v1577
        %2065 = vmatprep.subr.bf16.mxu0 %v1574
        %2066 = vmatpush1.bf16.msra.mxu0 %v1573
        %2067 = vmatprep.subr.bf16.mxu0 %v1570
        %2068 = vmatpush1.bf16.msra.mxu0 %v1569
        %2069 = vmatprep.subr.bf16.mxu0 %v1566
        %2070 = vmatpush1.bf16.msra.mxu0 %v1565
        %2071 = vmatprep.subr.bf16.mxu0 %v1626
        %2072 = vmatpush2.bf16.msra.mxu0 %v1625
        %2073 = vmatprep.subr.bf16.mxu0 %v1622
        %2074 = vmatpush2.bf16.msra.mxu0 %v1621
        %2075 = vmatprep.subr.bf16.mxu0 %v1618
        %2076 = vmatpush2.bf16.msra.mxu0 %v1617
        %2077 = vmatprep.subr.bf16.mxu0 %v1614
        %2078 = vmatpush2.bf16.msra.mxu0 %v1613
        %2079 = vmatprep.subr.bf16.mxu0 %v1610
        %2080 = vmatpush2.bf16.msra.mxu0 %v1609
        %2081 = vmatprep.subr.bf16.mxu0 %v1606
        %2082 = vmatpush2.bf16.msra.mxu0 %v1605
        %2083 = vmatprep.subr.bf16.mxu0 %v1602
        %2084 = vmatpush2.bf16.msra.mxu0 %v1601
        %2085 = vmatprep.subr.bf16.mxu0 %v1598
        %2086 = vmatpush2.bf16.msra.mxu0 %v1597
        %2087 = vmatprep.mubr.bf16.mxu0 %v642
        %2088 = vmatmul.mubr.bf16.gmra.mxu0 %v641
        %v2089 = vpop.f32.mrf.mxu0
        %v2090 = vadd.f32 %v2037, %v2089
        %v2091 = vpop.f32.mrf.mxu0
        %v2092 = vadd.f32 %v2039, %v2091
        %v2093 = vpop.f32.mrf.mxu0
        %v2094 = vadd.f32 %v2041, %v2093
        %v2095 = vpop.f32.mrf.mxu0
        %v2096 = vadd.f32 %v2043, %v2095
        %2097 = vmatprep.mubr.bf16.mxu0 %v650
        %2098 = vmatmul.mubr.bf16.gmra.mxu0 %v649
        %v2099 = vpop.f32.mrf.mxu0
        %v2100 = vadd.f32 %v2047, %v2099
        %v2101 = vpop.f32.mrf.mxu0
        %v2102 = vadd.f32 %v2049, %v2101
        %v2103 = vpop.f32.mrf.mxu0
        %v2104 = vadd.f32 %v2051, %v2103
        %v2105 = vpop.f32.mrf.mxu0
        %v2106 = vadd.f32 %v2053, %v2105
        %2107 = vdwg.mxu0
        %2108 = vmatprep.subr.bf16.mxu0 %v1658
        %2109 = vmatpush1.bf16.msra.mxu0 %v1657
        %2110 = vmatprep.subr.bf16.mxu0 %v1654
        %2111 = vmatpush1.bf16.msra.mxu0 %v1653
        %2112 = vmatprep.subr.bf16.mxu0 %v1650
        %2113 = vmatpush1.bf16.msra.mxu0 %v1649
        %2114 = vmatprep.subr.bf16.mxu0 %v1646
        %2115 = vmatpush1.bf16.msra.mxu0 %v1645
        %2116 = vmatprep.subr.bf16.mxu0 %v1642
        %2117 = vmatpush1.bf16.msra.mxu0 %v1641
        %2118 = vmatprep.subr.bf16.mxu0 %v1638
        %2119 = vmatpush1.bf16.msra.mxu0 %v1637
        %2120 = vmatprep.subr.bf16.mxu0 %v1634
        %2121 = vmatpush1.bf16.msra.mxu0 %v1633
        %2122 = vmatprep.subr.bf16.mxu0 %v1630
        %2123 = vmatpush1.bf16.msra.mxu0 %v1629
        %2124 = vmatprep.subr.bf16.mxu0 %v1690
        %2125 = vmatpush2.bf16.msra.mxu0 %v1689
        %2126 = vmatprep.subr.bf16.mxu0 %v1686
        %2127 = vmatpush2.bf16.msra.mxu0 %v1685
        %2128 = vmatprep.subr.bf16.mxu0 %v1682
        %2129 = vmatpush2.bf16.msra.mxu0 %v1681
        %2130 = vmatprep.subr.bf16.mxu0 %v1678
        %2131 = vmatpush2.bf16.msra.mxu0 %v1677
        %2132 = vmatprep.subr.bf16.mxu0 %v1674
        %2133 = vmatpush2.bf16.msra.mxu0 %v1673
        %2134 = vmatprep.subr.bf16.mxu0 %v1670
        %2135 = vmatpush2.bf16.msra.mxu0 %v1669
        %2136 = vmatprep.subr.bf16.mxu0 %v1666
        %2137 = vmatpush2.bf16.msra.mxu0 %v1665
        %2138 = vmatprep.subr.bf16.mxu0 %v1662
        %2139 = vmatpush2.bf16.msra.mxu0 %v1661
        %2140 = vmatprep.mubr.bf16.mxu0 %v644
        %2141 = vmatmul.mubr.bf16.gmra.mxu0 %v643
        %v2142 = vpop.f32.mrf.mxu0
        %v2143 = vadd.f32 %v2090, %v2142
        %v2144 = vpop.f32.mrf.mxu0
        %v2145 = vadd.f32 %v2092, %v2144
        %v2146 = vpop.f32.mrf.mxu0
        %v2147 = vadd.f32 %v2094, %v2146
        %v2148 = vpop.f32.mrf.mxu0
        %v2149 = vadd.f32 %v2096, %v2148
        %2150 = vmatprep.mubr.bf16.mxu0 %v652
        %2151 = vmatmul.mubr.bf16.gmra.mxu0 %v651
        %v2152 = vpop.f32.mrf.mxu0
        %v2153 = vadd.f32 %v2100, %v2152
        %v2154 = vpop.f32.mrf.mxu0
        %v2155 = vadd.f32 %v2102, %v2154
        %v2156 = vpop.f32.mrf.mxu0
        %v2157 = vadd.f32 %v2104, %v2156
        %v2158 = vpop.f32.mrf.mxu0
        %v2159 = vadd.f32 %v2106, %v2158
        %2160 = vdwg.mxu0
        %2161 = vmatprep.subr.bf16.mxu0 %v1468
        %2162 = vmatpush1.bf16.msra.mxu0 %v1467
        %2163 = vmatprep.subr.bf16.mxu0 %v1464
        %2164 = vmatpush1.bf16.msra.mxu0 %v1463
        %2165 = vmatprep.subr.bf16.mxu0 %v1460
        %2166 = vmatpush1.bf16.msra.mxu0 %v1459
        %2167 = vmatprep.subr.bf16.mxu0 %v1456
        %2168 = vmatpush1.bf16.msra.mxu0 %v1455
        %2169 = vmatprep.subr.bf16.mxu0 %v1452
        %2170 = vmatpush1.bf16.msra.mxu0 %v1451
        %2171 = vmatprep.subr.bf16.mxu0 %v1448
        %2172 = vmatpush1.bf16.msra.mxu0 %v1447
        %2173 = vmatprep.subr.bf16.mxu0 %v1444
        %2174 = vmatpush1.bf16.msra.mxu0 %v1443
        %2175 = vmatprep.subr.bf16.mxu0 %v1440
        %2176 = vmatpush1.bf16.msra.mxu0 %v1439
        %2177 = vmatprep.subr.bf16.mxu0 %v1500
        %2178 = vmatpush2.bf16.msra.mxu0 %v1499
        %2179 = vmatprep.subr.bf16.mxu0 %v1496
        %2180 = vmatpush2.bf16.msra.mxu0 %v1495
        %2181 = vmatprep.subr.bf16.mxu0 %v1492
        %2182 = vmatpush2.bf16.msra.mxu0 %v1491
        %2183 = vmatprep.subr.bf16.mxu0 %v1488
        %2184 = vmatpush2.bf16.msra.mxu0 %v1487
        %2185 = vmatprep.subr.bf16.mxu0 %v1484
        %2186 = vmatpush2.bf16.msra.mxu0 %v1483
        %2187 = vmatprep.subr.bf16.mxu0 %v1480
        %2188 = vmatpush2.bf16.msra.mxu0 %v1479
        %2189 = vmatprep.subr.bf16.mxu0 %v1476
        %2190 = vmatpush2.bf16.msra.mxu0 %v1475
        %2191 = vmatprep.subr.bf16.mxu0 %v1472
        %2192 = vmatpush2.bf16.msra.mxu0 %v1471
        %2193 = vmatprep.mubr.bf16.mxu0 %v638
        %2194 = vmatmul.mubr.bf16.gmra.mxu0 %v637
        %v2195 = vpop.f32.mrf.mxu0
        %v2196 = vadd.f32 0.0, %v2195
        %v2197 = vpop.f32.mrf.mxu0
        %v2198 = vadd.f32 0.0, %v2197
        %v2199 = vpop.f32.mrf.mxu0
        %v2200 = vadd.f32 0.0, %v2199
        %v2201 = vpop.f32.mrf.mxu0
        %v2202 = vadd.f32 0.0, %v2201
        %2203 = vmatprep.mubr.bf16.mxu0 %v646
        %2204 = vmatmul.mubr.bf16.gmra.mxu0 %v645
        %v2205 = vpop.f32.mrf.mxu0
        %v2206 = vadd.f32 0.0, %v2205
        %v2207 = vpop.f32.mrf.mxu0
        %v2208 = vadd.f32 0.0, %v2207
        %v2209 = vpop.f32.mrf.mxu0
        %v2210 = vadd.f32 0.0, %v2209
        %v2211 = vpop.f32.mrf.mxu0
        %v2212 = vadd.f32 0.0, %v2211
        %2213 = vdwg.mxu0
        %2214 = vmatprep.subr.bf16.mxu0 %v1532
        %2215 = vmatpush1.bf16.msra.mxu0 %v1531
        %2216 = vmatprep.subr.bf16.mxu0 %v1528
        %2217 = vmatpush1.bf16.msra.mxu0 %v1527
        %2218 = vmatprep.subr.bf16.mxu0 %v1524
        %2219 = vmatpush1.bf16.msra.mxu0 %v1523
        %2220 = vmatprep.subr.bf16.mxu0 %v1520
        %2221 = vmatpush1.bf16.msra.mxu0 %v1519
        %2222 = vmatprep.subr.bf16.mxu0 %v1516
        %2223 = vmatpush1.bf16.msra.mxu0 %v1515
        %2224 = vmatprep.subr.bf16.mxu0 %v1512
        %2225 = vmatpush1.bf16.msra.mxu0 %v1511
        %2226 = vmatprep.subr.bf16.mxu0 %v1508
        %2227 = vmatpush1.bf16.msra.mxu0 %v1507
        %2228 = vmatprep.subr.bf16.mxu0 %v1504
        %2229 = vmatpush1.bf16.msra.mxu0 %v1503
        %2230 = vmatprep.subr.bf16.mxu0 %v1564
        %2231 = vmatpush2.bf16.msra.mxu0 %v1563
        %2232 = vmatprep.subr.bf16.mxu0 %v1560
        %2233 = vmatpush2.bf16.msra.mxu0 %v1559
        %2234 = vmatprep.subr.bf16.mxu0 %v1556
        %2235 = vmatpush2.bf16.msra.mxu0 %v1555
        %2236 = vmatprep.subr.bf16.mxu0 %v1552
        %2237 = vmatpush2.bf16.msra.mxu0 %v1551
        %2238 = vmatprep.subr.bf16.mxu0 %v1548
        %2239 = vmatpush2.bf16.msra.mxu0 %v1547
        %2240 = vmatprep.subr.bf16.mxu0 %v1544
        %2241 = vmatpush2.bf16.msra.mxu0 %v1543
        %2242 = vmatprep.subr.bf16.mxu0 %v1540
        %2243 = vmatpush2.bf16.msra.mxu0 %v1539
        %2244 = vmatprep.subr.bf16.mxu0 %v1536
        %2245 = vmatpush2.bf16.msra.mxu0 %v1535
        %2246 = vmatprep.mubr.bf16.mxu0 %v640
        %2247 = vmatmul.mubr.bf16.gmra.mxu0 %v639
        %v2248 = vpop.f32.mrf.mxu0
        %v2249 = vadd.f32 %v2196, %v2248
        %v2250 = vpop.f32.mrf.mxu0
        %v2251 = vadd.f32 %v2198, %v2250
        %v2252 = vpop.f32.mrf.mxu0
        %v2253 = vadd.f32 %v2200, %v2252
        %v2254 = vpop.f32.mrf.mxu0
        %v2255 = vadd.f32 %v2202, %v2254
        %2256 = vmatprep.mubr.bf16.mxu0 %v648
        %2257 = vmatmul.mubr.bf16.gmra.mxu0 %v647
        %v2258 = vpop.f32.mrf.mxu0
        %v2259 = vadd.f32 %v2206, %v2258
        %v2260 = vpop.f32.mrf.mxu0
        %v2261 = vadd.f32 %v2208, %v2260
        %v2262 = vpop.f32.mrf.mxu0
        %v2263 = vadd.f32 %v2210, %v2262
        %v2264 = vpop.f32.mrf.mxu0
        %v2265 = vadd.f32 %v2212, %v2264
        %2266 = vdwg.mxu0
        %2267 = vmatprep.subr.bf16.mxu0 %v1596
        %2268 = vmatpush1.bf16.msra.mxu0 %v1595
        %2269 = vmatprep.subr.bf16.mxu0 %v1592
        %2270 = vmatpush1.bf16.msra.mxu0 %v1591
        %2271 = vmatprep.subr.bf16.mxu0 %v1588
        %2272 = vmatpush1.bf16.msra.mxu0 %v1587
        %2273 = vmatprep.subr.bf16.mxu0 %v1584
        %2274 = vmatpush1.bf16.msra.mxu0 %v1583
        %2275 = vmatprep.subr.bf16.mxu0 %v1580
        %2276 = vmatpush1.bf16.msra.mxu0 %v1579
        %2277 = vmatprep.subr.bf16.mxu0 %v1576
        %2278 = vmatpush1.bf16.msra.mxu0 %v1575
        %2279 = vmatprep.subr.bf16.mxu0 %v1572
        %2280 = vmatpush1.bf16.msra.mxu0 %v1571
        %2281 = vmatprep.subr.bf16.mxu0 %v1568
        %2282 = vmatpush1.bf16.msra.mxu0 %v1567
        %2283 = vmatprep.subr.bf16.mxu0 %v1628
        %2284 = vmatpush2.bf16.msra.mxu0 %v1627
        %2285 = vmatprep.subr.bf16.mxu0 %v1624
        %2286 = vmatpush2.bf16.msra.mxu0 %v1623
        %2287 = vmatprep.subr.bf16.mxu0 %v1620
        %2288 = vmatpush2.bf16.msra.mxu0 %v1619
        %2289 = vmatprep.subr.bf16.mxu0 %v1616
        %2290 = vmatpush2.bf16.msra.mxu0 %v1615
        %2291 = vmatprep.subr.bf16.mxu0 %v1612
        %2292 = vmatpush2.bf16.msra.mxu0 %v1611
        %2293 = vmatprep.subr.bf16.mxu0 %v1608
        %2294 = vmatpush2.bf16.msra.mxu0 %v1607
        %2295 = vmatprep.subr.bf16.mxu0 %v1604
        %2296 = vmatpush2.bf16.msra.mxu0 %v1603
        %2297 = vmatprep.subr.bf16.mxu0 %v1600
        %2298 = vmatpush2.bf16.msra.mxu0 %v1599
        %2299 = vmatprep.mubr.bf16.mxu0 %v642
        %2300 = vmatmul.mubr.bf16.gmra.mxu0 %v641
        %v2301 = vpop.f32.mrf.mxu0
        %v2302 = vadd.f32 %v2249, %v2301
        %v2303 = vpop.f32.mrf.mxu0
        %v2304 = vadd.f32 %v2251, %v2303
        %v2305 = vpop.f32.mrf.mxu0
        %v2306 = vadd.f32 %v2253, %v2305
        %v2307 = vpop.f32.mrf.mxu0
        %v2308 = vadd.f32 %v2255, %v2307
        %2309 = vmatprep.mubr.bf16.mxu0 %v650
        %2310 = vmatmul.mubr.bf16.gmra.mxu0 %v649
        %v2311 = vpop.f32.mrf.mxu0
        %v2312 = vadd.f32 %v2259, %v2311
        %v2313 = vpop.f32.mrf.mxu0
        %v2314 = vadd.f32 %v2261, %v2313
        %v2315 = vpop.f32.mrf.mxu0
        %v2316 = vadd.f32 %v2263, %v2315
        %v2317 = vpop.f32.mrf.mxu0
        %v2318 = vadd.f32 %v2265, %v2317
        %2319 = vdwg.mxu0
        %2320 = vmatprep.subr.bf16.mxu0 %v1660
        %2321 = vmatpush1.bf16.msra.mxu0 %v1659
        %2322 = vmatprep.subr.bf16.mxu0 %v1656
        %2323 = vmatpush1.bf16.msra.mxu0 %v1655
        %2324 = vmatprep.subr.bf16.mxu0 %v1652
        %2325 = vmatpush1.bf16.msra.mxu0 %v1651
        %2326 = vmatprep.subr.bf16.mxu0 %v1648
        %2327 = vmatpush1.bf16.msra.mxu0 %v1647
        %2328 = vmatprep.subr.bf16.mxu0 %v1644
        %2329 = vmatpush1.bf16.msra.mxu0 %v1643
        %2330 = vmatprep.subr.bf16.mxu0 %v1640
        %2331 = vmatpush1.bf16.msra.mxu0 %v1639
        %2332 = vmatprep.subr.bf16.mxu0 %v1636
        %2333 = vmatpush1.bf16.msra.mxu0 %v1635
        %2334 = vmatprep.subr.bf16.mxu0 %v1632
        %2335 = vmatpush1.bf16.msra.mxu0 %v1631
        %2336 = vmatprep.subr.bf16.mxu0 %v1692
        %2337 = vmatpush2.bf16.msra.mxu0 %v1691
        %2338 = vmatprep.subr.bf16.mxu0 %v1688
        %2339 = vmatpush2.bf16.msra.mxu0 %v1687
        %2340 = vmatprep.subr.bf16.mxu0 %v1684
        %2341 = vmatpush2.bf16.msra.mxu0 %v1683
        %2342 = vmatprep.subr.bf16.mxu0 %v1680
        %2343 = vmatpush2.bf16.msra.mxu0 %v1679
        %2344 = vmatprep.subr.bf16.mxu0 %v1676
        %2345 = vmatpush2.bf16.msra.mxu0 %v1675
        %2346 = vmatprep.subr.bf16.mxu0 %v1672
        %2347 = vmatpush2.bf16.msra.mxu0 %v1671
        %2348 = vmatprep.subr.bf16.mxu0 %v1668
        %2349 = vmatpush2.bf16.msra.mxu0 %v1667
        %2350 = vmatprep.subr.bf16.mxu0 %v1664
        %2351 = vmatpush2.bf16.msra.mxu0 %v1663
        %2352 = vmatprep.mubr.bf16.mxu0 %v644
        %2353 = vmatmul.mubr.bf16.gmra.mxu0 %v643
        %v2354 = vpop.f32.mrf.mxu0
        %v2355 = vadd.f32 %v2302, %v2354
        %v2356 = vpop.f32.mrf.mxu0
        %v2357 = vadd.f32 %v2304, %v2356
        %v2358 = vpop.f32.mrf.mxu0
        %v2359 = vadd.f32 %v2306, %v2358
        %v2360 = vpop.f32.mrf.mxu0
        %v2361 = vadd.f32 %v2308, %v2360
        %2362 = vmatprep.mubr.bf16.mxu0 %v652
        %2363 = vmatmul.mubr.bf16.gmra.mxu0 %v651
        %v2364 = vpop.f32.mrf.mxu0
        %v2365 = vadd.f32 %v2312, %v2364
        %v2366 = vpop.f32.mrf.mxu0
        %v2367 = vadd.f32 %v2314, %v2366
        %v2368 = vpop.f32.mrf.mxu0
        %v2369 = vadd.f32 %v2316, %v2368
        %v2370 = vpop.f32.mrf.mxu0
        %v2371 = vadd.f32 %v2318, %v2370
        %2372 = vdwg.mxu0
        %v2373 = vadd.f32 %v301, %v2143
        %v2374 = vadd.f32 %v302, %v2145
        %v2375 = vadd.f32 %v303, %v2355
        %v2376 = vadd.f32 %v304, %v2357
        %v2377 = vadd.f32 %v305, %v2147
        %v2378 = vadd.f32 %v306, %v2149
        %v2379 = vadd.f32 %v307, %v2359
        %v2380 = vadd.f32 %v308, %v2361
        %v2381 = vadd.f32 %v309, %v2153
        %v2382 = vadd.f32 %v310, %v2155
        %v2383 = vadd.f32 %v311, %v2365
        %v2384 = vadd.f32 %v312, %v2367
        %v2385 = vadd.f32 %v313, %v2157
        %v2386 = vadd.f32 %v314, %v2159
        %v2387 = vadd.f32 %v315, %v2369
        %v2388 = vadd.f32 %v316, %v2371
        %2389 = vst [vmem:[#allocation2] sm:$0xff] %v2373
        %2390 = vst [vmem:[#allocation2 + $0x8] sm:$0xff] %v2374
        %2391 = vst [vmem:[#allocation2 + $0x10] sm:$0xff] %v2375
        %2392 = vst [vmem:[#allocation2 + $0x18] sm:$0xff] %v2376
        %2393 = vst [vmem:[#allocation2 + $0x20] sm:$0xff] %v2377
        %2394 = vst [vmem:[#allocation2 + $0x28] sm:$0xff] %v2378
        %2395 = vst [vmem:[#allocation2 + $0x30] sm:$0xff] %v2379
        %2396 = vst [vmem:[#allocation2 + $0x38] sm:$0xff] %v2380
        %2397 = vst [vmem:[#allocation2 + $0x40] sm:$0xff] %v2381
        %2398 = vst [vmem:[#allocation2 + $0x48] sm:$0xff] %v2382
        %2399 = vst [vmem:[#allocation2 + $0x50] sm:$0xff] %v2383
        %2400 = vst [vmem:[#allocation2 + $0x58] sm:$0xff] %v2384
        %2401 = vst [vmem:[#allocation2 + $0x60] sm:$0xff] %v2385
        %2402 = vst [vmem:[#allocation2 + $0x68] sm:$0xff] %v2386
        %2403 = vst [vmem:[#allocation2 + $0x70] sm:$0xff] %v2387
        %2404 = vst [vmem:[#allocation2 + $0x78] sm:$0xff] %v2388
        %p2405 = scmp.eq.s32.totalorder %s20, 3
        // Predicated region
        $region56: #{discriminator_forward.13} parent=46 // pred_check
          %p2406 = pneg %p2405
        $region57: #{discriminator_forward.13} parent=46 // pred_check_branch
          %2408 = sbr.rel (%p2406) target = $region59
        $region58: #{discriminator_forward.13} parent=46 // pred_region
          %v2409 = vld [vmem:[#allocation2] sm:$0xff]
          %v2410 = vld [vmem:[#allocation2 + $0x8] sm:$0xff]
          %v2411 = vld [vmem:[#allocation2 + $0x10] sm:$0xff]
          %v2412 = vld [vmem:[#allocation2 + $0x18] sm:$0xff]
          %v2413 = vld [vmem:[#allocation2 + $0x20] sm:$0xff]
          %v2414 = vld [vmem:[#allocation2 + $0x28] sm:$0xff]
          %v2415 = vld [vmem:[#allocation2 + $0x30] sm:$0xff]
          %v2416 = vld [vmem:[#allocation2 + $0x38] sm:$0xff]
          %v2417 = vld [vmem:[#allocation2 + $0x40] sm:$0xff]
          %v2418 = vld [vmem:[#allocation2 + $0x48] sm:$0xff]
          %v2419 = vld [vmem:[#allocation2 + $0x50] sm:$0xff]
          %v2420 = vld [vmem:[#allocation2 + $0x58] sm:$0xff]
          %v2421 = vld [vmem:[#allocation2 + $0x60] sm:$0xff]
          %v2422 = vld [vmem:[#allocation2 + $0x68] sm:$0xff]
          %v2423 = vld [vmem:[#allocation2 + $0x70] sm:$0xff]
          %v2424 = vld [vmem:[#allocation2 + $0x78] sm:$0xff]
          %v2425 = vadd.f32 %v2409, %v2413
          %v2426 = vadd.f32 %v2425, %v2417
          %v2427 = vadd.f32 %v2426, %v2421
          %v2428 = vrot.slane %v2427, 4
          %v2429 = vadd.f32 %v2427, %v2428
          %v2430 = vrot.slane %v2429, 2
          %v2431 = vadd.f32 %v2429, %v2430
          %v2432 = vrot.slane %v2431, 1
          %v2433 = vadd.f32 %v2431, %v2432
          %v2434 = vadd.f32 %v2410, %v2414
          %v2435 = vadd.f32 %v2434, %v2418
          %v2436 = vadd.f32 %v2435, %v2422
          %v2437 = vrot.slane %v2436, 4
          %v2438 = vadd.f32 %v2436, %v2437
          %v2439 = vrot.slane %v2438, 2
          %v2440 = vadd.f32 %v2438, %v2439
          %v2441 = vrot.slane %v2440, 1
          %v2442 = vadd.f32 %v2440, %v2441
          %v2443 = vadd.f32 %v2411, %v2415
          %v2444 = vadd.f32 %v2443, %v2419
          %v2445 = vadd.f32 %v2444, %v2423
          %v2446 = vrot.slane %v2445, 4
          %v2447 = vadd.f32 %v2445, %v2446
          %v2448 = vrot.slane %v2447, 2
          %v2449 = vadd.f32 %v2447, %v2448
          %v2450 = vrot.slane %v2449, 1
          %v2451 = vadd.f32 %v2449, %v2450
          %v2452 = vadd.f32 %v2412, %v2416
          %v2453 = vadd.f32 %v2452, %v2420
          %v2454 = vadd.f32 %v2453, %v2424
          %v2455 = vrot.slane %v2454, 4
          %v2456 = vadd.f32 %v2454, %v2455
          %v2457 = vrot.slane %v2456, 2
          %v2458 = vadd.f32 %v2456, %v2457
          %v2459 = vrot.slane %v2458, 1
          %v2460 = vadd.f32 %v2458, %v2459
          %v2461 = vmul.f32 %v2409, %v2409
          %v2462 = vmul.f32 %v2410, %v2410
          %v2463 = vmul.f32 %v2411, %v2411
          %v2464 = vmul.f32 %v2412, %v2412
          %v2465 = vmul.f32 %v2413, %v2413
          %v2466 = vmul.f32 %v2414, %v2414
          %v2467 = vmul.f32 %v2415, %v2415
          %v2468 = vmul.f32 %v2416, %v2416
          %v2469 = vmul.f32 %v2417, %v2417
          %v2470 = vmul.f32 %v2418, %v2418
          %v2471 = vmul.f32 %v2419, %v2419
          %v2472 = vmul.f32 %v2420, %v2420
          %v2473 = vmul.f32 %v2421, %v2421
          %v2474 = vmul.f32 %v2422, %v2422
          %v2475 = vmul.f32 %v2423, %v2423
          %v2476 = vmul.f32 %v2424, %v2424
          %v2477 = vadd.f32 %v2461, %v2465
          %v2478 = vadd.f32 %v2477, %v2469
          %v2479 = vadd.f32 %v2478, %v2473
          %v2480 = vrot.slane %v2479, 4
          %v2481 = vadd.f32 %v2479, %v2480
          %v2482 = vrot.slane %v2481, 2
          %v2483 = vadd.f32 %v2481, %v2482
          %v2484 = vrot.slane %v2483, 1
          %v2485 = vadd.f32 %v2483, %v2484
          %v2486 = vadd.f32 %v2462, %v2466
          %v2487 = vadd.f32 %v2486, %v2470
          %v2488 = vadd.f32 %v2487, %v2474
          %v2489 = vrot.slane %v2488, 4
          %v2490 = vadd.f32 %v2488, %v2489
          %v2491 = vrot.slane %v2490, 2
          %v2492 = vadd.f32 %v2490, %v2491
          %v2493 = vrot.slane %v2492, 1
          %v2494 = vadd.f32 %v2492, %v2493
          %v2495 = vadd.f32 %v2463, %v2467
          %v2496 = vadd.f32 %v2495, %v2471
          %v2497 = vadd.f32 %v2496, %v2475
          %v2498 = vrot.slane %v2497, 4
          %v2499 = vadd.f32 %v2497, %v2498
          %v2500 = vrot.slane %v2499, 2
          %v2501 = vadd.f32 %v2499, %v2500
          %v2502 = vrot.slane %v2501, 1
          %v2503 = vadd.f32 %v2501, %v2502
          %v2504 = vadd.f32 %v2464, %v2468
          %v2505 = vadd.f32 %v2504, %v2472
          %v2506 = vadd.f32 %v2505, %v2476
          %v2507 = vrot.slane %v2506, 4
          %v2508 = vadd.f32 %v2506, %v2507
          %v2509 = vrot.slane %v2508, 2
          %v2510 = vadd.f32 %v2508, %v2509
          %v2511 = vrot.slane %v2510, 1
          %v2512 = vadd.f32 %v2510, %v2511
          %v2513 = vlaneseq
          %v2514 = vshrl.u32 %v2513, 7
          %vm2515 = vcmp.eq.s32.totalorder %v2514, 0
          %vm2516 = vcmp.eq.s32.totalorder %v2514, 1
          %v2517 = vsel %vm2516, %v2485, 0.0
          %v2518 = vsel %vm2516, %v2494, 0.0
          %v2519 = vsel %vm2516, %v2503, 0.0
          %v2520 = vsel %vm2516, %v2512, 0.0
          %v2521 = vsel %vm2515, %v2433, %v2517
          %v2522 = vsel %vm2515, %v2442, %v2518
          %v2523 = vsel %vm2515, %v2451, %v2519
          %v2524 = vsel %vm2515, %v2460, %v2520
          %2525 = vst [vmem:[%s280] sm:$0xff] %v2521
          %2526 = vst [vmem:[%s280 + $0x8] sm:$0xff] %v2522
          %2527 = vst [vmem:[%s280 + $0x10] sm:$0xff] %v2523
          %2528 = vst [vmem:[%s280 + $0x18] sm:$0xff] %v2524
          %2529 = vst [vmem:[%s274] sm:$0xff] %v2409
          %2530 = vst [vmem:[%s274 + $0x8] sm:$0xff] %v2410
          %2531 = vst [vmem:[%s274 + $0x10] sm:$0xff] %v2411
          %2532 = vst [vmem:[%s274 + $0x18] sm:$0xff] %v2412
          %2533 = vst [vmem:[%s274 + $0x20] sm:$0xff] %v2413
          %2534 = vst [vmem:[%s274 + $0x28] sm:$0xff] %v2414
          %2535 = vst [vmem:[%s274 + $0x30] sm:$0xff] %v2415
          %2536 = vst [vmem:[%s274 + $0x38] sm:$0xff] %v2416
          %2537 = vst [vmem:[%s274 + $0x40] sm:$0xff] %v2417
          %2538 = vst [vmem:[%s274 + $0x48] sm:$0xff] %v2418
          %2539 = vst [vmem:[%s274 + $0x50] sm:$0xff] %v2419
          %2540 = vst [vmem:[%s274 + $0x58] sm:$0xff] %v2420
          %2541 = vst [vmem:[%s274 + $0x60] sm:$0xff] %v2421
          %2542 = vst [vmem:[%s274 + $0x68] sm:$0xff] %v2422
          %2543 = vst [vmem:[%s274 + $0x70] sm:$0xff] %v2423
          %2544 = vst [vmem:[%s274 + $0x78] sm:$0xff] %v2424
        $region59: #{discriminator_forward.13} parent=46 // pred_fallthru
          _
        %s2545 = smul.u32 4, %s19
        %p2546 = scmp.lt.s32.totalorder %s2545, 3
        %s2547 = scalar_select %p2546, %s2545, 3
        %s2548 = smul.addr %s2547, 4
        %s2549 = smul.addr %s2548, 8
        %s2550 = scalar_lea.vmem %s2, %s2549
        %p2551 = scmp.lt.s32.totalorder %s19, 0
        %s2552 = scalar_select %p2551, %s19, 0
        %s2553 = smul.addr %s2552, 4
        %s2554 = smul.addr %s2553, 8
        %s2555 = scalar_lea.vmem %s3, %s2554
        // Predicated region
        $region60: #{discriminator_forward.13} parent=46 // pred_check
          %p2556 = pneg %p99
        $region61: #{discriminator_forward.13} parent=46 // pred_check_branch
          %2558 = sbr.rel (%p2556) target = $region63
        $region62: #{discriminator_forward.13} parent=46 // pred_region
          %s2559 = smul.u32 4, %s19
        $region63: #{discriminator_forward.13} parent=46 // pred_fallthru
          _
        // Predicated region
        $region64: #{discriminator_forward.13} parent=46 // pred_check
          %p2560 = pneg %p125
        $region65: #{discriminator_forward.13} parent=46 // pred_check_branch
          %2562 = sbr.rel (%p2560) target = $region67
        $region66: #{discriminator_forward.13} parent=46 // pred_region
          _
        $region67: #{discriminator_forward.13} parent=46 // pred_fallthru
          _
        // Predicated region
        $region68: #{discriminator_forward.13} parent=46 // pred_check
          %p2563 = pneg %p99
        $region69: #{discriminator_forward.13} parent=46 // pred_check_branch
          %2565 = sbr.rel (%p2563) target = $region71
        $region70: #{discriminator_forward.13} parent=46 // pred_region
          %s2566 = smul.u32 4, %s19
          %p2567 = scmp.lt.s32.totalorder %s2566, 3
          %s2568 = scalar_select %p2567, %s2566, 3
          %s2569 = smul.addr %s2568, 4
          %s2570 = smul.addr %s2569, 8
          %s2571 = scalar_lea.vmem %s2, %s2570
        $region71: #{discriminator_forward.13} parent=46 // pred_fallthru
          _
        // Predicated region
        $region72: #{discriminator_forward.13} parent=46 // pred_check
          %p2572 = pneg %p125
        $region73: #{discriminator_forward.13} parent=46 // pred_check_branch
          %2574 = sbr.rel (%p2572) target = $region75
        $region74: #{discriminator_forward.13} parent=46 // pred_region
          %p2575 = scmp.lt.s32.totalorder %s19, 0
          %s2576 = scalar_select %p2575, %s19, 0
          %s2577 = smul.addr %s2576, 4
          %s2578 = smul.addr %s2577, 8
          %s2579 = scalar_lea.vmem %s3, %s2578
        $region75: #{discriminator_forward.13} parent=46 // pred_fallthru
          _
      $region47: #{discriminator_forward.13} parent=5 // pred_fallthru
        _
      %p2580 = scmp.le.s32.totalorder 2, %s10
      // Predicated region
      $region76: #{discriminator_forward.13} parent=5 // pred_check
        %p2581 = pneg %p2580
      $region77: #{discriminator_forward.13} parent=5 // pred_check_branch
        %2583 = sbr.rel (%p2581) target = $region79
      $region78: #{discriminator_forward.13} parent=5 // pred_region
        %s2584 = ssub.s32 %s10, 2
      $region79: #{discriminator_forward.13} parent=5 // pred_fallthru
        _
    $region6: #{discriminator_forward.13} parent=1 // loop_footer
      %s14 = sadd.s32 1, %s10
    $region7: #{discriminator_forward.13} parent=1 // loop_footer_branch
      %9 = sbr.rel target = $region3
    $region8: #{discriminator_forward.13} parent=1 // loop_exit
      _

// kernel: discriminator_forward.15
$region0: #{discriminator_forward.15}
  #allocation0 [shape = 'u32[]', space=smem, size = 0x4, offset = 0x4, fixed_abs, tag = 'smem constant byte address 0x4 - core index']
  #allocation1 [shape = 'u32[144,128]{1,0:T(1,128)}', space=vmem, size = 0x12000, scoped, tag = 'internal scratch']
  #allocation2 [shape = 'f32[2,128]{1,0:T(2,128)}', space=vmem, size = 0x400, scoped, tag = 'scratch operand']
  %s0 = inlined_call_operand.vmem [shape: bf16[2,8192], index: 0, kind: input, shape index: {}]
  %s1 = inlined_call_operand.vmem [shape: bf16[8192,128], index: 1, kind: input, shape index: {}]
  %s2 = inlined_call_operand.vmem [shape: f32[2,128], index: 2, kind: output, shape index: {}]
  %s3 = sld [smem:[#allocation0]]
  $region49: #{discriminator_forward.15} parent=0
    _
  %s5 = ssub.s32 1, %s3
  %s6 = scalar_select 0, %s5, %s3
  loop: start=0, step=1, limit=10
  $region2: #{discriminator_forward.15} parent=0 // loop_pre_header
    _
  $region3: #{discriminator_forward.15} parent=0 // loop_header
    %s8 = sphi 0, %s12
    %p9 = scmp.ge.s32.totalorder %s8, 10
    %s15 = sphi 0, %s27
    %s16 = sphi 0, %s23
    %s17 = sphi 0, %s15
    %s18 = sphi 0, %s16
    %s19 = sphi 0, %s17
    %s20 = sphi 0, %s18
    %s32 = sphi 0, %s34
    %s35 = sphi 0, %s32
    %s36 = sphi 0, %s35
    %s52 = sphi 0, %s36
    %s58 = sphi 0, %s60
    %s61 = sphi 0, %s58
    %s62 = sphi 0, %s61
    %s78 = sphi 0, %s62
    %s84 = sphi 0, %s86
    %s87 = sphi 0, %s84
    %s88 = sphi 0, %s87
    %s104 = sphi 0, %s88
  $region4: #{discriminator_forward.15} parent=0 // loop_header_branch
    %11 = sbr.rel (%p9) target = $region8
  $region5: #{discriminator_forward.15} parent=0 // loop_body
    %s13 = ssub.s32 %s8, 1
    %s14 = ssub.s32 %s8, 2
    %s21 = sadd.s32 1, %s16
    %p22 = scmp.ge.s32.totalorder %s21, 8
    %s23 = scalar_select %p22, 0, %s21
    %s24 = sadd.s32 1, %s15
    %s25 = scalar_select %p22, %s24, %s15
    %p26 = scmp.ge.s32.totalorder %s25, 1
    %s27 = scalar_select %p26, 0, %s25
    %s28 = ssub.s32 %s15, %s27
    %s29 = ssub.s32 %s16, %s23
    %s30 = sor.u32 %s28, %s29
    %p31 = scmp.eq.s32.totalorder %s30, 0
    %s33 = sadd.s32 %s32, 1
    %s34 = scalar_select %p31, %s32, %s33
    %p37 = pneg %p31
    %p38 = scmp.eq.s32.totalorder %s8, 7
    %p39 = por %p37, %p38
    %p40 = scmp.ne.s32.totalorder %s32, %s35
    %p41 = scmp.eq.s32.totalorder %s8, 0
    %p42 = por %p40, %p41
    %p43 = scmp.ne.s32.totalorder %s32, %s35
    %p44 = scmp.eq.s32.totalorder %s13, 7
    %p45 = por %p43, %p44
    %p46 = scmp.ne.s32.totalorder %s35, %s36
    %p47 = scmp.eq.s32.totalorder %s13, 0
    %p48 = por %p46, %p47
    %p49 = scmp.ne.s32.totalorder %s35, %s36
    %p50 = scmp.eq.s32.totalorder %s14, 7
    %p51 = por %p49, %p50
    %p53 = scmp.ne.s32.totalorder %s36, %s52
    %p54 = scmp.eq.s32.totalorder %s14, 0
    %p55 = por %p53, %p54
    %s56 = ssub.s32 %s16, %s23
    %p57 = scmp.eq.s32.totalorder %s56, 0
    %s59 = sadd.s32 %s58, 1
    %s60 = scalar_select %p57, %s58, %s59
    %p63 = pneg %p57
    %p64 = scmp.eq.s32.totalorder %s8, 7
    %p65 = por %p63, %p64
    %p66 = scmp.ne.s32.totalorder %s58, %s61
    %p67 = scmp.eq.s32.totalorder %s8, 0
    %p68 = por %p66, %p67
    %p69 = scmp.ne.s32.totalorder %s58, %s61
    %p70 = scmp.eq.s32.totalorder %s13, 7
    %p71 = por %p69, %p70
    %p72 = scmp.ne.s32.totalorder %s61, %s62
    %p73 = scmp.eq.s32.totalorder %s13, 0
    %p74 = por %p72, %p73
    %p75 = scmp.ne.s32.totalorder %s61, %s62
    %p76 = scmp.eq.s32.totalorder %s14, 7
    %p77 = por %p75, %p76
    %p79 = scmp.ne.s32.totalorder %s62, %s78
    %p80 = scmp.eq.s32.totalorder %s14, 0
    %p81 = por %p79, %p80
    %s82 = ssub.s32 %s15, %s27
    %p83 = scmp.eq.s32.totalorder %s82, 0
    %s85 = sadd.s32 %s84, 1
    %s86 = scalar_select %p83, %s84, %s85
    %p89 = pneg %p83
    %p90 = scmp.eq.s32.totalorder %s8, 7
    %p91 = por %p89, %p90
    %p92 = scmp.ne.s32.totalorder %s84, %s87
    %p93 = scmp.eq.s32.totalorder %s8, 0
    %p94 = por %p92, %p93
    %p95 = scmp.ne.s32.totalorder %s84, %s87
    %p96 = scmp.eq.s32.totalorder %s13, 7
    %p97 = por %p95, %p96
    %p98 = scmp.ne.s32.totalorder %s87, %s88
    %p99 = scmp.eq.s32.totalorder %s13, 0
    %p100 = por %p98, %p99
    %p101 = scmp.ne.s32.totalorder %s87, %s88
    %p102 = scmp.eq.s32.totalorder %s14, 7
    %p103 = por %p101, %p102
    %p105 = scmp.ne.s32.totalorder %s88, %s104
    %p106 = scmp.eq.s32.totalorder %s14, 0
    %p107 = por %p105, %p106
    %p108 = scmp.le.s32.totalorder 1, %s8
    %p109 = scmp.lt.s32.totalorder %s8, 9
    %p110 = pnand %p108, %p109
    %p111 = pneg %p110
    // Predicated region
    $region9: #{discriminator_forward.15} parent=5 // pred_check
      _
    $region10: #{discriminator_forward.15} parent=5 // pred_check_branch
      %113 = sbr.rel (%p110) target = $region12
    $region11: #{discriminator_forward.15} parent=5 // pred_region
      %s114 = ssub.s32 %s8, 1
    $region12: #{discriminator_forward.15} parent=5 // pred_fallthru
      _
    %p115 = scmp.lt.s32.totalorder %s8, 8
    // Predicated region
    $region13: #{discriminator_forward.15} parent=5 // pred_check
      %p116 = pneg %p115
    $region14: #{discriminator_forward.15} parent=5 // pred_check_branch
      %118 = sbr.rel (%p116) target = $region16
    $region15: #{discriminator_forward.15} parent=5 // pred_region
      // Predicated region
      $region17: #{discriminator_forward.15} parent=15 // pred_check
        %p119 = pneg %p42
      $region18: #{discriminator_forward.15} parent=15 // pred_check_branch
        %121 = sbr.rel (%p119) target = $region20
      $region19: #{discriminator_forward.15} parent=15 // pred_region
        %s122 = smul.u32 8, %s16
        %p123 = scmp.lt.s32.totalorder %s15, 0
        %s124 = scalar_select %p123, %s15, 0
        %p125 = scmp.lt.s32.totalorder %s122, 63
        %s126 = scalar_select %p125, %s122, 63
        %s127 = smul.addr %s124, 64
        %s128 = sadd.s32 %s126, %s127
        %s129 = scalar_lea.vmem %s0, %s128
        %s130 = smul.u32 8, %s16
      $region20: #{discriminator_forward.15} parent=15 // pred_fallthru
        _
      // Predicated region
      $region21: #{discriminator_forward.15} parent=15 // pred_check
        %p131 = pneg %p68
      $region22: #{discriminator_forward.15} parent=15 // pred_check_branch
        %133 = sbr.rel (%p131) target = $region24
      $region23: #{discriminator_forward.15} parent=15 // pred_region
        %s134 = smul.u32 128, %s16
        %p135 = scmp.lt.s32.totalorder %s134, 1023
        %s136 = scalar_select %p135, %s134, 1023
        %s137 = smul.addr %s136, 4
        %s138 = scalar_lea.vmem %s1, %s137
        %s139 = smul.u32 128, %s16
      $region24: #{discriminator_forward.15} parent=15 // pred_fallthru
        _
    $region16: #{discriminator_forward.15} parent=5 // pred_fallthru
      _
    %p140 = scmp.le.s32.totalorder 1, %s8
    %p141 = scmp.lt.s32.totalorder %s8, 9
    %p142 = pnand %p140, %p141
    %p143 = pneg %p142
    // Predicated region
    $region25: #{discriminator_forward.15} parent=5 // pred_check
      _
    $region26: #{discriminator_forward.15} parent=5 // pred_check_branch
      %145 = sbr.rel (%p142) target = $region28
    $region27: #{discriminator_forward.15} parent=5 // pred_region
      %s146 = ssub.s32 %s8, 1
      %s147 = smul.u32 8, %s18
      %p148 = scmp.lt.s32.totalorder %s17, 0
      %s149 = scalar_select %p148, %s17, 0
      %p150 = scmp.lt.s32.totalorder %s147, 63
      %s151 = scalar_select %p150, %s147, 63
      %s152 = smul.addr %s149, 64
      %s153 = sadd.s32 %s151, %s152
      %s154 = scalar_lea.vmem %s0, %s153
      %p155 = pneg %p48
      %p156 = pneg %p45
      %s157 = smul.u32 128, %s18
      %p158 = scmp.lt.s32.totalorder %s157, 1023
      %s159 = scalar_select %p158, %s157, 1023
      %s160 = smul.addr %s159, 4
      %s161 = scalar_lea.vmem %s1, %s160
      %p162 = pneg %p74
      %p163 = pneg %p71
      %p164 = pneg %p100
      %p165 = pneg %p97
      %p166 = scmp.lt.s32.totalorder %s17, 0
      %s167 = scalar_select %p166, %s17, 0
      %s168 = smul.addr %s167, 2
      %s169 = scalar_lea.vmem %s2, %s168
      %s170 = smul.u32 8, %s18
      %p171 = scmp.lt.s32.totalorder %s17, 0
      %s172 = scalar_select %p171, %s17, 0
      %p173 = scmp.lt.s32.totalorder %s170, 63
      %s174 = scalar_select %p173, %s170, 63
      %s175 = smul.addr %s172, 64
      %s176 = sadd.s32 %s174, %s175
      %s177 = scalar_lea.vmem %s0, %s176
      %s178 = smul.u32 8, %s18
      %s179 = smul.u32 128, %s18
      %p180 = scmp.lt.s32.totalorder %s179, 1023
      %s181 = scalar_select %p180, %s179, 1023
      %s182 = smul.addr %s181, 4
      %s183 = scalar_lea.vmem %s1, %s182
      %s184 = smul.u32 128, %s18
      %p185 = scmp.lt.s32.totalorder %s17, 0
      %s186 = scalar_select %p185, %s17, 0
      %s187 = smul.addr %s186, 2
      %s188 = scalar_lea.vmem %s2, %s187
      %p190 = scmp.eq.s32.totalorder %s18, 0
      // Predicated region
      $region29: #{discriminator_forward.15} parent=27 // pred_check
        %p191 = pneg %p190
      $region30: #{discriminator_forward.15} parent=27 // pred_check_branch
        %193 = sbr.rel (%p191) target = $region32
      $region31: #{discriminator_forward.15} parent=27 // pred_region
        %194 = vst [vmem:[#allocation2] sm:$0x3] 0.0
      $region32: #{discriminator_forward.15} parent=27 // pred_fallthru
        _
      %v195 = vld [vmem:[#allocation2] sm:$0x3]
      %v196 = vld [vmem:[%s177] sm:$0xff]
      %v197 = vld [vmem:[%s183] sm:$0xf]
      %v198 = vld [vmem:[%s183 + $0x4] sm:$0xf]
      %v199 = vld [vmem:[%s183 + $0x8] sm:$0xf]
      %v200 = vld [vmem:[%s183 + $0xc] sm:$0xf]
      %v201 = vld [vmem:[%s183 + $0x10] sm:$0xf]
      %v202 = vld [vmem:[%s183 + $0x14] sm:$0xf]
      %v203 = vld [vmem:[%s183 + $0x18] sm:$0xf]
      %v204 = vld [vmem:[%s183 + $0x1c] sm:$0xf]
      %v205 = vld [vmem:[%s183 + $0x20] sm:$0xf]
      %v206 = vld [vmem:[%s183 + $0x24] sm:$0xf]
      %v207 = vld [vmem:[%s183 + $0x28] sm:$0xf]
      %v208 = vld [vmem:[%s183 + $0x2c] sm:$0xf]
      %v209 = vld [vmem:[%s183 + $0x30] sm:$0xf]
      %v210 = vld [vmem:[%s183 + $0x34] sm:$0xf]
      %v211 = vld [vmem:[%s183 + $0x38] sm:$0xf]
      %v212 = vld [vmem:[%s183 + $0x3c] sm:$0xf]
      %v213 = vld [vmem:[%s183 + $0x40] sm:$0xf]
      %v214 = vld [vmem:[%s183 + $0x44] sm:$0xf]
      %v215 = vld [vmem:[%s183 + $0x48] sm:$0xf]
      %v216 = vld [vmem:[%s183 + $0x4c] sm:$0xf]
      %v217 = vld [vmem:[%s183 + $0x50] sm:$0xf]
      %v218 = vld [vmem:[%s183 + $0x54] sm:$0xf]
      %v219 = vld [vmem:[%s183 + $0x58] sm:$0xf]
      %v220 = vld [vmem:[%s183 + $0x5c] sm:$0xf]
      %v221 = vld [vmem:[%s183 + $0x60] sm:$0xf]
      %v222 = vld [vmem:[%s183 + $0x64] sm:$0xf]
      %v223 = vld [vmem:[%s183 + $0x68] sm:$0xf]
      %v224 = vld [vmem:[%s183 + $0x6c] sm:$0xf]
      %v225 = vld [vmem:[%s183 + $0x70] sm:$0xf]
      %v226 = vld [vmem:[%s183 + $0x74] sm:$0xf]
      %v227 = vld [vmem:[%s183 + $0x78] sm:$0xf]
      %v228 = vld [vmem:[%s183 + $0x7c] sm:$0xf]
      %v229 = vld [vmem:[%s183 + $0x80] sm:$0xf]
      %v230 = vld [vmem:[%s183 + $0x84] sm:$0xf]
      %v231 = vld [vmem:[%s183 + $0x88] sm:$0xf]
      %v232 = vld [vmem:[%s183 + $0x8c] sm:$0xf]
      %v233 = vld [vmem:[%s183 + $0x90] sm:$0xf]
      %v234 = vld [vmem:[%s183 + $0x94] sm:$0xf]
      %v235 = vld [vmem:[%s183 + $0x98] sm:$0xf]
      %v236 = vld [vmem:[%s183 + $0x9c] sm:$0xf]
      %v237 = vld [vmem:[%s183 + $0xa0] sm:$0xf]
      %v238 = vld [vmem:[%s183 + $0xa4] sm:$0xf]
      %v239 = vld [vmem:[%s183 + $0xa8] sm:$0xf]
      %v240 = vld [vmem:[%s183 + $0xac] sm:$0xf]
      %v241 = vld [vmem:[%s183 + $0xb0] sm:$0xf]
      %v242 = vld [vmem:[%s183 + $0xb4] sm:$0xf]
      %v243 = vld [vmem:[%s183 + $0xb8] sm:$0xf]
      %v244 = vld [vmem:[%s183 + $0xbc] sm:$0xf]
      %v245 = vld [vmem:[%s183 + $0xc0] sm:$0xf]
      %v246 = vld [vmem:[%s183 + $0xc4] sm:$0xf]
      %v247 = vld [vmem:[%s183 + $0xc8] sm:$0xf]
      %v248 = vld [vmem:[%s183 + $0xcc] sm:$0xf]
      %v249 = vld [vmem:[%s183 + $0xd0] sm:$0xf]
      %v250 = vld [vmem:[%s183 + $0xd4] sm:$0xf]
      %v251 = vld [vmem:[%s183 + $0xd8] sm:$0xf]
      %v252 = vld [vmem:[%s183 + $0xdc] sm:$0xf]
      %v253 = vld [vmem:[%s183 + $0xe0] sm:$0xf]
      %v254 = vld [vmem:[%s183 + $0xe4] sm:$0xf]
      %v255 = vld [vmem:[%s183 + $0xe8] sm:$0xf]
      %v256 = vld [vmem:[%s183 + $0xec] sm:$0xf]
      %v257 = vld [vmem:[%s183 + $0xf0] sm:$0xf]
      %v258 = vld [vmem:[%s183 + $0xf4] sm:$0xf]
      %v259 = vld [vmem:[%s183 + $0xf8] sm:$0xf]
      %v260 = vld [vmem:[%s183 + $0xfc] sm:$0xf]
      %v261 = vld [vmem:[%s183 + $0x100] sm:$0xf]
      %v262 = vld [vmem:[%s183 + $0x104] sm:$0xf]
      %v263 = vld [vmem:[%s183 + $0x108] sm:$0xf]
      %v264 = vld [vmem:[%s183 + $0x10c] sm:$0xf]
      %v265 = vld [vmem:[%s183 + $0x110] sm:$0xf]
      %v266 = vld [vmem:[%s183 + $0x114] sm:$0xf]
      %v267 = vld [vmem:[%s183 + $0x118] sm:$0xf]
      %v268 = vld [vmem:[%s183 + $0x11c] sm:$0xf]
      %v269 = vld [vmem:[%s183 + $0x120] sm:$0xf]
      %v270 = vld [vmem:[%s183 + $0x124] sm:$0xf]
      %v271 = vld [vmem:[%s183 + $0x128] sm:$0xf]
      %v272 = vld [vmem:[%s183 + $0x12c] sm:$0xf]
      %v273 = vld [vmem:[%s183 + $0x130] sm:$0xf]
      %v274 = vld [vmem:[%s183 + $0x134] sm:$0xf]
      %v275 = vld [vmem:[%s183 + $0x138] sm:$0xf]
      %v276 = vld [vmem:[%s183 + $0x13c] sm:$0xf]
      %v277 = vld [vmem:[%s183 + $0x140] sm:$0xf]
      %v278 = vld [vmem:[%s183 + $0x144] sm:$0xf]
      %v279 = vld [vmem:[%s183 + $0x148] sm:$0xf]
      %v280 = vld [vmem:[%s183 + $0x14c] sm:$0xf]
      %v281 = vld [vmem:[%s183 + $0x150] sm:$0xf]
      %v282 = vld [vmem:[%s183 + $0x154] sm:$0xf]
      %v283 = vld [vmem:[%s183 + $0x158] sm:$0xf]
      %v284 = vld [vmem:[%s183 + $0x15c] sm:$0xf]
      %v285 = vld [vmem:[%s183 + $0x160] sm:$0xf]
      %v286 = vld [vmem:[%s183 + $0x164] sm:$0xf]
      %v287 = vld [vmem:[%s183 + $0x168] sm:$0xf]
      %v288 = vld [vmem:[%s183 + $0x16c] sm:$0xf]
      %v289 = vld [vmem:[%s183 + $0x170] sm:$0xf]
      %v290 = vld [vmem:[%s183 + $0x174] sm:$0xf]
      %v291 = vld [vmem:[%s183 + $0x178] sm:$0xf]
      %v292 = vld [vmem:[%s183 + $0x17c] sm:$0xf]
      %v293 = vld [vmem:[%s183 + $0x180] sm:$0xf]
      %v294 = vld [vmem:[%s183 + $0x184] sm:$0xf]
      %v295 = vld [vmem:[%s183 + $0x188] sm:$0xf]
      %v296 = vld [vmem:[%s183 + $0x18c] sm:$0xf]
      %v297 = vld [vmem:[%s183 + $0x190] sm:$0xf]
      %v298 = vld [vmem:[%s183 + $0x194] sm:$0xf]
      %v299 = vld [vmem:[%s183 + $0x198] sm:$0xf]
      %v300 = vld [vmem:[%s183 + $0x19c] sm:$0xf]
      %v301 = vld [vmem:[%s183 + $0x1a0] sm:$0xf]
      %v302 = vld [vmem:[%s183 + $0x1a4] sm:$0xf]
      %v303 = vld [vmem:[%s183 + $0x1a8] sm:$0xf]
      %v304 = vld [vmem:[%s183 + $0x1ac] sm:$0xf]
      %v305 = vld [vmem:[%s183 + $0x1b0] sm:$0xf]
      %v306 = vld [vmem:[%s183 + $0x1b4] sm:$0xf]
      %v307 = vld [vmem:[%s183 + $0x1b8] sm:$0xf]
      %v308 = vld [vmem:[%s183 + $0x1bc] sm:$0xf]
      %v309 = vld [vmem:[%s183 + $0x1c0] sm:$0xf]
      %v310 = vld [vmem:[%s183 + $0x1c4] sm:$0xf]
      %v311 = vld [vmem:[%s183 + $0x1c8] sm:$0xf]
      %v312 = vld [vmem:[%s183 + $0x1cc] sm:$0xf]
      %v313 = vld [vmem:[%s183 + $0x1d0] sm:$0xf]
      %v314 = vld [vmem:[%s183 + $0x1d4] sm:$0xf]
      %v315 = vld [vmem:[%s183 + $0x1d8] sm:$0xf]
      %v316 = vld [vmem:[%s183 + $0x1dc] sm:$0xf]
      %v317 = vld [vmem:[%s183 + $0x1e0] sm:$0xf]
      %v318 = vld [vmem:[%s183 + $0x1e4] sm:$0xf]
      %v319 = vld [vmem:[%s183 + $0x1e8] sm:$0xf]
      %v320 = vld [vmem:[%s183 + $0x1ec] sm:$0xf]
      %v321 = vld [vmem:[%s183 + $0x1f0] sm:$0xf]
      %v322 = vld [vmem:[%s183 + $0x1f4] sm:$0xf]
      %v323 = vld [vmem:[%s183 + $0x1f8] sm:$0xf]
      %v324 = vld [vmem:[%s183 + $0x1fc] sm:$0xf]
      %v326 = vcombine.high %v196, %v196
      %v328 = vunpack.c.l.s4 1966171168
      %v329 = vunpack.c.0.s8 %v328
      %v330 = vlaneseq
      %v331 = vshrl.u32 %v330, 7
      %v332 = vsub.s32 %v329, %v331
      %v333 = vrot.slane %v196, %v332
      %v335 = vunpack.c.l.s4 1966171168
      %v336 = vunpack.c.0.s8 %v335
      %v337 = vlaneseq
      %v338 = vshrl.u32 %v337, 7
      %v339 = vsub.s32 %v336, %v338
      %v340 = vrot.slane %v326, %v339
      %v341 = vcombine.high %v333, %v333
      %v342 = vcombine.high %v340, %v340
      %v344 = vunpack.c.l.s4 1966171168
      %v345 = vunpack.c.0.s8 %v344
      %v346 = vlaneseq
      %v347 = vshrl.u32 %v346, 7
      %v348 = vsub.s32 %v345, %v347
      %v349 = vrot.slane %v333, %v348
      %v351 = vunpack.c.l.s4 1966171168
      %v352 = vunpack.c.0.s8 %v351
      %v353 = vlaneseq
      %v354 = vshrl.u32 %v353, 7
      %v355 = vsub.s32 %v352, %v354
      %v356 = vrot.slane %v340, %v355
      %v358 = vunpack.c.l.s4 1966171168
      %v359 = vunpack.c.0.s8 %v358
      %v360 = vlaneseq
      %v361 = vshrl.u32 %v360, 7
      %v362 = vsub.s32 %v359, %v361
      %v363 = vrot.slane %v341, %v362
      %v365 = vunpack.c.l.s4 1966171168
      %v366 = vunpack.c.0.s8 %v365
      %v367 = vlaneseq
      %v368 = vshrl.u32 %v367, 7
      %v369 = vsub.s32 %v366, %v368
      %v370 = vrot.slane %v342, %v369
      %v371 = vcombine.high %v349, %v349
      %v372 = vcombine.high %v356, %v356
      %v373 = vcombine.high %v363, %v363
      %v374 = vcombine.high %v370, %v370
      %v511 = vunpack.c.l.b16 %v197
      %v512 = vunpack.c.l.b16 %v198
      %v513 = vunpack.c.l.b16 %v199
      %v514 = vunpack.c.l.b16 %v200
      %v515 = vunpack.c.l.b16 %v201
      %v516 = vunpack.c.l.b16 %v202
      %v517 = vunpack.c.l.b16 %v203
      %v518 = vunpack.c.l.b16 %v204
      %v519 = vunpack.c.l.b16 %v205
      %v520 = vunpack.c.l.b16 %v206
      %v521 = vunpack.c.l.b16 %v207
      %v522 = vunpack.c.l.b16 %v208
      %v523 = vunpack.c.l.b16 %v209
      %v524 = vunpack.c.l.b16 %v210
      %v525 = vunpack.c.l.b16 %v211
      %v526 = vunpack.c.l.b16 %v212
      %v527 = vunpack.c.l.b16 %v213
      %v528 = vunpack.c.l.b16 %v214
      %v529 = vunpack.c.l.b16 %v215
      %v530 = vunpack.c.l.b16 %v216
      %v531 = vunpack.c.l.b16 %v217
      %v532 = vunpack.c.l.b16 %v218
      %v533 = vunpack.c.l.b16 %v219
      %v534 = vunpack.c.l.b16 %v220
      %v535 = vunpack.c.l.b16 %v221
      %v536 = vunpack.c.l.b16 %v222
      %v537 = vunpack.c.l.b16 %v223
      %v538 = vunpack.c.l.b16 %v224
      %v539 = vunpack.c.l.b16 %v225
      %v540 = vunpack.c.l.b16 %v226
      %v541 = vunpack.c.l.b16 %v227
      %v542 = vunpack.c.l.b16 %v228
      %v543 = vunpack.c.l.b16 %v229
      %v544 = vunpack.c.l.b16 %v230
      %v545 = vunpack.c.l.b16 %v231
      %v546 = vunpack.c.l.b16 %v232
      %v547 = vunpack.c.l.b16 %v233
      %v548 = vunpack.c.l.b16 %v234
      %v549 = vunpack.c.l.b16 %v235
      %v550 = vunpack.c.l.b16 %v236
      %v551 = vunpack.c.l.b16 %v237
      %v552 = vunpack.c.l.b16 %v238
      %v553 = vunpack.c.l.b16 %v239
      %v554 = vunpack.c.l.b16 %v240
      %v555 = vunpack.c.l.b16 %v241
      %v556 = vunpack.c.l.b16 %v242
      %v557 = vunpack.c.l.b16 %v243
      %v558 = vunpack.c.l.b16 %v244
      %v559 = vunpack.c.l.b16 %v245
      %v560 = vunpack.c.l.b16 %v246
      %v561 = vunpack.c.l.b16 %v247
      %v562 = vunpack.c.l.b16 %v248
      %v563 = vunpack.c.l.b16 %v249
      %v564 = vunpack.c.l.b16 %v250
      %v565 = vunpack.c.l.b16 %v251
      %v566 = vunpack.c.l.b16 %v252
      %v567 = vunpack.c.l.b16 %v253
      %v568 = vunpack.c.l.b16 %v254
      %v569 = vunpack.c.l.b16 %v255
      %v570 = vunpack.c.l.b16 %v256
      %v571 = vunpack.c.l.b16 %v257
      %v572 = vunpack.c.l.b16 %v258
      %v573 = vunpack.c.l.b16 %v259
      %v574 = vunpack.c.l.b16 %v260
      %v575 = vunpack.c.l.b16 %v261
      %v576 = vunpack.c.l.b16 %v262
      %v577 = vunpack.c.l.b16 %v263
      %v578 = vunpack.c.l.b16 %v264
      %v579 = vunpack.c.l.b16 %v265
      %v580 = vunpack.c.l.b16 %v266
      %v581 = vunpack.c.l.b16 %v267
      %v582 = vunpack.c.l.b16 %v268
      %v583 = vunpack.c.l.b16 %v269
      %v584 = vunpack.c.l.b16 %v270
      %v585 = vunpack.c.l.b16 %v271
      %v586 = vunpack.c.l.b16 %v272
      %v587 = vunpack.c.l.b16 %v273
      %v588 = vunpack.c.l.b16 %v274
      %v589 = vunpack.c.l.b16 %v275
      %v590 = vunpack.c.l.b16 %v276
      %v591 = vunpack.c.l.b16 %v277
      %v592 = vunpack.c.l.b16 %v278
      %v593 = vunpack.c.l.b16 %v279
      %v594 = vunpack.c.l.b16 %v280
      %v595 = vunpack.c.l.b16 %v281
      %v596 = vunpack.c.l.b16 %v282
      %v597 = vunpack.c.l.b16 %v283
      %v598 = vunpack.c.l.b16 %v284
      %v599 = vunpack.c.l.b16 %v285
      %v600 = vunpack.c.l.b16 %v286
      %v601 = vunpack.c.l.b16 %v287
      %v602 = vunpack.c.l.b16 %v288
      %v603 = vunpack.c.l.b16 %v289
      %v604 = vunpack.c.l.b16 %v290
      %v605 = vunpack.c.l.b16 %v291
      %v606 = vunpack.c.l.b16 %v292
      %v607 = vunpack.c.l.b16 %v293
      %v608 = vunpack.c.l.b16 %v294
      %v609 = vunpack.c.l.b16 %v295
      %v610 = vunpack.c.l.b16 %v296
      %v611 = vunpack.c.l.b16 %v297
      %v612 = vunpack.c.l.b16 %v298
      %v613 = vunpack.c.l.b16 %v299
      %v614 = vunpack.c.l.b16 %v300
      %v615 = vunpack.c.l.b16 %v301
      %v616 = vunpack.c.l.b16 %v302
      %v617 = vunpack.c.l.b16 %v303
      %v618 = vunpack.c.l.b16 %v304
      %v619 = vunpack.c.l.b16 %v305
      %v620 = vunpack.c.l.b16 %v306
      %v621 = vunpack.c.l.b16 %v307
      %v622 = vunpack.c.l.b16 %v308
      %v623 = vunpack.c.l.b16 %v309
      %v624 = vunpack.c.l.b16 %v310
      %v625 = vunpack.c.l.b16 %v311
      %v626 = vunpack.c.l.b16 %v312
      %v627 = vunpack.c.l.b16 %v313
      %v628 = vunpack.c.l.b16 %v314
      %v629 = vunpack.c.l.b16 %v315
      %v630 = vunpack.c.l.b16 %v316
      %v631 = vunpack.c.l.b16 %v317
      %v632 = vunpack.c.l.b16 %v318
      %v633 = vunpack.c.l.b16 %v319
      %v634 = vunpack.c.l.b16 %v320
      %v635 = vunpack.c.l.b16 %v321
      %v636 = vunpack.c.l.b16 %v322
      %v637 = vunpack.c.l.b16 %v323
      %v638 = vunpack.c.l.b16 %v324
      %v639 = vpack.c.b16 %v512, %v511
      %v640 = vpack.c.b16 %v514, %v513
      %v641 = vpack.c.b16 %v516, %v515
      %v642 = vpack.c.b16 %v518, %v517
      %v643 = vpack.c.b16 %v520, %v519
      %v644 = vpack.c.b16 %v522, %v521
      %v645 = vpack.c.b16 %v524, %v523
      %v646 = vpack.c.b16 %v526, %v525
      %v647 = vpack.c.b16 %v528, %v527
      %v648 = vpack.c.b16 %v530, %v529
      %v649 = vpack.c.b16 %v532, %v531
      %v650 = vpack.c.b16 %v534, %v533
      %v651 = vpack.c.b16 %v536, %v535
      %v652 = vpack.c.b16 %v538, %v537
      %v653 = vpack.c.b16 %v540, %v539
      %v654 = vpack.c.b16 %v542, %v541
      %v655 = vpack.c.b16 %v544, %v543
      %v656 = vpack.c.b16 %v546, %v545
      %v657 = vpack.c.b16 %v548, %v547
      %v658 = vpack.c.b16 %v550, %v549
      %v659 = vpack.c.b16 %v552, %v551
      %v660 = vpack.c.b16 %v554, %v553
      %v661 = vpack.c.b16 %v556, %v555
      %v662 = vpack.c.b16 %v558, %v557
      %v663 = vpack.c.b16 %v560, %v559
      %v664 = vpack.c.b16 %v562, %v561
      %v665 = vpack.c.b16 %v564, %v563
      %v666 = vpack.c.b16 %v566, %v565
      %v667 = vpack.c.b16 %v568, %v567
      %v668 = vpack.c.b16 %v570, %v569
      %v669 = vpack.c.b16 %v572, %v571
      %v670 = vpack.c.b16 %v574, %v573
      %v671 = vpack.c.b16 %v576, %v575
      %v672 = vpack.c.b16 %v578, %v577
      %v673 = vpack.c.b16 %v580, %v579
      %v674 = vpack.c.b16 %v582, %v581
      %v675 = vpack.c.b16 %v584, %v583
      %v676 = vpack.c.b16 %v586, %v585
      %v677 = vpack.c.b16 %v588, %v587
      %v678 = vpack.c.b16 %v590, %v589
      %v679 = vpack.c.b16 %v592, %v591
      %v680 = vpack.c.b16 %v594, %v593
      %v681 = vpack.c.b16 %v596, %v595
      %v682 = vpack.c.b16 %v598, %v597
      %v683 = vpack.c.b16 %v600, %v599
      %v684 = vpack.c.b16 %v602, %v601
      %v685 = vpack.c.b16 %v604, %v603
      %v686 = vpack.c.b16 %v606, %v605
      %v687 = vpack.c.b16 %v608, %v607
      %v688 = vpack.c.b16 %v610, %v609
      %v689 = vpack.c.b16 %v612, %v611
      %v690 = vpack.c.b16 %v614, %v613
      %v691 = vpack.c.b16 %v616, %v615
      %v692 = vpack.c.b16 %v618, %v617
      %v693 = vpack.c.b16 %v620, %v619
      %v694 = vpack.c.b16 %v622, %v621
      %v695 = vpack.c.b16 %v624, %v623
      %v696 = vpack.c.b16 %v626, %v625
      %v697 = vpack.c.b16 %v628, %v627
      %v698 = vpack.c.b16 %v630, %v629
      %v699 = vpack.c.b16 %v632, %v631
      %v700 = vpack.c.b16 %v634, %v633
      %v701 = vpack.c.b16 %v636, %v635
      %v702 = vpack.c.b16 %v638, %v637
      %767 = vmatprep.subr.bf16.mxu0 0
      %768 = vmatpush1.bf16.msra.mxu0 %v646
      %769 = vmatprep.subr.bf16.mxu0 0
      %770 = vmatpush1.bf16.msra.mxu0 %v645
      %771 = vmatprep.subr.bf16.mxu0 0
      %772 = vmatpush1.bf16.msra.mxu0 %v644
      %773 = vmatprep.subr.bf16.mxu0 0
      %774 = vmatpush1.bf16.msra.mxu0 %v643
      %775 = vmatprep.subr.bf16.mxu0 0
      %776 = vmatpush1.bf16.msra.mxu0 %v642
      %777 = vmatprep.subr.bf16.mxu0 0
      %778 = vmatpush1.bf16.msra.mxu0 %v641
      %779 = vmatprep.subr.bf16.mxu0 0
      %780 = vmatpush1.bf16.msra.mxu0 %v640
      %781 = vmatprep.subr.bf16.mxu0 0
      %782 = vmatpush1.bf16.msra.mxu0 %v639
      %783 = vmatprep.subr.bf16.mxu0 0
      %784 = vmatpush2.bf16.msra.mxu0 %v654
      %785 = vmatprep.subr.bf16.mxu0 0
      %786 = vmatpush2.bf16.msra.mxu0 %v653
      %787 = vmatprep.subr.bf16.mxu0 0
      %788 = vmatpush2.bf16.msra.mxu0 %v652
      %789 = vmatprep.subr.bf16.mxu0 0
      %790 = vmatpush2.bf16.msra.mxu0 %v651
      %791 = vmatprep.subr.bf16.mxu0 0
      %792 = vmatpush2.bf16.msra.mxu0 %v650
      %793 = vmatprep.subr.bf16.mxu0 0
      %794 = vmatpush2.bf16.msra.mxu0 %v649
      %795 = vmatprep.subr.bf16.mxu0 0
      %796 = vmatpush2.bf16.msra.mxu0 %v648
      %797 = vmatprep.subr.bf16.mxu0 0
      %798 = vmatpush2.bf16.msra.mxu0 %v647
      %799 = vmatprep.mubr.bf16.mxu0 %v363
      %800 = vmatmul.mubr.bf16.gmra.mxu0 %v349
      %v801 = vpop.f32.mrf.mxu0
      %v802 = vadd.f32 0.0, %v801
      %v803 = vpop.f32.mrf.mxu0
      %v804 = vpop.f32.mrf.mxu0
      %v805 = vpop.f32.mrf.mxu0
      %806 = vdwg.mxu0
      %807 = vmatprep.subr.bf16.mxu0 0
      %808 = vmatpush1.bf16.msra.mxu0 %v662
      %809 = vmatprep.subr.bf16.mxu0 0
      %810 = vmatpush1.bf16.msra.mxu0 %v661
      %811 = vmatprep.subr.bf16.mxu0 0
      %812 = vmatpush1.bf16.msra.mxu0 %v660
      %813 = vmatprep.subr.bf16.mxu0 0
      %814 = vmatpush1.bf16.msra.mxu0 %v659
      %815 = vmatprep.subr.bf16.mxu0 0
      %816 = vmatpush1.bf16.msra.mxu0 %v658
      %817 = vmatprep.subr.bf16.mxu0 0
      %818 = vmatpush1.bf16.msra.mxu0 %v657
      %819 = vmatprep.subr.bf16.mxu0 0
      %820 = vmatpush1.bf16.msra.mxu0 %v656
      %821 = vmatprep.subr.bf16.mxu0 0
      %822 = vmatpush1.bf16.msra.mxu0 %v655
      %823 = vmatprep.subr.bf16.mxu0 0
      %824 = vmatpush2.bf16.msra.mxu0 %v670
      %825 = vmatprep.subr.bf16.mxu0 0
      %826 = vmatpush2.bf16.msra.mxu0 %v669
      %827 = vmatprep.subr.bf16.mxu0 0
      %828 = vmatpush2.bf16.msra.mxu0 %v668
      %829 = vmatprep.subr.bf16.mxu0 0
      %830 = vmatpush2.bf16.msra.mxu0 %v667
      %831 = vmatprep.subr.bf16.mxu0 0
      %832 = vmatpush2.bf16.msra.mxu0 %v666
      %833 = vmatprep.subr.bf16.mxu0 0
      %834 = vmatpush2.bf16.msra.mxu0 %v665
      %835 = vmatprep.subr.bf16.mxu0 0
      %836 = vmatpush2.bf16.msra.mxu0 %v664
      %837 = vmatprep.subr.bf16.mxu0 0
      %838 = vmatpush2.bf16.msra.mxu0 %v663
      %839 = vmatprep.mubr.bf16.mxu0 %v373
      %840 = vmatmul.mubr.bf16.gmra.mxu0 %v371
      %v841 = vpop.f32.mrf.mxu0
      %v842 = vadd.f32 %v802, %v841
      %v843 = vpop.f32.mrf.mxu0
      %v844 = vpop.f32.mrf.mxu0
      %v845 = vpop.f32.mrf.mxu0
      %846 = vdwg.mxu0
      %847 = vmatprep.subr.bf16.mxu0 0
      %848 = vmatpush1.bf16.msra.mxu0 %v678
      %849 = vmatprep.subr.bf16.mxu0 0
      %850 = vmatpush1.bf16.msra.mxu0 %v677
      %851 = vmatprep.subr.bf16.mxu0 0
      %852 = vmatpush1.bf16.msra.mxu0 %v676
      %853 = vmatprep.subr.bf16.mxu0 0
      %854 = vmatpush1.bf16.msra.mxu0 %v675
      %855 = vmatprep.subr.bf16.mxu0 0
      %856 = vmatpush1.bf16.msra.mxu0 %v674
      %857 = vmatprep.subr.bf16.mxu0 0
      %858 = vmatpush1.bf16.msra.mxu0 %v673
      %859 = vmatprep.subr.bf16.mxu0 0
      %860 = vmatpush1.bf16.msra.mxu0 %v672
      %861 = vmatprep.subr.bf16.mxu0 0
      %862 = vmatpush1.bf16.msra.mxu0 %v671
      %863 = vmatprep.subr.bf16.mxu0 0
      %864 = vmatpush2.bf16.msra.mxu0 %v686
      %865 = vmatprep.subr.bf16.mxu0 0
      %866 = vmatpush2.bf16.msra.mxu0 %v685
      %867 = vmatprep.subr.bf16.mxu0 0
      %868 = vmatpush2.bf16.msra.mxu0 %v684
      %869 = vmatprep.subr.bf16.mxu0 0
      %870 = vmatpush2.bf16.msra.mxu0 %v683
      %871 = vmatprep.subr.bf16.mxu0 0
      %872 = vmatpush2.bf16.msra.mxu0 %v682
      %873 = vmatprep.subr.bf16.mxu0 0
      %874 = vmatpush2.bf16.msra.mxu0 %v681
      %875 = vmatprep.subr.bf16.mxu0 0
      %876 = vmatpush2.bf16.msra.mxu0 %v680
      %877 = vmatprep.subr.bf16.mxu0 0
      %878 = vmatpush2.bf16.msra.mxu0 %v679
      %879 = vmatprep.mubr.bf16.mxu0 %v370
      %880 = vmatmul.mubr.bf16.gmra.mxu0 %v356
      %v881 = vpop.f32.mrf.mxu0
      %v882 = vadd.f32 %v842, %v881
      %v883 = vpop.f32.mrf.mxu0
      %v884 = vpop.f32.mrf.mxu0
      %v885 = vpop.f32.mrf.mxu0
      %886 = vdwg.mxu0
      %887 = vmatprep.subr.bf16.mxu0 0
      %888 = vmatpush1.bf16.msra.mxu0 %v694
      %889 = vmatprep.subr.bf16.mxu0 0
      %890 = vmatpush1.bf16.msra.mxu0 %v693
      %891 = vmatprep.subr.bf16.mxu0 0
      %892 = vmatpush1.bf16.msra.mxu0 %v692
      %893 = vmatprep.subr.bf16.mxu0 0
      %894 = vmatpush1.bf16.msra.mxu0 %v691
      %895 = vmatprep.subr.bf16.mxu0 0
      %896 = vmatpush1.bf16.msra.mxu0 %v690
      %897 = vmatprep.subr.bf16.mxu0 0
      %898 = vmatpush1.bf16.msra.mxu0 %v689
      %899 = vmatprep.subr.bf16.mxu0 0
      %900 = vmatpush1.bf16.msra.mxu0 %v688
      %901 = vmatprep.subr.bf16.mxu0 0
      %902 = vmatpush1.bf16.msra.mxu0 %v687
      %903 = vmatprep.subr.bf16.mxu0 0
      %904 = vmatpush2.bf16.msra.mxu0 %v702
      %905 = vmatprep.subr.bf16.mxu0 0
      %906 = vmatpush2.bf16.msra.mxu0 %v701
      %907 = vmatprep.subr.bf16.mxu0 0
      %908 = vmatpush2.bf16.msra.mxu0 %v700
      %909 = vmatprep.subr.bf16.mxu0 0
      %910 = vmatpush2.bf16.msra.mxu0 %v699
      %911 = vmatprep.subr.bf16.mxu0 0
      %912 = vmatpush2.bf16.msra.mxu0 %v698
      %913 = vmatprep.subr.bf16.mxu0 0
      %914 = vmatpush2.bf16.msra.mxu0 %v697
      %915 = vmatprep.subr.bf16.mxu0 0
      %916 = vmatpush2.bf16.msra.mxu0 %v696
      %917 = vmatprep.subr.bf16.mxu0 0
      %918 = vmatpush2.bf16.msra.mxu0 %v695
      %919 = vmatprep.mubr.bf16.mxu0 %v374
      %920 = vmatmul.mubr.bf16.gmra.mxu0 %v372
      %v921 = vpop.f32.mrf.mxu0
      %v922 = vadd.f32 %v882, %v921
      %v923 = vpop.f32.mrf.mxu0
      %v924 = vpop.f32.mrf.mxu0
      %v925 = vpop.f32.mrf.mxu0
      %926 = vdwg.mxu0
      %v927 = vadd.f32 %v195, %v922
      %928 = vst [vmem:[#allocation2] sm:$0x3] %v927
      %p929 = scmp.eq.s32.totalorder %s18, 7
      // Predicated region
      $region33: #{discriminator_forward.15} parent=27 // pred_check
        %p930 = pneg %p929
      $region34: #{discriminator_forward.15} parent=27 // pred_check_branch
        %932 = sbr.rel (%p930) target = $region36
      $region35: #{discriminator_forward.15} parent=27 // pred_region
        %v933 = vld [vmem:[#allocation2] sm:$0x3]
        %v934 = vxor.u32 %v933, 2147483648
        %v935 = vmul.f32 %v934, 1.442695
        %v936 = vpow.pop %v935
        %v937 = vadd.f32 %v936, 1.0
        %v938 = vrcp.pop %v937
        %v939 = vmul.f32 1.0, %v938
        %940 = vst [vmem:[%s188] sm:$0x3] %v939
      $region36: #{discriminator_forward.15} parent=27 // pred_fallthru
        _
      %p941 = scmp.lt.s32.totalorder %s17, 0
      %s942 = scalar_select %p941, %s17, 0
      %s943 = smul.addr %s942, 2
      %s944 = scalar_lea.vmem %s2, %s943
      // Predicated region
      $region37: #{discriminator_forward.15} parent=27 // pred_check
        %p945 = pneg %p97
      $region38: #{discriminator_forward.15} parent=27 // pred_check_branch
        %947 = sbr.rel (%p945) target = $region40
      $region39: #{discriminator_forward.15} parent=27 // pred_region
        _
      $region40: #{discriminator_forward.15} parent=27 // pred_fallthru
        _
      // Predicated region
      $region41: #{discriminator_forward.15} parent=27 // pred_check
        %p948 = pneg %p97
      $region42: #{discriminator_forward.15} parent=27 // pred_check_branch
        %950 = sbr.rel (%p948) target = $region44
      $region43: #{discriminator_forward.15} parent=27 // pred_region
        %p951 = scmp.lt.s32.totalorder %s17, 0
        %s952 = scalar_select %p951, %s17, 0
        %s953 = smul.addr %s952, 2
        %s954 = scalar_lea.vmem %s2, %s953
      $region44: #{discriminator_forward.15} parent=27 // pred_fallthru
        _
    $region28: #{discriminator_forward.15} parent=5 // pred_fallthru
      _
    %p955 = scmp.le.s32.totalorder 2, %s8
    // Predicated region
    $region45: #{discriminator_forward.15} parent=5 // pred_check
      %p956 = pneg %p955
    $region46: #{discriminator_forward.15} parent=5 // pred_check_branch
      %958 = sbr.rel (%p956) target = $region48
    $region47: #{discriminator_forward.15} parent=5 // pred_region
      %s959 = ssub.s32 %s8, 2
    $region48: #{discriminator_forward.15} parent=5 // pred_fallthru
      _
  $region6: #{discriminator_forward.15} parent=0 // loop_footer
    %s12 = sadd.s32 1, %s8
  $region7: #{discriminator_forward.15} parent=0 // loop_footer_branch
    %7 = sbr.rel target = $region3
  $region8: #{discriminator_forward.15} parent=0 // loop_exit
    _

</llo_original>
